<compile_context>
chip_gen: v7x
topology: tpu7x:2x2x1
jax: 0.10.0
libtpu: 0.0.40
codegen_flags: <defaults>
</compile_context>

<pallas_src>
import functools

import jax
import jax.numpy as jnp
from jax.experimental import pallas as pl
from jax.experimental.pallas import tpu as pltpu

LANE = 128
NEG_BIG = -1e30   # finite "never wins argmax" fill for padded vocab lanes


def _round_up(x, m):
    return ((x + m - 1) // m) * m


# ---------------------------------------------------------------------------
# The fused encoder+decoder kernel.
# ---------------------------------------------------------------------------
def _make_seq2seq_kernel(S, Tm1):
    """S encoder steps + Tm1 decode steps, fully unrolled in one kernel.

    For long sequences switch the Python loops to lax.fori_loop over a
    time-major layout (dynamic leading-dim indexing); at these shapes full
    unrolling is both simpler and faster (LLO gets the whole schedule).
    """

    def kernel(tf_ref,                      # SMEM (Tm1,) int32 teacher-forcing flags
               src_ref,                     # (B, S,   EP) source embeddings
               tgt_ref,                     # (B, Tm1, EP) target embeddings (teacher inputs)
               enc_wx_ref, enc_wh_ref, enc_b_ref,
               dec_wx_ref, dec_wh_ref, dec_b_ref,
               fc_w_ref, fc_b_ref,          # (HP, VP), (1, VP) (padding baked into bias)
               emb_ref,                     # (VP, EP) decoder embedding table
               out_ref,                     # (B, T, VP) logits, row t=0 zeroed
               x_greedy):                   # VMEM scratch (B, EP): greedy-token embedding
        B = src_ref.shape[0]
        EP = src_ref.shape[2]
        HP = enc_wh_ref.shape[0]
        VP = out_ref.shape[-1]

        # Loop-invariant values (JAX does not CSE broadcast_in_dim / iota, so
        # build them exactly once outside the unrolled loops).
        enc_b = enc_b_ref[...]
        dec_b = dec_b_ref[...]
        fc_b = fc_b_ref[...]
        lane = jax.lax.broadcasted_iota(jnp.int32, (B, VP), 1)

        def gru_step(x, h, wx_ref, wh_ref, b):
            # Two MXU passes (x @ Wx + h @ Wh); gate columns are [r | z | n_x | n_h].
            g = (jnp.dot(x, wx_ref[...], preferred_element_type=jnp.float32)
                 + jnp.dot(h, wh_ref[...], preferred_element_type=jnp.float32)
                 + b)
            r = jax.nn.sigmoid(g[:, 0:HP])
            z = jax.nn.sigmoid(g[:, HP:2 * HP])
            n = jnp.tanh(g[:, 2 * HP:3 * HP] + r * g[:, 3 * HP:4 * HP])
            return (1.0 - z) * n + z * h

        # ---------------- encoder (only the final hidden state is needed) ----
        h = jnp.zeros((B, HP), jnp.float32)
        for t in range(S):
            h = gru_step(src_ref[:, t, :], h, enc_wx_ref, enc_wh_ref, enc_b)

        # ---------------- decoder ----------------
        out_ref[:, 0, :] = jnp.zeros((B, VP), jnp.float32)   # outputs[:, 0] = 0
        x_greedy[...] = jnp.zeros_like(x_greedy)

        for s in range(Tm1):                  # decode step t = s + 1
            if s == 0:
                x = tgt_ref[:, 0, :]          # decoder_input = target[:, 0]
            else:
                use_tgt = tf_ref[s - 1] != 0  # coin flipped after previous step
                x = jnp.where(use_tgt, tgt_ref[:, s, :], x_greedy[...])

            h = gru_step(x, h, dec_wx_ref, dec_wh_ref, dec_b)

            # fc projection; padded vocab lanes carry NEG_BIG from the bias so
            # they can never win the argmax below (no per-step masking needed).
            logits = (jnp.dot(h, fc_w_ref[...],
                              preferred_element_type=jnp.float32) + fc_b)
            out_ref[:, s + 1, :] = logits

            # Greedy next-token embedding is only consumed when a next decode
            # step exists AND that step is not teacher-forced.
            if s + 1 < Tm1:
                @pl.when(tf_ref[s] == 0)
                def _(logits=logits):
                    row_max = jnp.max(logits, axis=-1, keepdims=True)
                    # first index attaining the max (torch.argmax tie-breaking)
                    top1 = jnp.min(jnp.where(logits == row_max, lane, VP),
                                   axis=-1, keepdims=True)
                    onehot = (lane == top1).astype(jnp.float32)
                    x_greedy[...] = jnp.dot(onehot, emb_ref[...],
                                            preferred_element_type=jnp.float32)

    return kernel


def seq2seq_pallas(tf_flags, src_emb, tgt_emb, p):
    """tf_flags: (T-1,) int32; src_emb: (B,S,EP); tgt_emb: (B,T-1,EP).
    Returns logits (B, T, VP) with row t=0 zeroed."""
    B, S, EP = src_emb.shape
    Tm1 = tgt_emb.shape[1]
    T = Tm1 + 1
    VP = p["fc_w"].shape[1]

    def full(a):
        return pl.BlockSpec(a.shape, lambda i, tf, nd=a.ndim: (0,) * nd)

    return pl.pallas_call(
        _make_seq2seq_kernel(S, Tm1),
        out_shape=jax.ShapeDtypeStruct((B, T, VP), jnp.float32),
        grid_spec=pltpu.PrefetchScalarGridSpec(
            num_scalar_prefetch=1,
            grid=(1,),
            in_specs=[
                full(src_emb), full(tgt_emb),
                full(p["enc_wx"]), full(p["enc_wh"]), full(p["enc_b"]),
                full(p["dec_wx"]), full(p["dec_wh"]), full(p["dec_b"]),
                full(p["fc_w"]), full(p["fc_b"]),
                full(p["dec_emb"]),
            ],
            out_specs=pl.BlockSpec((B, T, VP), lambda i, tf: (0, 0, 0)),
            scratch_shapes=[pltpu.VMEM((B, EP), jnp.float32)],   # greedy-token emb
        ),
        # Sequential recurrence; total VMEM footprint ~1.3 MiB so the default
        # scoped VMEM limit is fine (set vmem_limit_bytes when scaling H/V).
        compiler_params=pltpu.CompilerParams(
            dimension_semantics=("arbitrary",)),
    )(tf_flags, src_emb, tgt_emb,
      p["enc_wx"], p["enc_wh"], p["enc_b"],
      p["dec_wx"], p["dec_wh"], p["dec_b"],
      p["fc_w"], p["fc_b"], p["dec_emb"])


# ---------------------------------------------------------------------------
# Parameters: PyTorch layout -> split/padded kernel layout.
# ---------------------------------------------------------------------------
def make_raw_params(key, src_vocab, tgt_vocab, emb_dim, hidden_dim):
    """PyTorch-layout parameters (GRU gate order r, z, n)."""
    ks = jax.random.split(key, 12)
    s = 0.1

    def rnd(k, shape):
        return s * jax.random.normal(k, shape, jnp.float32)

    H, E, V = hidden_dim, emb_dim, tgt_vocab
    return {
        "enc_emb":  rnd(ks[0], (src_vocab, E)),
        "enc_w_ih": rnd(ks[1], (3 * H, E)),
        "enc_w_hh": rnd(ks[2], (3 * H, H)),
        "enc_b_ih": rnd(ks[3], (3 * H,)),
        "enc_b_hh": rnd(ks[4], (3 * H,)),
        "dec_emb":  rnd(ks[5], (V, E)),
        "dec_w_ih": rnd(ks[6], (3 * H, E)),
        "dec_w_hh": rnd(ks[7], (3 * H, H)),
        "dec_b_ih": rnd(ks[8], (3 * H,)),
        "dec_b_hh": rnd(ks[9], (3 * H,)),
        "fc_w":     rnd(ks[10], (V, H)),
        "fc_b":     rnd(ks[11], (V,)),
    }


def prepare_fused_params(raw, emb_dim, hidden_dim, tgt_vocab):
    """Pad E/H/V to 128 lanes, split GRU weights into Wx/Wh with gate layout
    [r | z | n_x | n_h], and bake the vocab-padding mask into fc_b."""
    E, H, V = emb_dim, hidden_dim, tgt_vocab
    EP = max(LANE, _round_up(E, LANE))
    HP = max(LANE, _round_up(H, LANE))
    VP = max(LANE, _round_up(V, LANE))

    def split_gru(w_ih, w_hh, b_ih, b_hh):
        wx = jnp.zeros((EP, 4 * HP), jnp.float32)
        wh = jnp.zeros((HP, 4 * HP), jnp.float32)
        b = jnp.zeros((1, 4 * HP), jnp.float32)
        Wi = [w_ih[0:H], w_ih[H:2 * H], w_ih[2 * H:3 * H]]   # r, z, n  (H, E)
        Wh = [w_hh[0:H], w_hh[H:2 * H], w_hh[2 * H:3 * H]]   # r, z, n  (H, H)
        bi = [b_ih[0:H], b_ih[H:2 * H], b_ih[2 * H:3 * H]]
        bh = [b_hh[0:H], b_hh[H:2 * H], b_hh[2 * H:3 * H]]
        for gate in range(2):                 # r, z: x and h contributions sum
            c = gate * HP
            wx = wx.at[:E, c:c + H].set(Wi[gate].T)
            wh = wh.at[:H, c:c + H].set(Wh[gate].T)
            b = b.at[0, c:c + H].set(bi[gate] + bh[gate])
        # n gate: x part in [2HP:3HP), h part in [3HP:4HP) (r scales only the
        # hidden contribution of n).
        wx = wx.at[:E, 2 * HP:2 * HP + H].set(Wi[2].T)
        b = b.at[0, 2 * HP:2 * HP + H].set(bi[2])
        wh = wh.at[:H, 3 * HP:3 * HP + H].set(Wh[2].T)
        b = b.at[0, 3 * HP:3 * HP + H].set(bh[2])
        return wx, wh, b

    enc_wx, enc_wh, enc_b = split_gru(raw["enc_w_ih"], raw["enc_w_hh"],
                                      raw["enc_b_ih"], raw["enc_b_hh"])
    dec_wx, dec_wh, dec_b = split_gru(raw["dec_w_ih"], raw["dec_w_hh"],
                                      raw["dec_b_ih"], raw["dec_b_hh"])

    enc_emb = jnp.zeros((raw["enc_emb"].shape[0], EP), jnp.float32)
    enc_emb = enc_emb.at[:, :E].set(raw["enc_emb"])
    dec_emb = jnp.zeros((VP, EP), jnp.float32).at[:V, :E].set(raw["dec_emb"])

    fc_w = jnp.zeros((HP, VP), jnp.float32).at[:H, :V].set(raw["fc_w"].T)
    # Padded vocab lanes get a large finite negative so they never win the
    # in-kernel argmax (finite, so no inf/NaN can propagate).
    fc_b = jnp.full((1, VP), NEG_BIG, jnp.float32).at[0, :V].set(raw["fc_b"])

    return {"enc_emb": enc_emb, "enc_wx": enc_wx, "enc_wh": enc_wh, "enc_b": enc_b,
            "dec_emb": dec_emb, "dec_wx": dec_wx, "dec_wh": dec_wh, "dec_b": dec_b,
            "fc_w": fc_w, "fc_b": fc_b}


# ---------------------------------------------------------------------------
# Seq2Seq forward (matches the PyTorch module semantics).
# ---------------------------------------------------------------------------
def seq2seq_forward(fused, source, target, tf_flags, tgt_vocab):
    """source: (B,S) int32, target: (B,T) int32, tf_flags: (T-1,) int32.
    Returns (B, T, tgt_vocab) f32 with outputs[:, 0] == 0, as in PyTorch."""
    T = target.shape[1]
    src_emb = fused["enc_emb"][source]               # (B, S,   EP)
    tgt_emb = fused["dec_emb"][target[:, :T - 1]]    # (B, T-1, EP)
    out = seq2seq_pallas(tf_flags, src_emb, tgt_emb, fused)   # (B, T, VP)
    return out[:, :, :tgt_vocab]


# ---------------------------------------------------------------------------
# Pure-JAX reference (mirrors the PyTorch forward) for correctness checking.
# ---------------------------------------------------------------------------
def seq2seq_reference(raw, source, target, tf_flags):
    def gru_cell(x, h, w_ih, w_hh, b_ih, b_hh):
        H = h.shape[1]
        gi = x @ w_ih.T + b_ih
        gh = h @ w_hh.T + b_hh
        r = jax.nn.sigmoid(gi[:, :H] + gh[:, :H])
        z = jax.nn.sigmoid(gi[:, H:2 * H] + gh[:, H:2 * H])
        n = jnp.tanh(gi[:, 2 * H:] + r * gh[:, 2 * H:])
        return (1.0 - z) * n + z * h

    B, S = source.shape
    T = target.shape[1]
    V = raw["fc_w"].shape[0]
    H = raw["enc_w_hh"].shape[1]

    h = jnp.zeros((B, H), jnp.float32)
    for t in range(S):
        h = gru_cell(raw["enc_emb"][source[:, t]], h,
                     raw["enc_w_ih"], raw["enc_w_hh"],
                     raw["enc_b_ih"], raw["enc_b_hh"])

    outputs = jnp.zeros((B, T, V), jnp.float32)
    dec_in = target[:, 0]
    for t in range(1, T):
        x = raw["dec_emb"][dec_in]
        h = gru_cell(x, h, raw["dec_w_ih"], raw["dec_w_hh"],
                     raw["dec_b_ih"], raw["dec_b_hh"])
        logits = h @ raw["fc_w"].T + raw["fc_b"]
        outputs = outputs.at[:, t].set(logits)
        top1 = jnp.argmax(logits, axis=1).astype(target.dtype)
        dec_in = jnp.where(tf_flags[t - 1] != 0, target[:, t], top1)
    return outputs


# ---------------------------------------------------------------------------
if __name__ == "__main__":
    B, S_SRC, T_TGT = 8, 10, 6
    SRC_VOCAB, TGT_VOCAB = 50, 64
    EMB, HID = 32, 32

    key = jax.random.PRNGKey(0)
    k_par, k_src, k_tgt, k_tf = jax.random.split(key, 4)

    raw = make_raw_params(k_par, SRC_VOCAB, TGT_VOCAB, EMB, HID)
    fused = prepare_fused_params(raw, EMB, HID, TGT_VOCAB)

    source = jax.random.randint(k_src, (B, S_SRC), 0, SRC_VOCAB, jnp.int32)
    target = jax.random.randint(k_tgt, (B, T_TGT), 0, TGT_VOCAB, jnp.int32)

    # torch.rand(1) < ratio: one scalar coin flip per decode step, drawn up
    # front (same semantics as the PyTorch loop, different RNG stream).
    tf_flags = (jax.random.uniform(k_tf, (T_TGT - 1,)) < 0.5).astype(jnp.int32)

    fwd = jax.jit(functools.partial(seq2seq_forward, tgt_vocab=TGT_VOCAB))
    outputs = jax.block_until_ready(fwd(fused, source, target, tf_flags))

    assert outputs.shape == (B, T_TGT, TGT_VOCAB)
    assert outputs.dtype == jnp.float32
    assert bool(jnp.all(outputs[:, 0] == 0.0))          # t=0 row left as zeros
    assert bool(jnp.all(jnp.isfinite(outputs)))

    ref = seq2seq_reference(raw, source, target, tf_flags)
    max_err = float(jnp.max(jnp.abs(outputs - ref)))
    assert bool(jnp.allclose(outputs, ref, atol=2e-3, rtol=2e-3)), max_err

    print("KERNEL_OK")
</pallas_src>

<mosaic_0001>
module attributes {stable_mosaic.version = 11 : i64} {
  func.func @kernel(%arg0: i32, %arg1: memref<5xi32, #tpu.memory_space<smem>>, %arg2: memref<8x10x128xf32, #tpu.memory_space<vmem>>, %arg3: memref<8x5x128xf32, #tpu.memory_space<vmem>>, %arg4: memref<128x512xf32, #tpu.memory_space<vmem>>, %arg5: memref<128x512xf32, #tpu.memory_space<vmem>>, %arg6: memref<1x512xf32, #tpu.memory_space<vmem>>, %arg7: memref<128x512xf32, #tpu.memory_space<vmem>>, %arg8: memref<128x512xf32, #tpu.memory_space<vmem>>, %arg9: memref<1x512xf32, #tpu.memory_space<vmem>>, %arg10: memref<128x128xf32, #tpu.memory_space<vmem>>, %arg11: memref<1x128xf32, #tpu.memory_space<vmem>>, %arg12: memref<128x128xf32, #tpu.memory_space<vmem>>, %arg13: memref<8x6x128xf32, #tpu.memory_space<vmem>>, %arg14: memref<8x128xf32, #tpu.memory_space<vmem>>) attributes {dimension_semantics = [#tpu.dimension_semantics<arbitrary>], iteration_bounds = array<i64: 1>, scalar_prefetch = 1 : i64, scratch_operands = 1 : i64, tpu.core_type = #tpu.core_type<tc>, window_params = [{pipeline_mode = #tpu.pipeline_mode<synchronous>, transform_indices = @transform_0, window_bounds = array<i64: 8, 10, 128>}, {pipeline_mode = #tpu.pipeline_mode<synchronous>, transform_indices = @transform_1, window_bounds = array<i64: 8, 5, 128>}, {pipeline_mode = #tpu.pipeline_mode<synchronous>, transform_indices = @transform_2, window_bounds = array<i64: 128, 512>}, {pipeline_mode = #tpu.pipeline_mode<synchronous>, transform_indices = @transform_3, window_bounds = array<i64: 128, 512>}, {pipeline_mode = #tpu.pipeline_mode<synchronous>, transform_indices = @transform_4, window_bounds = array<i64: 1, 512>}, {pipeline_mode = #tpu.pipeline_mode<synchronous>, transform_indices = @transform_5, window_bounds = array<i64: 128, 512>}, {pipeline_mode = #tpu.pipeline_mode<synchronous>, transform_indices = @transform_6, window_bounds = array<i64: 128, 512>}, {pipeline_mode = #tpu.pipeline_mode<synchronous>, transform_indices = @transform_7, window_bounds = array<i64: 1, 512>}, {pipeline_mode = #tpu.pipeline_mode<synchronous>, transform_indices = @transform_8, window_bounds = array<i64: 128, 128>}, {pipeline_mode = #tpu.pipeline_mode<synchronous>, transform_indices = @transform_9, window_bounds = array<i64: 1, 128>}, {pipeline_mode = #tpu.pipeline_mode<synchronous>, transform_indices = @transform_10, window_bounds = array<i64: 128, 128>}, {pipeline_mode = #tpu.pipeline_mode<synchronous>, transform_indices = @transform_11, window_bounds = array<i64: 8, 6, 128>}]} {
    %c0 = arith.constant 0 : index
    %c0_0 = arith.constant 0 : index
    %0 = vector.load %arg6[%c0, %c0_0] : memref<1x512xf32, #tpu.memory_space<vmem>>, vector<1x512xf32>
    %c0_1 = arith.constant 0 : index
    %c0_2 = arith.constant 0 : index
    %1 = vector.load %arg9[%c0_1, %c0_2] : memref<1x512xf32, #tpu.memory_space<vmem>>, vector<1x512xf32>
    %c0_3 = arith.constant 0 : index
    %c0_4 = arith.constant 0 : index
    %2 = vector.load %arg11[%c0_3, %c0_4] : memref<1x128xf32, #tpu.memory_space<vmem>>, vector<1x128xf32>
    %3 = tpu.iota {dimensions = array<i32: 1>} : vector<8x128xi32>
    %cst = arith.constant 0.000000e+00 : f32
    %4 = vector.broadcast %cst : f32 to vector<8x128xf32>
    %c0_5 = arith.constant 0 : index
    %c0_6 = arith.constant 0 : index
    %c0_7 = arith.constant 0 : index
    %5 = vector.load %arg2[%c0_5, %c0_6, %c0_7] : memref<8x10x128xf32, #tpu.memory_space<vmem>>, vector<8x1x128xf32>
    %6 = vector.shape_cast %5 : vector<8x1x128xf32> to vector<8x128xf32>
    %c0_8 = arith.constant 0 : index
    %c0_9 = arith.constant 0 : index
    %7 = vector.load %arg4[%c0_8, %c0_9] : memref<128x512xf32, #tpu.memory_space<vmem>>, vector<128x512xf32>
    %cst_10 = arith.constant dense<0.000000e+00> : vector<8x512xf32>
    %8 = tpu.matmul %6, %7, %cst_10 {dimension_numbers = #tpu.dot_dimension_numbers<[1], [0], [0], [1], [0, 0, 1, 1], [], []>} : vector<8x128xf32>, vector<128x512xf32>, vector<8x512xf32> -> vector<8x512xf32>
    %c0_11 = arith.constant 0 : index
    %c0_12 = arith.constant 0 : index
    %9 = vector.load %arg5[%c0_11, %c0_12] : memref<128x512xf32, #tpu.memory_space<vmem>>, vector<128x512xf32>
    %cst_13 = arith.constant dense<0.000000e+00> : vector<8x512xf32>
    %10 = tpu.matmul %4, %9, %cst_13 {dimension_numbers = #tpu.dot_dimension_numbers<[1], [0], [0], [1], [0, 0, 1, 1], [], []>} : vector<8x128xf32>, vector<128x512xf32>, vector<8x512xf32> -> vector<8x512xf32>
    %11 = arith.addf %8, %10 : vector<8x512xf32>
    %12 = vector.broadcast %0 : vector<1x512xf32> to vector<8x512xf32>
    %13 = arith.addf %11, %12 : vector<8x512xf32>
    %14 = vector.extract_strided_slice %13 {offsets = [0, 0], sizes = [8, 128], strides = [1, 1]} : vector<8x512xf32> to vector<8x128xf32>
    %15 = arith.negf %14 : vector<8x128xf32>
    %16 = math.exp %15 : vector<8x128xf32>
    %cst_14 = arith.constant 1.000000e+00 : f32
    %17 = vector.broadcast %cst_14 : f32 to vector<8x128xf32>
    %18 = arith.addf %17, %16 : vector<8x128xf32>
    %19 = arith.divf %17, %18 : vector<8x128xf32>
    %20 = vector.extract_strided_slice %13 {offsets = [0, 128], sizes = [8, 128], strides = [1, 1]} : vector<8x512xf32> to vector<8x128xf32>
    %21 = arith.negf %20 : vector<8x128xf32>
    %22 = math.exp %21 : vector<8x128xf32>
    %cst_15 = arith.constant 1.000000e+00 : f32
    %23 = vector.broadcast %cst_15 : f32 to vector<8x128xf32>
    %24 = arith.addf %23, %22 : vector<8x128xf32>
    %25 = arith.divf %23, %24 : vector<8x128xf32>
    %26 = vector.extract_strided_slice %13 {offsets = [0, 256], sizes = [8, 128], strides = [1, 1]} : vector<8x512xf32> to vector<8x128xf32>
    %27 = vector.extract_strided_slice %13 {offsets = [0, 384], sizes = [8, 128], strides = [1, 1]} : vector<8x512xf32> to vector<8x128xf32>
    %28 = arith.mulf %19, %27 : vector<8x128xf32>
    %29 = arith.addf %26, %28 : vector<8x128xf32>
    %30 = math.tanh %29 : vector<8x128xf32>
    %cst_16 = arith.constant 1.000000e+00 : f32
    %31 = vector.broadcast %cst_16 : f32 to vector<8x128xf32>
    %32 = arith.subf %31, %25 : vector<8x128xf32>
    %33 = arith.mulf %32, %30 : vector<8x128xf32>
    %34 = arith.mulf %25, %4 : vector<8x128xf32>
    %35 = arith.addf %33, %34 : vector<8x128xf32>
    %c0_17 = arith.constant 0 : index
    %c1 = arith.constant 1 : index
    %c0_18 = arith.constant 0 : index
    %36 = vector.load %arg2[%c0_17, %c1, %c0_18] : memref<8x10x128xf32, #tpu.memory_space<vmem>>, vector<8x1x128xf32>
    %37 = vector.shape_cast %36 : vector<8x1x128xf32> to vector<8x128xf32>
    %c0_19 = arith.constant 0 : index
    %c0_20 = arith.constant 0 : index
    %38 = vector.load %arg4[%c0_19, %c0_20] : memref<128x512xf32, #tpu.memory_space<vmem>>, vector<128x512xf32>
    %cst_21 = arith.constant dense<0.000000e+00> : vector<8x512xf32>
    %39 = tpu.matmul %37, %38, %cst_21 {dimension_numbers = #tpu.dot_dimension_numbers<[1], [0], [0], [1], [0, 0, 1, 1], [], []>} : vector<8x128xf32>, vector<128x512xf32>, vector<8x512xf32> -> vector<8x512xf32>
    %c0_22 = arith.constant 0 : index
    %c0_23 = arith.constant 0 : index
    %40 = vector.load %arg5[%c0_22, %c0_23] : memref<128x512xf32, #tpu.memory_space<vmem>>, vector<128x512xf32>
    %cst_24 = arith.constant dense<0.000000e+00> : vector<8x512xf32>
    %41 = tpu.matmul %35, %40, %cst_24 {dimension_numbers = #tpu.dot_dimension_numbers<[1], [0], [0], [1], [0, 0, 1, 1], [], []>} : vector<8x128xf32>, vector<128x512xf32>, vector<8x512xf32> -> vector<8x512xf32>
    %42 = arith.addf %39, %41 : vector<8x512xf32>
    %43 = vector.broadcast %0 : vector<1x512xf32> to vector<8x512xf32>
    %44 = arith.addf %42, %43 : vector<8x512xf32>
    %45 = vector.extract_strided_slice %44 {offsets = [0, 0], sizes = [8, 128], strides = [1, 1]} : vector<8x512xf32> to vector<8x128xf32>
    %46 = arith.negf %45 : vector<8x128xf32>
    %47 = math.exp %46 : vector<8x128xf32>
    %cst_25 = arith.constant 1.000000e+00 : f32
    %48 = vector.broadcast %cst_25 : f32 to vector<8x128xf32>
    %49 = arith.addf %48, %47 : vector<8x128xf32>
    %50 = arith.divf %48, %49 : vector<8x128xf32>
    %51 = vector.extract_strided_slice %44 {offsets = [0, 128], sizes = [8, 128], strides = [1, 1]} : vector<8x512xf32> to vector<8x128xf32>
    %52 = arith.negf %51 : vector<8x128xf32>
    %53 = math.exp %52 : vector<8x128xf32>
    %cst_26 = arith.constant 1.000000e+00 : f32
    %54 = vector.broadcast %cst_26 : f32 to vector<8x128xf32>
    %55 = arith.addf %54, %53 : vector<8x128xf32>
    %56 = arith.divf %54, %55 : vector<8x128xf32>
    %57 = vector.extract_strided_slice %44 {offsets = [0, 256], sizes = [8, 128], strides = [1, 1]} : vector<8x512xf32> to vector<8x128xf32>
    %58 = vector.extract_strided_slice %44 {offsets = [0, 384], sizes = [8, 128], strides = [1, 1]} : vector<8x512xf32> to vector<8x128xf32>
    %59 = arith.mulf %50, %58 : vector<8x128xf32>
    %60 = arith.addf %57, %59 : vector<8x128xf32>
    %61 = math.tanh %60 : vector<8x128xf32>
    %cst_27 = arith.constant 1.000000e+00 : f32
    %62 = vector.broadcast %cst_27 : f32 to vector<8x128xf32>
    %63 = arith.subf %62, %56 : vector<8x128xf32>
    %64 = arith.mulf %63, %61 : vector<8x128xf32>
    %65 = arith.mulf %56, %35 : vector<8x128xf32>
    %66 = arith.addf %64, %65 : vector<8x128xf32>
    %c0_28 = arith.constant 0 : index
    %c2 = arith.constant 2 : index
    %c0_29 = arith.constant 0 : index
    %67 = vector.load %arg2[%c0_28, %c2, %c0_29] : memref<8x10x128xf32, #tpu.memory_space<vmem>>, vector<8x1x128xf32>
    %68 = vector.shape_cast %67 : vector<8x1x128xf32> to vector<8x128xf32>
    %c0_30 = arith.constant 0 : index
    %c0_31 = arith.constant 0 : index
    %69 = vector.load %arg4[%c0_30, %c0_31] : memref<128x512xf32, #tpu.memory_space<vmem>>, vector<128x512xf32>
    %cst_32 = arith.constant dense<0.000000e+00> : vector<8x512xf32>
    %70 = tpu.matmul %68, %69, %cst_32 {dimension_numbers = #tpu.dot_dimension_numbers<[1], [0], [0], [1], [0, 0, 1, 1], [], []>} : vector<8x128xf32>, vector<128x512xf32>, vector<8x512xf32> -> vector<8x512xf32>
    %c0_33 = arith.constant 0 : index
    %c0_34 = arith.constant 0 : index
    %71 = vector.load %arg5[%c0_33, %c0_34] : memref<128x512xf32, #tpu.memory_space<vmem>>, vector<128x512xf32>
    %cst_35 = arith.constant dense<0.000000e+00> : vector<8x512xf32>
    %72 = tpu.matmul %66, %71, %cst_35 {dimension_numbers = #tpu.dot_dimension_numbers<[1], [0], [0], [1], [0, 0, 1, 1], [], []>} : vector<8x128xf32>, vector<128x512xf32>, vector<8x512xf32> -> vector<8x512xf32>
    %73 = arith.addf %70, %72 : vector<8x512xf32>
    %74 = vector.broadcast %0 : vector<1x512xf32> to vector<8x512xf32>
    %75 = arith.addf %73, %74 : vector<8x512xf32>
    %76 = vector.extract_strided_slice %75 {offsets = [0, 0], sizes = [8, 128], strides = [1, 1]} : vector<8x512xf32> to vector<8x128xf32>
    %77 = arith.negf %76 : vector<8x128xf32>
    %78 = math.exp %77 : vector<8x128xf32>
    %cst_36 = arith.constant 1.000000e+00 : f32
    %79 = vector.broadcast %cst_36 : f32 to vector<8x128xf32>
    %80 = arith.addf %79, %78 : vector<8x128xf32>
    %81 = arith.divf %79, %80 : vector<8x128xf32>
    %82 = vector.extract_strided_slice %75 {offsets = [0, 128], sizes = [8, 128], strides = [1, 1]} : vector<8x512xf32> to vector<8x128xf32>
    %83 = arith.negf %82 : vector<8x128xf32>
    %84 = math.exp %83 : vector<8x128xf32>
    %cst_37 = arith.constant 1.000000e+00 : f32
    %85 = vector.broadcast %cst_37 : f32 to vector<8x128xf32>
    %86 = arith.addf %85, %84 : vector<8x128xf32>
    %87 = arith.divf %85, %86 : vector<8x128xf32>
    %88 = vector.extract_strided_slice %75 {offsets = [0, 256], sizes = [8, 128], strides = [1, 1]} : vector<8x512xf32> to vector<8x128xf32>
    %89 = vector.extract_strided_slice %75 {offsets = [0, 384], sizes = [8, 128], strides = [1, 1]} : vector<8x512xf32> to vector<8x128xf32>
    %90 = arith.mulf %81, %89 : vector<8x128xf32>
    %91 = arith.addf %88, %90 : vector<8x128xf32>
    %92 = math.tanh %91 : vector<8x128xf32>
    %cst_38 = arith.constant 1.000000e+00 : f32
    %93 = vector.broadcast %cst_38 : f32 to vector<8x128xf32>
    %94 = arith.subf %93, %87 : vector<8x128xf32>
    %95 = arith.mulf %94, %92 : vector<8x128xf32>
    %96 = arith.mulf %87, %66 : vector<8x128xf32>
    %97 = arith.addf %95, %96 : vector<8x128xf32>
    %c0_39 = arith.constant 0 : index
    %c3 = arith.constant 3 : index
    %c0_40 = arith.constant 0 : index
    %98 = vector.load %arg2[%c0_39, %c3, %c0_40] : memref<8x10x128xf32, #tpu.memory_space<vmem>>, vector<8x1x128xf32>
    %99 = vector.shape_cast %98 : vector<8x1x128xf32> to vector<8x128xf32>
    %c0_41 = arith.constant 0 : index
    %c0_42 = arith.constant 0 : index
    %100 = vector.load %arg4[%c0_41, %c0_42] : memref<128x512xf32, #tpu.memory_space<vmem>>, vector<128x512xf32>
    %cst_43 = arith.constant dense<0.000000e+00> : vector<8x512xf32>
    %101 = tpu.matmul %99, %100, %cst_43 {dimension_numbers = #tpu.dot_dimension_numbers<[1], [0], [0], [1], [0, 0, 1, 1], [], []>} : vector<8x128xf32>, vector<128x512xf32>, vector<8x512xf32> -> vector<8x512xf32>
    %c0_44 = arith.constant 0 : index
    %c0_45 = arith.constant 0 : index
    %102 = vector.load %arg5[%c0_44, %c0_45] : memref<128x512xf32, #tpu.memory_space<vmem>>, vector<128x512xf32>
    %cst_46 = arith.constant dense<0.000000e+00> : vector<8x512xf32>
    %103 = tpu.matmul %97, %102, %cst_46 {dimension_numbers = #tpu.dot_dimension_numbers<[1], [0], [0], [1], [0, 0, 1, 1], [], []>} : vector<8x128xf32>, vector<128x512xf32>, vector<8x512xf32> -> vector<8x512xf32>
    %104 = arith.addf %101, %103 : vector<8x512xf32>
    %105 = vector.broadcast %0 : vector<1x512xf32> to vector<8x512xf32>
    %106 = arith.addf %104, %105 : vector<8x512xf32>
    %107 = vector.extract_strided_slice %106 {offsets = [0, 0], sizes = [8, 128], strides = [1, 1]} : vector<8x512xf32> to vector<8x128xf32>
    %108 = arith.negf %107 : vector<8x128xf32>
    %109 = math.exp %108 : vector<8x128xf32>
    %cst_47 = arith.constant 1.000000e+00 : f32
    %110 = vector.broadcast %cst_47 : f32 to vector<8x128xf32>
    %111 = arith.addf %110, %109 : vector<8x128xf32>
    %112 = arith.divf %110, %111 : vector<8x128xf32>
    %113 = vector.extract_strided_slice %106 {offsets = [0, 128], sizes = [8, 128], strides = [1, 1]} : vector<8x512xf32> to vector<8x128xf32>
    %114 = arith.negf %113 : vector<8x128xf32>
    %115 = math.exp %114 : vector<8x128xf32>
    %cst_48 = arith.constant 1.000000e+00 : f32
    %116 = vector.broadcast %cst_48 : f32 to vector<8x128xf32>
    %117 = arith.addf %116, %115 : vector<8x128xf32>
    %118 = arith.divf %116, %117 : vector<8x128xf32>
    %119 = vector.extract_strided_slice %106 {offsets = [0, 256], sizes = [8, 128], strides = [1, 1]} : vector<8x512xf32> to vector<8x128xf32>
    %120 = vector.extract_strided_slice %106 {offsets = [0, 384], sizes = [8, 128], strides = [1, 1]} : vector<8x512xf32> to vector<8x128xf32>
    %121 = arith.mulf %112, %120 : vector<8x128xf32>
    %122 = arith.addf %119, %121 : vector<8x128xf32>
    %123 = math.tanh %122 : vector<8x128xf32>
    %cst_49 = arith.constant 1.000000e+00 : f32
    %124 = vector.broadcast %cst_49 : f32 to vector<8x128xf32>
    %125 = arith.subf %124, %118 : vector<8x128xf32>
    %126 = arith.mulf %125, %123 : vector<8x128xf32>
    %127 = arith.mulf %118, %97 : vector<8x128xf32>
    %128 = arith.addf %126, %127 : vector<8x128xf32>
    %c0_50 = arith.constant 0 : index
    %c4 = arith.constant 4 : index
    %c0_51 = arith.constant 0 : index
    %129 = vector.load %arg2[%c0_50, %c4, %c0_51] : memref<8x10x128xf32, #tpu.memory_space<vmem>>, vector<8x1x128xf32>
    %130 = vector.shape_cast %129 : vector<8x1x128xf32> to vector<8x128xf32>
    %c0_52 = arith.constant 0 : index
    %c0_53 = arith.constant 0 : index
    %131 = vector.load %arg4[%c0_52, %c0_53] : memref<128x512xf32, #tpu.memory_space<vmem>>, vector<128x512xf32>
    %cst_54 = arith.constant dense<0.000000e+00> : vector<8x512xf32>
    %132 = tpu.matmul %130, %131, %cst_54 {dimension_numbers = #tpu.dot_dimension_numbers<[1], [0], [0], [1], [0, 0, 1, 1], [], []>} : vector<8x128xf32>, vector<128x512xf32>, vector<8x512xf32> -> vector<8x512xf32>
    %c0_55 = arith.constant 0 : index
    %c0_56 = arith.constant 0 : index
    %133 = vector.load %arg5[%c0_55, %c0_56] : memref<128x512xf32, #tpu.memory_space<vmem>>, vector<128x512xf32>
    %cst_57 = arith.constant dense<0.000000e+00> : vector<8x512xf32>
    %134 = tpu.matmul %128, %133, %cst_57 {dimension_numbers = #tpu.dot_dimension_numbers<[1], [0], [0], [1], [0, 0, 1, 1], [], []>} : vector<8x128xf32>, vector<128x512xf32>, vector<8x512xf32> -> vector<8x512xf32>
    %135 = arith.addf %132, %134 : vector<8x512xf32>
    %136 = vector.broadcast %0 : vector<1x512xf32> to vector<8x512xf32>
    %137 = arith.addf %135, %136 : vector<8x512xf32>
    %138 = vector.extract_strided_slice %137 {offsets = [0, 0], sizes = [8, 128], strides = [1, 1]} : vector<8x512xf32> to vector<8x128xf32>
    %139 = arith.negf %138 : vector<8x128xf32>
    %140 = math.exp %139 : vector<8x128xf32>
    %cst_58 = arith.constant 1.000000e+00 : f32
    %141 = vector.broadcast %cst_58 : f32 to vector<8x128xf32>
    %142 = arith.addf %141, %140 : vector<8x128xf32>
    %143 = arith.divf %141, %142 : vector<8x128xf32>
    %144 = vector.extract_strided_slice %137 {offsets = [0, 128], sizes = [8, 128], strides = [1, 1]} : vector<8x512xf32> to vector<8x128xf32>
    %145 = arith.negf %144 : vector<8x128xf32>
    %146 = math.exp %145 : vector<8x128xf32>
    %cst_59 = arith.constant 1.000000e+00 : f32
    %147 = vector.broadcast %cst_59 : f32 to vector<8x128xf32>
    %148 = arith.addf %147, %146 : vector<8x128xf32>
    %149 = arith.divf %147, %148 : vector<8x128xf32>
    %150 = vector.extract_strided_slice %137 {offsets = [0, 256], sizes = [8, 128], strides = [1, 1]} : vector<8x512xf32> to vector<8x128xf32>
    %151 = vector.extract_strided_slice %137 {offsets = [0, 384], sizes = [8, 128], strides = [1, 1]} : vector<8x512xf32> to vector<8x128xf32>
    %152 = arith.mulf %143, %151 : vector<8x128xf32>
    %153 = arith.addf %150, %152 : vector<8x128xf32>
    %154 = math.tanh %153 : vector<8x128xf32>
    %cst_60 = arith.constant 1.000000e+00 : f32
    %155 = vector.broadcast %cst_60 : f32 to vector<8x128xf32>
    %156 = arith.subf %155, %149 : vector<8x128xf32>
    %157 = arith.mulf %156, %154 : vector<8x128xf32>
    %158 = arith.mulf %149, %128 : vector<8x128xf32>
    %159 = arith.addf %157, %158 : vector<8x128xf32>
    %c0_61 = arith.constant 0 : index
    %c5 = arith.constant 5 : index
    %c0_62 = arith.constant 0 : index
    %160 = vector.load %arg2[%c0_61, %c5, %c0_62] : memref<8x10x128xf32, #tpu.memory_space<vmem>>, vector<8x1x128xf32>
    %161 = vector.shape_cast %160 : vector<8x1x128xf32> to vector<8x128xf32>
    %c0_63 = arith.constant 0 : index
    %c0_64 = arith.constant 0 : index
    %162 = vector.load %arg4[%c0_63, %c0_64] : memref<128x512xf32, #tpu.memory_space<vmem>>, vector<128x512xf32>
    %cst_65 = arith.constant dense<0.000000e+00> : vector<8x512xf32>
    %163 = tpu.matmul %161, %162, %cst_65 {dimension_numbers = #tpu.dot_dimension_numbers<[1], [0], [0], [1], [0, 0, 1, 1], [], []>} : vector<8x128xf32>, vector<128x512xf32>, vector<8x512xf32> -> vector<8x512xf32>
    %c0_66 = arith.constant 0 : index
    %c0_67 = arith.constant 0 : index
    %164 = vector.load %arg5[%c0_66, %c0_67] : memref<128x512xf32, #tpu.memory_space<vmem>>, vector<128x512xf32>
    %cst_68 = arith.constant dense<0.000000e+00> : vector<8x512xf32>
    %165 = tpu.matmul %159, %164, %cst_68 {dimension_numbers = #tpu.dot_dimension_numbers<[1], [0], [0], [1], [0, 0, 1, 1], [], []>} : vector<8x128xf32>, vector<128x512xf32>, vector<8x512xf32> -> vector<8x512xf32>
    %166 = arith.addf %163, %165 : vector<8x512xf32>
    %167 = vector.broadcast %0 : vector<1x512xf32> to vector<8x512xf32>
    %168 = arith.addf %166, %167 : vector<8x512xf32>
    %169 = vector.extract_strided_slice %168 {offsets = [0, 0], sizes = [8, 128], strides = [1, 1]} : vector<8x512xf32> to vector<8x128xf32>
    %170 = arith.negf %169 : vector<8x128xf32>
    %171 = math.exp %170 : vector<8x128xf32>
    %cst_69 = arith.constant 1.000000e+00 : f32
    %172 = vector.broadcast %cst_69 : f32 to vector<8x128xf32>
    %173 = arith.addf %172, %171 : vector<8x128xf32>
    %174 = arith.divf %172, %173 : vector<8x128xf32>
    %175 = vector.extract_strided_slice %168 {offsets = [0, 128], sizes = [8, 128], strides = [1, 1]} : vector<8x512xf32> to vector<8x128xf32>
    %176 = arith.negf %175 : vector<8x128xf32>
    %177 = math.exp %176 : vector<8x128xf32>
    %cst_70 = arith.constant 1.000000e+00 : f32
    %178 = vector.broadcast %cst_70 : f32 to vector<8x128xf32>
    %179 = arith.addf %178, %177 : vector<8x128xf32>
    %180 = arith.divf %178, %179 : vector<8x128xf32>
    %181 = vector.extract_strided_slice %168 {offsets = [0, 256], sizes = [8, 128], strides = [1, 1]} : vector<8x512xf32> to vector<8x128xf32>
    %182 = vector.extract_strided_slice %168 {offsets = [0, 384], sizes = [8, 128], strides = [1, 1]} : vector<8x512xf32> to vector<8x128xf32>
    %183 = arith.mulf %174, %182 : vector<8x128xf32>
    %184 = arith.addf %181, %183 : vector<8x128xf32>
    %185 = math.tanh %184 : vector<8x128xf32>
    %cst_71 = arith.constant 1.000000e+00 : f32
    %186 = vector.broadcast %cst_71 : f32 to vector<8x128xf32>
    %187 = arith.subf %186, %180 : vector<8x128xf32>
    %188 = arith.mulf %187, %185 : vector<8x128xf32>
    %189 = arith.mulf %180, %159 : vector<8x128xf32>
    %190 = arith.addf %188, %189 : vector<8x128xf32>
    %c0_72 = arith.constant 0 : index
    %c6 = arith.constant 6 : index
    %c0_73 = arith.constant 0 : index
    %191 = vector.load %arg2[%c0_72, %c6, %c0_73] : memref<8x10x128xf32, #tpu.memory_space<vmem>>, vector<8x1x128xf32>
    %192 = vector.shape_cast %191 : vector<8x1x128xf32> to vector<8x128xf32>
    %c0_74 = arith.constant 0 : index
    %c0_75 = arith.constant 0 : index
    %193 = vector.load %arg4[%c0_74, %c0_75] : memref<128x512xf32, #tpu.memory_space<vmem>>, vector<128x512xf32>
    %cst_76 = arith.constant dense<0.000000e+00> : vector<8x512xf32>
    %194 = tpu.matmul %192, %193, %cst_76 {dimension_numbers = #tpu.dot_dimension_numbers<[1], [0], [0], [1], [0, 0, 1, 1], [], []>} : vector<8x128xf32>, vector<128x512xf32>, vector<8x512xf32> -> vector<8x512xf32>
    %c0_77 = arith.constant 0 : index
    %c0_78 = arith.constant 0 : index
    %195 = vector.load %arg5[%c0_77, %c0_78] : memref<128x512xf32, #tpu.memory_space<vmem>>, vector<128x512xf32>
    %cst_79 = arith.constant dense<0.000000e+00> : vector<8x512xf32>
    %196 = tpu.matmul %190, %195, %cst_79 {dimension_numbers = #tpu.dot_dimension_numbers<[1], [0], [0], [1], [0, 0, 1, 1], [], []>} : vector<8x128xf32>, vector<128x512xf32>, vector<8x512xf32> -> vector<8x512xf32>
    %197 = arith.addf %194, %196 : vector<8x512xf32>
    %198 = vector.broadcast %0 : vector<1x512xf32> to vector<8x512xf32>
    %199 = arith.addf %197, %198 : vector<8x512xf32>
    %200 = vector.extract_strided_slice %199 {offsets = [0, 0], sizes = [8, 128], strides = [1, 1]} : vector<8x512xf32> to vector<8x128xf32>
    %201 = arith.negf %200 : vector<8x128xf32>
    %202 = math.exp %201 : vector<8x128xf32>
    %cst_80 = arith.constant 1.000000e+00 : f32
    %203 = vector.broadcast %cst_80 : f32 to vector<8x128xf32>
    %204 = arith.addf %203, %202 : vector<8x128xf32>
    %205 = arith.divf %203, %204 : vector<8x128xf32>
    %206 = vector.extract_strided_slice %199 {offsets = [0, 128], sizes = [8, 128], strides = [1, 1]} : vector<8x512xf32> to vector<8x128xf32>
    %207 = arith.negf %206 : vector<8x128xf32>
    %208 = math.exp %207 : vector<8x128xf32>
    %cst_81 = arith.constant 1.000000e+00 : f32
    %209 = vector.broadcast %cst_81 : f32 to vector<8x128xf32>
    %210 = arith.addf %209, %208 : vector<8x128xf32>
    %211 = arith.divf %209, %210 : vector<8x128xf32>
    %212 = vector.extract_strided_slice %199 {offsets = [0, 256], sizes = [8, 128], strides = [1, 1]} : vector<8x512xf32> to vector<8x128xf32>
    %213 = vector.extract_strided_slice %199 {offsets = [0, 384], sizes = [8, 128], strides = [1, 1]} : vector<8x512xf32> to vector<8x128xf32>
    %214 = arith.mulf %205, %213 : vector<8x128xf32>
    %215 = arith.addf %212, %214 : vector<8x128xf32>
    %216 = math.tanh %215 : vector<8x128xf32>
    %cst_82 = arith.constant 1.000000e+00 : f32
    %217 = vector.broadcast %cst_82 : f32 to vector<8x128xf32>
    %218 = arith.subf %217, %211 : vector<8x128xf32>
    %219 = arith.mulf %218, %216 : vector<8x128xf32>
    %220 = arith.mulf %211, %190 : vector<8x128xf32>
    %221 = arith.addf %219, %220 : vector<8x128xf32>
    %c0_83 = arith.constant 0 : index
    %c7 = arith.constant 7 : index
    %c0_84 = arith.constant 0 : index
    %222 = vector.load %arg2[%c0_83, %c7, %c0_84] : memref<8x10x128xf32, #tpu.memory_space<vmem>>, vector<8x1x128xf32>
    %223 = vector.shape_cast %222 : vector<8x1x128xf32> to vector<8x128xf32>
    %c0_85 = arith.constant 0 : index
    %c0_86 = arith.constant 0 : index
    %224 = vector.load %arg4[%c0_85, %c0_86] : memref<128x512xf32, #tpu.memory_space<vmem>>, vector<128x512xf32>
    %cst_87 = arith.constant dense<0.000000e+00> : vector<8x512xf32>
    %225 = tpu.matmul %223, %224, %cst_87 {dimension_numbers = #tpu.dot_dimension_numbers<[1], [0], [0], [1], [0, 0, 1, 1], [], []>} : vector<8x128xf32>, vector<128x512xf32>, vector<8x512xf32> -> vector<8x512xf32>
    %c0_88 = arith.constant 0 : index
    %c0_89 = arith.constant 0 : index
    %226 = vector.load %arg5[%c0_88, %c0_89] : memref<128x512xf32, #tpu.memory_space<vmem>>, vector<128x512xf32>
    %cst_90 = arith.constant dense<0.000000e+00> : vector<8x512xf32>
    %227 = tpu.matmul %221, %226, %cst_90 {dimension_numbers = #tpu.dot_dimension_numbers<[1], [0], [0], [1], [0, 0, 1, 1], [], []>} : vector<8x128xf32>, vector<128x512xf32>, vector<8x512xf32> -> vector<8x512xf32>
    %228 = arith.addf %225, %227 : vector<8x512xf32>
    %229 = vector.broadcast %0 : vector<1x512xf32> to vector<8x512xf32>
    %230 = arith.addf %228, %229 : vector<8x512xf32>
    %231 = vector.extract_strided_slice %230 {offsets = [0, 0], sizes = [8, 128], strides = [1, 1]} : vector<8x512xf32> to vector<8x128xf32>
    %232 = arith.negf %231 : vector<8x128xf32>
    %233 = math.exp %232 : vector<8x128xf32>
    %cst_91 = arith.constant 1.000000e+00 : f32
    %234 = vector.broadcast %cst_91 : f32 to vector<8x128xf32>
    %235 = arith.addf %234, %233 : vector<8x128xf32>
    %236 = arith.divf %234, %235 : vector<8x128xf32>
    %237 = vector.extract_strided_slice %230 {offsets = [0, 128], sizes = [8, 128], strides = [1, 1]} : vector<8x512xf32> to vector<8x128xf32>
    %238 = arith.negf %237 : vector<8x128xf32>
    %239 = math.exp %238 : vector<8x128xf32>
    %cst_92 = arith.constant 1.000000e+00 : f32
    %240 = vector.broadcast %cst_92 : f32 to vector<8x128xf32>
    %241 = arith.addf %240, %239 : vector<8x128xf32>
    %242 = arith.divf %240, %241 : vector<8x128xf32>
    %243 = vector.extract_strided_slice %230 {offsets = [0, 256], sizes = [8, 128], strides = [1, 1]} : vector<8x512xf32> to vector<8x128xf32>
    %244 = vector.extract_strided_slice %230 {offsets = [0, 384], sizes = [8, 128], strides = [1, 1]} : vector<8x512xf32> to vector<8x128xf32>
    %245 = arith.mulf %236, %244 : vector<8x128xf32>
    %246 = arith.addf %243, %245 : vector<8x128xf32>
    %247 = math.tanh %246 : vector<8x128xf32>
    %cst_93 = arith.constant 1.000000e+00 : f32
    %248 = vector.broadcast %cst_93 : f32 to vector<8x128xf32>
    %249 = arith.subf %248, %242 : vector<8x128xf32>
    %250 = arith.mulf %249, %247 : vector<8x128xf32>
    %251 = arith.mulf %242, %221 : vector<8x128xf32>
    %252 = arith.addf %250, %251 : vector<8x128xf32>
    %c0_94 = arith.constant 0 : index
    %c8 = arith.constant 8 : index
    %c0_95 = arith.constant 0 : index
    %253 = vector.load %arg2[%c0_94, %c8, %c0_95] : memref<8x10x128xf32, #tpu.memory_space<vmem>>, vector<8x1x128xf32>
    %254 = vector.shape_cast %253 : vector<8x1x128xf32> to vector<8x128xf32>
    %c0_96 = arith.constant 0 : index
    %c0_97 = arith.constant 0 : index
    %255 = vector.load %arg4[%c0_96, %c0_97] : memref<128x512xf32, #tpu.memory_space<vmem>>, vector<128x512xf32>
    %cst_98 = arith.constant dense<0.000000e+00> : vector<8x512xf32>
    %256 = tpu.matmul %254, %255, %cst_98 {dimension_numbers = #tpu.dot_dimension_numbers<[1], [0], [0], [1], [0, 0, 1, 1], [], []>} : vector<8x128xf32>, vector<128x512xf32>, vector<8x512xf32> -> vector<8x512xf32>
    %c0_99 = arith.constant 0 : index
    %c0_100 = arith.constant 0 : index
    %257 = vector.load %arg5[%c0_99, %c0_100] : memref<128x512xf32, #tpu.memory_space<vmem>>, vector<128x512xf32>
    %cst_101 = arith.constant dense<0.000000e+00> : vector<8x512xf32>
    %258 = tpu.matmul %252, %257, %cst_101 {dimension_numbers = #tpu.dot_dimension_numbers<[1], [0], [0], [1], [0, 0, 1, 1], [], []>} : vector<8x128xf32>, vector<128x512xf32>, vector<8x512xf32> -> vector<8x512xf32>
    %259 = arith.addf %256, %258 : vector<8x512xf32>
    %260 = vector.broadcast %0 : vector<1x512xf32> to vector<8x512xf32>
    %261 = arith.addf %259, %260 : vector<8x512xf32>
    %262 = vector.extract_strided_slice %261 {offsets = [0, 0], sizes = [8, 128], strides = [1, 1]} : vector<8x512xf32> to vector<8x128xf32>
    %263 = arith.negf %262 : vector<8x128xf32>
    %264 = math.exp %263 : vector<8x128xf32>
    %cst_102 = arith.constant 1.000000e+00 : f32
    %265 = vector.broadcast %cst_102 : f32 to vector<8x128xf32>
    %266 = arith.addf %265, %264 : vector<8x128xf32>
    %267 = arith.divf %265, %266 : vector<8x128xf32>
    %268 = vector.extract_strided_slice %261 {offsets = [0, 128], sizes = [8, 128], strides = [1, 1]} : vector<8x512xf32> to vector<8x128xf32>
    %269 = arith.negf %268 : vector<8x128xf32>
    %270 = math.exp %269 : vector<8x128xf32>
    %cst_103 = arith.constant 1.000000e+00 : f32
    %271 = vector.broadcast %cst_103 : f32 to vector<8x128xf32>
    %272 = arith.addf %271, %270 : vector<8x128xf32>
    %273 = arith.divf %271, %272 : vector<8x128xf32>
    %274 = vector.extract_strided_slice %261 {offsets = [0, 256], sizes = [8, 128], strides = [1, 1]} : vector<8x512xf32> to vector<8x128xf32>
    %275 = vector.extract_strided_slice %261 {offsets = [0, 384], sizes = [8, 128], strides = [1, 1]} : vector<8x512xf32> to vector<8x128xf32>
    %276 = arith.mulf %267, %275 : vector<8x128xf32>
    %277 = arith.addf %274, %276 : vector<8x128xf32>
    %278 = math.tanh %277 : vector<8x128xf32>
    %cst_104 = arith.constant 1.000000e+00 : f32
    %279 = vector.broadcast %cst_104 : f32 to vector<8x128xf32>
    %280 = arith.subf %279, %273 : vector<8x128xf32>
    %281 = arith.mulf %280, %278 : vector<8x128xf32>
    %282 = arith.mulf %273, %252 : vector<8x128xf32>
    %283 = arith.addf %281, %282 : vector<8x128xf32>
    %c0_105 = arith.constant 0 : index
    %c9 = arith.constant 9 : index
    %c0_106 = arith.constant 0 : index
    %284 = vector.load %arg2[%c0_105, %c9, %c0_106] : memref<8x10x128xf32, #tpu.memory_space<vmem>>, vector<8x1x128xf32>
    %285 = vector.shape_cast %284 : vector<8x1x128xf32> to vector<8x128xf32>
    %c0_107 = arith.constant 0 : index
    %c0_108 = arith.constant 0 : index
    %286 = vector.load %arg4[%c0_107, %c0_108] : memref<128x512xf32, #tpu.memory_space<vmem>>, vector<128x512xf32>
    %cst_109 = arith.constant dense<0.000000e+00> : vector<8x512xf32>
    %287 = tpu.matmul %285, %286, %cst_109 {dimension_numbers = #tpu.dot_dimension_numbers<[1], [0], [0], [1], [0, 0, 1, 1], [], []>} : vector<8x128xf32>, vector<128x512xf32>, vector<8x512xf32> -> vector<8x512xf32>
    %c0_110 = arith.constant 0 : index
    %c0_111 = arith.constant 0 : index
    %288 = vector.load %arg5[%c0_110, %c0_111] : memref<128x512xf32, #tpu.memory_space<vmem>>, vector<128x512xf32>
    %cst_112 = arith.constant dense<0.000000e+00> : vector<8x512xf32>
    %289 = tpu.matmul %283, %288, %cst_112 {dimension_numbers = #tpu.dot_dimension_numbers<[1], [0], [0], [1], [0, 0, 1, 1], [], []>} : vector<8x128xf32>, vector<128x512xf32>, vector<8x512xf32> -> vector<8x512xf32>
    %290 = arith.addf %287, %289 : vector<8x512xf32>
    %291 = vector.broadcast %0 : vector<1x512xf32> to vector<8x512xf32>
    %292 = arith.addf %290, %291 : vector<8x512xf32>
    %293 = vector.extract_strided_slice %292 {offsets = [0, 0], sizes = [8, 128], strides = [1, 1]} : vector<8x512xf32> to vector<8x128xf32>
    %294 = arith.negf %293 : vector<8x128xf32>
    %295 = math.exp %294 : vector<8x128xf32>
    %cst_113 = arith.constant 1.000000e+00 : f32
    %296 = vector.broadcast %cst_113 : f32 to vector<8x128xf32>
    %297 = arith.addf %296, %295 : vector<8x128xf32>
    %298 = arith.divf %296, %297 : vector<8x128xf32>
    %299 = vector.extract_strided_slice %292 {offsets = [0, 128], sizes = [8, 128], strides = [1, 1]} : vector<8x512xf32> to vector<8x128xf32>
    %300 = arith.negf %299 : vector<8x128xf32>
    %301 = math.exp %300 : vector<8x128xf32>
    %cst_114 = arith.constant 1.000000e+00 : f32
    %302 = vector.broadcast %cst_114 : f32 to vector<8x128xf32>
    %303 = arith.addf %302, %301 : vector<8x128xf32>
    %304 = arith.divf %302, %303 : vector<8x128xf32>
    %305 = vector.extract_strided_slice %292 {offsets = [0, 256], sizes = [8, 128], strides = [1, 1]} : vector<8x512xf32> to vector<8x128xf32>
    %306 = vector.extract_strided_slice %292 {offsets = [0, 384], sizes = [8, 128], strides = [1, 1]} : vector<8x512xf32> to vector<8x128xf32>
    %307 = arith.mulf %298, %306 : vector<8x128xf32>
    %308 = arith.addf %305, %307 : vector<8x128xf32>
    %309 = math.tanh %308 : vector<8x128xf32>
    %cst_115 = arith.constant 1.000000e+00 : f32
    %310 = vector.broadcast %cst_115 : f32 to vector<8x128xf32>
    %311 = arith.subf %310, %304 : vector<8x128xf32>
    %312 = arith.mulf %311, %309 : vector<8x128xf32>
    %313 = arith.mulf %304, %283 : vector<8x128xf32>
    %314 = arith.addf %312, %313 : vector<8x128xf32>
    %cst_116 = arith.constant 0.000000e+00 : f32
    %315 = vector.broadcast %cst_116 : f32 to vector<8x128xf32>
    %c0_117 = arith.constant 0 : index
    %c0_118 = arith.constant 0 : index
    %c0_119 = arith.constant 0 : index
    %316 = vector.load %arg13[%c0_117, %c0_118, %c0_119] : memref<8x6x128xf32, #tpu.memory_space<vmem>>, vector<8x1x128xf32>
    %317 = vector.shape_cast %316 : vector<8x1x128xf32> to vector<8x128xf32>
    %318 = vector.shape_cast %315 : vector<8x128xf32> to vector<8x1x128xf32>
    tpu.vector_store %arg13[%c0_117, %c0_118, %c0_119], %318 {strides = array<i32>} : memref<8x6x128xf32, #tpu.memory_space<vmem>>, vector<8x1x128xf32>,
    %cst_120 = arith.constant 0.000000e+00 : f32
    %319 = vector.broadcast %cst_120 : f32 to vector<8x128xf32>
    %c0_121 = arith.constant 0 : index
    %c0_122 = arith.constant 0 : index
    %320 = vector.load %arg14[%c0_121, %c0_122] : memref<8x128xf32, #tpu.memory_space<vmem>>, vector<8x128xf32>
    tpu.vector_store %arg14[%c0_121, %c0_122], %319 {strides = array<i32>} : memref<8x128xf32, #tpu.memory_space<vmem>>, vector<8x128xf32>,
    %c0_123 = arith.constant 0 : index
    %c0_124 = arith.constant 0 : index
    %c0_125 = arith.constant 0 : index
    %321 = vector.load %arg3[%c0_123, %c0_124, %c0_125] : memref<8x5x128xf32, #tpu.memory_space<vmem>>, vector<8x1x128xf32>
    %322 = vector.shape_cast %321 : vector<8x1x128xf32> to vector<8x128xf32>
    %c0_126 = arith.constant 0 : index
    %c0_127 = arith.constant 0 : index
    %323 = vector.load %arg7[%c0_126, %c0_127] : memref<128x512xf32, #tpu.memory_space<vmem>>, vector<128x512xf32>
    %cst_128 = arith.constant dense<0.000000e+00> : vector<8x512xf32>
    %324 = tpu.matmul %322, %323, %cst_128 {dimension_numbers = #tpu.dot_dimension_numbers<[1], [0], [0], [1], [0, 0, 1, 1], [], []>} : vector<8x128xf32>, vector<128x512xf32>, vector<8x512xf32> -> vector<8x512xf32>
    %c0_129 = arith.constant 0 : index
    %c0_130 = arith.constant 0 : index
    %325 = vector.load %arg8[%c0_129, %c0_130] : memref<128x512xf32, #tpu.memory_space<vmem>>, vector<128x512xf32>
    %cst_131 = arith.constant dense<0.000000e+00> : vector<8x512xf32>
    %326 = tpu.matmul %314, %325, %cst_131 {dimension_numbers = #tpu.dot_dimension_numbers<[1], [0], [0], [1], [0, 0, 1, 1], [], []>} : vector<8x128xf32>, vector<128x512xf32>, vector<8x512xf32> -> vector<8x512xf32>
    %327 = arith.addf %324, %326 : vector<8x512xf32>
    %328 = vector.broadcast %1 : vector<1x512xf32> to vector<8x512xf32>
    %329 = arith.addf %327, %328 : vector<8x512xf32>
    %330 = vector.extract_strided_slice %329 {offsets = [0, 0], sizes = [8, 128], strides = [1, 1]} : vector<8x512xf32> to vector<8x128xf32>
    %331 = arith.negf %330 : vector<8x128xf32>
    %332 = math.exp %331 : vector<8x128xf32>
    %cst_132 = arith.constant 1.000000e+00 : f32
    %333 = vector.broadcast %cst_132 : f32 to vector<8x128xf32>
    %334 = arith.addf %333, %332 : vector<8x128xf32>
    %335 = arith.divf %333, %334 : vector<8x128xf32>
    %336 = vector.extract_strided_slice %329 {offsets = [0, 128], sizes = [8, 128], strides = [1, 1]} : vector<8x512xf32> to vector<8x128xf32>
    %337 = arith.negf %336 : vector<8x128xf32>
    %338 = math.exp %337 : vector<8x128xf32>
    %cst_133 = arith.constant 1.000000e+00 : f32
    %339 = vector.broadcast %cst_133 : f32 to vector<8x128xf32>
    %340 = arith.addf %339, %338 : vector<8x128xf32>
    %341 = arith.divf %339, %340 : vector<8x128xf32>
    %342 = vector.extract_strided_slice %329 {offsets = [0, 256], sizes = [8, 128], strides = [1, 1]} : vector<8x512xf32> to vector<8x128xf32>
    %343 = vector.extract_strided_slice %329 {offsets = [0, 384], sizes = [8, 128], strides = [1, 1]} : vector<8x512xf32> to vector<8x128xf32>
    %344 = arith.mulf %335, %343 : vector<8x128xf32>
    %345 = arith.addf %342, %344 : vector<8x128xf32>
    %346 = math.tanh %345 : vector<8x128xf32>
    %cst_134 = arith.constant 1.000000e+00 : f32
    %347 = vector.broadcast %cst_134 : f32 to vector<8x128xf32>
    %348 = arith.subf %347, %341 : vector<8x128xf32>
    %349 = arith.mulf %348, %346 : vector<8x128xf32>
    %350 = arith.mulf %341, %314 : vector<8x128xf32>
    %351 = arith.addf %349, %350 : vector<8x128xf32>
    %c0_135 = arith.constant 0 : index
    %c0_136 = arith.constant 0 : index
    %352 = vector.load %arg10[%c0_135, %c0_136] : memref<128x128xf32, #tpu.memory_space<vmem>>, vector<128x128xf32>
    %cst_137 = arith.constant dense<0.000000e+00> : vector<8x128xf32>
    %353 = tpu.matmul %351, %352, %cst_137 {dimension_numbers = #tpu.dot_dimension_numbers<[1], [0], [0], [1], [0, 0, 1, 1], [], []>} : vector<8x128xf32>, vector<128x128xf32>, vector<8x128xf32> -> vector<8x128xf32>
    %354 = vector.broadcast %2 : vector<1x128xf32> to vector<8x128xf32>
    %355 = arith.addf %353, %354 : vector<8x128xf32>
    %c0_138 = arith.constant 0 : index
    %c1_139 = arith.constant 1 : index
    %c0_140 = arith.constant 0 : index
    %356 = vector.load %arg13[%c0_138, %c1_139, %c0_140] : memref<8x6x128xf32, #tpu.memory_space<vmem>>, vector<8x1x128xf32>
    %357 = vector.shape_cast %356 : vector<8x1x128xf32> to vector<8x128xf32>
    %358 = vector.shape_cast %355 : vector<8x128xf32> to vector<8x1x128xf32>
    tpu.vector_store %arg13[%c0_138, %c1_139, %c0_140], %358 {strides = array<i32>} : memref<8x6x128xf32, #tpu.memory_space<vmem>>, vector<8x1x128xf32>,
    %c0_141 = arith.constant 0 : index
    %359 = memref.load %arg1[%c0_141] : memref<5xi32, #tpu.memory_space<smem>>
    %c0_i32 = arith.constant 0 : i32
    %360 = arith.cmpi eq, %359, %c0_i32 : i32
    %361 = arith.extui %360 : i1 to i32
    %c0_i32_142 = arith.constant 0 : i32
    %362 = arith.cmpi ne, %361, %c0_i32_142 : i32
    scf.if %362 {
      %cst_240 = arith.constant dense<0xFF800000> : vector<8xf32>
      %543 = vector.multi_reduction <maximumf>, %355, %cst_240 [1] : vector<8x128xf32> to vector<8xf32>
      %544 = vector.shape_cast %543 : vector<8xf32> to vector<8x1xf32>
      %545 = vector.broadcast %544 : vector<8x1xf32> to vector<8x128xf32>
      %546 = arith.cmpf oeq, %355, %545 : vector<8x128xf32>
      %c128_i32 = arith.constant 128 : i32
      %547 = vector.broadcast %c128_i32 : i32 to vector<8x128xi32>
      %548 = arith.select %546, %3, %547 : vector<8x128xi1>, vector<8x128xi32>
      %cst_241 = arith.constant dense<2147483647> : vector<8xi32>
      %549 = vector.multi_reduction <minsi>, %548, %cst_241 [1] : vector<8x128xi32> to vector<8xi32>
      %550 = vector.shape_cast %549 : vector<8xi32> to vector<8x1xi32>
      %551 = vector.broadcast %550 : vector<8x1xi32> to vector<8x128xi32>
      %552 = arith.cmpi eq, %3, %551 : vector<8x128xi32>
      %553 = arith.extui %552 : vector<8x128xi1> to vector<8x128xi32>
      %554 = arith.sitofp %553 : vector<8x128xi32> to vector<8x128xf32>
      %c0_242 = arith.constant 0 : index
      %c0_243 = arith.constant 0 : index
      %555 = vector.load %arg12[%c0_242, %c0_243] : memref<128x128xf32, #tpu.memory_space<vmem>>, vector<128x128xf32>
      %cst_244 = arith.constant dense<0.000000e+00> : vector<8x128xf32>
      %556 = tpu.matmul %554, %555, %cst_244 {dimension_numbers = #tpu.dot_dimension_numbers<[1], [0], [0], [1], [0, 0, 1, 1], [], []>} : vector<8x128xf32>, vector<128x128xf32>, vector<8x128xf32> -> vector<8x128xf32>
      %c0_245 = arith.constant 0 : index
      %c0_246 = arith.constant 0 : index
      %557 = vector.load %arg14[%c0_245, %c0_246] : memref<8x128xf32, #tpu.memory_space<vmem>>, vector<8x128xf32>
      tpu.vector_store %arg14[%c0_245, %c0_246], %556 {strides = array<i32>} : memref<8x128xf32, #tpu.memory_space<vmem>>, vector<8x128xf32>,
    } else {
    }
    %c0_143 = arith.constant 0 : index
    %363 = memref.load %arg1[%c0_143] : memref<5xi32, #tpu.memory_space<smem>>
    %c0_i32_144 = arith.constant 0 : i32
    %364 = arith.cmpi ne, %363, %c0_i32_144 : i32
    %c0_145 = arith.constant 0 : index
    %c1_146 = arith.constant 1 : index
    %c0_147 = arith.constant 0 : index
    %365 = vector.load %arg3[%c0_145, %c1_146, %c0_147] : memref<8x5x128xf32, #tpu.memory_space<vmem>>, vector<8x1x128xf32>
    %366 = vector.shape_cast %365 : vector<8x1x128xf32> to vector<8x128xf32>
    %c0_148 = arith.constant 0 : index
    %c0_149 = arith.constant 0 : index
    %367 = vector.load %arg14[%c0_148, %c0_149] : memref<8x128xf32, #tpu.memory_space<vmem>>, vector<8x128xf32>
    %368 = arith.select %364, %366, %367 : vector<8x128xf32>
    %c0_150 = arith.constant 0 : index
    %c0_151 = arith.constant 0 : index
    %369 = vector.load %arg7[%c0_150, %c0_151] : memref<128x512xf32, #tpu.memory_space<vmem>>, vector<128x512xf32>
    %cst_152 = arith.constant dense<0.000000e+00> : vector<8x512xf32>
    %370 = tpu.matmul %368, %369, %cst_152 {dimension_numbers = #tpu.dot_dimension_numbers<[1], [0], [0], [1], [0, 0, 1, 1], [], []>} : vector<8x128xf32>, vector<128x512xf32>, vector<8x512xf32> -> vector<8x512xf32>
    %c0_153 = arith.constant 0 : index
    %c0_154 = arith.constant 0 : index
    %371 = vector.load %arg8[%c0_153, %c0_154] : memref<128x512xf32, #tpu.memory_space<vmem>>, vector<128x512xf32>
    %cst_155 = arith.constant dense<0.000000e+00> : vector<8x512xf32>
    %372 = tpu.matmul %351, %371, %cst_155 {dimension_numbers = #tpu.dot_dimension_numbers<[1], [0], [0], [1], [0, 0, 1, 1], [], []>} : vector<8x128xf32>, vector<128x512xf32>, vector<8x512xf32> -> vector<8x512xf32>
    %373 = arith.addf %370, %372 : vector<8x512xf32>
    %374 = vector.broadcast %1 : vector<1x512xf32> to vector<8x512xf32>
    %375 = arith.addf %373, %374 : vector<8x512xf32>
    %376 = vector.extract_strided_slice %375 {offsets = [0, 0], sizes = [8, 128], strides = [1, 1]} : vector<8x512xf32> to vector<8x128xf32>
    %377 = arith.negf %376 : vector<8x128xf32>
    %378 = math.exp %377 : vector<8x128xf32>
    %cst_156 = arith.constant 1.000000e+00 : f32
    %379 = vector.broadcast %cst_156 : f32 to vector<8x128xf32>
    %380 = arith.addf %379, %378 : vector<8x128xf32>
    %381 = arith.divf %379, %380 : vector<8x128xf32>
    %382 = vector.extract_strided_slice %375 {offsets = [0, 128], sizes = [8, 128], strides = [1, 1]} : vector<8x512xf32> to vector<8x128xf32>
    %383 = arith.negf %382 : vector<8x128xf32>
    %384 = math.exp %383 : vector<8x128xf32>
    %cst_157 = arith.constant 1.000000e+00 : f32
    %385 = vector.broadcast %cst_157 : f32 to vector<8x128xf32>
    %386 = arith.addf %385, %384 : vector<8x128xf32>
    %387 = arith.divf %385, %386 : vector<8x128xf32>
    %388 = vector.extract_strided_slice %375 {offsets = [0, 256], sizes = [8, 128], strides = [1, 1]} : vector<8x512xf32> to vector<8x128xf32>
    %389 = vector.extract_strided_slice %375 {offsets = [0, 384], sizes = [8, 128], strides = [1, 1]} : vector<8x512xf32> to vector<8x128xf32>
    %390 = arith.mulf %381, %389 : vector<8x128xf32>
    %391 = arith.addf %388, %390 : vector<8x128xf32>
    %392 = math.tanh %391 : vector<8x128xf32>
    %cst_158 = arith.constant 1.000000e+00 : f32
    %393 = vector.broadcast %cst_158 : f32 to vector<8x128xf32>
    %394 = arith.subf %393, %387 : vector<8x128xf32>
    %395 = arith.mulf %394, %392 : vector<8x128xf32>
    %396 = arith.mulf %387, %351 : vector<8x128xf32>
    %397 = arith.addf %395, %396 : vector<8x128xf32>
    %c0_159 = arith.constant 0 : index
    %c0_160 = arith.constant 0 : index
    %398 = vector.load %arg10[%c0_159, %c0_160] : memref<128x128xf32, #tpu.memory_space<vmem>>, vector<128x128xf32>
    %cst_161 = arith.constant dense<0.000000e+00> : vector<8x128xf32>
    %399 = tpu.matmul %397, %398, %cst_161 {dimension_numbers = #tpu.dot_dimension_numbers<[1], [0], [0], [1], [0, 0, 1, 1], [], []>} : vector<8x128xf32>, vector<128x128xf32>, vector<8x128xf32> -> vector<8x128xf32>
    %400 = vector.broadcast %2 : vector<1x128xf32> to vector<8x128xf32>
    %401 = arith.addf %399, %400 : vector<8x128xf32>
    %c0_162 = arith.constant 0 : index
    %c2_163 = arith.constant 2 : index
    %c0_164 = arith.constant 0 : index
    %402 = vector.load %arg13[%c0_162, %c2_163, %c0_164] : memref<8x6x128xf32, #tpu.memory_space<vmem>>, vector<8x1x128xf32>
    %403 = vector.shape_cast %402 : vector<8x1x128xf32> to vector<8x128xf32>
    %404 = vector.shape_cast %401 : vector<8x128xf32> to vector<8x1x128xf32>
    tpu.vector_store %arg13[%c0_162, %c2_163, %c0_164], %404 {strides = array<i32>} : memref<8x6x128xf32, #tpu.memory_space<vmem>>, vector<8x1x128xf32>,
    %c1_165 = arith.constant 1 : index
    %405 = memref.load %arg1[%c1_165] : memref<5xi32, #tpu.memory_space<smem>>
    %c0_i32_166 = arith.constant 0 : i32
    %406 = arith.cmpi eq, %405, %c0_i32_166 : i32
    %407 = arith.extui %406 : i1 to i32
    %c0_i32_167 = arith.constant 0 : i32
    %408 = arith.cmpi ne, %407, %c0_i32_167 : i32
    scf.if %408 {
      %cst_240 = arith.constant dense<0xFF800000> : vector<8xf32>
      %543 = vector.multi_reduction <maximumf>, %401, %cst_240 [1] : vector<8x128xf32> to vector<8xf32>
      %544 = vector.shape_cast %543 : vector<8xf32> to vector<8x1xf32>
      %545 = vector.broadcast %544 : vector<8x1xf32> to vector<8x128xf32>
      %546 = arith.cmpf oeq, %401, %545 : vector<8x128xf32>
      %c128_i32 = arith.constant 128 : i32
      %547 = vector.broadcast %c128_i32 : i32 to vector<8x128xi32>
      %548 = arith.select %546, %3, %547 : vector<8x128xi1>, vector<8x128xi32>
      %cst_241 = arith.constant dense<2147483647> : vector<8xi32>
      %549 = vector.multi_reduction <minsi>, %548, %cst_241 [1] : vector<8x128xi32> to vector<8xi32>
      %550 = vector.shape_cast %549 : vector<8xi32> to vector<8x1xi32>
      %551 = vector.broadcast %550 : vector<8x1xi32> to vector<8x128xi32>
      %552 = arith.cmpi eq, %3, %551 : vector<8x128xi32>
      %553 = arith.extui %552 : vector<8x128xi1> to vector<8x128xi32>
      %554 = arith.sitofp %553 : vector<8x128xi32> to vector<8x128xf32>
      %c0_242 = arith.constant 0 : index
      %c0_243 = arith.constant 0 : index
      %555 = vector.load %arg12[%c0_242, %c0_243] : memref<128x128xf32, #tpu.memory_space<vmem>>, vector<128x128xf32>
      %cst_244 = arith.constant dense<0.000000e+00> : vector<8x128xf32>
      %556 = tpu.matmul %554, %555, %cst_244 {dimension_numbers = #tpu.dot_dimension_numbers<[1], [0], [0], [1], [0, 0, 1, 1], [], []>} : vector<8x128xf32>, vector<128x128xf32>, vector<8x128xf32> -> vector<8x128xf32>
      %c0_245 = arith.constant 0 : index
      %c0_246 = arith.constant 0 : index
      %557 = vector.load %arg14[%c0_245, %c0_246] : memref<8x128xf32, #tpu.memory_space<vmem>>, vector<8x128xf32>
      tpu.vector_store %arg14[%c0_245, %c0_246], %556 {strides = array<i32>} : memref<8x128xf32, #tpu.memory_space<vmem>>, vector<8x128xf32>,
    } else {
    }
    %c1_168 = arith.constant 1 : index
    %409 = memref.load %arg1[%c1_168] : memref<5xi32, #tpu.memory_space<smem>>
    %c0_i32_169 = arith.constant 0 : i32
    %410 = arith.cmpi ne, %409, %c0_i32_169 : i32
    %c0_170 = arith.constant 0 : index
    %c2_171 = arith.constant 2 : index
    %c0_172 = arith.constant 0 : index
    %411 = vector.load %arg3[%c0_170, %c2_171, %c0_172] : memref<8x5x128xf32, #tpu.memory_space<vmem>>, vector<8x1x128xf32>
    %412 = vector.shape_cast %411 : vector<8x1x128xf32> to vector<8x128xf32>
    %c0_173 = arith.constant 0 : index
    %c0_174 = arith.constant 0 : index
    %413 = vector.load %arg14[%c0_173, %c0_174] : memref<8x128xf32, #tpu.memory_space<vmem>>, vector<8x128xf32>
    %414 = arith.select %410, %412, %413 : vector<8x128xf32>
    %c0_175 = arith.constant 0 : index
    %c0_176 = arith.constant 0 : index
    %415 = vector.load %arg7[%c0_175, %c0_176] : memref<128x512xf32, #tpu.memory_space<vmem>>, vector<128x512xf32>
    %cst_177 = arith.constant dense<0.000000e+00> : vector<8x512xf32>
    %416 = tpu.matmul %414, %415, %cst_177 {dimension_numbers = #tpu.dot_dimension_numbers<[1], [0], [0], [1], [0, 0, 1, 1], [], []>} : vector<8x128xf32>, vector<128x512xf32>, vector<8x512xf32> -> vector<8x512xf32>
    %c0_178 = arith.constant 0 : index
    %c0_179 = arith.constant 0 : index
    %417 = vector.load %arg8[%c0_178, %c0_179] : memref<128x512xf32, #tpu.memory_space<vmem>>, vector<128x512xf32>
    %cst_180 = arith.constant dense<0.000000e+00> : vector<8x512xf32>
    %418 = tpu.matmul %397, %417, %cst_180 {dimension_numbers = #tpu.dot_dimension_numbers<[1], [0], [0], [1], [0, 0, 1, 1], [], []>} : vector<8x128xf32>, vector<128x512xf32>, vector<8x512xf32> -> vector<8x512xf32>
    %419 = arith.addf %416, %418 : vector<8x512xf32>
    %420 = vector.broadcast %1 : vector<1x512xf32> to vector<8x512xf32>
    %421 = arith.addf %419, %420 : vector<8x512xf32>
    %422 = vector.extract_strided_slice %421 {offsets = [0, 0], sizes = [8, 128], strides = [1, 1]} : vector<8x512xf32> to vector<8x128xf32>
    %423 = arith.negf %422 : vector<8x128xf32>
    %424 = math.exp %423 : vector<8x128xf32>
    %cst_181 = arith.constant 1.000000e+00 : f32
    %425 = vector.broadcast %cst_181 : f32 to vector<8x128xf32>
    %426 = arith.addf %425, %424 : vector<8x128xf32>
    %427 = arith.divf %425, %426 : vector<8x128xf32>
    %428 = vector.extract_strided_slice %421 {offsets = [0, 128], sizes = [8, 128], strides = [1, 1]} : vector<8x512xf32> to vector<8x128xf32>
    %429 = arith.negf %428 : vector<8x128xf32>
    %430 = math.exp %429 : vector<8x128xf32>
    %cst_182 = arith.constant 1.000000e+00 : f32
    %431 = vector.broadcast %cst_182 : f32 to vector<8x128xf32>
    %432 = arith.addf %431, %430 : vector<8x128xf32>
    %433 = arith.divf %431, %432 : vector<8x128xf32>
    %434 = vector.extract_strided_slice %421 {offsets = [0, 256], sizes = [8, 128], strides = [1, 1]} : vector<8x512xf32> to vector<8x128xf32>
    %435 = vector.extract_strided_slice %421 {offsets = [0, 384], sizes = [8, 128], strides = [1, 1]} : vector<8x512xf32> to vector<8x128xf32>
    %436 = arith.mulf %427, %435 : vector<8x128xf32>
    %437 = arith.addf %434, %436 : vector<8x128xf32>
    %438 = math.tanh %437 : vector<8x128xf32>
    %cst_183 = arith.constant 1.000000e+00 : f32
    %439 = vector.broadcast %cst_183 : f32 to vector<8x128xf32>
    %440 = arith.subf %439, %433 : vector<8x128xf32>
    %441 = arith.mulf %440, %438 : vector<8x128xf32>
    %442 = arith.mulf %433, %397 : vector<8x128xf32>
    %443 = arith.addf %441, %442 : vector<8x128xf32>
    %c0_184 = arith.constant 0 : index
    %c0_185 = arith.constant 0 : index
    %444 = vector.load %arg10[%c0_184, %c0_185] : memref<128x128xf32, #tpu.memory_space<vmem>>, vector<128x128xf32>
    %cst_186 = arith.constant dense<0.000000e+00> : vector<8x128xf32>
    %445 = tpu.matmul %443, %444, %cst_186 {dimension_numbers = #tpu.dot_dimension_numbers<[1], [0], [0], [1], [0, 0, 1, 1], [], []>} : vector<8x128xf32>, vector<128x128xf32>, vector<8x128xf32> -> vector<8x128xf32>
    %446 = vector.broadcast %2 : vector<1x128xf32> to vector<8x128xf32>
    %447 = arith.addf %445, %446 : vector<8x128xf32>
    %c0_187 = arith.constant 0 : index
    %c3_188 = arith.constant 3 : index
    %c0_189 = arith.constant 0 : index
    %448 = vector.load %arg13[%c0_187, %c3_188, %c0_189] : memref<8x6x128xf32, #tpu.memory_space<vmem>>, vector<8x1x128xf32>
    %449 = vector.shape_cast %448 : vector<8x1x128xf32> to vector<8x128xf32>
    %450 = vector.shape_cast %447 : vector<8x128xf32> to vector<8x1x128xf32>
    tpu.vector_store %arg13[%c0_187, %c3_188, %c0_189], %450 {strides = array<i32>} : memref<8x6x128xf32, #tpu.memory_space<vmem>>, vector<8x1x128xf32>,
    %c2_190 = arith.constant 2 : index
    %451 = memref.load %arg1[%c2_190] : memref<5xi32, #tpu.memory_space<smem>>
    %c0_i32_191 = arith.constant 0 : i32
    %452 = arith.cmpi eq, %451, %c0_i32_191 : i32
    %453 = arith.extui %452 : i1 to i32
    %c0_i32_192 = arith.constant 0 : i32
    %454 = arith.cmpi ne, %453, %c0_i32_192 : i32
    scf.if %454 {
      %cst_240 = arith.constant dense<0xFF800000> : vector<8xf32>
      %543 = vector.multi_reduction <maximumf>, %447, %cst_240 [1] : vector<8x128xf32> to vector<8xf32>
      %544 = vector.shape_cast %543 : vector<8xf32> to vector<8x1xf32>
      %545 = vector.broadcast %544 : vector<8x1xf32> to vector<8x128xf32>
      %546 = arith.cmpf oeq, %447, %545 : vector<8x128xf32>
      %c128_i32 = arith.constant 128 : i32
      %547 = vector.broadcast %c128_i32 : i32 to vector<8x128xi32>
      %548 = arith.select %546, %3, %547 : vector<8x128xi1>, vector<8x128xi32>
      %cst_241 = arith.constant dense<2147483647> : vector<8xi32>
      %549 = vector.multi_reduction <minsi>, %548, %cst_241 [1] : vector<8x128xi32> to vector<8xi32>
      %550 = vector.shape_cast %549 : vector<8xi32> to vector<8x1xi32>
      %551 = vector.broadcast %550 : vector<8x1xi32> to vector<8x128xi32>
      %552 = arith.cmpi eq, %3, %551 : vector<8x128xi32>
      %553 = arith.extui %552 : vector<8x128xi1> to vector<8x128xi32>
      %554 = arith.sitofp %553 : vector<8x128xi32> to vector<8x128xf32>
      %c0_242 = arith.constant 0 : index
      %c0_243 = arith.constant 0 : index
      %555 = vector.load %arg12[%c0_242, %c0_243] : memref<128x128xf32, #tpu.memory_space<vmem>>, vector<128x128xf32>
      %cst_244 = arith.constant dense<0.000000e+00> : vector<8x128xf32>
      %556 = tpu.matmul %554, %555, %cst_244 {dimension_numbers = #tpu.dot_dimension_numbers<[1], [0], [0], [1], [0, 0, 1, 1], [], []>} : vector<8x128xf32>, vector<128x128xf32>, vector<8x128xf32> -> vector<8x128xf32>
      %c0_245 = arith.constant 0 : index
      %c0_246 = arith.constant 0 : index
      %557 = vector.load %arg14[%c0_245, %c0_246] : memref<8x128xf32, #tpu.memory_space<vmem>>, vector<8x128xf32>
      tpu.vector_store %arg14[%c0_245, %c0_246], %556 {strides = array<i32>} : memref<8x128xf32, #tpu.memory_space<vmem>>, vector<8x128xf32>,
    } else {
    }
    %c2_193 = arith.constant 2 : index
    %455 = memref.load %arg1[%c2_193] : memref<5xi32, #tpu.memory_space<smem>>
    %c0_i32_194 = arith.constant 0 : i32
    %456 = arith.cmpi ne, %455, %c0_i32_194 : i32
    %c0_195 = arith.constant 0 : index
    %c3_196 = arith.constant 3 : index
    %c0_197 = arith.constant 0 : index
    %457 = vector.load %arg3[%c0_195, %c3_196, %c0_197] : memref<8x5x128xf32, #tpu.memory_space<vmem>>, vector<8x1x128xf32>
    %458 = vector.shape_cast %457 : vector<8x1x128xf32> to vector<8x128xf32>
    %c0_198 = arith.constant 0 : index
    %c0_199 = arith.constant 0 : index
    %459 = vector.load %arg14[%c0_198, %c0_199] : memref<8x128xf32, #tpu.memory_space<vmem>>, vector<8x128xf32>
    %460 = arith.select %456, %458, %459 : vector<8x128xf32>
    %c0_200 = arith.constant 0 : index
    %c0_201 = arith.constant 0 : index
    %461 = vector.load %arg7[%c0_200, %c0_201] : memref<128x512xf32, #tpu.memory_space<vmem>>, vector<128x512xf32>
    %cst_202 = arith.constant dense<0.000000e+00> : vector<8x512xf32>
    %462 = tpu.matmul %460, %461, %cst_202 {dimension_numbers = #tpu.dot_dimension_numbers<[1], [0], [0], [1], [0, 0, 1, 1], [], []>} : vector<8x128xf32>, vector<128x512xf32>, vector<8x512xf32> -> vector<8x512xf32>
    %c0_203 = arith.constant 0 : index
    %c0_204 = arith.constant 0 : index
    %463 = vector.load %arg8[%c0_203, %c0_204] : memref<128x512xf32, #tpu.memory_space<vmem>>, vector<128x512xf32>
    %cst_205 = arith.constant dense<0.000000e+00> : vector<8x512xf32>
    %464 = tpu.matmul %443, %463, %cst_205 {dimension_numbers = #tpu.dot_dimension_numbers<[1], [0], [0], [1], [0, 0, 1, 1], [], []>} : vector<8x128xf32>, vector<128x512xf32>, vector<8x512xf32> -> vector<8x512xf32>
    %465 = arith.addf %462, %464 : vector<8x512xf32>
    %466 = vector.broadcast %1 : vector<1x512xf32> to vector<8x512xf32>
    %467 = arith.addf %465, %466 : vector<8x512xf32>
    %468 = vector.extract_strided_slice %467 {offsets = [0, 0], sizes = [8, 128], strides = [1, 1]} : vector<8x512xf32> to vector<8x128xf32>
    %469 = arith.negf %468 : vector<8x128xf32>
    %470 = math.exp %469 : vector<8x128xf32>
    %cst_206 = arith.constant 1.000000e+00 : f32
    %471 = vector.broadcast %cst_206 : f32 to vector<8x128xf32>
    %472 = arith.addf %471, %470 : vector<8x128xf32>
    %473 = arith.divf %471, %472 : vector<8x128xf32>
    %474 = vector.extract_strided_slice %467 {offsets = [0, 128], sizes = [8, 128], strides = [1, 1]} : vector<8x512xf32> to vector<8x128xf32>
    %475 = arith.negf %474 : vector<8x128xf32>
    %476 = math.exp %475 : vector<8x128xf32>
    %cst_207 = arith.constant 1.000000e+00 : f32
    %477 = vector.broadcast %cst_207 : f32 to vector<8x128xf32>
    %478 = arith.addf %477, %476 : vector<8x128xf32>
    %479 = arith.divf %477, %478 : vector<8x128xf32>
    %480 = vector.extract_strided_slice %467 {offsets = [0, 256], sizes = [8, 128], strides = [1, 1]} : vector<8x512xf32> to vector<8x128xf32>
    %481 = vector.extract_strided_slice %467 {offsets = [0, 384], sizes = [8, 128], strides = [1, 1]} : vector<8x512xf32> to vector<8x128xf32>
    %482 = arith.mulf %473, %481 : vector<8x128xf32>
    %483 = arith.addf %480, %482 : vector<8x128xf32>
    %484 = math.tanh %483 : vector<8x128xf32>
    %cst_208 = arith.constant 1.000000e+00 : f32
    %485 = vector.broadcast %cst_208 : f32 to vector<8x128xf32>
    %486 = arith.subf %485, %479 : vector<8x128xf32>
    %487 = arith.mulf %486, %484 : vector<8x128xf32>
    %488 = arith.mulf %479, %443 : vector<8x128xf32>
    %489 = arith.addf %487, %488 : vector<8x128xf32>
    %c0_209 = arith.constant 0 : index
    %c0_210 = arith.constant 0 : index
    %490 = vector.load %arg10[%c0_209, %c0_210] : memref<128x128xf32, #tpu.memory_space<vmem>>, vector<128x128xf32>
    %cst_211 = arith.constant dense<0.000000e+00> : vector<8x128xf32>
    %491 = tpu.matmul %489, %490, %cst_211 {dimension_numbers = #tpu.dot_dimension_numbers<[1], [0], [0], [1], [0, 0, 1, 1], [], []>} : vector<8x128xf32>, vector<128x128xf32>, vector<8x128xf32> -> vector<8x128xf32>
    %492 = vector.broadcast %2 : vector<1x128xf32> to vector<8x128xf32>
    %493 = arith.addf %491, %492 : vector<8x128xf32>
    %c0_212 = arith.constant 0 : index
    %c4_213 = arith.constant 4 : index
    %c0_214 = arith.constant 0 : index
    %494 = vector.load %arg13[%c0_212, %c4_213, %c0_214] : memref<8x6x128xf32, #tpu.memory_space<vmem>>, vector<8x1x128xf32>
    %495 = vector.shape_cast %494 : vector<8x1x128xf32> to vector<8x128xf32>
    %496 = vector.shape_cast %493 : vector<8x128xf32> to vector<8x1x128xf32>
    tpu.vector_store %arg13[%c0_212, %c4_213, %c0_214], %496 {strides = array<i32>} : memref<8x6x128xf32, #tpu.memory_space<vmem>>, vector<8x1x128xf32>,
    %c3_215 = arith.constant 3 : index
    %497 = memref.load %arg1[%c3_215] : memref<5xi32, #tpu.memory_space<smem>>
    %c0_i32_216 = arith.constant 0 : i32
    %498 = arith.cmpi eq, %497, %c0_i32_216 : i32
    %499 = arith.extui %498 : i1 to i32
    %c0_i32_217 = arith.constant 0 : i32
    %500 = arith.cmpi ne, %499, %c0_i32_217 : i32
    scf.if %500 {
      %cst_240 = arith.constant dense<0xFF800000> : vector<8xf32>
      %543 = vector.multi_reduction <maximumf>, %493, %cst_240 [1] : vector<8x128xf32> to vector<8xf32>
      %544 = vector.shape_cast %543 : vector<8xf32> to vector<8x1xf32>
      %545 = vector.broadcast %544 : vector<8x1xf32> to vector<8x128xf32>
      %546 = arith.cmpf oeq, %493, %545 : vector<8x128xf32>
      %c128_i32 = arith.constant 128 : i32
      %547 = vector.broadcast %c128_i32 : i32 to vector<8x128xi32>
      %548 = arith.select %546, %3, %547 : vector<8x128xi1>, vector<8x128xi32>
      %cst_241 = arith.constant dense<2147483647> : vector<8xi32>
      %549 = vector.multi_reduction <minsi>, %548, %cst_241 [1] : vector<8x128xi32> to vector<8xi32>
      %550 = vector.shape_cast %549 : vector<8xi32> to vector<8x1xi32>
      %551 = vector.broadcast %550 : vector<8x1xi32> to vector<8x128xi32>
      %552 = arith.cmpi eq, %3, %551 : vector<8x128xi32>
      %553 = arith.extui %552 : vector<8x128xi1> to vector<8x128xi32>
      %554 = arith.sitofp %553 : vector<8x128xi32> to vector<8x128xf32>
      %c0_242 = arith.constant 0 : index
      %c0_243 = arith.constant 0 : index
      %555 = vector.load %arg12[%c0_242, %c0_243] : memref<128x128xf32, #tpu.memory_space<vmem>>, vector<128x128xf32>
      %cst_244 = arith.constant dense<0.000000e+00> : vector<8x128xf32>
      %556 = tpu.matmul %554, %555, %cst_244 {dimension_numbers = #tpu.dot_dimension_numbers<[1], [0], [0], [1], [0, 0, 1, 1], [], []>} : vector<8x128xf32>, vector<128x128xf32>, vector<8x128xf32> -> vector<8x128xf32>
      %c0_245 = arith.constant 0 : index
      %c0_246 = arith.constant 0 : index
      %557 = vector.load %arg14[%c0_245, %c0_246] : memref<8x128xf32, #tpu.memory_space<vmem>>, vector<8x128xf32>
      tpu.vector_store %arg14[%c0_245, %c0_246], %556 {strides = array<i32>} : memref<8x128xf32, #tpu.memory_space<vmem>>, vector<8x128xf32>,
    } else {
    }
    %c3_218 = arith.constant 3 : index
    %501 = memref.load %arg1[%c3_218] : memref<5xi32, #tpu.memory_space<smem>>
    %c0_i32_219 = arith.constant 0 : i32
    %502 = arith.cmpi ne, %501, %c0_i32_219 : i32
    %c0_220 = arith.constant 0 : index
    %c4_221 = arith.constant 4 : index
    %c0_222 = arith.constant 0 : index
    %503 = vector.load %arg3[%c0_220, %c4_221, %c0_222] : memref<8x5x128xf32, #tpu.memory_space<vmem>>, vector<8x1x128xf32>
    %504 = vector.shape_cast %503 : vector<8x1x128xf32> to vector<8x128xf32>
    %c0_223 = arith.constant 0 : index
    %c0_224 = arith.constant 0 : index
    %505 = vector.load %arg14[%c0_223, %c0_224] : memref<8x128xf32, #tpu.memory_space<vmem>>, vector<8x128xf32>
    %506 = arith.select %502, %504, %505 : vector<8x128xf32>
    %c0_225 = arith.constant 0 : index
    %c0_226 = arith.constant 0 : index
    %507 = vector.load %arg7[%c0_225, %c0_226] : memref<128x512xf32, #tpu.memory_space<vmem>>, vector<128x512xf32>
    %cst_227 = arith.constant dense<0.000000e+00> : vector<8x512xf32>
    %508 = tpu.matmul %506, %507, %cst_227 {dimension_numbers = #tpu.dot_dimension_numbers<[1], [0], [0], [1], [0, 0, 1, 1], [], []>} : vector<8x128xf32>, vector<128x512xf32>, vector<8x512xf32> -> vector<8x512xf32>
    %c0_228 = arith.constant 0 : index
    %c0_229 = arith.constant 0 : index
    %509 = vector.load %arg8[%c0_228, %c0_229] : memref<128x512xf32, #tpu.memory_space<vmem>>, vector<128x512xf32>
    %cst_230 = arith.constant dense<0.000000e+00> : vector<8x512xf32>
    %510 = tpu.matmul %489, %509, %cst_230 {dimension_numbers = #tpu.dot_dimension_numbers<[1], [0], [0], [1], [0, 0, 1, 1], [], []>} : vector<8x128xf32>, vector<128x512xf32>, vector<8x512xf32> -> vector<8x512xf32>
    %511 = arith.addf %508, %510 : vector<8x512xf32>
    %512 = vector.broadcast %1 : vector<1x512xf32> to vector<8x512xf32>
    %513 = arith.addf %511, %512 : vector<8x512xf32>
    %514 = vector.extract_strided_slice %513 {offsets = [0, 0], sizes = [8, 128], strides = [1, 1]} : vector<8x512xf32> to vector<8x128xf32>
    %515 = arith.negf %514 : vector<8x128xf32>
    %516 = math.exp %515 : vector<8x128xf32>
    %cst_231 = arith.constant 1.000000e+00 : f32
    %517 = vector.broadcast %cst_231 : f32 to vector<8x128xf32>
    %518 = arith.addf %517, %516 : vector<8x128xf32>
    %519 = arith.divf %517, %518 : vector<8x128xf32>
    %520 = vector.extract_strided_slice %513 {offsets = [0, 128], sizes = [8, 128], strides = [1, 1]} : vector<8x512xf32> to vector<8x128xf32>
    %521 = arith.negf %520 : vector<8x128xf32>
    %522 = math.exp %521 : vector<8x128xf32>
    %cst_232 = arith.constant 1.000000e+00 : f32
    %523 = vector.broadcast %cst_232 : f32 to vector<8x128xf32>
    %524 = arith.addf %523, %522 : vector<8x128xf32>
    %525 = arith.divf %523, %524 : vector<8x128xf32>
    %526 = vector.extract_strided_slice %513 {offsets = [0, 256], sizes = [8, 128], strides = [1, 1]} : vector<8x512xf32> to vector<8x128xf32>
    %527 = vector.extract_strided_slice %513 {offsets = [0, 384], sizes = [8, 128], strides = [1, 1]} : vector<8x512xf32> to vector<8x128xf32>
    %528 = arith.mulf %519, %527 : vector<8x128xf32>
    %529 = arith.addf %526, %528 : vector<8x128xf32>
    %530 = math.tanh %529 : vector<8x128xf32>
    %cst_233 = arith.constant 1.000000e+00 : f32
    %531 = vector.broadcast %cst_233 : f32 to vector<8x128xf32>
    %532 = arith.subf %531, %525 : vector<8x128xf32>
    %533 = arith.mulf %532, %530 : vector<8x128xf32>
    %534 = arith.mulf %525, %489 : vector<8x128xf32>
    %535 = arith.addf %533, %534 : vector<8x128xf32>
    %c0_234 = arith.constant 0 : index
    %c0_235 = arith.constant 0 : index
    %536 = vector.load %arg10[%c0_234, %c0_235] : memref<128x128xf32, #tpu.memory_space<vmem>>, vector<128x128xf32>
    %cst_236 = arith.constant dense<0.000000e+00> : vector<8x128xf32>
    %537 = tpu.matmul %535, %536, %cst_236 {dimension_numbers = #tpu.dot_dimension_numbers<[1], [0], [0], [1], [0, 0, 1, 1], [], []>} : vector<8x128xf32>, vector<128x128xf32>, vector<8x128xf32> -> vector<8x128xf32>
    %538 = vector.broadcast %2 : vector<1x128xf32> to vector<8x128xf32>
    %539 = arith.addf %537, %538 : vector<8x128xf32>
    %c0_237 = arith.constant 0 : index
    %c5_238 = arith.constant 5 : index
    %c0_239 = arith.constant 0 : index
    %540 = vector.load %arg13[%c0_237, %c5_238, %c0_239] : memref<8x6x128xf32, #tpu.memory_space<vmem>>, vector<8x1x128xf32>
    %541 = vector.shape_cast %540 : vector<8x1x128xf32> to vector<8x128xf32>
    %542 = vector.shape_cast %539 : vector<8x128xf32> to vector<8x1x128xf32>
    tpu.vector_store %arg13[%c0_237, %c5_238, %c0_239], %542 {strides = array<i32>} : memref<8x6x128xf32, #tpu.memory_space<vmem>>, vector<8x1x128xf32>,
    return
  }
  func.func @transform_0(%arg0: i32, %arg1: memref<5xi32, #tpu.memory_space<smem>>) -> (i32, i32, i32) {
    %c0_i32 = arith.constant 0 : i32
    %c0_i32_0 = arith.constant 0 : i32
    %c0_i32_1 = arith.constant 0 : i32
    %c0_i32_2 = arith.constant 0 : i32
    return %c0_i32, %c0_i32_0, %c0_i32_1 : i32, i32, i32
  }
  func.func @transform_1(%arg0: i32, %arg1: memref<5xi32, #tpu.memory_space<smem>>) -> (i32, i32, i32) {
    %c0_i32 = arith.constant 0 : i32
    %c0_i32_0 = arith.constant 0 : i32
    %c0_i32_1 = arith.constant 0 : i32
    %c0_i32_2 = arith.constant 0 : i32
    return %c0_i32, %c0_i32_0, %c0_i32_1 : i32, i32, i32
  }
  func.func @transform_2(%arg0: i32, %arg1: memref<5xi32, #tpu.memory_space<smem>>) -> (i32, i32) {
    %c0_i32 = arith.constant 0 : i32
    %c0_i32_0 = arith.constant 0 : i32
    %c0_i32_1 = arith.constant 0 : i32
    return %c0_i32, %c0_i32_0 : i32, i32
  }
  func.func @transform_3(%arg0: i32, %arg1: memref<5xi32, #tpu.memory_space<smem>>) -> (i32, i32) {
    %c0_i32 = arith.constant 0 : i32
    %c0_i32_0 = arith.constant 0 : i32
    %c0_i32_1 = arith.constant 0 : i32
    return %c0_i32, %c0_i32_0 : i32, i32
  }
  func.func @transform_4(%arg0: i32, %arg1: memref<5xi32, #tpu.memory_space<smem>>) -> (i32, i32) {
    %c0_i32 = arith.constant 0 : i32
    %c0_i32_0 = arith.constant 0 : i32
    %c0_i32_1 = arith.constant 0 : i32
    return %c0_i32, %c0_i32_0 : i32, i32
  }
  func.func @transform_5(%arg0: i32, %arg1: memref<5xi32, #tpu.memory_space<smem>>) -> (i32, i32) {
    %c0_i32 = arith.constant 0 : i32
    %c0_i32_0 = arith.constant 0 : i32
    %c0_i32_1 = arith.constant 0 : i32
    return %c0_i32, %c0_i32_0 : i32, i32
  }
  func.func @transform_6(%arg0: i32, %arg1: memref<5xi32, #tpu.memory_space<smem>>) -> (i32, i32) {
    %c0_i32 = arith.constant 0 : i32
    %c0_i32_0 = arith.constant 0 : i32
    %c0_i32_1 = arith.constant 0 : i32
    return %c0_i32, %c0_i32_0 : i32, i32
  }
  func.func @transform_7(%arg0: i32, %arg1: memref<5xi32, #tpu.memory_space<smem>>) -> (i32, i32) {
    %c0_i32 = arith.constant 0 : i32
    %c0_i32_0 = arith.constant 0 : i32
    %c0_i32_1 = arith.constant 0 : i32
    return %c0_i32, %c0_i32_0 : i32, i32
  }
  func.func @transform_8(%arg0: i32, %arg1: memref<5xi32, #tpu.memory_space<smem>>) -> (i32, i32) {
    %c0_i32 = arith.constant 0 : i32
    %c0_i32_0 = arith.constant 0 : i32
    %c0_i32_1 = arith.constant 0 : i32
    return %c0_i32, %c0_i32_0 : i32, i32
  }
  func.func @transform_9(%arg0: i32, %arg1: memref<5xi32, #tpu.memory_space<smem>>) -> (i32, i32) {
    %c0_i32 = arith.constant 0 : i32
    %c0_i32_0 = arith.constant 0 : i32
    %c0_i32_1 = arith.constant 0 : i32
    return %c0_i32, %c0_i32_0 : i32, i32
  }
  func.func @transform_10(%arg0: i32, %arg1: memref<5xi32, #tpu.memory_space<smem>>) -> (i32, i32) {
    %c0_i32 = arith.constant 0 : i32
    %c0_i32_0 = arith.constant 0 : i32
    %c0_i32_1 = arith.constant 0 : i32
    return %c0_i32, %c0_i32_0 : i32, i32
  }
  func.func @transform_11(%arg0: i32, %arg1: memref<5xi32, #tpu.memory_space<smem>>) -> (i32, i32, i32) {
    %c0_i32 = arith.constant 0 : i32
    %c0_i32_0 = arith.constant 0 : i32
    %c0_i32_1 = arith.constant 0 : i32
    %c0_i32_2 = arith.constant 0 : i32
    return %c0_i32, %c0_i32_0, %c0_i32_1 : i32, i32, i32
  }
}

</mosaic_0001>

<llo_original>
// kernel: seq2seq_forward.1
$region0: #{seq2seq_forward.1}
  #allocation0 [shape = 'u32[]', space=smem, size = 0x4, offset = 0x4, fixed_abs, tag = 'smem constant byte address 0x4 - core index']
  #allocation1 [shape = 'u32[144,128]{1,0:T(1,128)}', space=vmem, size = 0x12000, scoped, tag = 'internal scratch']
  #allocation2 [shape = 'f32[8,128]{1,0:T(8,128)}', space=vmem, size = 0x1000, scoped, tag = 'scratch operand']
  #allocation3 [shape = 's32[1]{0}', space=sflag, size = 0x4, scoped, tag = 'scoped memory for seq2seq_forward.1']
  #allocation4 [shape = 'u8[512]{0}', space=smem, size = 0x200, scoped, tag = 'prefetched SMEM operand 0']
  %s0 = inlined_call_operand.vmem [shape: s32[5], index: 0, kind: input, shape index: {}]
  %s1 = inlined_call_operand.vmem [shape: f32[8,10,128], index: 1, kind: input, shape index: {}]
  %s2 = inlined_call_operand.vmem [shape: f32[8,5,128], index: 2, kind: input, shape index: {}]
  %s3 = inlined_call_operand.vmem [shape: f32[128,512], index: 3, kind: input, shape index: {}]
  %s4 = inlined_call_operand.vmem [shape: f32[128,512], index: 4, kind: input, shape index: {}]
  %s5 = inlined_call_operand.vmem [shape: f32[1,512], index: 5, kind: input, shape index: {}]
  %s6 = inlined_call_operand.vmem [shape: f32[128,512], index: 6, kind: input, shape index: {}]
  %s7 = inlined_call_operand.hbm [shape: f32[128,512], index: 7, kind: input, shape index: {}]
  %s8 = inlined_call_operand.vmem [shape: f32[1,512], index: 8, kind: input, shape index: {}]
  %s9 = inlined_call_operand.vmem [shape: f32[128,128], index: 9, kind: input, shape index: {}]
  %s10 = inlined_call_operand.vmem [shape: f32[1,128], index: 10, kind: input, shape index: {}]
  %s11 = inlined_call_operand.vmem [shape: f32[128,128], index: 11, kind: input, shape index: {}]
  %s12 = inlined_call_operand.vmem [shape: f32[8,6,128], index: 12, kind: output, shape index: {}]
  %s13 = sld [smem:[#allocation0]]
  $region74: #{seq2seq_forward.1} parent=0
    _
  %s15 = ssub.s32 1, %s13
  %s16 = scalar_select 0, %s15, %s13
  %s17 = sshll.u32 %s0, 4
  %s18 = int_to_ptr.vmem [resolvable:$true] %s17
  %20 = dma.vmem_to_smem %s18, 16, [#allocation4], [#allocation3]
  %21 = dma.done [#allocation3], 16
  %22 = sfence
  $region1: #{seq2seq_forward.1} parent=0
    #allocation5 [shape = 'u8[262144]{0}', space=vmem, size = 0x40000, scoped, tag = 'input window, operand 7, single buffered']
    #allocation6 [shape = 's32[1]{0}', space=sflag, size = 0x4, scoped, tag = 'scoped memory for seq2seq_forward.1']
    %23 = vsyncpa [#allocation6], 0
    // Predicated region
    $region2: #{seq2seq_forward.1} parent=1 // pred_check
      _
    $region3: #{seq2seq_forward.1} parent=1 // pred_check_branch
      %25 = sbr.rel (0) target = $region5
    $region4: #{seq2seq_forward.1} parent=1 // pred_region
      _
    $region5: #{seq2seq_forward.1} parent=1 // pred_fallthru
      _
    // Predicated region
    $region6: #{seq2seq_forward.1} parent=1 // pred_check
      _
    $region7: #{seq2seq_forward.1} parent=1 // pred_check_branch
      %27 = sbr.rel (0) target = $region9
    $region8: #{seq2seq_forward.1} parent=1 // pred_region
      _
    $region9: #{seq2seq_forward.1} parent=1 // pred_fallthru
      _
    // Predicated region
    $region10: #{seq2seq_forward.1} parent=1 // pred_check
      _
    $region11: #{seq2seq_forward.1} parent=1 // pred_check_branch
      %29 = sbr.rel (0) target = $region13
    $region12: #{seq2seq_forward.1} parent=1 // pred_region
      _
    $region13: #{seq2seq_forward.1} parent=1 // pred_fallthru
      _
    // Predicated region
    $region14: #{seq2seq_forward.1} parent=1 // pred_check
      _
    $region15: #{seq2seq_forward.1} parent=1 // pred_check_branch
      %31 = sbr.rel (0) target = $region17
    $region16: #{seq2seq_forward.1} parent=1 // pred_region
      _
    $region17: #{seq2seq_forward.1} parent=1 // pred_fallthru
      _
    // Predicated region
    $region18: #{seq2seq_forward.1} parent=1 // pred_check
      _
    $region19: #{seq2seq_forward.1} parent=1 // pred_check_branch
      %33 = sbr.rel (0) target = $region21
    $region20: #{seq2seq_forward.1} parent=1 // pred_region
      _
    $region21: #{seq2seq_forward.1} parent=1 // pred_fallthru
      _
    // Predicated region
    $region22: #{seq2seq_forward.1} parent=1 // pred_check
      _
    $region23: #{seq2seq_forward.1} parent=1 // pred_check_branch
      %35 = sbr.rel (0) target = $region25
    $region24: #{seq2seq_forward.1} parent=1 // pred_region
      _
    $region25: #{seq2seq_forward.1} parent=1 // pred_fallthru
      _
    // Predicated region
    $region26: #{seq2seq_forward.1} parent=1 // pred_check
      _
    $region27: #{seq2seq_forward.1} parent=1 // pred_check_branch
      %37 = sbr.rel (0) target = $region29
    $region28: #{seq2seq_forward.1} parent=1 // pred_region
      %s39 = ssub.s32 8192, 8192
      %40 = vsyncadd [#allocation6], %s39
      %s41 = sshll.u32 [#allocation5], 4
      %s42 = int_to_ptr.vmem [resolvable:$true] %s41
      %47 = dma.hbm_to_vmem [thread:$0]  %s7, 8192, %s42, [#allocation6], 512, 512, 32
    $region29: #{seq2seq_forward.1} parent=1 // pred_fallthru
      _
    // Predicated region
    $region30: #{seq2seq_forward.1} parent=1 // pred_check
      _
    $region31: #{seq2seq_forward.1} parent=1 // pred_check_branch
      %49 = sbr.rel (0) target = $region33
    $region32: #{seq2seq_forward.1} parent=1 // pred_region
      _
    $region33: #{seq2seq_forward.1} parent=1 // pred_fallthru
      _
    // Predicated region
    $region34: #{seq2seq_forward.1} parent=1 // pred_check
      _
    $region35: #{seq2seq_forward.1} parent=1 // pred_check_branch
      %51 = sbr.rel (0) target = $region37
    $region36: #{seq2seq_forward.1} parent=1 // pred_region
      _
    $region37: #{seq2seq_forward.1} parent=1 // pred_fallthru
      _
    // Predicated region
    $region38: #{seq2seq_forward.1} parent=1 // pred_check
      _
    $region39: #{seq2seq_forward.1} parent=1 // pred_check_branch
      %53 = sbr.rel (0) target = $region41
    $region40: #{seq2seq_forward.1} parent=1 // pred_region
      _
    $region41: #{seq2seq_forward.1} parent=1 // pred_fallthru
      _
    // Predicated region
    $region42: #{seq2seq_forward.1} parent=1 // pred_check
      _
    $region43: #{seq2seq_forward.1} parent=1 // pred_check_branch
      %55 = sbr.rel (0) target = $region45
    $region44: #{seq2seq_forward.1} parent=1 // pred_region
      _
    $region45: #{seq2seq_forward.1} parent=1 // pred_fallthru
      _
    // Predicated region
    $region46: #{seq2seq_forward.1} parent=1 // pred_check
      _
    $region47: #{seq2seq_forward.1} parent=1 // pred_check_branch
      %57 = sbr.rel (0) target = $region49
    $region48: #{seq2seq_forward.1} parent=1 // pred_region
      %58 = dma.done [#allocation6], 8192
    $region49: #{seq2seq_forward.1} parent=1 // pred_fallthru
      _
    %v59 = vld [vmem:[%s5] sm:$0xf]
    %v60 = vld [vmem:[%s8] sm:$0xf]
    %v61 = vld [vmem:[%s10] sm:$0x1]
    %v62 = vlaneseq
    %v63 = vand.u32 %v62, 127
    %v64 = vld [vmem:[%s1] sm:$0x1]
    %v65 = vld [vmem:[%s1 + $0x10] sm:$0x1]
    %v66 = vld [vmem:[%s1 + $0x20] sm:$0x1]
    %v67 = vld [vmem:[%s1 + $0x30] sm:$0x1]
    %v68 = vld [vmem:[%s1 + $0x40] sm:$0x1]
    %v69 = vld [vmem:[%s1 + $0x50] sm:$0x1]
    %v70 = vld [vmem:[%s1 + $0x60] sm:$0x1]
    %v71 = vld [vmem:[%s1 + $0x70] sm:$0x1]
    %v72 = vld [vmem:[%s3] sm:$0xff]
    %v73 = vld [vmem:[%s3 + $0x8] sm:$0xff]
    %v74 = vld [vmem:[%s3 + $0x10] sm:$0xff]
    %v75 = vld [vmem:[%s3 + $0x18] sm:$0xff]
    %v76 = vld [vmem:[%s3 + $0x20] sm:$0xff]
    %v77 = vld [vmem:[%s3 + $0x28] sm:$0xff]
    %v78 = vld [vmem:[%s3 + $0x30] sm:$0xff]
    %v79 = vld [vmem:[%s3 + $0x38] sm:$0xff]
    %v80 = vld [vmem:[%s3 + $0x40] sm:$0xff]
    %v81 = vld [vmem:[%s3 + $0x48] sm:$0xff]
    %v82 = vld [vmem:[%s3 + $0x50] sm:$0xff]
    %v83 = vld [vmem:[%s3 + $0x58] sm:$0xff]
    %v84 = vld [vmem:[%s3 + $0x60] sm:$0xff]
    %v85 = vld [vmem:[%s3 + $0x68] sm:$0xff]
    %v86 = vld [vmem:[%s3 + $0x70] sm:$0xff]
    %v87 = vld [vmem:[%s3 + $0x78] sm:$0xff]
    %v88 = vld [vmem:[%s3 + $0x80] sm:$0xff]
    %v89 = vld [vmem:[%s3 + $0x88] sm:$0xff]
    %v90 = vld [vmem:[%s3 + $0x90] sm:$0xff]
    %v91 = vld [vmem:[%s3 + $0x98] sm:$0xff]
    %v92 = vld [vmem:[%s3 + $0xa0] sm:$0xff]
    %v93 = vld [vmem:[%s3 + $0xa8] sm:$0xff]
    %v94 = vld [vmem:[%s3 + $0xb0] sm:$0xff]
    %v95 = vld [vmem:[%s3 + $0xb8] sm:$0xff]
    %v96 = vld [vmem:[%s3 + $0xc0] sm:$0xff]
    %v97 = vld [vmem:[%s3 + $0xc8] sm:$0xff]
    %v98 = vld [vmem:[%s3 + $0xd0] sm:$0xff]
    %v99 = vld [vmem:[%s3 + $0xd8] sm:$0xff]
    %v100 = vld [vmem:[%s3 + $0xe0] sm:$0xff]
    %v101 = vld [vmem:[%s3 + $0xe8] sm:$0xff]
    %v102 = vld [vmem:[%s3 + $0xf0] sm:$0xff]
    %v103 = vld [vmem:[%s3 + $0xf8] sm:$0xff]
    %v104 = vld [vmem:[%s3 + $0x100] sm:$0xff]
    %v105 = vld [vmem:[%s3 + $0x108] sm:$0xff]
    %v106 = vld [vmem:[%s3 + $0x110] sm:$0xff]
    %v107 = vld [vmem:[%s3 + $0x118] sm:$0xff]
    %v108 = vld [vmem:[%s3 + $0x120] sm:$0xff]
    %v109 = vld [vmem:[%s3 + $0x128] sm:$0xff]
    %v110 = vld [vmem:[%s3 + $0x130] sm:$0xff]
    %v111 = vld [vmem:[%s3 + $0x138] sm:$0xff]
    %v112 = vld [vmem:[%s3 + $0x140] sm:$0xff]
    %v113 = vld [vmem:[%s3 + $0x148] sm:$0xff]
    %v114 = vld [vmem:[%s3 + $0x150] sm:$0xff]
    %v115 = vld [vmem:[%s3 + $0x158] sm:$0xff]
    %v116 = vld [vmem:[%s3 + $0x160] sm:$0xff]
    %v117 = vld [vmem:[%s3 + $0x168] sm:$0xff]
    %v118 = vld [vmem:[%s3 + $0x170] sm:$0xff]
    %v119 = vld [vmem:[%s3 + $0x178] sm:$0xff]
    %v120 = vld [vmem:[%s3 + $0x180] sm:$0xff]
    %v121 = vld [vmem:[%s3 + $0x188] sm:$0xff]
    %v122 = vld [vmem:[%s3 + $0x190] sm:$0xff]
    %v123 = vld [vmem:[%s3 + $0x198] sm:$0xff]
    %v124 = vld [vmem:[%s3 + $0x1a0] sm:$0xff]
    %v125 = vld [vmem:[%s3 + $0x1a8] sm:$0xff]
    %v126 = vld [vmem:[%s3 + $0x1b0] sm:$0xff]
    %v127 = vld [vmem:[%s3 + $0x1b8] sm:$0xff]
    %v128 = vld [vmem:[%s3 + $0x1c0] sm:$0xff]
    %v129 = vld [vmem:[%s3 + $0x1c8] sm:$0xff]
    %v130 = vld [vmem:[%s3 + $0x1d0] sm:$0xff]
    %v131 = vld [vmem:[%s3 + $0x1d8] sm:$0xff]
    %v132 = vld [vmem:[%s3 + $0x1e0] sm:$0xff]
    %v133 = vld [vmem:[%s3 + $0x1e8] sm:$0xff]
    %v134 = vld [vmem:[%s3 + $0x1f0] sm:$0xff]
    %v135 = vld [vmem:[%s3 + $0x1f8] sm:$0xff]
    %v136 = vld [vmem:[%s4] sm:$0xff]
    %v137 = vld [vmem:[%s4 + $0x8] sm:$0xff]
    %v138 = vld [vmem:[%s4 + $0x10] sm:$0xff]
    %v139 = vld [vmem:[%s4 + $0x18] sm:$0xff]
    %v140 = vld [vmem:[%s4 + $0x20] sm:$0xff]
    %v141 = vld [vmem:[%s4 + $0x28] sm:$0xff]
    %v142 = vld [vmem:[%s4 + $0x30] sm:$0xff]
    %v143 = vld [vmem:[%s4 + $0x38] sm:$0xff]
    %v144 = vld [vmem:[%s4 + $0x40] sm:$0xff]
    %v145 = vld [vmem:[%s4 + $0x48] sm:$0xff]
    %v146 = vld [vmem:[%s4 + $0x50] sm:$0xff]
    %v147 = vld [vmem:[%s4 + $0x58] sm:$0xff]
    %v148 = vld [vmem:[%s4 + $0x60] sm:$0xff]
    %v149 = vld [vmem:[%s4 + $0x68] sm:$0xff]
    %v150 = vld [vmem:[%s4 + $0x70] sm:$0xff]
    %v151 = vld [vmem:[%s4 + $0x78] sm:$0xff]
    %v152 = vld [vmem:[%s4 + $0x80] sm:$0xff]
    %v153 = vld [vmem:[%s4 + $0x88] sm:$0xff]
    %v154 = vld [vmem:[%s4 + $0x90] sm:$0xff]
    %v155 = vld [vmem:[%s4 + $0x98] sm:$0xff]
    %v156 = vld [vmem:[%s4 + $0xa0] sm:$0xff]
    %v157 = vld [vmem:[%s4 + $0xa8] sm:$0xff]
    %v158 = vld [vmem:[%s4 + $0xb0] sm:$0xff]
    %v159 = vld [vmem:[%s4 + $0xb8] sm:$0xff]
    %v160 = vld [vmem:[%s4 + $0xc0] sm:$0xff]
    %v161 = vld [vmem:[%s4 + $0xc8] sm:$0xff]
    %v162 = vld [vmem:[%s4 + $0xd0] sm:$0xff]
    %v163 = vld [vmem:[%s4 + $0xd8] sm:$0xff]
    %v164 = vld [vmem:[%s4 + $0xe0] sm:$0xff]
    %v165 = vld [vmem:[%s4 + $0xe8] sm:$0xff]
    %v166 = vld [vmem:[%s4 + $0xf0] sm:$0xff]
    %v167 = vld [vmem:[%s4 + $0xf8] sm:$0xff]
    %v168 = vld [vmem:[%s4 + $0x100] sm:$0xff]
    %v169 = vld [vmem:[%s4 + $0x108] sm:$0xff]
    %v170 = vld [vmem:[%s4 + $0x110] sm:$0xff]
    %v171 = vld [vmem:[%s4 + $0x118] sm:$0xff]
    %v172 = vld [vmem:[%s4 + $0x120] sm:$0xff]
    %v173 = vld [vmem:[%s4 + $0x128] sm:$0xff]
    %v174 = vld [vmem:[%s4 + $0x130] sm:$0xff]
    %v175 = vld [vmem:[%s4 + $0x138] sm:$0xff]
    %v176 = vld [vmem:[%s4 + $0x140] sm:$0xff]
    %v177 = vld [vmem:[%s4 + $0x148] sm:$0xff]
    %v178 = vld [vmem:[%s4 + $0x150] sm:$0xff]
    %v179 = vld [vmem:[%s4 + $0x158] sm:$0xff]
    %v180 = vld [vmem:[%s4 + $0x160] sm:$0xff]
    %v181 = vld [vmem:[%s4 + $0x168] sm:$0xff]
    %v182 = vld [vmem:[%s4 + $0x170] sm:$0xff]
    %v183 = vld [vmem:[%s4 + $0x178] sm:$0xff]
    %v184 = vld [vmem:[%s4 + $0x180] sm:$0xff]
    %v185 = vld [vmem:[%s4 + $0x188] sm:$0xff]
    %v186 = vld [vmem:[%s4 + $0x190] sm:$0xff]
    %v187 = vld [vmem:[%s4 + $0x198] sm:$0xff]
    %v188 = vld [vmem:[%s4 + $0x1a0] sm:$0xff]
    %v189 = vld [vmem:[%s4 + $0x1a8] sm:$0xff]
    %v190 = vld [vmem:[%s4 + $0x1b0] sm:$0xff]
    %v191 = vld [vmem:[%s4 + $0x1b8] sm:$0xff]
    %v192 = vld [vmem:[%s4 + $0x1c0] sm:$0xff]
    %v193 = vld [vmem:[%s4 + $0x1c8] sm:$0xff]
    %v194 = vld [vmem:[%s4 + $0x1d0] sm:$0xff]
    %v195 = vld [vmem:[%s4 + $0x1d8] sm:$0xff]
    %v196 = vld [vmem:[%s4 + $0x1e0] sm:$0xff]
    %v197 = vld [vmem:[%s4 + $0x1e8] sm:$0xff]
    %v198 = vld [vmem:[%s4 + $0x1f0] sm:$0xff]
    %v199 = vld [vmem:[%s4 + $0x1f8] sm:$0xff]
    %200 = vmatprep.subr.mxu0 %v137
    %201 = vmatpush1.msra.mxu0 %v136
    %202 = vmatprep.subr.mxu0 %v141
    %203 = vmatpush1.msra.mxu0 %v140
    %204 = vmatprep.subr.mxu0 %v145
    %205 = vmatpush1.msra.mxu0 %v144
    %206 = vmatprep.subr.mxu0 %v149
    %207 = vmatpush1.msra.mxu0 %v148
    %208 = vmatprep.subr.mxu0 %v153
    %209 = vmatpush1.msra.mxu0 %v152
    %210 = vmatprep.subr.mxu0 %v157
    %211 = vmatpush1.msra.mxu0 %v156
    %212 = vmatprep.subr.mxu0 %v161
    %213 = vmatpush1.msra.mxu0 %v160
    %214 = vmatprep.subr.mxu0 %v165
    %215 = vmatpush1.msra.mxu0 %v164
    %216 = vmatprep.subr.mxu0 %v169
    %217 = vmatpush1.msra.mxu0 %v168
    %218 = vmatprep.subr.mxu0 %v173
    %219 = vmatpush1.msra.mxu0 %v172
    %220 = vmatprep.subr.mxu0 %v177
    %221 = vmatpush1.msra.mxu0 %v176
    %222 = vmatprep.subr.mxu0 %v181
    %223 = vmatpush1.msra.mxu0 %v180
    %224 = vmatprep.subr.mxu0 %v185
    %225 = vmatpush1.msra.mxu0 %v184
    %226 = vmatprep.subr.mxu0 %v189
    %227 = vmatpush1.msra.mxu0 %v188
    %228 = vmatprep.subr.mxu0 %v193
    %229 = vmatpush1.msra.mxu0 %v192
    %230 = vmatprep.subr.mxu0 %v197
    %231 = vmatpush1.msra.mxu0 %v196
    %232 = vmatprep.subr.mxu0 0.0
    %233 = vmatpush1.msra.mxu0 0.0
    %234 = vmatprep.subr.mxu0 0.0
    %235 = vmatpush1.msra.mxu0 0.0
    %236 = vmatprep.subr.mxu0 0.0
    %237 = vmatpush1.msra.mxu0 0.0
    %238 = vmatprep.subr.mxu0 0.0
    %239 = vmatpush1.msra.mxu0 0.0
    %240 = vmatprep.subr.mxu0 0.0
    %241 = vmatpush1.msra.mxu0 0.0
    %242 = vmatprep.subr.mxu0 0.0
    %243 = vmatpush1.msra.mxu0 0.0
    %244 = vmatprep.subr.mxu0 0.0
    %245 = vmatpush1.msra.mxu0 0.0
    %246 = vmatprep.subr.mxu0 0.0
    %247 = vmatpush1.msra.mxu0 0.0
    %248 = vmatprep.subr.mxu0 0.0
    %249 = vmatpush1.msra.mxu0 0.0
    %250 = vmatprep.subr.mxu0 0.0
    %251 = vmatpush1.msra.mxu0 0.0
    %252 = vmatprep.subr.mxu0 0.0
    %253 = vmatpush1.msra.mxu0 0.0
    %254 = vmatprep.subr.mxu0 0.0
    %255 = vmatpush1.msra.mxu0 0.0
    %256 = vmatprep.subr.mxu0 0.0
    %257 = vmatpush1.msra.mxu0 0.0
    %258 = vmatprep.subr.mxu0 0.0
    %259 = vmatpush1.msra.mxu0 0.0
    %260 = vmatprep.subr.mxu0 0.0
    %261 = vmatpush1.msra.mxu0 0.0
    %262 = vmatprep.subr.mxu0 0.0
    %263 = vmatpush1.msra.mxu0 0.0
    %264 = vmatprep.mubr.f32.mxu0 0.0
    %265 = vmatmul.mubr.f32.gmra.mrb[0].mxu0 0.0
    %v266 = vpop.f32.mrb[0].mxu0
    %v267 = vadd.f32 0.0, %v266
    %v268 = vpop.f32.mrb[0].mxu0
    %v269 = vadd.f32 0.0, %v268
    %270 = vdwg.mxu0
    %271 = vmatprep.subr.mxu0 %v139
    %272 = vmatpush1.msra.mxu0 %v138
    %273 = vmatprep.subr.mxu0 %v143
    %274 = vmatpush1.msra.mxu0 %v142
    %275 = vmatprep.subr.mxu0 %v147
    %276 = vmatpush1.msra.mxu0 %v146
    %277 = vmatprep.subr.mxu0 %v151
    %278 = vmatpush1.msra.mxu0 %v150
    %279 = vmatprep.subr.mxu0 %v155
    %280 = vmatpush1.msra.mxu0 %v154
    %281 = vmatprep.subr.mxu0 %v159
    %282 = vmatpush1.msra.mxu0 %v158
    %283 = vmatprep.subr.mxu0 %v163
    %284 = vmatpush1.msra.mxu0 %v162
    %285 = vmatprep.subr.mxu0 %v167
    %286 = vmatpush1.msra.mxu0 %v166
    %287 = vmatprep.subr.mxu0 %v171
    %288 = vmatpush1.msra.mxu0 %v170
    %289 = vmatprep.subr.mxu0 %v175
    %290 = vmatpush1.msra.mxu0 %v174
    %291 = vmatprep.subr.mxu0 %v179
    %292 = vmatpush1.msra.mxu0 %v178
    %293 = vmatprep.subr.mxu0 %v183
    %294 = vmatpush1.msra.mxu0 %v182
    %295 = vmatprep.subr.mxu0 %v187
    %296 = vmatpush1.msra.mxu0 %v186
    %297 = vmatprep.subr.mxu0 %v191
    %298 = vmatpush1.msra.mxu0 %v190
    %299 = vmatprep.subr.mxu0 %v195
    %300 = vmatpush1.msra.mxu0 %v194
    %301 = vmatprep.subr.mxu0 %v199
    %302 = vmatpush1.msra.mxu0 %v198
    %303 = vmatprep.subr.mxu0 0.0
    %304 = vmatpush1.msra.mxu0 0.0
    %305 = vmatprep.subr.mxu0 0.0
    %306 = vmatpush1.msra.mxu0 0.0
    %307 = vmatprep.subr.mxu0 0.0
    %308 = vmatpush1.msra.mxu0 0.0
    %309 = vmatprep.subr.mxu0 0.0
    %310 = vmatpush1.msra.mxu0 0.0
    %311 = vmatprep.subr.mxu0 0.0
    %312 = vmatpush1.msra.mxu0 0.0
    %313 = vmatprep.subr.mxu0 0.0
    %314 = vmatpush1.msra.mxu0 0.0
    %315 = vmatprep.subr.mxu0 0.0
    %316 = vmatpush1.msra.mxu0 0.0
    %317 = vmatprep.subr.mxu0 0.0
    %318 = vmatpush1.msra.mxu0 0.0
    %319 = vmatprep.subr.mxu0 0.0
    %320 = vmatpush1.msra.mxu0 0.0
    %321 = vmatprep.subr.mxu0 0.0
    %322 = vmatpush1.msra.mxu0 0.0
    %323 = vmatprep.subr.mxu0 0.0
    %324 = vmatpush1.msra.mxu0 0.0
    %325 = vmatprep.subr.mxu0 0.0
    %326 = vmatpush1.msra.mxu0 0.0
    %327 = vmatprep.subr.mxu0 0.0
    %328 = vmatpush1.msra.mxu0 0.0
    %329 = vmatprep.subr.mxu0 0.0
    %330 = vmatpush1.msra.mxu0 0.0
    %331 = vmatprep.subr.mxu0 0.0
    %332 = vmatpush1.msra.mxu0 0.0
    %333 = vmatprep.subr.mxu0 0.0
    %334 = vmatpush1.msra.mxu0 0.0
    %335 = vmatprep.mubr.f32.mxu0 0.0
    %336 = vmatmul.mubr.f32.gmra.mrb[0].mxu0 0.0
    %v337 = vpop.f32.mrb[0].mxu0
    %v338 = vadd.f32 0.0, %v337
    %v339 = vpop.f32.mrb[0].mxu0
    %v340 = vadd.f32 0.0, %v339
    %341 = vdwg.mxu0
    %v350 = vrot.slane %v65, 7
    %vm351 = vcmask 1041409
    %v352 = vsel %vm351, %v350, %v64
    %v353 = vrot.slane %v66, 6
    %vm354 = vcmask 1042434
    %v355 = vsel %vm354, %v353, %v352
    %v356 = vrot.slane %v67, 5
    %vm357 = vcmask 1043459
    %v358 = vsel %vm357, %v356, %v355
    %v359 = vrot.slane %v68, 4
    %vm360 = vcmask 1044484
    %v361 = vsel %vm360, %v359, %v358
    %v362 = vrot.slane %v69, 3
    %vm363 = vcmask 1045509
    %v364 = vsel %vm363, %v362, %v361
    %v365 = vrot.slane %v70, 2
    %vm366 = vcmask 1046534
    %v367 = vsel %vm366, %v365, %v364
    %v368 = vrot.slane %v71, 1
    %vm369 = vcmask 1047559
    %v370 = vsel %vm369, %v368, %v367
    %372 = vmatprep.subr.mxu0 %v73
    %373 = vmatpush1.msra.mxu0 %v72
    %374 = vmatprep.subr.mxu0 %v77
    %375 = vmatpush1.msra.mxu0 %v76
    %376 = vmatprep.subr.mxu0 %v81
    %377 = vmatpush1.msra.mxu0 %v80
    %378 = vmatprep.subr.mxu0 %v85
    %379 = vmatpush1.msra.mxu0 %v84
    %380 = vmatprep.subr.mxu0 %v89
    %381 = vmatpush1.msra.mxu0 %v88
    %382 = vmatprep.subr.mxu0 %v93
    %383 = vmatpush1.msra.mxu0 %v92
    %384 = vmatprep.subr.mxu0 %v97
    %385 = vmatpush1.msra.mxu0 %v96
    %386 = vmatprep.subr.mxu0 %v101
    %387 = vmatpush1.msra.mxu0 %v100
    %388 = vmatprep.subr.mxu0 %v105
    %389 = vmatpush1.msra.mxu0 %v104
    %390 = vmatprep.subr.mxu0 %v109
    %391 = vmatpush1.msra.mxu0 %v108
    %392 = vmatprep.subr.mxu0 %v113
    %393 = vmatpush1.msra.mxu0 %v112
    %394 = vmatprep.subr.mxu0 %v117
    %395 = vmatpush1.msra.mxu0 %v116
    %396 = vmatprep.subr.mxu0 %v121
    %397 = vmatpush1.msra.mxu0 %v120
    %398 = vmatprep.subr.mxu0 %v125
    %399 = vmatpush1.msra.mxu0 %v124
    %400 = vmatprep.subr.mxu0 %v129
    %401 = vmatpush1.msra.mxu0 %v128
    %402 = vmatprep.subr.mxu0 %v133
    %403 = vmatpush1.msra.mxu0 %v132
    %404 = vmatprep.subr.mxu0 0.0
    %405 = vmatpush1.msra.mxu0 0.0
    %406 = vmatprep.subr.mxu0 0.0
    %407 = vmatpush1.msra.mxu0 0.0
    %408 = vmatprep.subr.mxu0 0.0
    %409 = vmatpush1.msra.mxu0 0.0
    %410 = vmatprep.subr.mxu0 0.0
    %411 = vmatpush1.msra.mxu0 0.0
    %412 = vmatprep.subr.mxu0 0.0
    %413 = vmatpush1.msra.mxu0 0.0
    %414 = vmatprep.subr.mxu0 0.0
    %415 = vmatpush1.msra.mxu0 0.0
    %416 = vmatprep.subr.mxu0 0.0
    %417 = vmatpush1.msra.mxu0 0.0
    %418 = vmatprep.subr.mxu0 0.0
    %419 = vmatpush1.msra.mxu0 0.0
    %420 = vmatprep.subr.mxu0 0.0
    %421 = vmatpush1.msra.mxu0 0.0
    %422 = vmatprep.subr.mxu0 0.0
    %423 = vmatpush1.msra.mxu0 0.0
    %424 = vmatprep.subr.mxu0 0.0
    %425 = vmatpush1.msra.mxu0 0.0
    %426 = vmatprep.subr.mxu0 0.0
    %427 = vmatpush1.msra.mxu0 0.0
    %428 = vmatprep.subr.mxu0 0.0
    %429 = vmatpush1.msra.mxu0 0.0
    %430 = vmatprep.subr.mxu0 0.0
    %431 = vmatpush1.msra.mxu0 0.0
    %432 = vmatprep.subr.mxu0 0.0
    %433 = vmatpush1.msra.mxu0 0.0
    %434 = vmatprep.subr.mxu0 0.0
    %435 = vmatpush1.msra.mxu0 0.0
    %436 = vmatprep.mubr.f32.mxu0 0.0
    %437 = vmatmul.mubr.f32.gmra.mrb[0].mxu0 %v370
    %v438 = vpop.f32.mrb[0].mxu0
    %v439 = vadd.f32 %v267, %v438
    %v440 = vpop.f32.mrb[0].mxu0
    %v441 = vadd.f32 %v269, %v440
    %442 = vdwg.mxu0
    %443 = vmatprep.subr.mxu0 %v75
    %444 = vmatpush1.msra.mxu0 %v74
    %445 = vmatprep.subr.mxu0 %v79
    %446 = vmatpush1.msra.mxu0 %v78
    %447 = vmatprep.subr.mxu0 %v83
    %448 = vmatpush1.msra.mxu0 %v82
    %449 = vmatprep.subr.mxu0 %v87
    %450 = vmatpush1.msra.mxu0 %v86
    %451 = vmatprep.subr.mxu0 %v91
    %452 = vmatpush1.msra.mxu0 %v90
    %453 = vmatprep.subr.mxu0 %v95
    %454 = vmatpush1.msra.mxu0 %v94
    %455 = vmatprep.subr.mxu0 %v99
    %456 = vmatpush1.msra.mxu0 %v98
    %457 = vmatprep.subr.mxu0 %v103
    %458 = vmatpush1.msra.mxu0 %v102
    %459 = vmatprep.subr.mxu0 %v107
    %460 = vmatpush1.msra.mxu0 %v106
    %461 = vmatprep.subr.mxu0 %v111
    %462 = vmatpush1.msra.mxu0 %v110
    %463 = vmatprep.subr.mxu0 %v115
    %464 = vmatpush1.msra.mxu0 %v114
    %465 = vmatprep.subr.mxu0 %v119
    %466 = vmatpush1.msra.mxu0 %v118
    %467 = vmatprep.subr.mxu0 %v123
    %468 = vmatpush1.msra.mxu0 %v122
    %469 = vmatprep.subr.mxu0 %v127
    %470 = vmatpush1.msra.mxu0 %v126
    %471 = vmatprep.subr.mxu0 %v131
    %472 = vmatpush1.msra.mxu0 %v130
    %473 = vmatprep.subr.mxu0 %v135
    %474 = vmatpush1.msra.mxu0 %v134
    %475 = vmatprep.subr.mxu0 0.0
    %476 = vmatpush1.msra.mxu0 0.0
    %477 = vmatprep.subr.mxu0 0.0
    %478 = vmatpush1.msra.mxu0 0.0
    %479 = vmatprep.subr.mxu0 0.0
    %480 = vmatpush1.msra.mxu0 0.0
    %481 = vmatprep.subr.mxu0 0.0
    %482 = vmatpush1.msra.mxu0 0.0
    %483 = vmatprep.subr.mxu0 0.0
    %484 = vmatpush1.msra.mxu0 0.0
    %485 = vmatprep.subr.mxu0 0.0
    %486 = vmatpush1.msra.mxu0 0.0
    %487 = vmatprep.subr.mxu0 0.0
    %488 = vmatpush1.msra.mxu0 0.0
    %489 = vmatprep.subr.mxu0 0.0
    %490 = vmatpush1.msra.mxu0 0.0
    %491 = vmatprep.subr.mxu0 0.0
    %492 = vmatpush1.msra.mxu0 0.0
    %493 = vmatprep.subr.mxu0 0.0
    %494 = vmatpush1.msra.mxu0 0.0
    %495 = vmatprep.subr.mxu0 0.0
    %496 = vmatpush1.msra.mxu0 0.0
    %497 = vmatprep.subr.mxu0 0.0
    %498 = vmatpush1.msra.mxu0 0.0
    %499 = vmatprep.subr.mxu0 0.0
    %500 = vmatpush1.msra.mxu0 0.0
    %501 = vmatprep.subr.mxu0 0.0
    %502 = vmatpush1.msra.mxu0 0.0
    %503 = vmatprep.subr.mxu0 0.0
    %504 = vmatpush1.msra.mxu0 0.0
    %505 = vmatprep.subr.mxu0 0.0
    %506 = vmatpush1.msra.mxu0 0.0
    %507 = vmatprep.mubr.f32.mxu0 0.0
    %508 = vmatmul.mubr.f32.gmra.mrb[0].mxu0 %v370
    %v509 = vpop.f32.mrb[0].mxu0
    %v510 = vadd.f32 %v338, %v509
    %v511 = vpop.f32.mrb[0].mxu0
    %v512 = vadd.f32 %v340, %v511
    %513 = vdwg.mxu0
    %v515 = vlaneseq
    %v516 = vshrl.u32 %v515, 7
    %v517 = vsub.s32 0, %v516
    %v518 = vrot.slane %v59, %v517
    %v519 = vlaneseq
    %v520 = vshrl.u32 %v519, 7
    %v521 = vsub.s32 1, %v520
    %v522 = vrot.slane %v59, %v521
    %v523 = vlaneseq
    %v524 = vshrl.u32 %v523, 7
    %v525 = vsub.s32 2, %v524
    %v526 = vrot.slane %v59, %v525
    %v527 = vlaneseq
    %v528 = vshrl.u32 %v527, 7
    %v529 = vsub.s32 3, %v528
    %v530 = vrot.slane %v59, %v529
    %v535 = vadd.f32 %v439, %v518
    %v536 = vadd.f32 %v441, %v522
    %v537 = vadd.f32 %v510, %v526
    %v538 = vadd.f32 %v512, %v530
    %v539 = vxor.u32 %v535, 2147483648
    %v540 = vmul.f32 %v539, 1.442695
    %v541 = vpow.pop %v540
    %v542 = vadd.f32 %v541, 1.0
    %v543 = vrcp.pop %v542
    %v544 = vmul.f32 1.0, %v543
    %v545 = vxor.u32 %v536, 2147483648
    %v546 = vmul.f32 %v545, 1.442695
    %v547 = vpow.pop %v546
    %v548 = vadd.f32 %v547, 1.0
    %v549 = vrcp.pop %v548
    %v550 = vmul.f32 1.0, %v549
    %v551 = vmul.f32 %v544, %v538
    %v552 = vadd.f32 %v537, %v551
    %v553 = vtanh.pop %v552
    %v554 = vsub.f32 1.0, %v550
    %v555 = vmul.f32 %v554, %v553
    %v556 = vmul.f32 %v550, 0.0
    %v557 = vadd.f32 %v555, %v556
    %v558 = vld [vmem:[%s1 + $0x1] sm:$0x1]
    %v559 = vld [vmem:[%s1 + $0x11] sm:$0x1]
    %v560 = vld [vmem:[%s1 + $0x21] sm:$0x1]
    %v561 = vld [vmem:[%s1 + $0x31] sm:$0x1]
    %v562 = vld [vmem:[%s1 + $0x41] sm:$0x1]
    %v563 = vld [vmem:[%s1 + $0x51] sm:$0x1]
    %v564 = vld [vmem:[%s1 + $0x61] sm:$0x1]
    %v565 = vld [vmem:[%s1 + $0x71] sm:$0x1]
    %566 = vmatprep.subr.mxu0 %v137
    %567 = vmatpush1.msra.mxu0 %v136
    %568 = vmatprep.subr.mxu0 %v141
    %569 = vmatpush1.msra.mxu0 %v140
    %570 = vmatprep.subr.mxu0 %v145
    %571 = vmatpush1.msra.mxu0 %v144
    %572 = vmatprep.subr.mxu0 %v149
    %573 = vmatpush1.msra.mxu0 %v148
    %574 = vmatprep.subr.mxu0 %v153
    %575 = vmatpush1.msra.mxu0 %v152
    %576 = vmatprep.subr.mxu0 %v157
    %577 = vmatpush1.msra.mxu0 %v156
    %578 = vmatprep.subr.mxu0 %v161
    %579 = vmatpush1.msra.mxu0 %v160
    %580 = vmatprep.subr.mxu0 %v165
    %581 = vmatpush1.msra.mxu0 %v164
    %582 = vmatprep.subr.mxu0 %v169
    %583 = vmatpush1.msra.mxu0 %v168
    %584 = vmatprep.subr.mxu0 %v173
    %585 = vmatpush1.msra.mxu0 %v172
    %586 = vmatprep.subr.mxu0 %v177
    %587 = vmatpush1.msra.mxu0 %v176
    %588 = vmatprep.subr.mxu0 %v181
    %589 = vmatpush1.msra.mxu0 %v180
    %590 = vmatprep.subr.mxu0 %v185
    %591 = vmatpush1.msra.mxu0 %v184
    %592 = vmatprep.subr.mxu0 %v189
    %593 = vmatpush1.msra.mxu0 %v188
    %594 = vmatprep.subr.mxu0 %v193
    %595 = vmatpush1.msra.mxu0 %v192
    %596 = vmatprep.subr.mxu0 %v197
    %597 = vmatpush1.msra.mxu0 %v196
    %598 = vmatprep.subr.mxu0 0.0
    %599 = vmatpush1.msra.mxu0 0.0
    %600 = vmatprep.subr.mxu0 0.0
    %601 = vmatpush1.msra.mxu0 0.0
    %602 = vmatprep.subr.mxu0 0.0
    %603 = vmatpush1.msra.mxu0 0.0
    %604 = vmatprep.subr.mxu0 0.0
    %605 = vmatpush1.msra.mxu0 0.0
    %606 = vmatprep.subr.mxu0 0.0
    %607 = vmatpush1.msra.mxu0 0.0
    %608 = vmatprep.subr.mxu0 0.0
    %609 = vmatpush1.msra.mxu0 0.0
    %610 = vmatprep.subr.mxu0 0.0
    %611 = vmatpush1.msra.mxu0 0.0
    %612 = vmatprep.subr.mxu0 0.0
    %613 = vmatpush1.msra.mxu0 0.0
    %614 = vmatprep.subr.mxu0 0.0
    %615 = vmatpush1.msra.mxu0 0.0
    %616 = vmatprep.subr.mxu0 0.0
    %617 = vmatpush1.msra.mxu0 0.0
    %618 = vmatprep.subr.mxu0 0.0
    %619 = vmatpush1.msra.mxu0 0.0
    %620 = vmatprep.subr.mxu0 0.0
    %621 = vmatpush1.msra.mxu0 0.0
    %622 = vmatprep.subr.mxu0 0.0
    %623 = vmatpush1.msra.mxu0 0.0
    %624 = vmatprep.subr.mxu0 0.0
    %625 = vmatpush1.msra.mxu0 0.0
    %626 = vmatprep.subr.mxu0 0.0
    %627 = vmatpush1.msra.mxu0 0.0
    %628 = vmatprep.subr.mxu0 0.0
    %629 = vmatpush1.msra.mxu0 0.0
    %630 = vmatprep.mubr.f32.mxu0 0.0
    %631 = vmatmul.mubr.f32.gmra.mrb[0].mxu0 %v557
    %v632 = vpop.f32.mrb[0].mxu0
    %v633 = vadd.f32 0.0, %v632
    %v634 = vpop.f32.mrb[0].mxu0
    %v635 = vadd.f32 0.0, %v634
    %636 = vdwg.mxu0
    %637 = vmatprep.subr.mxu0 %v139
    %638 = vmatpush1.msra.mxu0 %v138
    %639 = vmatprep.subr.mxu0 %v143
    %640 = vmatpush1.msra.mxu0 %v142
    %641 = vmatprep.subr.mxu0 %v147
    %642 = vmatpush1.msra.mxu0 %v146
    %643 = vmatprep.subr.mxu0 %v151
    %644 = vmatpush1.msra.mxu0 %v150
    %645 = vmatprep.subr.mxu0 %v155
    %646 = vmatpush1.msra.mxu0 %v154
    %647 = vmatprep.subr.mxu0 %v159
    %648 = vmatpush1.msra.mxu0 %v158
    %649 = vmatprep.subr.mxu0 %v163
    %650 = vmatpush1.msra.mxu0 %v162
    %651 = vmatprep.subr.mxu0 %v167
    %652 = vmatpush1.msra.mxu0 %v166
    %653 = vmatprep.subr.mxu0 %v171
    %654 = vmatpush1.msra.mxu0 %v170
    %655 = vmatprep.subr.mxu0 %v175
    %656 = vmatpush1.msra.mxu0 %v174
    %657 = vmatprep.subr.mxu0 %v179
    %658 = vmatpush1.msra.mxu0 %v178
    %659 = vmatprep.subr.mxu0 %v183
    %660 = vmatpush1.msra.mxu0 %v182
    %661 = vmatprep.subr.mxu0 %v187
    %662 = vmatpush1.msra.mxu0 %v186
    %663 = vmatprep.subr.mxu0 %v191
    %664 = vmatpush1.msra.mxu0 %v190
    %665 = vmatprep.subr.mxu0 %v195
    %666 = vmatpush1.msra.mxu0 %v194
    %667 = vmatprep.subr.mxu0 %v199
    %668 = vmatpush1.msra.mxu0 %v198
    %669 = vmatprep.subr.mxu0 0.0
    %670 = vmatpush1.msra.mxu0 0.0
    %671 = vmatprep.subr.mxu0 0.0
    %672 = vmatpush1.msra.mxu0 0.0
    %673 = vmatprep.subr.mxu0 0.0
    %674 = vmatpush1.msra.mxu0 0.0
    %675 = vmatprep.subr.mxu0 0.0
    %676 = vmatpush1.msra.mxu0 0.0
    %677 = vmatprep.subr.mxu0 0.0
    %678 = vmatpush1.msra.mxu0 0.0
    %679 = vmatprep.subr.mxu0 0.0
    %680 = vmatpush1.msra.mxu0 0.0
    %681 = vmatprep.subr.mxu0 0.0
    %682 = vmatpush1.msra.mxu0 0.0
    %683 = vmatprep.subr.mxu0 0.0
    %684 = vmatpush1.msra.mxu0 0.0
    %685 = vmatprep.subr.mxu0 0.0
    %686 = vmatpush1.msra.mxu0 0.0
    %687 = vmatprep.subr.mxu0 0.0
    %688 = vmatpush1.msra.mxu0 0.0
    %689 = vmatprep.subr.mxu0 0.0
    %690 = vmatpush1.msra.mxu0 0.0
    %691 = vmatprep.subr.mxu0 0.0
    %692 = vmatpush1.msra.mxu0 0.0
    %693 = vmatprep.subr.mxu0 0.0
    %694 = vmatpush1.msra.mxu0 0.0
    %695 = vmatprep.subr.mxu0 0.0
    %696 = vmatpush1.msra.mxu0 0.0
    %697 = vmatprep.subr.mxu0 0.0
    %698 = vmatpush1.msra.mxu0 0.0
    %699 = vmatprep.subr.mxu0 0.0
    %700 = vmatpush1.msra.mxu0 0.0
    %701 = vmatprep.mubr.f32.mxu0 0.0
    %702 = vmatmul.mubr.f32.gmra.mrb[0].mxu0 %v557
    %v703 = vpop.f32.mrb[0].mxu0
    %v704 = vadd.f32 0.0, %v703
    %v705 = vpop.f32.mrb[0].mxu0
    %v706 = vadd.f32 0.0, %v705
    %707 = vdwg.mxu0
    %v716 = vrot.slane %v559, 7
    %v717 = vsel %vm351, %v716, %v558
    %v718 = vrot.slane %v560, 6
    %v719 = vsel %vm354, %v718, %v717
    %v720 = vrot.slane %v561, 5
    %v721 = vsel %vm357, %v720, %v719
    %v722 = vrot.slane %v562, 4
    %v723 = vsel %vm360, %v722, %v721
    %v724 = vrot.slane %v563, 3
    %v725 = vsel %vm363, %v724, %v723
    %v726 = vrot.slane %v564, 2
    %v727 = vsel %vm366, %v726, %v725
    %v728 = vrot.slane %v565, 1
    %v729 = vsel %vm369, %v728, %v727
    %731 = vmatprep.subr.mxu0 %v73
    %732 = vmatpush1.msra.mxu0 %v72
    %733 = vmatprep.subr.mxu0 %v77
    %734 = vmatpush1.msra.mxu0 %v76
    %735 = vmatprep.subr.mxu0 %v81
    %736 = vmatpush1.msra.mxu0 %v80
    %737 = vmatprep.subr.mxu0 %v85
    %738 = vmatpush1.msra.mxu0 %v84
    %739 = vmatprep.subr.mxu0 %v89
    %740 = vmatpush1.msra.mxu0 %v88
    %741 = vmatprep.subr.mxu0 %v93
    %742 = vmatpush1.msra.mxu0 %v92
    %743 = vmatprep.subr.mxu0 %v97
    %744 = vmatpush1.msra.mxu0 %v96
    %745 = vmatprep.subr.mxu0 %v101
    %746 = vmatpush1.msra.mxu0 %v100
    %747 = vmatprep.subr.mxu0 %v105
    %748 = vmatpush1.msra.mxu0 %v104
    %749 = vmatprep.subr.mxu0 %v109
    %750 = vmatpush1.msra.mxu0 %v108
    %751 = vmatprep.subr.mxu0 %v113
    %752 = vmatpush1.msra.mxu0 %v112
    %753 = vmatprep.subr.mxu0 %v117
    %754 = vmatpush1.msra.mxu0 %v116
    %755 = vmatprep.subr.mxu0 %v121
    %756 = vmatpush1.msra.mxu0 %v120
    %757 = vmatprep.subr.mxu0 %v125
    %758 = vmatpush1.msra.mxu0 %v124
    %759 = vmatprep.subr.mxu0 %v129
    %760 = vmatpush1.msra.mxu0 %v128
    %761 = vmatprep.subr.mxu0 %v133
    %762 = vmatpush1.msra.mxu0 %v132
    %763 = vmatprep.subr.mxu0 0.0
    %764 = vmatpush1.msra.mxu0 0.0
    %765 = vmatprep.subr.mxu0 0.0
    %766 = vmatpush1.msra.mxu0 0.0
    %767 = vmatprep.subr.mxu0 0.0
    %768 = vmatpush1.msra.mxu0 0.0
    %769 = vmatprep.subr.mxu0 0.0
    %770 = vmatpush1.msra.mxu0 0.0
    %771 = vmatprep.subr.mxu0 0.0
    %772 = vmatpush1.msra.mxu0 0.0
    %773 = vmatprep.subr.mxu0 0.0
    %774 = vmatpush1.msra.mxu0 0.0
    %775 = vmatprep.subr.mxu0 0.0
    %776 = vmatpush1.msra.mxu0 0.0
    %777 = vmatprep.subr.mxu0 0.0
    %778 = vmatpush1.msra.mxu0 0.0
    %779 = vmatprep.subr.mxu0 0.0
    %780 = vmatpush1.msra.mxu0 0.0
    %781 = vmatprep.subr.mxu0 0.0
    %782 = vmatpush1.msra.mxu0 0.0
    %783 = vmatprep.subr.mxu0 0.0
    %784 = vmatpush1.msra.mxu0 0.0
    %785 = vmatprep.subr.mxu0 0.0
    %786 = vmatpush1.msra.mxu0 0.0
    %787 = vmatprep.subr.mxu0 0.0
    %788 = vmatpush1.msra.mxu0 0.0
    %789 = vmatprep.subr.mxu0 0.0
    %790 = vmatpush1.msra.mxu0 0.0
    %791 = vmatprep.subr.mxu0 0.0
    %792 = vmatpush1.msra.mxu0 0.0
    %793 = vmatprep.subr.mxu0 0.0
    %794 = vmatpush1.msra.mxu0 0.0
    %795 = vmatprep.mubr.f32.mxu0 0.0
    %796 = vmatmul.mubr.f32.gmra.mrb[0].mxu0 %v729
    %v797 = vpop.f32.mrb[0].mxu0
    %v798 = vadd.f32 %v633, %v797
    %v799 = vpop.f32.mrb[0].mxu0
    %v800 = vadd.f32 %v635, %v799
    %801 = vdwg.mxu0
    %802 = vmatprep.subr.mxu0 %v75
    %803 = vmatpush1.msra.mxu0 %v74
    %804 = vmatprep.subr.mxu0 %v79
    %805 = vmatpush1.msra.mxu0 %v78
    %806 = vmatprep.subr.mxu0 %v83
    %807 = vmatpush1.msra.mxu0 %v82
    %808 = vmatprep.subr.mxu0 %v87
    %809 = vmatpush1.msra.mxu0 %v86
    %810 = vmatprep.subr.mxu0 %v91
    %811 = vmatpush1.msra.mxu0 %v90
    %812 = vmatprep.subr.mxu0 %v95
    %813 = vmatpush1.msra.mxu0 %v94
    %814 = vmatprep.subr.mxu0 %v99
    %815 = vmatpush1.msra.mxu0 %v98
    %816 = vmatprep.subr.mxu0 %v103
    %817 = vmatpush1.msra.mxu0 %v102
    %818 = vmatprep.subr.mxu0 %v107
    %819 = vmatpush1.msra.mxu0 %v106
    %820 = vmatprep.subr.mxu0 %v111
    %821 = vmatpush1.msra.mxu0 %v110
    %822 = vmatprep.subr.mxu0 %v115
    %823 = vmatpush1.msra.mxu0 %v114
    %824 = vmatprep.subr.mxu0 %v119
    %825 = vmatpush1.msra.mxu0 %v118
    %826 = vmatprep.subr.mxu0 %v123
    %827 = vmatpush1.msra.mxu0 %v122
    %828 = vmatprep.subr.mxu0 %v127
    %829 = vmatpush1.msra.mxu0 %v126
    %830 = vmatprep.subr.mxu0 %v131
    %831 = vmatpush1.msra.mxu0 %v130
    %832 = vmatprep.subr.mxu0 %v135
    %833 = vmatpush1.msra.mxu0 %v134
    %834 = vmatprep.subr.mxu0 0.0
    %835 = vmatpush1.msra.mxu0 0.0
    %836 = vmatprep.subr.mxu0 0.0
    %837 = vmatpush1.msra.mxu0 0.0
    %838 = vmatprep.subr.mxu0 0.0
    %839 = vmatpush1.msra.mxu0 0.0
    %840 = vmatprep.subr.mxu0 0.0
    %841 = vmatpush1.msra.mxu0 0.0
    %842 = vmatprep.subr.mxu0 0.0
    %843 = vmatpush1.msra.mxu0 0.0
    %844 = vmatprep.subr.mxu0 0.0
    %845 = vmatpush1.msra.mxu0 0.0
    %846 = vmatprep.subr.mxu0 0.0
    %847 = vmatpush1.msra.mxu0 0.0
    %848 = vmatprep.subr.mxu0 0.0
    %849 = vmatpush1.msra.mxu0 0.0
    %850 = vmatprep.subr.mxu0 0.0
    %851 = vmatpush1.msra.mxu0 0.0
    %852 = vmatprep.subr.mxu0 0.0
    %853 = vmatpush1.msra.mxu0 0.0
    %854 = vmatprep.subr.mxu0 0.0
    %855 = vmatpush1.msra.mxu0 0.0
    %856 = vmatprep.subr.mxu0 0.0
    %857 = vmatpush1.msra.mxu0 0.0
    %858 = vmatprep.subr.mxu0 0.0
    %859 = vmatpush1.msra.mxu0 0.0
    %860 = vmatprep.subr.mxu0 0.0
    %861 = vmatpush1.msra.mxu0 0.0
    %862 = vmatprep.subr.mxu0 0.0
    %863 = vmatpush1.msra.mxu0 0.0
    %864 = vmatprep.subr.mxu0 0.0
    %865 = vmatpush1.msra.mxu0 0.0
    %866 = vmatprep.mubr.f32.mxu0 0.0
    %867 = vmatmul.mubr.f32.gmra.mrb[0].mxu0 %v729
    %v868 = vpop.f32.mrb[0].mxu0
    %v869 = vadd.f32 %v704, %v868
    %v870 = vpop.f32.mrb[0].mxu0
    %v871 = vadd.f32 %v706, %v870
    %872 = vdwg.mxu0
    %v873 = vadd.f32 %v798, %v518
    %v874 = vadd.f32 %v800, %v522
    %v875 = vadd.f32 %v869, %v526
    %v876 = vadd.f32 %v871, %v530
    %v877 = vxor.u32 %v873, 2147483648
    %v878 = vmul.f32 %v877, 1.442695
    %v879 = vpow.pop %v878
    %v880 = vadd.f32 %v879, 1.0
    %v881 = vrcp.pop %v880
    %v882 = vmul.f32 1.0, %v881
    %v883 = vxor.u32 %v874, 2147483648
    %v884 = vmul.f32 %v883, 1.442695
    %v885 = vpow.pop %v884
    %v886 = vadd.f32 %v885, 1.0
    %v887 = vrcp.pop %v886
    %v888 = vmul.f32 1.0, %v887
    %v889 = vmul.f32 %v882, %v876
    %v890 = vadd.f32 %v875, %v889
    %v891 = vtanh.pop %v890
    %v892 = vsub.f32 1.0, %v888
    %v893 = vmul.f32 %v892, %v891
    %v894 = vmul.f32 %v888, %v557
    %v895 = vadd.f32 %v893, %v894
    %v896 = vld [vmem:[%s1 + $0x2] sm:$0x1]
    %v897 = vld [vmem:[%s1 + $0x12] sm:$0x1]
    %v898 = vld [vmem:[%s1 + $0x22] sm:$0x1]
    %v899 = vld [vmem:[%s1 + $0x32] sm:$0x1]
    %v900 = vld [vmem:[%s1 + $0x42] sm:$0x1]
    %v901 = vld [vmem:[%s1 + $0x52] sm:$0x1]
    %v902 = vld [vmem:[%s1 + $0x62] sm:$0x1]
    %v903 = vld [vmem:[%s1 + $0x72] sm:$0x1]
    %904 = vmatprep.subr.mxu0 %v137
    %905 = vmatpush1.msra.mxu0 %v136
    %906 = vmatprep.subr.mxu0 %v141
    %907 = vmatpush1.msra.mxu0 %v140
    %908 = vmatprep.subr.mxu0 %v145
    %909 = vmatpush1.msra.mxu0 %v144
    %910 = vmatprep.subr.mxu0 %v149
    %911 = vmatpush1.msra.mxu0 %v148
    %912 = vmatprep.subr.mxu0 %v153
    %913 = vmatpush1.msra.mxu0 %v152
    %914 = vmatprep.subr.mxu0 %v157
    %915 = vmatpush1.msra.mxu0 %v156
    %916 = vmatprep.subr.mxu0 %v161
    %917 = vmatpush1.msra.mxu0 %v160
    %918 = vmatprep.subr.mxu0 %v165
    %919 = vmatpush1.msra.mxu0 %v164
    %920 = vmatprep.subr.mxu0 %v169
    %921 = vmatpush1.msra.mxu0 %v168
    %922 = vmatprep.subr.mxu0 %v173
    %923 = vmatpush1.msra.mxu0 %v172
    %924 = vmatprep.subr.mxu0 %v177
    %925 = vmatpush1.msra.mxu0 %v176
    %926 = vmatprep.subr.mxu0 %v181
    %927 = vmatpush1.msra.mxu0 %v180
    %928 = vmatprep.subr.mxu0 %v185
    %929 = vmatpush1.msra.mxu0 %v184
    %930 = vmatprep.subr.mxu0 %v189
    %931 = vmatpush1.msra.mxu0 %v188
    %932 = vmatprep.subr.mxu0 %v193
    %933 = vmatpush1.msra.mxu0 %v192
    %934 = vmatprep.subr.mxu0 %v197
    %935 = vmatpush1.msra.mxu0 %v196
    %936 = vmatprep.subr.mxu0 0.0
    %937 = vmatpush1.msra.mxu0 0.0
    %938 = vmatprep.subr.mxu0 0.0
    %939 = vmatpush1.msra.mxu0 0.0
    %940 = vmatprep.subr.mxu0 0.0
    %941 = vmatpush1.msra.mxu0 0.0
    %942 = vmatprep.subr.mxu0 0.0
    %943 = vmatpush1.msra.mxu0 0.0
    %944 = vmatprep.subr.mxu0 0.0
    %945 = vmatpush1.msra.mxu0 0.0
    %946 = vmatprep.subr.mxu0 0.0
    %947 = vmatpush1.msra.mxu0 0.0
    %948 = vmatprep.subr.mxu0 0.0
    %949 = vmatpush1.msra.mxu0 0.0
    %950 = vmatprep.subr.mxu0 0.0
    %951 = vmatpush1.msra.mxu0 0.0
    %952 = vmatprep.subr.mxu0 0.0
    %953 = vmatpush1.msra.mxu0 0.0
    %954 = vmatprep.subr.mxu0 0.0
    %955 = vmatpush1.msra.mxu0 0.0
    %956 = vmatprep.subr.mxu0 0.0
    %957 = vmatpush1.msra.mxu0 0.0
    %958 = vmatprep.subr.mxu0 0.0
    %959 = vmatpush1.msra.mxu0 0.0
    %960 = vmatprep.subr.mxu0 0.0
    %961 = vmatpush1.msra.mxu0 0.0
    %962 = vmatprep.subr.mxu0 0.0
    %963 = vmatpush1.msra.mxu0 0.0
    %964 = vmatprep.subr.mxu0 0.0
    %965 = vmatpush1.msra.mxu0 0.0
    %966 = vmatprep.subr.mxu0 0.0
    %967 = vmatpush1.msra.mxu0 0.0
    %968 = vmatprep.mubr.f32.mxu0 0.0
    %969 = vmatmul.mubr.f32.gmra.mrb[0].mxu0 %v895
    %v970 = vpop.f32.mrb[0].mxu0
    %v971 = vadd.f32 0.0, %v970
    %v972 = vpop.f32.mrb[0].mxu0
    %v973 = vadd.f32 0.0, %v972
    %974 = vdwg.mxu0
    %975 = vmatprep.subr.mxu0 %v139
    %976 = vmatpush1.msra.mxu0 %v138
    %977 = vmatprep.subr.mxu0 %v143
    %978 = vmatpush1.msra.mxu0 %v142
    %979 = vmatprep.subr.mxu0 %v147
    %980 = vmatpush1.msra.mxu0 %v146
    %981 = vmatprep.subr.mxu0 %v151
    %982 = vmatpush1.msra.mxu0 %v150
    %983 = vmatprep.subr.mxu0 %v155
    %984 = vmatpush1.msra.mxu0 %v154
    %985 = vmatprep.subr.mxu0 %v159
    %986 = vmatpush1.msra.mxu0 %v158
    %987 = vmatprep.subr.mxu0 %v163
    %988 = vmatpush1.msra.mxu0 %v162
    %989 = vmatprep.subr.mxu0 %v167
    %990 = vmatpush1.msra.mxu0 %v166
    %991 = vmatprep.subr.mxu0 %v171
    %992 = vmatpush1.msra.mxu0 %v170
    %993 = vmatprep.subr.mxu0 %v175
    %994 = vmatpush1.msra.mxu0 %v174
    %995 = vmatprep.subr.mxu0 %v179
    %996 = vmatpush1.msra.mxu0 %v178
    %997 = vmatprep.subr.mxu0 %v183
    %998 = vmatpush1.msra.mxu0 %v182
    %999 = vmatprep.subr.mxu0 %v187
    %1000 = vmatpush1.msra.mxu0 %v186
    %1001 = vmatprep.subr.mxu0 %v191
    %1002 = vmatpush1.msra.mxu0 %v190
    %1003 = vmatprep.subr.mxu0 %v195
    %1004 = vmatpush1.msra.mxu0 %v194
    %1005 = vmatprep.subr.mxu0 %v199
    %1006 = vmatpush1.msra.mxu0 %v198
    %1007 = vmatprep.subr.mxu0 0.0
    %1008 = vmatpush1.msra.mxu0 0.0
    %1009 = vmatprep.subr.mxu0 0.0
    %1010 = vmatpush1.msra.mxu0 0.0
    %1011 = vmatprep.subr.mxu0 0.0
    %1012 = vmatpush1.msra.mxu0 0.0
    %1013 = vmatprep.subr.mxu0 0.0
    %1014 = vmatpush1.msra.mxu0 0.0
    %1015 = vmatprep.subr.mxu0 0.0
    %1016 = vmatpush1.msra.mxu0 0.0
    %1017 = vmatprep.subr.mxu0 0.0
    %1018 = vmatpush1.msra.mxu0 0.0
    %1019 = vmatprep.subr.mxu0 0.0
    %1020 = vmatpush1.msra.mxu0 0.0
    %1021 = vmatprep.subr.mxu0 0.0
    %1022 = vmatpush1.msra.mxu0 0.0
    %1023 = vmatprep.subr.mxu0 0.0
    %1024 = vmatpush1.msra.mxu0 0.0
    %1025 = vmatprep.subr.mxu0 0.0
    %1026 = vmatpush1.msra.mxu0 0.0
    %1027 = vmatprep.subr.mxu0 0.0
    %1028 = vmatpush1.msra.mxu0 0.0
    %1029 = vmatprep.subr.mxu0 0.0
    %1030 = vmatpush1.msra.mxu0 0.0
    %1031 = vmatprep.subr.mxu0 0.0
    %1032 = vmatpush1.msra.mxu0 0.0
    %1033 = vmatprep.subr.mxu0 0.0
    %1034 = vmatpush1.msra.mxu0 0.0
    %1035 = vmatprep.subr.mxu0 0.0
    %1036 = vmatpush1.msra.mxu0 0.0
    %1037 = vmatprep.subr.mxu0 0.0
    %1038 = vmatpush1.msra.mxu0 0.0
    %1039 = vmatprep.mubr.f32.mxu0 0.0
    %1040 = vmatmul.mubr.f32.gmra.mrb[0].mxu0 %v895
    %v1041 = vpop.f32.mrb[0].mxu0
    %v1042 = vadd.f32 0.0, %v1041
    %v1043 = vpop.f32.mrb[0].mxu0
    %v1044 = vadd.f32 0.0, %v1043
    %1045 = vdwg.mxu0
    %v1054 = vrot.slane %v897, 7
    %v1055 = vsel %vm351, %v1054, %v896
    %v1056 = vrot.slane %v898, 6
    %v1057 = vsel %vm354, %v1056, %v1055
    %v1058 = vrot.slane %v899, 5
    %v1059 = vsel %vm357, %v1058, %v1057
    %v1060 = vrot.slane %v900, 4
    %v1061 = vsel %vm360, %v1060, %v1059
    %v1062 = vrot.slane %v901, 3
    %v1063 = vsel %vm363, %v1062, %v1061
    %v1064 = vrot.slane %v902, 2
    %v1065 = vsel %vm366, %v1064, %v1063
    %v1066 = vrot.slane %v903, 1
    %v1067 = vsel %vm369, %v1066, %v1065
    %1069 = vmatprep.subr.mxu0 %v73
    %1070 = vmatpush1.msra.mxu0 %v72
    %1071 = vmatprep.subr.mxu0 %v77
    %1072 = vmatpush1.msra.mxu0 %v76
    %1073 = vmatprep.subr.mxu0 %v81
    %1074 = vmatpush1.msra.mxu0 %v80
    %1075 = vmatprep.subr.mxu0 %v85
    %1076 = vmatpush1.msra.mxu0 %v84
    %1077 = vmatprep.subr.mxu0 %v89
    %1078 = vmatpush1.msra.mxu0 %v88
    %1079 = vmatprep.subr.mxu0 %v93
    %1080 = vmatpush1.msra.mxu0 %v92
    %1081 = vmatprep.subr.mxu0 %v97
    %1082 = vmatpush1.msra.mxu0 %v96
    %1083 = vmatprep.subr.mxu0 %v101
    %1084 = vmatpush1.msra.mxu0 %v100
    %1085 = vmatprep.subr.mxu0 %v105
    %1086 = vmatpush1.msra.mxu0 %v104
    %1087 = vmatprep.subr.mxu0 %v109
    %1088 = vmatpush1.msra.mxu0 %v108
    %1089 = vmatprep.subr.mxu0 %v113
    %1090 = vmatpush1.msra.mxu0 %v112
    %1091 = vmatprep.subr.mxu0 %v117
    %1092 = vmatpush1.msra.mxu0 %v116
    %1093 = vmatprep.subr.mxu0 %v121
    %1094 = vmatpush1.msra.mxu0 %v120
    %1095 = vmatprep.subr.mxu0 %v125
    %1096 = vmatpush1.msra.mxu0 %v124
    %1097 = vmatprep.subr.mxu0 %v129
    %1098 = vmatpush1.msra.mxu0 %v128
    %1099 = vmatprep.subr.mxu0 %v133
    %1100 = vmatpush1.msra.mxu0 %v132
    %1101 = vmatprep.subr.mxu0 0.0
    %1102 = vmatpush1.msra.mxu0 0.0
    %1103 = vmatprep.subr.mxu0 0.0
    %1104 = vmatpush1.msra.mxu0 0.0
    %1105 = vmatprep.subr.mxu0 0.0
    %1106 = vmatpush1.msra.mxu0 0.0
    %1107 = vmatprep.subr.mxu0 0.0
    %1108 = vmatpush1.msra.mxu0 0.0
    %1109 = vmatprep.subr.mxu0 0.0
    %1110 = vmatpush1.msra.mxu0 0.0
    %1111 = vmatprep.subr.mxu0 0.0
    %1112 = vmatpush1.msra.mxu0 0.0
    %1113 = vmatprep.subr.mxu0 0.0
    %1114 = vmatpush1.msra.mxu0 0.0
    %1115 = vmatprep.subr.mxu0 0.0
    %1116 = vmatpush1.msra.mxu0 0.0
    %1117 = vmatprep.subr.mxu0 0.0
    %1118 = vmatpush1.msra.mxu0 0.0
    %1119 = vmatprep.subr.mxu0 0.0
    %1120 = vmatpush1.msra.mxu0 0.0
    %1121 = vmatprep.subr.mxu0 0.0
    %1122 = vmatpush1.msra.mxu0 0.0
    %1123 = vmatprep.subr.mxu0 0.0
    %1124 = vmatpush1.msra.mxu0 0.0
    %1125 = vmatprep.subr.mxu0 0.0
    %1126 = vmatpush1.msra.mxu0 0.0
    %1127 = vmatprep.subr.mxu0 0.0
    %1128 = vmatpush1.msra.mxu0 0.0
    %1129 = vmatprep.subr.mxu0 0.0
    %1130 = vmatpush1.msra.mxu0 0.0
    %1131 = vmatprep.subr.mxu0 0.0
    %1132 = vmatpush1.msra.mxu0 0.0
    %1133 = vmatprep.mubr.f32.mxu0 0.0
    %1134 = vmatmul.mubr.f32.gmra.mrb[0].mxu0 %v1067
    %v1135 = vpop.f32.mrb[0].mxu0
    %v1136 = vadd.f32 %v971, %v1135
    %v1137 = vpop.f32.mrb[0].mxu0
    %v1138 = vadd.f32 %v973, %v1137
    %1139 = vdwg.mxu0
    %1140 = vmatprep.subr.mxu0 %v75
    %1141 = vmatpush1.msra.mxu0 %v74
    %1142 = vmatprep.subr.mxu0 %v79
    %1143 = vmatpush1.msra.mxu0 %v78
    %1144 = vmatprep.subr.mxu0 %v83
    %1145 = vmatpush1.msra.mxu0 %v82
    %1146 = vmatprep.subr.mxu0 %v87
    %1147 = vmatpush1.msra.mxu0 %v86
    %1148 = vmatprep.subr.mxu0 %v91
    %1149 = vmatpush1.msra.mxu0 %v90
    %1150 = vmatprep.subr.mxu0 %v95
    %1151 = vmatpush1.msra.mxu0 %v94
    %1152 = vmatprep.subr.mxu0 %v99
    %1153 = vmatpush1.msra.mxu0 %v98
    %1154 = vmatprep.subr.mxu0 %v103
    %1155 = vmatpush1.msra.mxu0 %v102
    %1156 = vmatprep.subr.mxu0 %v107
    %1157 = vmatpush1.msra.mxu0 %v106
    %1158 = vmatprep.subr.mxu0 %v111
    %1159 = vmatpush1.msra.mxu0 %v110
    %1160 = vmatprep.subr.mxu0 %v115
    %1161 = vmatpush1.msra.mxu0 %v114
    %1162 = vmatprep.subr.mxu0 %v119
    %1163 = vmatpush1.msra.mxu0 %v118
    %1164 = vmatprep.subr.mxu0 %v123
    %1165 = vmatpush1.msra.mxu0 %v122
    %1166 = vmatprep.subr.mxu0 %v127
    %1167 = vmatpush1.msra.mxu0 %v126
    %1168 = vmatprep.subr.mxu0 %v131
    %1169 = vmatpush1.msra.mxu0 %v130
    %1170 = vmatprep.subr.mxu0 %v135
    %1171 = vmatpush1.msra.mxu0 %v134
    %1172 = vmatprep.subr.mxu0 0.0
    %1173 = vmatpush1.msra.mxu0 0.0
    %1174 = vmatprep.subr.mxu0 0.0
    %1175 = vmatpush1.msra.mxu0 0.0
    %1176 = vmatprep.subr.mxu0 0.0
    %1177 = vmatpush1.msra.mxu0 0.0
    %1178 = vmatprep.subr.mxu0 0.0
    %1179 = vmatpush1.msra.mxu0 0.0
    %1180 = vmatprep.subr.mxu0 0.0
    %1181 = vmatpush1.msra.mxu0 0.0
    %1182 = vmatprep.subr.mxu0 0.0
    %1183 = vmatpush1.msra.mxu0 0.0
    %1184 = vmatprep.subr.mxu0 0.0
    %1185 = vmatpush1.msra.mxu0 0.0
    %1186 = vmatprep.subr.mxu0 0.0
    %1187 = vmatpush1.msra.mxu0 0.0
    %1188 = vmatprep.subr.mxu0 0.0
    %1189 = vmatpush1.msra.mxu0 0.0
    %1190 = vmatprep.subr.mxu0 0.0
    %1191 = vmatpush1.msra.mxu0 0.0
    %1192 = vmatprep.subr.mxu0 0.0
    %1193 = vmatpush1.msra.mxu0 0.0
    %1194 = vmatprep.subr.mxu0 0.0
    %1195 = vmatpush1.msra.mxu0 0.0
    %1196 = vmatprep.subr.mxu0 0.0
    %1197 = vmatpush1.msra.mxu0 0.0
    %1198 = vmatprep.subr.mxu0 0.0
    %1199 = vmatpush1.msra.mxu0 0.0
    %1200 = vmatprep.subr.mxu0 0.0
    %1201 = vmatpush1.msra.mxu0 0.0
    %1202 = vmatprep.subr.mxu0 0.0
    %1203 = vmatpush1.msra.mxu0 0.0
    %1204 = vmatprep.mubr.f32.mxu0 0.0
    %1205 = vmatmul.mubr.f32.gmra.mrb[0].mxu0 %v1067
    %v1206 = vpop.f32.mrb[0].mxu0
    %v1207 = vadd.f32 %v1042, %v1206
    %v1208 = vpop.f32.mrb[0].mxu0
    %v1209 = vadd.f32 %v1044, %v1208
    %1210 = vdwg.mxu0
    %v1211 = vadd.f32 %v1136, %v518
    %v1212 = vadd.f32 %v1138, %v522
    %v1213 = vadd.f32 %v1207, %v526
    %v1214 = vadd.f32 %v1209, %v530
    %v1215 = vxor.u32 %v1211, 2147483648
    %v1216 = vmul.f32 %v1215, 1.442695
    %v1217 = vpow.pop %v1216
    %v1218 = vadd.f32 %v1217, 1.0
    %v1219 = vrcp.pop %v1218
    %v1220 = vmul.f32 1.0, %v1219
    %v1221 = vxor.u32 %v1212, 2147483648
    %v1222 = vmul.f32 %v1221, 1.442695
    %v1223 = vpow.pop %v1222
    %v1224 = vadd.f32 %v1223, 1.0
    %v1225 = vrcp.pop %v1224
    %v1226 = vmul.f32 1.0, %v1225
    %v1227 = vmul.f32 %v1220, %v1214
    %v1228 = vadd.f32 %v1213, %v1227
    %v1229 = vtanh.pop %v1228
    %v1230 = vsub.f32 1.0, %v1226
    %v1231 = vmul.f32 %v1230, %v1229
    %v1232 = vmul.f32 %v1226, %v895
    %v1233 = vadd.f32 %v1231, %v1232
    %v1234 = vld [vmem:[%s1 + $0x3] sm:$0x1]
    %v1235 = vld [vmem:[%s1 + $0x13] sm:$0x1]
    %v1236 = vld [vmem:[%s1 + $0x23] sm:$0x1]
    %v1237 = vld [vmem:[%s1 + $0x33] sm:$0x1]
    %v1238 = vld [vmem:[%s1 + $0x43] sm:$0x1]
    %v1239 = vld [vmem:[%s1 + $0x53] sm:$0x1]
    %v1240 = vld [vmem:[%s1 + $0x63] sm:$0x1]
    %v1241 = vld [vmem:[%s1 + $0x73] sm:$0x1]
    %1242 = vmatprep.subr.mxu0 %v137
    %1243 = vmatpush1.msra.mxu0 %v136
    %1244 = vmatprep.subr.mxu0 %v141
    %1245 = vmatpush1.msra.mxu0 %v140
    %1246 = vmatprep.subr.mxu0 %v145
    %1247 = vmatpush1.msra.mxu0 %v144
    %1248 = vmatprep.subr.mxu0 %v149
    %1249 = vmatpush1.msra.mxu0 %v148
    %1250 = vmatprep.subr.mxu0 %v153
    %1251 = vmatpush1.msra.mxu0 %v152
    %1252 = vmatprep.subr.mxu0 %v157
    %1253 = vmatpush1.msra.mxu0 %v156
    %1254 = vmatprep.subr.mxu0 %v161
    %1255 = vmatpush1.msra.mxu0 %v160
    %1256 = vmatprep.subr.mxu0 %v165
    %1257 = vmatpush1.msra.mxu0 %v164
    %1258 = vmatprep.subr.mxu0 %v169
    %1259 = vmatpush1.msra.mxu0 %v168
    %1260 = vmatprep.subr.mxu0 %v173
    %1261 = vmatpush1.msra.mxu0 %v172
    %1262 = vmatprep.subr.mxu0 %v177
    %1263 = vmatpush1.msra.mxu0 %v176
    %1264 = vmatprep.subr.mxu0 %v181
    %1265 = vmatpush1.msra.mxu0 %v180
    %1266 = vmatprep.subr.mxu0 %v185
    %1267 = vmatpush1.msra.mxu0 %v184
    %1268 = vmatprep.subr.mxu0 %v189
    %1269 = vmatpush1.msra.mxu0 %v188
    %1270 = vmatprep.subr.mxu0 %v193
    %1271 = vmatpush1.msra.mxu0 %v192
    %1272 = vmatprep.subr.mxu0 %v197
    %1273 = vmatpush1.msra.mxu0 %v196
    %1274 = vmatprep.subr.mxu0 0.0
    %1275 = vmatpush1.msra.mxu0 0.0
    %1276 = vmatprep.subr.mxu0 0.0
    %1277 = vmatpush1.msra.mxu0 0.0
    %1278 = vmatprep.subr.mxu0 0.0
    %1279 = vmatpush1.msra.mxu0 0.0
    %1280 = vmatprep.subr.mxu0 0.0
    %1281 = vmatpush1.msra.mxu0 0.0
    %1282 = vmatprep.subr.mxu0 0.0
    %1283 = vmatpush1.msra.mxu0 0.0
    %1284 = vmatprep.subr.mxu0 0.0
    %1285 = vmatpush1.msra.mxu0 0.0
    %1286 = vmatprep.subr.mxu0 0.0
    %1287 = vmatpush1.msra.mxu0 0.0
    %1288 = vmatprep.subr.mxu0 0.0
    %1289 = vmatpush1.msra.mxu0 0.0
    %1290 = vmatprep.subr.mxu0 0.0
    %1291 = vmatpush1.msra.mxu0 0.0
    %1292 = vmatprep.subr.mxu0 0.0
    %1293 = vmatpush1.msra.mxu0 0.0
    %1294 = vmatprep.subr.mxu0 0.0
    %1295 = vmatpush1.msra.mxu0 0.0
    %1296 = vmatprep.subr.mxu0 0.0
    %1297 = vmatpush1.msra.mxu0 0.0
    %1298 = vmatprep.subr.mxu0 0.0
    %1299 = vmatpush1.msra.mxu0 0.0
    %1300 = vmatprep.subr.mxu0 0.0
    %1301 = vmatpush1.msra.mxu0 0.0
    %1302 = vmatprep.subr.mxu0 0.0
    %1303 = vmatpush1.msra.mxu0 0.0
    %1304 = vmatprep.subr.mxu0 0.0
    %1305 = vmatpush1.msra.mxu0 0.0
    %1306 = vmatprep.mubr.f32.mxu0 0.0
    %1307 = vmatmul.mubr.f32.gmra.mrb[0].mxu0 %v1233
    %v1308 = vpop.f32.mrb[0].mxu0
    %v1309 = vadd.f32 0.0, %v1308
    %v1310 = vpop.f32.mrb[0].mxu0
    %v1311 = vadd.f32 0.0, %v1310
    %1312 = vdwg.mxu0
    %1313 = vmatprep.subr.mxu0 %v139
    %1314 = vmatpush1.msra.mxu0 %v138
    %1315 = vmatprep.subr.mxu0 %v143
    %1316 = vmatpush1.msra.mxu0 %v142
    %1317 = vmatprep.subr.mxu0 %v147
    %1318 = vmatpush1.msra.mxu0 %v146
    %1319 = vmatprep.subr.mxu0 %v151
    %1320 = vmatpush1.msra.mxu0 %v150
    %1321 = vmatprep.subr.mxu0 %v155
    %1322 = vmatpush1.msra.mxu0 %v154
    %1323 = vmatprep.subr.mxu0 %v159
    %1324 = vmatpush1.msra.mxu0 %v158
    %1325 = vmatprep.subr.mxu0 %v163
    %1326 = vmatpush1.msra.mxu0 %v162
    %1327 = vmatprep.subr.mxu0 %v167
    %1328 = vmatpush1.msra.mxu0 %v166
    %1329 = vmatprep.subr.mxu0 %v171
    %1330 = vmatpush1.msra.mxu0 %v170
    %1331 = vmatprep.subr.mxu0 %v175
    %1332 = vmatpush1.msra.mxu0 %v174
    %1333 = vmatprep.subr.mxu0 %v179
    %1334 = vmatpush1.msra.mxu0 %v178
    %1335 = vmatprep.subr.mxu0 %v183
    %1336 = vmatpush1.msra.mxu0 %v182
    %1337 = vmatprep.subr.mxu0 %v187
    %1338 = vmatpush1.msra.mxu0 %v186
    %1339 = vmatprep.subr.mxu0 %v191
    %1340 = vmatpush1.msra.mxu0 %v190
    %1341 = vmatprep.subr.mxu0 %v195
    %1342 = vmatpush1.msra.mxu0 %v194
    %1343 = vmatprep.subr.mxu0 %v199
    %1344 = vmatpush1.msra.mxu0 %v198
    %1345 = vmatprep.subr.mxu0 0.0
    %1346 = vmatpush1.msra.mxu0 0.0
    %1347 = vmatprep.subr.mxu0 0.0
    %1348 = vmatpush1.msra.mxu0 0.0
    %1349 = vmatprep.subr.mxu0 0.0
    %1350 = vmatpush1.msra.mxu0 0.0
    %1351 = vmatprep.subr.mxu0 0.0
    %1352 = vmatpush1.msra.mxu0 0.0
    %1353 = vmatprep.subr.mxu0 0.0
    %1354 = vmatpush1.msra.mxu0 0.0
    %1355 = vmatprep.subr.mxu0 0.0
    %1356 = vmatpush1.msra.mxu0 0.0
    %1357 = vmatprep.subr.mxu0 0.0
    %1358 = vmatpush1.msra.mxu0 0.0
    %1359 = vmatprep.subr.mxu0 0.0
    %1360 = vmatpush1.msra.mxu0 0.0
    %1361 = vmatprep.subr.mxu0 0.0
    %1362 = vmatpush1.msra.mxu0 0.0
    %1363 = vmatprep.subr.mxu0 0.0
    %1364 = vmatpush1.msra.mxu0 0.0
    %1365 = vmatprep.subr.mxu0 0.0
    %1366 = vmatpush1.msra.mxu0 0.0
    %1367 = vmatprep.subr.mxu0 0.0
    %1368 = vmatpush1.msra.mxu0 0.0
    %1369 = vmatprep.subr.mxu0 0.0
    %1370 = vmatpush1.msra.mxu0 0.0
    %1371 = vmatprep.subr.mxu0 0.0
    %1372 = vmatpush1.msra.mxu0 0.0
    %1373 = vmatprep.subr.mxu0 0.0
    %1374 = vmatpush1.msra.mxu0 0.0
    %1375 = vmatprep.subr.mxu0 0.0
    %1376 = vmatpush1.msra.mxu0 0.0
    %1377 = vmatprep.mubr.f32.mxu0 0.0
    %1378 = vmatmul.mubr.f32.gmra.mrb[0].mxu0 %v1233
    %v1379 = vpop.f32.mrb[0].mxu0
    %v1380 = vadd.f32 0.0, %v1379
    %v1381 = vpop.f32.mrb[0].mxu0
    %v1382 = vadd.f32 0.0, %v1381
    %1383 = vdwg.mxu0
    %v1392 = vrot.slane %v1235, 7
    %v1393 = vsel %vm351, %v1392, %v1234
    %v1394 = vrot.slane %v1236, 6
    %v1395 = vsel %vm354, %v1394, %v1393
    %v1396 = vrot.slane %v1237, 5
    %v1397 = vsel %vm357, %v1396, %v1395
    %v1398 = vrot.slane %v1238, 4
    %v1399 = vsel %vm360, %v1398, %v1397
    %v1400 = vrot.slane %v1239, 3
    %v1401 = vsel %vm363, %v1400, %v1399
    %v1402 = vrot.slane %v1240, 2
    %v1403 = vsel %vm366, %v1402, %v1401
    %v1404 = vrot.slane %v1241, 1
    %v1405 = vsel %vm369, %v1404, %v1403
    %1407 = vmatprep.subr.mxu0 %v73
    %1408 = vmatpush1.msra.mxu0 %v72
    %1409 = vmatprep.subr.mxu0 %v77
    %1410 = vmatpush1.msra.mxu0 %v76
    %1411 = vmatprep.subr.mxu0 %v81
    %1412 = vmatpush1.msra.mxu0 %v80
    %1413 = vmatprep.subr.mxu0 %v85
    %1414 = vmatpush1.msra.mxu0 %v84
    %1415 = vmatprep.subr.mxu0 %v89
    %1416 = vmatpush1.msra.mxu0 %v88
    %1417 = vmatprep.subr.mxu0 %v93
    %1418 = vmatpush1.msra.mxu0 %v92
    %1419 = vmatprep.subr.mxu0 %v97
    %1420 = vmatpush1.msra.mxu0 %v96
    %1421 = vmatprep.subr.mxu0 %v101
    %1422 = vmatpush1.msra.mxu0 %v100
    %1423 = vmatprep.subr.mxu0 %v105
    %1424 = vmatpush1.msra.mxu0 %v104
    %1425 = vmatprep.subr.mxu0 %v109
    %1426 = vmatpush1.msra.mxu0 %v108
    %1427 = vmatprep.subr.mxu0 %v113
    %1428 = vmatpush1.msra.mxu0 %v112
    %1429 = vmatprep.subr.mxu0 %v117
    %1430 = vmatpush1.msra.mxu0 %v116
    %1431 = vmatprep.subr.mxu0 %v121
    %1432 = vmatpush1.msra.mxu0 %v120
    %1433 = vmatprep.subr.mxu0 %v125
    %1434 = vmatpush1.msra.mxu0 %v124
    %1435 = vmatprep.subr.mxu0 %v129
    %1436 = vmatpush1.msra.mxu0 %v128
    %1437 = vmatprep.subr.mxu0 %v133
    %1438 = vmatpush1.msra.mxu0 %v132
    %1439 = vmatprep.subr.mxu0 0.0
    %1440 = vmatpush1.msra.mxu0 0.0
    %1441 = vmatprep.subr.mxu0 0.0
    %1442 = vmatpush1.msra.mxu0 0.0
    %1443 = vmatprep.subr.mxu0 0.0
    %1444 = vmatpush1.msra.mxu0 0.0
    %1445 = vmatprep.subr.mxu0 0.0
    %1446 = vmatpush1.msra.mxu0 0.0
    %1447 = vmatprep.subr.mxu0 0.0
    %1448 = vmatpush1.msra.mxu0 0.0
    %1449 = vmatprep.subr.mxu0 0.0
    %1450 = vmatpush1.msra.mxu0 0.0
    %1451 = vmatprep.subr.mxu0 0.0
    %1452 = vmatpush1.msra.mxu0 0.0
    %1453 = vmatprep.subr.mxu0 0.0
    %1454 = vmatpush1.msra.mxu0 0.0
    %1455 = vmatprep.subr.mxu0 0.0
    %1456 = vmatpush1.msra.mxu0 0.0
    %1457 = vmatprep.subr.mxu0 0.0
    %1458 = vmatpush1.msra.mxu0 0.0
    %1459 = vmatprep.subr.mxu0 0.0
    %1460 = vmatpush1.msra.mxu0 0.0
    %1461 = vmatprep.subr.mxu0 0.0
    %1462 = vmatpush1.msra.mxu0 0.0
    %1463 = vmatprep.subr.mxu0 0.0
    %1464 = vmatpush1.msra.mxu0 0.0
    %1465 = vmatprep.subr.mxu0 0.0
    %1466 = vmatpush1.msra.mxu0 0.0
    %1467 = vmatprep.subr.mxu0 0.0
    %1468 = vmatpush1.msra.mxu0 0.0
    %1469 = vmatprep.subr.mxu0 0.0
    %1470 = vmatpush1.msra.mxu0 0.0
    %1471 = vmatprep.mubr.f32.mxu0 0.0
    %1472 = vmatmul.mubr.f32.gmra.mrb[0].mxu0 %v1405
    %v1473 = vpop.f32.mrb[0].mxu0
    %v1474 = vadd.f32 %v1309, %v1473
    %v1475 = vpop.f32.mrb[0].mxu0
    %v1476 = vadd.f32 %v1311, %v1475
    %1477 = vdwg.mxu0
    %1478 = vmatprep.subr.mxu0 %v75
    %1479 = vmatpush1.msra.mxu0 %v74
    %1480 = vmatprep.subr.mxu0 %v79
    %1481 = vmatpush1.msra.mxu0 %v78
    %1482 = vmatprep.subr.mxu0 %v83
    %1483 = vmatpush1.msra.mxu0 %v82
    %1484 = vmatprep.subr.mxu0 %v87
    %1485 = vmatpush1.msra.mxu0 %v86
    %1486 = vmatprep.subr.mxu0 %v91
    %1487 = vmatpush1.msra.mxu0 %v90
    %1488 = vmatprep.subr.mxu0 %v95
    %1489 = vmatpush1.msra.mxu0 %v94
    %1490 = vmatprep.subr.mxu0 %v99
    %1491 = vmatpush1.msra.mxu0 %v98
    %1492 = vmatprep.subr.mxu0 %v103
    %1493 = vmatpush1.msra.mxu0 %v102
    %1494 = vmatprep.subr.mxu0 %v107
    %1495 = vmatpush1.msra.mxu0 %v106
    %1496 = vmatprep.subr.mxu0 %v111
    %1497 = vmatpush1.msra.mxu0 %v110
    %1498 = vmatprep.subr.mxu0 %v115
    %1499 = vmatpush1.msra.mxu0 %v114
    %1500 = vmatprep.subr.mxu0 %v119
    %1501 = vmatpush1.msra.mxu0 %v118
    %1502 = vmatprep.subr.mxu0 %v123
    %1503 = vmatpush1.msra.mxu0 %v122
    %1504 = vmatprep.subr.mxu0 %v127
    %1505 = vmatpush1.msra.mxu0 %v126
    %1506 = vmatprep.subr.mxu0 %v131
    %1507 = vmatpush1.msra.mxu0 %v130
    %1508 = vmatprep.subr.mxu0 %v135
    %1509 = vmatpush1.msra.mxu0 %v134
    %1510 = vmatprep.subr.mxu0 0.0
    %1511 = vmatpush1.msra.mxu0 0.0
    %1512 = vmatprep.subr.mxu0 0.0
    %1513 = vmatpush1.msra.mxu0 0.0
    %1514 = vmatprep.subr.mxu0 0.0
    %1515 = vmatpush1.msra.mxu0 0.0
    %1516 = vmatprep.subr.mxu0 0.0
    %1517 = vmatpush1.msra.mxu0 0.0
    %1518 = vmatprep.subr.mxu0 0.0
    %1519 = vmatpush1.msra.mxu0 0.0
    %1520 = vmatprep.subr.mxu0 0.0
    %1521 = vmatpush1.msra.mxu0 0.0
    %1522 = vmatprep.subr.mxu0 0.0
    %1523 = vmatpush1.msra.mxu0 0.0
    %1524 = vmatprep.subr.mxu0 0.0
    %1525 = vmatpush1.msra.mxu0 0.0
    %1526 = vmatprep.subr.mxu0 0.0
    %1527 = vmatpush1.msra.mxu0 0.0
    %1528 = vmatprep.subr.mxu0 0.0
    %1529 = vmatpush1.msra.mxu0 0.0
    %1530 = vmatprep.subr.mxu0 0.0
    %1531 = vmatpush1.msra.mxu0 0.0
    %1532 = vmatprep.subr.mxu0 0.0
    %1533 = vmatpush1.msra.mxu0 0.0
    %1534 = vmatprep.subr.mxu0 0.0
    %1535 = vmatpush1.msra.mxu0 0.0
    %1536 = vmatprep.subr.mxu0 0.0
    %1537 = vmatpush1.msra.mxu0 0.0
    %1538 = vmatprep.subr.mxu0 0.0
    %1539 = vmatpush1.msra.mxu0 0.0
    %1540 = vmatprep.subr.mxu0 0.0
    %1541 = vmatpush1.msra.mxu0 0.0
    %1542 = vmatprep.mubr.f32.mxu0 0.0
    %1543 = vmatmul.mubr.f32.gmra.mrb[0].mxu0 %v1405
    %v1544 = vpop.f32.mrb[0].mxu0
    %v1545 = vadd.f32 %v1380, %v1544
    %v1546 = vpop.f32.mrb[0].mxu0
    %v1547 = vadd.f32 %v1382, %v1546
    %1548 = vdwg.mxu0
    %v1549 = vadd.f32 %v1474, %v518
    %v1550 = vadd.f32 %v1476, %v522
    %v1551 = vadd.f32 %v1545, %v526
    %v1552 = vadd.f32 %v1547, %v530
    %v1553 = vxor.u32 %v1549, 2147483648
    %v1554 = vmul.f32 %v1553, 1.442695
    %v1555 = vpow.pop %v1554
    %v1556 = vadd.f32 %v1555, 1.0
    %v1557 = vrcp.pop %v1556
    %v1558 = vmul.f32 1.0, %v1557
    %v1559 = vxor.u32 %v1550, 2147483648
    %v1560 = vmul.f32 %v1559, 1.442695
    %v1561 = vpow.pop %v1560
    %v1562 = vadd.f32 %v1561, 1.0
    %v1563 = vrcp.pop %v1562
    %v1564 = vmul.f32 1.0, %v1563
    %v1565 = vmul.f32 %v1558, %v1552
    %v1566 = vadd.f32 %v1551, %v1565
    %v1567 = vtanh.pop %v1566
    %v1568 = vsub.f32 1.0, %v1564
    %v1569 = vmul.f32 %v1568, %v1567
    %v1570 = vmul.f32 %v1564, %v1233
    %v1571 = vadd.f32 %v1569, %v1570
    %v1572 = vld [vmem:[%s1 + $0x4] sm:$0x1]
    %v1573 = vld [vmem:[%s1 + $0x14] sm:$0x1]
    %v1574 = vld [vmem:[%s1 + $0x24] sm:$0x1]
    %v1575 = vld [vmem:[%s1 + $0x34] sm:$0x1]
    %v1576 = vld [vmem:[%s1 + $0x44] sm:$0x1]
    %v1577 = vld [vmem:[%s1 + $0x54] sm:$0x1]
    %v1578 = vld [vmem:[%s1 + $0x64] sm:$0x1]
    %v1579 = vld [vmem:[%s1 + $0x74] sm:$0x1]
    %1580 = vmatprep.subr.mxu0 %v137
    %1581 = vmatpush1.msra.mxu0 %v136
    %1582 = vmatprep.subr.mxu0 %v141
    %1583 = vmatpush1.msra.mxu0 %v140
    %1584 = vmatprep.subr.mxu0 %v145
    %1585 = vmatpush1.msra.mxu0 %v144
    %1586 = vmatprep.subr.mxu0 %v149
    %1587 = vmatpush1.msra.mxu0 %v148
    %1588 = vmatprep.subr.mxu0 %v153
    %1589 = vmatpush1.msra.mxu0 %v152
    %1590 = vmatprep.subr.mxu0 %v157
    %1591 = vmatpush1.msra.mxu0 %v156
    %1592 = vmatprep.subr.mxu0 %v161
    %1593 = vmatpush1.msra.mxu0 %v160
    %1594 = vmatprep.subr.mxu0 %v165
    %1595 = vmatpush1.msra.mxu0 %v164
    %1596 = vmatprep.subr.mxu0 %v169
    %1597 = vmatpush1.msra.mxu0 %v168
    %1598 = vmatprep.subr.mxu0 %v173
    %1599 = vmatpush1.msra.mxu0 %v172
    %1600 = vmatprep.subr.mxu0 %v177
    %1601 = vmatpush1.msra.mxu0 %v176
    %1602 = vmatprep.subr.mxu0 %v181
    %1603 = vmatpush1.msra.mxu0 %v180
    %1604 = vmatprep.subr.mxu0 %v185
    %1605 = vmatpush1.msra.mxu0 %v184
    %1606 = vmatprep.subr.mxu0 %v189
    %1607 = vmatpush1.msra.mxu0 %v188
    %1608 = vmatprep.subr.mxu0 %v193
    %1609 = vmatpush1.msra.mxu0 %v192
    %1610 = vmatprep.subr.mxu0 %v197
    %1611 = vmatpush1.msra.mxu0 %v196
    %1612 = vmatprep.subr.mxu0 0.0
    %1613 = vmatpush1.msra.mxu0 0.0
    %1614 = vmatprep.subr.mxu0 0.0
    %1615 = vmatpush1.msra.mxu0 0.0
    %1616 = vmatprep.subr.mxu0 0.0
    %1617 = vmatpush1.msra.mxu0 0.0
    %1618 = vmatprep.subr.mxu0 0.0
    %1619 = vmatpush1.msra.mxu0 0.0
    %1620 = vmatprep.subr.mxu0 0.0
    %1621 = vmatpush1.msra.mxu0 0.0
    %1622 = vmatprep.subr.mxu0 0.0
    %1623 = vmatpush1.msra.mxu0 0.0
    %1624 = vmatprep.subr.mxu0 0.0
    %1625 = vmatpush1.msra.mxu0 0.0
    %1626 = vmatprep.subr.mxu0 0.0
    %1627 = vmatpush1.msra.mxu0 0.0
    %1628 = vmatprep.subr.mxu0 0.0
    %1629 = vmatpush1.msra.mxu0 0.0
    %1630 = vmatprep.subr.mxu0 0.0
    %1631 = vmatpush1.msra.mxu0 0.0
    %1632 = vmatprep.subr.mxu0 0.0
    %1633 = vmatpush1.msra.mxu0 0.0
    %1634 = vmatprep.subr.mxu0 0.0
    %1635 = vmatpush1.msra.mxu0 0.0
    %1636 = vmatprep.subr.mxu0 0.0
    %1637 = vmatpush1.msra.mxu0 0.0
    %1638 = vmatprep.subr.mxu0 0.0
    %1639 = vmatpush1.msra.mxu0 0.0
    %1640 = vmatprep.subr.mxu0 0.0
    %1641 = vmatpush1.msra.mxu0 0.0
    %1642 = vmatprep.subr.mxu0 0.0
    %1643 = vmatpush1.msra.mxu0 0.0
    %1644 = vmatprep.mubr.f32.mxu0 0.0
    %1645 = vmatmul.mubr.f32.gmra.mrb[0].mxu0 %v1571
    %v1646 = vpop.f32.mrb[0].mxu0
    %v1647 = vadd.f32 0.0, %v1646
    %v1648 = vpop.f32.mrb[0].mxu0
    %v1649 = vadd.f32 0.0, %v1648
    %1650 = vdwg.mxu0
    %1651 = vmatprep.subr.mxu0 %v139
    %1652 = vmatpush1.msra.mxu0 %v138
    %1653 = vmatprep.subr.mxu0 %v143
    %1654 = vmatpush1.msra.mxu0 %v142
    %1655 = vmatprep.subr.mxu0 %v147
    %1656 = vmatpush1.msra.mxu0 %v146
    %1657 = vmatprep.subr.mxu0 %v151
    %1658 = vmatpush1.msra.mxu0 %v150
    %1659 = vmatprep.subr.mxu0 %v155
    %1660 = vmatpush1.msra.mxu0 %v154
    %1661 = vmatprep.subr.mxu0 %v159
    %1662 = vmatpush1.msra.mxu0 %v158
    %1663 = vmatprep.subr.mxu0 %v163
    %1664 = vmatpush1.msra.mxu0 %v162
    %1665 = vmatprep.subr.mxu0 %v167
    %1666 = vmatpush1.msra.mxu0 %v166
    %1667 = vmatprep.subr.mxu0 %v171
    %1668 = vmatpush1.msra.mxu0 %v170
    %1669 = vmatprep.subr.mxu0 %v175
    %1670 = vmatpush1.msra.mxu0 %v174
    %1671 = vmatprep.subr.mxu0 %v179
    %1672 = vmatpush1.msra.mxu0 %v178
    %1673 = vmatprep.subr.mxu0 %v183
    %1674 = vmatpush1.msra.mxu0 %v182
    %1675 = vmatprep.subr.mxu0 %v187
    %1676 = vmatpush1.msra.mxu0 %v186
    %1677 = vmatprep.subr.mxu0 %v191
    %1678 = vmatpush1.msra.mxu0 %v190
    %1679 = vmatprep.subr.mxu0 %v195
    %1680 = vmatpush1.msra.mxu0 %v194
    %1681 = vmatprep.subr.mxu0 %v199
    %1682 = vmatpush1.msra.mxu0 %v198
    %1683 = vmatprep.subr.mxu0 0.0
    %1684 = vmatpush1.msra.mxu0 0.0
    %1685 = vmatprep.subr.mxu0 0.0
    %1686 = vmatpush1.msra.mxu0 0.0
    %1687 = vmatprep.subr.mxu0 0.0
    %1688 = vmatpush1.msra.mxu0 0.0
    %1689 = vmatprep.subr.mxu0 0.0
    %1690 = vmatpush1.msra.mxu0 0.0
    %1691 = vmatprep.subr.mxu0 0.0
    %1692 = vmatpush1.msra.mxu0 0.0
    %1693 = vmatprep.subr.mxu0 0.0
    %1694 = vmatpush1.msra.mxu0 0.0
    %1695 = vmatprep.subr.mxu0 0.0
    %1696 = vmatpush1.msra.mxu0 0.0
    %1697 = vmatprep.subr.mxu0 0.0
    %1698 = vmatpush1.msra.mxu0 0.0
    %1699 = vmatprep.subr.mxu0 0.0
    %1700 = vmatpush1.msra.mxu0 0.0
    %1701 = vmatprep.subr.mxu0 0.0
    %1702 = vmatpush1.msra.mxu0 0.0
    %1703 = vmatprep.subr.mxu0 0.0
    %1704 = vmatpush1.msra.mxu0 0.0
    %1705 = vmatprep.subr.mxu0 0.0
    %1706 = vmatpush1.msra.mxu0 0.0
    %1707 = vmatprep.subr.mxu0 0.0
    %1708 = vmatpush1.msra.mxu0 0.0
    %1709 = vmatprep.subr.mxu0 0.0
    %1710 = vmatpush1.msra.mxu0 0.0
    %1711 = vmatprep.subr.mxu0 0.0
    %1712 = vmatpush1.msra.mxu0 0.0
    %1713 = vmatprep.subr.mxu0 0.0
    %1714 = vmatpush1.msra.mxu0 0.0
    %1715 = vmatprep.mubr.f32.mxu0 0.0
    %1716 = vmatmul.mubr.f32.gmra.mrb[0].mxu0 %v1571
    %v1717 = vpop.f32.mrb[0].mxu0
    %v1718 = vadd.f32 0.0, %v1717
    %v1719 = vpop.f32.mrb[0].mxu0
    %v1720 = vadd.f32 0.0, %v1719
    %1721 = vdwg.mxu0
    %v1730 = vrot.slane %v1573, 7
    %v1731 = vsel %vm351, %v1730, %v1572
    %v1732 = vrot.slane %v1574, 6
    %v1733 = vsel %vm354, %v1732, %v1731
    %v1734 = vrot.slane %v1575, 5
    %v1735 = vsel %vm357, %v1734, %v1733
    %v1736 = vrot.slane %v1576, 4
    %v1737 = vsel %vm360, %v1736, %v1735
    %v1738 = vrot.slane %v1577, 3
    %v1739 = vsel %vm363, %v1738, %v1737
    %v1740 = vrot.slane %v1578, 2
    %v1741 = vsel %vm366, %v1740, %v1739
    %v1742 = vrot.slane %v1579, 1
    %v1743 = vsel %vm369, %v1742, %v1741
    %1745 = vmatprep.subr.mxu0 %v73
    %1746 = vmatpush1.msra.mxu0 %v72
    %1747 = vmatprep.subr.mxu0 %v77
    %1748 = vmatpush1.msra.mxu0 %v76
    %1749 = vmatprep.subr.mxu0 %v81
    %1750 = vmatpush1.msra.mxu0 %v80
    %1751 = vmatprep.subr.mxu0 %v85
    %1752 = vmatpush1.msra.mxu0 %v84
    %1753 = vmatprep.subr.mxu0 %v89
    %1754 = vmatpush1.msra.mxu0 %v88
    %1755 = vmatprep.subr.mxu0 %v93
    %1756 = vmatpush1.msra.mxu0 %v92
    %1757 = vmatprep.subr.mxu0 %v97
    %1758 = vmatpush1.msra.mxu0 %v96
    %1759 = vmatprep.subr.mxu0 %v101
    %1760 = vmatpush1.msra.mxu0 %v100
    %1761 = vmatprep.subr.mxu0 %v105
    %1762 = vmatpush1.msra.mxu0 %v104
    %1763 = vmatprep.subr.mxu0 %v109
    %1764 = vmatpush1.msra.mxu0 %v108
    %1765 = vmatprep.subr.mxu0 %v113
    %1766 = vmatpush1.msra.mxu0 %v112
    %1767 = vmatprep.subr.mxu0 %v117
    %1768 = vmatpush1.msra.mxu0 %v116
    %1769 = vmatprep.subr.mxu0 %v121
    %1770 = vmatpush1.msra.mxu0 %v120
    %1771 = vmatprep.subr.mxu0 %v125
    %1772 = vmatpush1.msra.mxu0 %v124
    %1773 = vmatprep.subr.mxu0 %v129
    %1774 = vmatpush1.msra.mxu0 %v128
    %1775 = vmatprep.subr.mxu0 %v133
    %1776 = vmatpush1.msra.mxu0 %v132
    %1777 = vmatprep.subr.mxu0 0.0
    %1778 = vmatpush1.msra.mxu0 0.0
    %1779 = vmatprep.subr.mxu0 0.0
    %1780 = vmatpush1.msra.mxu0 0.0
    %1781 = vmatprep.subr.mxu0 0.0
    %1782 = vmatpush1.msra.mxu0 0.0
    %1783 = vmatprep.subr.mxu0 0.0
    %1784 = vmatpush1.msra.mxu0 0.0
    %1785 = vmatprep.subr.mxu0 0.0
    %1786 = vmatpush1.msra.mxu0 0.0
    %1787 = vmatprep.subr.mxu0 0.0
    %1788 = vmatpush1.msra.mxu0 0.0
    %1789 = vmatprep.subr.mxu0 0.0
    %1790 = vmatpush1.msra.mxu0 0.0
    %1791 = vmatprep.subr.mxu0 0.0
    %1792 = vmatpush1.msra.mxu0 0.0
    %1793 = vmatprep.subr.mxu0 0.0
    %1794 = vmatpush1.msra.mxu0 0.0
    %1795 = vmatprep.subr.mxu0 0.0
    %1796 = vmatpush1.msra.mxu0 0.0
    %1797 = vmatprep.subr.mxu0 0.0
    %1798 = vmatpush1.msra.mxu0 0.0
    %1799 = vmatprep.subr.mxu0 0.0
    %1800 = vmatpush1.msra.mxu0 0.0
    %1801 = vmatprep.subr.mxu0 0.0
    %1802 = vmatpush1.msra.mxu0 0.0
    %1803 = vmatprep.subr.mxu0 0.0
    %1804 = vmatpush1.msra.mxu0 0.0
    %1805 = vmatprep.subr.mxu0 0.0
    %1806 = vmatpush1.msra.mxu0 0.0
    %1807 = vmatprep.subr.mxu0 0.0
    %1808 = vmatpush1.msra.mxu0 0.0
    %1809 = vmatprep.mubr.f32.mxu0 0.0
    %1810 = vmatmul.mubr.f32.gmra.mrb[0].mxu0 %v1743
    %v1811 = vpop.f32.mrb[0].mxu0
    %v1812 = vadd.f32 %v1647, %v1811
    %v1813 = vpop.f32.mrb[0].mxu0
    %v1814 = vadd.f32 %v1649, %v1813
    %1815 = vdwg.mxu0
    %1816 = vmatprep.subr.mxu0 %v75
    %1817 = vmatpush1.msra.mxu0 %v74
    %1818 = vmatprep.subr.mxu0 %v79
    %1819 = vmatpush1.msra.mxu0 %v78
    %1820 = vmatprep.subr.mxu0 %v83
    %1821 = vmatpush1.msra.mxu0 %v82
    %1822 = vmatprep.subr.mxu0 %v87
    %1823 = vmatpush1.msra.mxu0 %v86
    %1824 = vmatprep.subr.mxu0 %v91
    %1825 = vmatpush1.msra.mxu0 %v90
    %1826 = vmatprep.subr.mxu0 %v95
    %1827 = vmatpush1.msra.mxu0 %v94
    %1828 = vmatprep.subr.mxu0 %v99
    %1829 = vmatpush1.msra.mxu0 %v98
    %1830 = vmatprep.subr.mxu0 %v103
    %1831 = vmatpush1.msra.mxu0 %v102
    %1832 = vmatprep.subr.mxu0 %v107
    %1833 = vmatpush1.msra.mxu0 %v106
    %1834 = vmatprep.subr.mxu0 %v111
    %1835 = vmatpush1.msra.mxu0 %v110
    %1836 = vmatprep.subr.mxu0 %v115
    %1837 = vmatpush1.msra.mxu0 %v114
    %1838 = vmatprep.subr.mxu0 %v119
    %1839 = vmatpush1.msra.mxu0 %v118
    %1840 = vmatprep.subr.mxu0 %v123
    %1841 = vmatpush1.msra.mxu0 %v122
    %1842 = vmatprep.subr.mxu0 %v127
    %1843 = vmatpush1.msra.mxu0 %v126
    %1844 = vmatprep.subr.mxu0 %v131
    %1845 = vmatpush1.msra.mxu0 %v130
    %1846 = vmatprep.subr.mxu0 %v135
    %1847 = vmatpush1.msra.mxu0 %v134
    %1848 = vmatprep.subr.mxu0 0.0
    %1849 = vmatpush1.msra.mxu0 0.0
    %1850 = vmatprep.subr.mxu0 0.0
    %1851 = vmatpush1.msra.mxu0 0.0
    %1852 = vmatprep.subr.mxu0 0.0
    %1853 = vmatpush1.msra.mxu0 0.0
    %1854 = vmatprep.subr.mxu0 0.0
    %1855 = vmatpush1.msra.mxu0 0.0
    %1856 = vmatprep.subr.mxu0 0.0
    %1857 = vmatpush1.msra.mxu0 0.0
    %1858 = vmatprep.subr.mxu0 0.0
    %1859 = vmatpush1.msra.mxu0 0.0
    %1860 = vmatprep.subr.mxu0 0.0
    %1861 = vmatpush1.msra.mxu0 0.0
    %1862 = vmatprep.subr.mxu0 0.0
    %1863 = vmatpush1.msra.mxu0 0.0
    %1864 = vmatprep.subr.mxu0 0.0
    %1865 = vmatpush1.msra.mxu0 0.0
    %1866 = vmatprep.subr.mxu0 0.0
    %1867 = vmatpush1.msra.mxu0 0.0
    %1868 = vmatprep.subr.mxu0 0.0
    %1869 = vmatpush1.msra.mxu0 0.0
    %1870 = vmatprep.subr.mxu0 0.0
    %1871 = vmatpush1.msra.mxu0 0.0
    %1872 = vmatprep.subr.mxu0 0.0
    %1873 = vmatpush1.msra.mxu0 0.0
    %1874 = vmatprep.subr.mxu0 0.0
    %1875 = vmatpush1.msra.mxu0 0.0
    %1876 = vmatprep.subr.mxu0 0.0
    %1877 = vmatpush1.msra.mxu0 0.0
    %1878 = vmatprep.subr.mxu0 0.0
    %1879 = vmatpush1.msra.mxu0 0.0
    %1880 = vmatprep.mubr.f32.mxu0 0.0
    %1881 = vmatmul.mubr.f32.gmra.mrb[0].mxu0 %v1743
    %v1882 = vpop.f32.mrb[0].mxu0
    %v1883 = vadd.f32 %v1718, %v1882
    %v1884 = vpop.f32.mrb[0].mxu0
    %v1885 = vadd.f32 %v1720, %v1884
    %1886 = vdwg.mxu0
    %v1887 = vadd.f32 %v1812, %v518
    %v1888 = vadd.f32 %v1814, %v522
    %v1889 = vadd.f32 %v1883, %v526
    %v1890 = vadd.f32 %v1885, %v530
    %v1891 = vxor.u32 %v1887, 2147483648
    %v1892 = vmul.f32 %v1891, 1.442695
    %v1893 = vpow.pop %v1892
    %v1894 = vadd.f32 %v1893, 1.0
    %v1895 = vrcp.pop %v1894
    %v1896 = vmul.f32 1.0, %v1895
    %v1897 = vxor.u32 %v1888, 2147483648
    %v1898 = vmul.f32 %v1897, 1.442695
    %v1899 = vpow.pop %v1898
    %v1900 = vadd.f32 %v1899, 1.0
    %v1901 = vrcp.pop %v1900
    %v1902 = vmul.f32 1.0, %v1901
    %v1903 = vmul.f32 %v1896, %v1890
    %v1904 = vadd.f32 %v1889, %v1903
    %v1905 = vtanh.pop %v1904
    %v1906 = vsub.f32 1.0, %v1902
    %v1907 = vmul.f32 %v1906, %v1905
    %v1908 = vmul.f32 %v1902, %v1571
    %v1909 = vadd.f32 %v1907, %v1908
    %v1910 = vld [vmem:[%s1 + $0x5] sm:$0x1]
    %v1911 = vld [vmem:[%s1 + $0x15] sm:$0x1]
    %v1912 = vld [vmem:[%s1 + $0x25] sm:$0x1]
    %v1913 = vld [vmem:[%s1 + $0x35] sm:$0x1]
    %v1914 = vld [vmem:[%s1 + $0x45] sm:$0x1]
    %v1915 = vld [vmem:[%s1 + $0x55] sm:$0x1]
    %v1916 = vld [vmem:[%s1 + $0x65] sm:$0x1]
    %v1917 = vld [vmem:[%s1 + $0x75] sm:$0x1]
    %1918 = vmatprep.subr.mxu0 %v137
    %1919 = vmatpush1.msra.mxu0 %v136
    %1920 = vmatprep.subr.mxu0 %v141
    %1921 = vmatpush1.msra.mxu0 %v140
    %1922 = vmatprep.subr.mxu0 %v145
    %1923 = vmatpush1.msra.mxu0 %v144
    %1924 = vmatprep.subr.mxu0 %v149
    %1925 = vmatpush1.msra.mxu0 %v148
    %1926 = vmatprep.subr.mxu0 %v153
    %1927 = vmatpush1.msra.mxu0 %v152
    %1928 = vmatprep.subr.mxu0 %v157
    %1929 = vmatpush1.msra.mxu0 %v156
    %1930 = vmatprep.subr.mxu0 %v161
    %1931 = vmatpush1.msra.mxu0 %v160
    %1932 = vmatprep.subr.mxu0 %v165
    %1933 = vmatpush1.msra.mxu0 %v164
    %1934 = vmatprep.subr.mxu0 %v169
    %1935 = vmatpush1.msra.mxu0 %v168
    %1936 = vmatprep.subr.mxu0 %v173
    %1937 = vmatpush1.msra.mxu0 %v172
    %1938 = vmatprep.subr.mxu0 %v177
    %1939 = vmatpush1.msra.mxu0 %v176
    %1940 = vmatprep.subr.mxu0 %v181
    %1941 = vmatpush1.msra.mxu0 %v180
    %1942 = vmatprep.subr.mxu0 %v185
    %1943 = vmatpush1.msra.mxu0 %v184
    %1944 = vmatprep.subr.mxu0 %v189
    %1945 = vmatpush1.msra.mxu0 %v188
    %1946 = vmatprep.subr.mxu0 %v193
    %1947 = vmatpush1.msra.mxu0 %v192
    %1948 = vmatprep.subr.mxu0 %v197
    %1949 = vmatpush1.msra.mxu0 %v196
    %1950 = vmatprep.subr.mxu0 0.0
    %1951 = vmatpush1.msra.mxu0 0.0
    %1952 = vmatprep.subr.mxu0 0.0
    %1953 = vmatpush1.msra.mxu0 0.0
    %1954 = vmatprep.subr.mxu0 0.0
    %1955 = vmatpush1.msra.mxu0 0.0
    %1956 = vmatprep.subr.mxu0 0.0
    %1957 = vmatpush1.msra.mxu0 0.0
    %1958 = vmatprep.subr.mxu0 0.0
    %1959 = vmatpush1.msra.mxu0 0.0
    %1960 = vmatprep.subr.mxu0 0.0
    %1961 = vmatpush1.msra.mxu0 0.0
    %1962 = vmatprep.subr.mxu0 0.0
    %1963 = vmatpush1.msra.mxu0 0.0
    %1964 = vmatprep.subr.mxu0 0.0
    %1965 = vmatpush1.msra.mxu0 0.0
    %1966 = vmatprep.subr.mxu0 0.0
    %1967 = vmatpush1.msra.mxu0 0.0
    %1968 = vmatprep.subr.mxu0 0.0
    %1969 = vmatpush1.msra.mxu0 0.0
    %1970 = vmatprep.subr.mxu0 0.0
    %1971 = vmatpush1.msra.mxu0 0.0
    %1972 = vmatprep.subr.mxu0 0.0
    %1973 = vmatpush1.msra.mxu0 0.0
    %1974 = vmatprep.subr.mxu0 0.0
    %1975 = vmatpush1.msra.mxu0 0.0
    %1976 = vmatprep.subr.mxu0 0.0
    %1977 = vmatpush1.msra.mxu0 0.0
    %1978 = vmatprep.subr.mxu0 0.0
    %1979 = vmatpush1.msra.mxu0 0.0
    %1980 = vmatprep.subr.mxu0 0.0
    %1981 = vmatpush1.msra.mxu0 0.0
    %1982 = vmatprep.mubr.f32.mxu0 0.0
    %1983 = vmatmul.mubr.f32.gmra.mrb[0].mxu0 %v1909
    %v1984 = vpop.f32.mrb[0].mxu0
    %v1985 = vadd.f32 0.0, %v1984
    %v1986 = vpop.f32.mrb[0].mxu0
    %v1987 = vadd.f32 0.0, %v1986
    %1988 = vdwg.mxu0
    %1989 = vmatprep.subr.mxu0 %v139
    %1990 = vmatpush1.msra.mxu0 %v138
    %1991 = vmatprep.subr.mxu0 %v143
    %1992 = vmatpush1.msra.mxu0 %v142
    %1993 = vmatprep.subr.mxu0 %v147
    %1994 = vmatpush1.msra.mxu0 %v146
    %1995 = vmatprep.subr.mxu0 %v151
    %1996 = vmatpush1.msra.mxu0 %v150
    %1997 = vmatprep.subr.mxu0 %v155
    %1998 = vmatpush1.msra.mxu0 %v154
    %1999 = vmatprep.subr.mxu0 %v159
    %2000 = vmatpush1.msra.mxu0 %v158
    %2001 = vmatprep.subr.mxu0 %v163
    %2002 = vmatpush1.msra.mxu0 %v162
    %2003 = vmatprep.subr.mxu0 %v167
    %2004 = vmatpush1.msra.mxu0 %v166
    %2005 = vmatprep.subr.mxu0 %v171
    %2006 = vmatpush1.msra.mxu0 %v170
    %2007 = vmatprep.subr.mxu0 %v175
    %2008 = vmatpush1.msra.mxu0 %v174
    %2009 = vmatprep.subr.mxu0 %v179
    %2010 = vmatpush1.msra.mxu0 %v178
    %2011 = vmatprep.subr.mxu0 %v183
    %2012 = vmatpush1.msra.mxu0 %v182
    %2013 = vmatprep.subr.mxu0 %v187
    %2014 = vmatpush1.msra.mxu0 %v186
    %2015 = vmatprep.subr.mxu0 %v191
    %2016 = vmatpush1.msra.mxu0 %v190
    %2017 = vmatprep.subr.mxu0 %v195
    %2018 = vmatpush1.msra.mxu0 %v194
    %2019 = vmatprep.subr.mxu0 %v199
    %2020 = vmatpush1.msra.mxu0 %v198
    %2021 = vmatprep.subr.mxu0 0.0
    %2022 = vmatpush1.msra.mxu0 0.0
    %2023 = vmatprep.subr.mxu0 0.0
    %2024 = vmatpush1.msra.mxu0 0.0
    %2025 = vmatprep.subr.mxu0 0.0
    %2026 = vmatpush1.msra.mxu0 0.0
    %2027 = vmatprep.subr.mxu0 0.0
    %2028 = vmatpush1.msra.mxu0 0.0
    %2029 = vmatprep.subr.mxu0 0.0
    %2030 = vmatpush1.msra.mxu0 0.0
    %2031 = vmatprep.subr.mxu0 0.0
    %2032 = vmatpush1.msra.mxu0 0.0
    %2033 = vmatprep.subr.mxu0 0.0
    %2034 = vmatpush1.msra.mxu0 0.0
    %2035 = vmatprep.subr.mxu0 0.0
    %2036 = vmatpush1.msra.mxu0 0.0
    %2037 = vmatprep.subr.mxu0 0.0
    %2038 = vmatpush1.msra.mxu0 0.0
    %2039 = vmatprep.subr.mxu0 0.0
    %2040 = vmatpush1.msra.mxu0 0.0
    %2041 = vmatprep.subr.mxu0 0.0
    %2042 = vmatpush1.msra.mxu0 0.0
    %2043 = vmatprep.subr.mxu0 0.0
    %2044 = vmatpush1.msra.mxu0 0.0
    %2045 = vmatprep.subr.mxu0 0.0
    %2046 = vmatpush1.msra.mxu0 0.0
    %2047 = vmatprep.subr.mxu0 0.0
    %2048 = vmatpush1.msra.mxu0 0.0
    %2049 = vmatprep.subr.mxu0 0.0
    %2050 = vmatpush1.msra.mxu0 0.0
    %2051 = vmatprep.subr.mxu0 0.0
    %2052 = vmatpush1.msra.mxu0 0.0
    %2053 = vmatprep.mubr.f32.mxu0 0.0
    %2054 = vmatmul.mubr.f32.gmra.mrb[0].mxu0 %v1909
    %v2055 = vpop.f32.mrb[0].mxu0
    %v2056 = vadd.f32 0.0, %v2055
    %v2057 = vpop.f32.mrb[0].mxu0
    %v2058 = vadd.f32 0.0, %v2057
    %2059 = vdwg.mxu0
    %v2068 = vrot.slane %v1911, 7
    %v2069 = vsel %vm351, %v2068, %v1910
    %v2070 = vrot.slane %v1912, 6
    %v2071 = vsel %vm354, %v2070, %v2069
    %v2072 = vrot.slane %v1913, 5
    %v2073 = vsel %vm357, %v2072, %v2071
    %v2074 = vrot.slane %v1914, 4
    %v2075 = vsel %vm360, %v2074, %v2073
    %v2076 = vrot.slane %v1915, 3
    %v2077 = vsel %vm363, %v2076, %v2075
    %v2078 = vrot.slane %v1916, 2
    %v2079 = vsel %vm366, %v2078, %v2077
    %v2080 = vrot.slane %v1917, 1
    %v2081 = vsel %vm369, %v2080, %v2079
    %2083 = vmatprep.subr.mxu0 %v73
    %2084 = vmatpush1.msra.mxu0 %v72
    %2085 = vmatprep.subr.mxu0 %v77
    %2086 = vmatpush1.msra.mxu0 %v76
    %2087 = vmatprep.subr.mxu0 %v81
    %2088 = vmatpush1.msra.mxu0 %v80
    %2089 = vmatprep.subr.mxu0 %v85
    %2090 = vmatpush1.msra.mxu0 %v84
    %2091 = vmatprep.subr.mxu0 %v89
    %2092 = vmatpush1.msra.mxu0 %v88
    %2093 = vmatprep.subr.mxu0 %v93
    %2094 = vmatpush1.msra.mxu0 %v92
    %2095 = vmatprep.subr.mxu0 %v97
    %2096 = vmatpush1.msra.mxu0 %v96
    %2097 = vmatprep.subr.mxu0 %v101
    %2098 = vmatpush1.msra.mxu0 %v100
    %2099 = vmatprep.subr.mxu0 %v105
    %2100 = vmatpush1.msra.mxu0 %v104
    %2101 = vmatprep.subr.mxu0 %v109
    %2102 = vmatpush1.msra.mxu0 %v108
    %2103 = vmatprep.subr.mxu0 %v113
    %2104 = vmatpush1.msra.mxu0 %v112
    %2105 = vmatprep.subr.mxu0 %v117
    %2106 = vmatpush1.msra.mxu0 %v116
    %2107 = vmatprep.subr.mxu0 %v121
    %2108 = vmatpush1.msra.mxu0 %v120
    %2109 = vmatprep.subr.mxu0 %v125
    %2110 = vmatpush1.msra.mxu0 %v124
    %2111 = vmatprep.subr.mxu0 %v129
    %2112 = vmatpush1.msra.mxu0 %v128
    %2113 = vmatprep.subr.mxu0 %v133
    %2114 = vmatpush1.msra.mxu0 %v132
    %2115 = vmatprep.subr.mxu0 0.0
    %2116 = vmatpush1.msra.mxu0 0.0
    %2117 = vmatprep.subr.mxu0 0.0
    %2118 = vmatpush1.msra.mxu0 0.0
    %2119 = vmatprep.subr.mxu0 0.0
    %2120 = vmatpush1.msra.mxu0 0.0
    %2121 = vmatprep.subr.mxu0 0.0
    %2122 = vmatpush1.msra.mxu0 0.0
    %2123 = vmatprep.subr.mxu0 0.0
    %2124 = vmatpush1.msra.mxu0 0.0
    %2125 = vmatprep.subr.mxu0 0.0
    %2126 = vmatpush1.msra.mxu0 0.0
    %2127 = vmatprep.subr.mxu0 0.0
    %2128 = vmatpush1.msra.mxu0 0.0
    %2129 = vmatprep.subr.mxu0 0.0
    %2130 = vmatpush1.msra.mxu0 0.0
    %2131 = vmatprep.subr.mxu0 0.0
    %2132 = vmatpush1.msra.mxu0 0.0
    %2133 = vmatprep.subr.mxu0 0.0
    %2134 = vmatpush1.msra.mxu0 0.0
    %2135 = vmatprep.subr.mxu0 0.0
    %2136 = vmatpush1.msra.mxu0 0.0
    %2137 = vmatprep.subr.mxu0 0.0
    %2138 = vmatpush1.msra.mxu0 0.0
    %2139 = vmatprep.subr.mxu0 0.0
    %2140 = vmatpush1.msra.mxu0 0.0
    %2141 = vmatprep.subr.mxu0 0.0
    %2142 = vmatpush1.msra.mxu0 0.0
    %2143 = vmatprep.subr.mxu0 0.0
    %2144 = vmatpush1.msra.mxu0 0.0
    %2145 = vmatprep.subr.mxu0 0.0
    %2146 = vmatpush1.msra.mxu0 0.0
    %2147 = vmatprep.mubr.f32.mxu0 0.0
    %2148 = vmatmul.mubr.f32.gmra.mrb[0].mxu0 %v2081
    %v2149 = vpop.f32.mrb[0].mxu0
    %v2150 = vadd.f32 %v1985, %v2149
    %v2151 = vpop.f32.mrb[0].mxu0
    %v2152 = vadd.f32 %v1987, %v2151
    %2153 = vdwg.mxu0
    %2154 = vmatprep.subr.mxu0 %v75
    %2155 = vmatpush1.msra.mxu0 %v74
    %2156 = vmatprep.subr.mxu0 %v79
    %2157 = vmatpush1.msra.mxu0 %v78
    %2158 = vmatprep.subr.mxu0 %v83
    %2159 = vmatpush1.msra.mxu0 %v82
    %2160 = vmatprep.subr.mxu0 %v87
    %2161 = vmatpush1.msra.mxu0 %v86
    %2162 = vmatprep.subr.mxu0 %v91
    %2163 = vmatpush1.msra.mxu0 %v90
    %2164 = vmatprep.subr.mxu0 %v95
    %2165 = vmatpush1.msra.mxu0 %v94
    %2166 = vmatprep.subr.mxu0 %v99
    %2167 = vmatpush1.msra.mxu0 %v98
    %2168 = vmatprep.subr.mxu0 %v103
    %2169 = vmatpush1.msra.mxu0 %v102
    %2170 = vmatprep.subr.mxu0 %v107
    %2171 = vmatpush1.msra.mxu0 %v106
    %2172 = vmatprep.subr.mxu0 %v111
    %2173 = vmatpush1.msra.mxu0 %v110
    %2174 = vmatprep.subr.mxu0 %v115
    %2175 = vmatpush1.msra.mxu0 %v114
    %2176 = vmatprep.subr.mxu0 %v119
    %2177 = vmatpush1.msra.mxu0 %v118
    %2178 = vmatprep.subr.mxu0 %v123
    %2179 = vmatpush1.msra.mxu0 %v122
    %2180 = vmatprep.subr.mxu0 %v127
    %2181 = vmatpush1.msra.mxu0 %v126
    %2182 = vmatprep.subr.mxu0 %v131
    %2183 = vmatpush1.msra.mxu0 %v130
    %2184 = vmatprep.subr.mxu0 %v135
    %2185 = vmatpush1.msra.mxu0 %v134
    %2186 = vmatprep.subr.mxu0 0.0
    %2187 = vmatpush1.msra.mxu0 0.0
    %2188 = vmatprep.subr.mxu0 0.0
    %2189 = vmatpush1.msra.mxu0 0.0
    %2190 = vmatprep.subr.mxu0 0.0
    %2191 = vmatpush1.msra.mxu0 0.0
    %2192 = vmatprep.subr.mxu0 0.0
    %2193 = vmatpush1.msra.mxu0 0.0
    %2194 = vmatprep.subr.mxu0 0.0
    %2195 = vmatpush1.msra.mxu0 0.0
    %2196 = vmatprep.subr.mxu0 0.0
    %2197 = vmatpush1.msra.mxu0 0.0
    %2198 = vmatprep.subr.mxu0 0.0
    %2199 = vmatpush1.msra.mxu0 0.0
    %2200 = vmatprep.subr.mxu0 0.0
    %2201 = vmatpush1.msra.mxu0 0.0
    %2202 = vmatprep.subr.mxu0 0.0
    %2203 = vmatpush1.msra.mxu0 0.0
    %2204 = vmatprep.subr.mxu0 0.0
    %2205 = vmatpush1.msra.mxu0 0.0
    %2206 = vmatprep.subr.mxu0 0.0
    %2207 = vmatpush1.msra.mxu0 0.0
    %2208 = vmatprep.subr.mxu0 0.0
    %2209 = vmatpush1.msra.mxu0 0.0
    %2210 = vmatprep.subr.mxu0 0.0
    %2211 = vmatpush1.msra.mxu0 0.0
    %2212 = vmatprep.subr.mxu0 0.0
    %2213 = vmatpush1.msra.mxu0 0.0
    %2214 = vmatprep.subr.mxu0 0.0
    %2215 = vmatpush1.msra.mxu0 0.0
    %2216 = vmatprep.subr.mxu0 0.0
    %2217 = vmatpush1.msra.mxu0 0.0
    %2218 = vmatprep.mubr.f32.mxu0 0.0
    %2219 = vmatmul.mubr.f32.gmra.mrb[0].mxu0 %v2081
    %v2220 = vpop.f32.mrb[0].mxu0
    %v2221 = vadd.f32 %v2056, %v2220
    %v2222 = vpop.f32.mrb[0].mxu0
    %v2223 = vadd.f32 %v2058, %v2222
    %2224 = vdwg.mxu0
    %v2225 = vadd.f32 %v2150, %v518
    %v2226 = vadd.f32 %v2152, %v522
    %v2227 = vadd.f32 %v2221, %v526
    %v2228 = vadd.f32 %v2223, %v530
    %v2229 = vxor.u32 %v2225, 2147483648
    %v2230 = vmul.f32 %v2229, 1.442695
    %v2231 = vpow.pop %v2230
    %v2232 = vadd.f32 %v2231, 1.0
    %v2233 = vrcp.pop %v2232
    %v2234 = vmul.f32 1.0, %v2233
    %v2235 = vxor.u32 %v2226, 2147483648
    %v2236 = vmul.f32 %v2235, 1.442695
    %v2237 = vpow.pop %v2236
    %v2238 = vadd.f32 %v2237, 1.0
    %v2239 = vrcp.pop %v2238
    %v2240 = vmul.f32 1.0, %v2239
    %v2241 = vmul.f32 %v2234, %v2228
    %v2242 = vadd.f32 %v2227, %v2241
    %v2243 = vtanh.pop %v2242
    %v2244 = vsub.f32 1.0, %v2240
    %v2245 = vmul.f32 %v2244, %v2243
    %v2246 = vmul.f32 %v2240, %v1909
    %v2247 = vadd.f32 %v2245, %v2246
    %v2248 = vld [vmem:[%s1 + $0x6] sm:$0x1]
    %v2249 = vld [vmem:[%s1 + $0x16] sm:$0x1]
    %v2250 = vld [vmem:[%s1 + $0x26] sm:$0x1]
    %v2251 = vld [vmem:[%s1 + $0x36] sm:$0x1]
    %v2252 = vld [vmem:[%s1 + $0x46] sm:$0x1]
    %v2253 = vld [vmem:[%s1 + $0x56] sm:$0x1]
    %v2254 = vld [vmem:[%s1 + $0x66] sm:$0x1]
    %v2255 = vld [vmem:[%s1 + $0x76] sm:$0x1]
    %2256 = vmatprep.subr.mxu0 %v137
    %2257 = vmatpush1.msra.mxu0 %v136
    %2258 = vmatprep.subr.mxu0 %v141
    %2259 = vmatpush1.msra.mxu0 %v140
    %2260 = vmatprep.subr.mxu0 %v145
    %2261 = vmatpush1.msra.mxu0 %v144
    %2262 = vmatprep.subr.mxu0 %v149
    %2263 = vmatpush1.msra.mxu0 %v148
    %2264 = vmatprep.subr.mxu0 %v153
    %2265 = vmatpush1.msra.mxu0 %v152
    %2266 = vmatprep.subr.mxu0 %v157
    %2267 = vmatpush1.msra.mxu0 %v156
    %2268 = vmatprep.subr.mxu0 %v161
    %2269 = vmatpush1.msra.mxu0 %v160
    %2270 = vmatprep.subr.mxu0 %v165
    %2271 = vmatpush1.msra.mxu0 %v164
    %2272 = vmatprep.subr.mxu0 %v169
    %2273 = vmatpush1.msra.mxu0 %v168
    %2274 = vmatprep.subr.mxu0 %v173
    %2275 = vmatpush1.msra.mxu0 %v172
    %2276 = vmatprep.subr.mxu0 %v177
    %2277 = vmatpush1.msra.mxu0 %v176
    %2278 = vmatprep.subr.mxu0 %v181
    %2279 = vmatpush1.msra.mxu0 %v180
    %2280 = vmatprep.subr.mxu0 %v185
    %2281 = vmatpush1.msra.mxu0 %v184
    %2282 = vmatprep.subr.mxu0 %v189
    %2283 = vmatpush1.msra.mxu0 %v188
    %2284 = vmatprep.subr.mxu0 %v193
    %2285 = vmatpush1.msra.mxu0 %v192
    %2286 = vmatprep.subr.mxu0 %v197
    %2287 = vmatpush1.msra.mxu0 %v196
    %2288 = vmatprep.subr.mxu0 0.0
    %2289 = vmatpush1.msra.mxu0 0.0
    %2290 = vmatprep.subr.mxu0 0.0
    %2291 = vmatpush1.msra.mxu0 0.0
    %2292 = vmatprep.subr.mxu0 0.0
    %2293 = vmatpush1.msra.mxu0 0.0
    %2294 = vmatprep.subr.mxu0 0.0
    %2295 = vmatpush1.msra.mxu0 0.0
    %2296 = vmatprep.subr.mxu0 0.0
    %2297 = vmatpush1.msra.mxu0 0.0
    %2298 = vmatprep.subr.mxu0 0.0
    %2299 = vmatpush1.msra.mxu0 0.0
    %2300 = vmatprep.subr.mxu0 0.0
    %2301 = vmatpush1.msra.mxu0 0.0
    %2302 = vmatprep.subr.mxu0 0.0
    %2303 = vmatpush1.msra.mxu0 0.0
    %2304 = vmatprep.subr.mxu0 0.0
    %2305 = vmatpush1.msra.mxu0 0.0
    %2306 = vmatprep.subr.mxu0 0.0
    %2307 = vmatpush1.msra.mxu0 0.0
    %2308 = vmatprep.subr.mxu0 0.0
    %2309 = vmatpush1.msra.mxu0 0.0
    %2310 = vmatprep.subr.mxu0 0.0
    %2311 = vmatpush1.msra.mxu0 0.0
    %2312 = vmatprep.subr.mxu0 0.0
    %2313 = vmatpush1.msra.mxu0 0.0
    %2314 = vmatprep.subr.mxu0 0.0
    %2315 = vmatpush1.msra.mxu0 0.0
    %2316 = vmatprep.subr.mxu0 0.0
    %2317 = vmatpush1.msra.mxu0 0.0
    %2318 = vmatprep.subr.mxu0 0.0
    %2319 = vmatpush1.msra.mxu0 0.0
    %2320 = vmatprep.mubr.f32.mxu0 0.0
    %2321 = vmatmul.mubr.f32.gmra.mrb[0].mxu0 %v2247
    %v2322 = vpop.f32.mrb[0].mxu0
    %v2323 = vadd.f32 0.0, %v2322
    %v2324 = vpop.f32.mrb[0].mxu0
    %v2325 = vadd.f32 0.0, %v2324
    %2326 = vdwg.mxu0
    %2327 = vmatprep.subr.mxu0 %v139
    %2328 = vmatpush1.msra.mxu0 %v138
    %2329 = vmatprep.subr.mxu0 %v143
    %2330 = vmatpush1.msra.mxu0 %v142
    %2331 = vmatprep.subr.mxu0 %v147
    %2332 = vmatpush1.msra.mxu0 %v146
    %2333 = vmatprep.subr.mxu0 %v151
    %2334 = vmatpush1.msra.mxu0 %v150
    %2335 = vmatprep.subr.mxu0 %v155
    %2336 = vmatpush1.msra.mxu0 %v154
    %2337 = vmatprep.subr.mxu0 %v159
    %2338 = vmatpush1.msra.mxu0 %v158
    %2339 = vmatprep.subr.mxu0 %v163
    %2340 = vmatpush1.msra.mxu0 %v162
    %2341 = vmatprep.subr.mxu0 %v167
    %2342 = vmatpush1.msra.mxu0 %v166
    %2343 = vmatprep.subr.mxu0 %v171
    %2344 = vmatpush1.msra.mxu0 %v170
    %2345 = vmatprep.subr.mxu0 %v175
    %2346 = vmatpush1.msra.mxu0 %v174
    %2347 = vmatprep.subr.mxu0 %v179
    %2348 = vmatpush1.msra.mxu0 %v178
    %2349 = vmatprep.subr.mxu0 %v183
    %2350 = vmatpush1.msra.mxu0 %v182
    %2351 = vmatprep.subr.mxu0 %v187
    %2352 = vmatpush1.msra.mxu0 %v186
    %2353 = vmatprep.subr.mxu0 %v191
    %2354 = vmatpush1.msra.mxu0 %v190
    %2355 = vmatprep.subr.mxu0 %v195
    %2356 = vmatpush1.msra.mxu0 %v194
    %2357 = vmatprep.subr.mxu0 %v199
    %2358 = vmatpush1.msra.mxu0 %v198
    %2359 = vmatprep.subr.mxu0 0.0
    %2360 = vmatpush1.msra.mxu0 0.0
    %2361 = vmatprep.subr.mxu0 0.0
    %2362 = vmatpush1.msra.mxu0 0.0
    %2363 = vmatprep.subr.mxu0 0.0
    %2364 = vmatpush1.msra.mxu0 0.0
    %2365 = vmatprep.subr.mxu0 0.0
    %2366 = vmatpush1.msra.mxu0 0.0
    %2367 = vmatprep.subr.mxu0 0.0
    %2368 = vmatpush1.msra.mxu0 0.0
    %2369 = vmatprep.subr.mxu0 0.0
    %2370 = vmatpush1.msra.mxu0 0.0
    %2371 = vmatprep.subr.mxu0 0.0
    %2372 = vmatpush1.msra.mxu0 0.0
    %2373 = vmatprep.subr.mxu0 0.0
    %2374 = vmatpush1.msra.mxu0 0.0
    %2375 = vmatprep.subr.mxu0 0.0
    %2376 = vmatpush1.msra.mxu0 0.0
    %2377 = vmatprep.subr.mxu0 0.0
    %2378 = vmatpush1.msra.mxu0 0.0
    %2379 = vmatprep.subr.mxu0 0.0
    %2380 = vmatpush1.msra.mxu0 0.0
    %2381 = vmatprep.subr.mxu0 0.0
    %2382 = vmatpush1.msra.mxu0 0.0
    %2383 = vmatprep.subr.mxu0 0.0
    %2384 = vmatpush1.msra.mxu0 0.0
    %2385 = vmatprep.subr.mxu0 0.0
    %2386 = vmatpush1.msra.mxu0 0.0
    %2387 = vmatprep.subr.mxu0 0.0
    %2388 = vmatpush1.msra.mxu0 0.0
    %2389 = vmatprep.subr.mxu0 0.0
    %2390 = vmatpush1.msra.mxu0 0.0
    %2391 = vmatprep.mubr.f32.mxu0 0.0
    %2392 = vmatmul.mubr.f32.gmra.mrb[0].mxu0 %v2247
    %v2393 = vpop.f32.mrb[0].mxu0
    %v2394 = vadd.f32 0.0, %v2393
    %v2395 = vpop.f32.mrb[0].mxu0
    %v2396 = vadd.f32 0.0, %v2395
    %2397 = vdwg.mxu0
    %v2406 = vrot.slane %v2249, 7
    %v2407 = vsel %vm351, %v2406, %v2248
    %v2408 = vrot.slane %v2250, 6
    %v2409 = vsel %vm354, %v2408, %v2407
    %v2410 = vrot.slane %v2251, 5
    %v2411 = vsel %vm357, %v2410, %v2409
    %v2412 = vrot.slane %v2252, 4
    %v2413 = vsel %vm360, %v2412, %v2411
    %v2414 = vrot.slane %v2253, 3
    %v2415 = vsel %vm363, %v2414, %v2413
    %v2416 = vrot.slane %v2254, 2
    %v2417 = vsel %vm366, %v2416, %v2415
    %v2418 = vrot.slane %v2255, 1
    %v2419 = vsel %vm369, %v2418, %v2417
    %2421 = vmatprep.subr.mxu0 %v73
    %2422 = vmatpush1.msra.mxu0 %v72
    %2423 = vmatprep.subr.mxu0 %v77
    %2424 = vmatpush1.msra.mxu0 %v76
    %2425 = vmatprep.subr.mxu0 %v81
    %2426 = vmatpush1.msra.mxu0 %v80
    %2427 = vmatprep.subr.mxu0 %v85
    %2428 = vmatpush1.msra.mxu0 %v84
    %2429 = vmatprep.subr.mxu0 %v89
    %2430 = vmatpush1.msra.mxu0 %v88
    %2431 = vmatprep.subr.mxu0 %v93
    %2432 = vmatpush1.msra.mxu0 %v92
    %2433 = vmatprep.subr.mxu0 %v97
    %2434 = vmatpush1.msra.mxu0 %v96
    %2435 = vmatprep.subr.mxu0 %v101
    %2436 = vmatpush1.msra.mxu0 %v100
    %2437 = vmatprep.subr.mxu0 %v105
    %2438 = vmatpush1.msra.mxu0 %v104
    %2439 = vmatprep.subr.mxu0 %v109
    %2440 = vmatpush1.msra.mxu0 %v108
    %2441 = vmatprep.subr.mxu0 %v113
    %2442 = vmatpush1.msra.mxu0 %v112
    %2443 = vmatprep.subr.mxu0 %v117
    %2444 = vmatpush1.msra.mxu0 %v116
    %2445 = vmatprep.subr.mxu0 %v121
    %2446 = vmatpush1.msra.mxu0 %v120
    %2447 = vmatprep.subr.mxu0 %v125
    %2448 = vmatpush1.msra.mxu0 %v124
    %2449 = vmatprep.subr.mxu0 %v129
    %2450 = vmatpush1.msra.mxu0 %v128
    %2451 = vmatprep.subr.mxu0 %v133
    %2452 = vmatpush1.msra.mxu0 %v132
    %2453 = vmatprep.subr.mxu0 0.0
    %2454 = vmatpush1.msra.mxu0 0.0
    %2455 = vmatprep.subr.mxu0 0.0
    %2456 = vmatpush1.msra.mxu0 0.0
    %2457 = vmatprep.subr.mxu0 0.0
    %2458 = vmatpush1.msra.mxu0 0.0
    %2459 = vmatprep.subr.mxu0 0.0
    %2460 = vmatpush1.msra.mxu0 0.0
    %2461 = vmatprep.subr.mxu0 0.0
    %2462 = vmatpush1.msra.mxu0 0.0
    %2463 = vmatprep.subr.mxu0 0.0
    %2464 = vmatpush1.msra.mxu0 0.0
    %2465 = vmatprep.subr.mxu0 0.0
    %2466 = vmatpush1.msra.mxu0 0.0
    %2467 = vmatprep.subr.mxu0 0.0
    %2468 = vmatpush1.msra.mxu0 0.0
    %2469 = vmatprep.subr.mxu0 0.0
    %2470 = vmatpush1.msra.mxu0 0.0
    %2471 = vmatprep.subr.mxu0 0.0
    %2472 = vmatpush1.msra.mxu0 0.0
    %2473 = vmatprep.subr.mxu0 0.0
    %2474 = vmatpush1.msra.mxu0 0.0
    %2475 = vmatprep.subr.mxu0 0.0
    %2476 = vmatpush1.msra.mxu0 0.0
    %2477 = vmatprep.subr.mxu0 0.0
    %2478 = vmatpush1.msra.mxu0 0.0
    %2479 = vmatprep.subr.mxu0 0.0
    %2480 = vmatpush1.msra.mxu0 0.0
    %2481 = vmatprep.subr.mxu0 0.0
    %2482 = vmatpush1.msra.mxu0 0.0
    %2483 = vmatprep.subr.mxu0 0.0
    %2484 = vmatpush1.msra.mxu0 0.0
    %2485 = vmatprep.mubr.f32.mxu0 0.0
    %2486 = vmatmul.mubr.f32.gmra.mrb[0].mxu0 %v2419
    %v2487 = vpop.f32.mrb[0].mxu0
    %v2488 = vadd.f32 %v2323, %v2487
    %v2489 = vpop.f32.mrb[0].mxu0
    %v2490 = vadd.f32 %v2325, %v2489
    %2491 = vdwg.mxu0
    %2492 = vmatprep.subr.mxu0 %v75
    %2493 = vmatpush1.msra.mxu0 %v74
    %2494 = vmatprep.subr.mxu0 %v79
    %2495 = vmatpush1.msra.mxu0 %v78
    %2496 = vmatprep.subr.mxu0 %v83
    %2497 = vmatpush1.msra.mxu0 %v82
    %2498 = vmatprep.subr.mxu0 %v87
    %2499 = vmatpush1.msra.mxu0 %v86
    %2500 = vmatprep.subr.mxu0 %v91
    %2501 = vmatpush1.msra.mxu0 %v90
    %2502 = vmatprep.subr.mxu0 %v95
    %2503 = vmatpush1.msra.mxu0 %v94
    %2504 = vmatprep.subr.mxu0 %v99
    %2505 = vmatpush1.msra.mxu0 %v98
    %2506 = vmatprep.subr.mxu0 %v103
    %2507 = vmatpush1.msra.mxu0 %v102
    %2508 = vmatprep.subr.mxu0 %v107
    %2509 = vmatpush1.msra.mxu0 %v106
    %2510 = vmatprep.subr.mxu0 %v111
    %2511 = vmatpush1.msra.mxu0 %v110
    %2512 = vmatprep.subr.mxu0 %v115
    %2513 = vmatpush1.msra.mxu0 %v114
    %2514 = vmatprep.subr.mxu0 %v119
    %2515 = vmatpush1.msra.mxu0 %v118
    %2516 = vmatprep.subr.mxu0 %v123
    %2517 = vmatpush1.msra.mxu0 %v122
    %2518 = vmatprep.subr.mxu0 %v127
    %2519 = vmatpush1.msra.mxu0 %v126
    %2520 = vmatprep.subr.mxu0 %v131
    %2521 = vmatpush1.msra.mxu0 %v130
    %2522 = vmatprep.subr.mxu0 %v135
    %2523 = vmatpush1.msra.mxu0 %v134
    %2524 = vmatprep.subr.mxu0 0.0
    %2525 = vmatpush1.msra.mxu0 0.0
    %2526 = vmatprep.subr.mxu0 0.0
    %2527 = vmatpush1.msra.mxu0 0.0
    %2528 = vmatprep.subr.mxu0 0.0
    %2529 = vmatpush1.msra.mxu0 0.0
    %2530 = vmatprep.subr.mxu0 0.0
    %2531 = vmatpush1.msra.mxu0 0.0
    %2532 = vmatprep.subr.mxu0 0.0
    %2533 = vmatpush1.msra.mxu0 0.0
    %2534 = vmatprep.subr.mxu0 0.0
    %2535 = vmatpush1.msra.mxu0 0.0
    %2536 = vmatprep.subr.mxu0 0.0
    %2537 = vmatpush1.msra.mxu0 0.0
    %2538 = vmatprep.subr.mxu0 0.0
    %2539 = vmatpush1.msra.mxu0 0.0
    %2540 = vmatprep.subr.mxu0 0.0
    %2541 = vmatpush1.msra.mxu0 0.0
    %2542 = vmatprep.subr.mxu0 0.0
    %2543 = vmatpush1.msra.mxu0 0.0
    %2544 = vmatprep.subr.mxu0 0.0
    %2545 = vmatpush1.msra.mxu0 0.0
    %2546 = vmatprep.subr.mxu0 0.0
    %2547 = vmatpush1.msra.mxu0 0.0
    %2548 = vmatprep.subr.mxu0 0.0
    %2549 = vmatpush1.msra.mxu0 0.0
    %2550 = vmatprep.subr.mxu0 0.0
    %2551 = vmatpush1.msra.mxu0 0.0
    %2552 = vmatprep.subr.mxu0 0.0
    %2553 = vmatpush1.msra.mxu0 0.0
    %2554 = vmatprep.subr.mxu0 0.0
    %2555 = vmatpush1.msra.mxu0 0.0
    %2556 = vmatprep.mubr.f32.mxu0 0.0
    %2557 = vmatmul.mubr.f32.gmra.mrb[0].mxu0 %v2419
    %v2558 = vpop.f32.mrb[0].mxu0
    %v2559 = vadd.f32 %v2394, %v2558
    %v2560 = vpop.f32.mrb[0].mxu0
    %v2561 = vadd.f32 %v2396, %v2560
    %2562 = vdwg.mxu0
    %v2563 = vadd.f32 %v2488, %v518
    %v2564 = vadd.f32 %v2490, %v522
    %v2565 = vadd.f32 %v2559, %v526
    %v2566 = vadd.f32 %v2561, %v530
    %v2567 = vxor.u32 %v2563, 2147483648
    %v2568 = vmul.f32 %v2567, 1.442695
    %v2569 = vpow.pop %v2568
    %v2570 = vadd.f32 %v2569, 1.0
    %v2571 = vrcp.pop %v2570
    %v2572 = vmul.f32 1.0, %v2571
    %v2573 = vxor.u32 %v2564, 2147483648
    %v2574 = vmul.f32 %v2573, 1.442695
    %v2575 = vpow.pop %v2574
    %v2576 = vadd.f32 %v2575, 1.0
    %v2577 = vrcp.pop %v2576
    %v2578 = vmul.f32 1.0, %v2577
    %v2579 = vmul.f32 %v2572, %v2566
    %v2580 = vadd.f32 %v2565, %v2579
    %v2581 = vtanh.pop %v2580
    %v2582 = vsub.f32 1.0, %v2578
    %v2583 = vmul.f32 %v2582, %v2581
    %v2584 = vmul.f32 %v2578, %v2247
    %v2585 = vadd.f32 %v2583, %v2584
    %v2586 = vld [vmem:[%s1 + $0x7] sm:$0x1]
    %v2587 = vld [vmem:[%s1 + $0x17] sm:$0x1]
    %v2588 = vld [vmem:[%s1 + $0x27] sm:$0x1]
    %v2589 = vld [vmem:[%s1 + $0x37] sm:$0x1]
    %v2590 = vld [vmem:[%s1 + $0x47] sm:$0x1]
    %v2591 = vld [vmem:[%s1 + $0x57] sm:$0x1]
    %v2592 = vld [vmem:[%s1 + $0x67] sm:$0x1]
    %v2593 = vld [vmem:[%s1 + $0x77] sm:$0x1]
    %2594 = vmatprep.subr.mxu0 %v137
    %2595 = vmatpush1.msra.mxu0 %v136
    %2596 = vmatprep.subr.mxu0 %v141
    %2597 = vmatpush1.msra.mxu0 %v140
    %2598 = vmatprep.subr.mxu0 %v145
    %2599 = vmatpush1.msra.mxu0 %v144
    %2600 = vmatprep.subr.mxu0 %v149
    %2601 = vmatpush1.msra.mxu0 %v148
    %2602 = vmatprep.subr.mxu0 %v153
    %2603 = vmatpush1.msra.mxu0 %v152
    %2604 = vmatprep.subr.mxu0 %v157
    %2605 = vmatpush1.msra.mxu0 %v156
    %2606 = vmatprep.subr.mxu0 %v161
    %2607 = vmatpush1.msra.mxu0 %v160
    %2608 = vmatprep.subr.mxu0 %v165
    %2609 = vmatpush1.msra.mxu0 %v164
    %2610 = vmatprep.subr.mxu0 %v169
    %2611 = vmatpush1.msra.mxu0 %v168
    %2612 = vmatprep.subr.mxu0 %v173
    %2613 = vmatpush1.msra.mxu0 %v172
    %2614 = vmatprep.subr.mxu0 %v177
    %2615 = vmatpush1.msra.mxu0 %v176
    %2616 = vmatprep.subr.mxu0 %v181
    %2617 = vmatpush1.msra.mxu0 %v180
    %2618 = vmatprep.subr.mxu0 %v185
    %2619 = vmatpush1.msra.mxu0 %v184
    %2620 = vmatprep.subr.mxu0 %v189
    %2621 = vmatpush1.msra.mxu0 %v188
    %2622 = vmatprep.subr.mxu0 %v193
    %2623 = vmatpush1.msra.mxu0 %v192
    %2624 = vmatprep.subr.mxu0 %v197
    %2625 = vmatpush1.msra.mxu0 %v196
    %2626 = vmatprep.subr.mxu0 0.0
    %2627 = vmatpush1.msra.mxu0 0.0
    %2628 = vmatprep.subr.mxu0 0.0
    %2629 = vmatpush1.msra.mxu0 0.0
    %2630 = vmatprep.subr.mxu0 0.0
    %2631 = vmatpush1.msra.mxu0 0.0
    %2632 = vmatprep.subr.mxu0 0.0
    %2633 = vmatpush1.msra.mxu0 0.0
    %2634 = vmatprep.subr.mxu0 0.0
    %2635 = vmatpush1.msra.mxu0 0.0
    %2636 = vmatprep.subr.mxu0 0.0
    %2637 = vmatpush1.msra.mxu0 0.0
    %2638 = vmatprep.subr.mxu0 0.0
    %2639 = vmatpush1.msra.mxu0 0.0
    %2640 = vmatprep.subr.mxu0 0.0
    %2641 = vmatpush1.msra.mxu0 0.0
    %2642 = vmatprep.subr.mxu0 0.0
    %2643 = vmatpush1.msra.mxu0 0.0
    %2644 = vmatprep.subr.mxu0 0.0
    %2645 = vmatpush1.msra.mxu0 0.0
    %2646 = vmatprep.subr.mxu0 0.0
    %2647 = vmatpush1.msra.mxu0 0.0
    %2648 = vmatprep.subr.mxu0 0.0
    %2649 = vmatpush1.msra.mxu0 0.0
    %2650 = vmatprep.subr.mxu0 0.0
    %2651 = vmatpush1.msra.mxu0 0.0
    %2652 = vmatprep.subr.mxu0 0.0
    %2653 = vmatpush1.msra.mxu0 0.0
    %2654 = vmatprep.subr.mxu0 0.0
    %2655 = vmatpush1.msra.mxu0 0.0
    %2656 = vmatprep.subr.mxu0 0.0
    %2657 = vmatpush1.msra.mxu0 0.0
    %2658 = vmatprep.mubr.f32.mxu0 0.0
    %2659 = vmatmul.mubr.f32.gmra.mrb[0].mxu0 %v2585
    %v2660 = vpop.f32.mrb[0].mxu0
    %v2661 = vadd.f32 0.0, %v2660
    %v2662 = vpop.f32.mrb[0].mxu0
    %v2663 = vadd.f32 0.0, %v2662
    %2664 = vdwg.mxu0
    %2665 = vmatprep.subr.mxu0 %v139
    %2666 = vmatpush1.msra.mxu0 %v138
    %2667 = vmatprep.subr.mxu0 %v143
    %2668 = vmatpush1.msra.mxu0 %v142
    %2669 = vmatprep.subr.mxu0 %v147
    %2670 = vmatpush1.msra.mxu0 %v146
    %2671 = vmatprep.subr.mxu0 %v151
    %2672 = vmatpush1.msra.mxu0 %v150
    %2673 = vmatprep.subr.mxu0 %v155
    %2674 = vmatpush1.msra.mxu0 %v154
    %2675 = vmatprep.subr.mxu0 %v159
    %2676 = vmatpush1.msra.mxu0 %v158
    %2677 = vmatprep.subr.mxu0 %v163
    %2678 = vmatpush1.msra.mxu0 %v162
    %2679 = vmatprep.subr.mxu0 %v167
    %2680 = vmatpush1.msra.mxu0 %v166
    %2681 = vmatprep.subr.mxu0 %v171
    %2682 = vmatpush1.msra.mxu0 %v170
    %2683 = vmatprep.subr.mxu0 %v175
    %2684 = vmatpush1.msra.mxu0 %v174
    %2685 = vmatprep.subr.mxu0 %v179
    %2686 = vmatpush1.msra.mxu0 %v178
    %2687 = vmatprep.subr.mxu0 %v183
    %2688 = vmatpush1.msra.mxu0 %v182
    %2689 = vmatprep.subr.mxu0 %v187
    %2690 = vmatpush1.msra.mxu0 %v186
    %2691 = vmatprep.subr.mxu0 %v191
    %2692 = vmatpush1.msra.mxu0 %v190
    %2693 = vmatprep.subr.mxu0 %v195
    %2694 = vmatpush1.msra.mxu0 %v194
    %2695 = vmatprep.subr.mxu0 %v199
    %2696 = vmatpush1.msra.mxu0 %v198
    %2697 = vmatprep.subr.mxu0 0.0
    %2698 = vmatpush1.msra.mxu0 0.0
    %2699 = vmatprep.subr.mxu0 0.0
    %2700 = vmatpush1.msra.mxu0 0.0
    %2701 = vmatprep.subr.mxu0 0.0
    %2702 = vmatpush1.msra.mxu0 0.0
    %2703 = vmatprep.subr.mxu0 0.0
    %2704 = vmatpush1.msra.mxu0 0.0
    %2705 = vmatprep.subr.mxu0 0.0
    %2706 = vmatpush1.msra.mxu0 0.0
    %2707 = vmatprep.subr.mxu0 0.0
    %2708 = vmatpush1.msra.mxu0 0.0
    %2709 = vmatprep.subr.mxu0 0.0
    %2710 = vmatpush1.msra.mxu0 0.0
    %2711 = vmatprep.subr.mxu0 0.0
    %2712 = vmatpush1.msra.mxu0 0.0
    %2713 = vmatprep.subr.mxu0 0.0
    %2714 = vmatpush1.msra.mxu0 0.0
    %2715 = vmatprep.subr.mxu0 0.0
    %2716 = vmatpush1.msra.mxu0 0.0
    %2717 = vmatprep.subr.mxu0 0.0
    %2718 = vmatpush1.msra.mxu0 0.0
    %2719 = vmatprep.subr.mxu0 0.0
    %2720 = vmatpush1.msra.mxu0 0.0
    %2721 = vmatprep.subr.mxu0 0.0
    %2722 = vmatpush1.msra.mxu0 0.0
    %2723 = vmatprep.subr.mxu0 0.0
    %2724 = vmatpush1.msra.mxu0 0.0
    %2725 = vmatprep.subr.mxu0 0.0
    %2726 = vmatpush1.msra.mxu0 0.0
    %2727 = vmatprep.subr.mxu0 0.0
    %2728 = vmatpush1.msra.mxu0 0.0
    %2729 = vmatprep.mubr.f32.mxu0 0.0
    %2730 = vmatmul.mubr.f32.gmra.mrb[0].mxu0 %v2585
    %v2731 = vpop.f32.mrb[0].mxu0
    %v2732 = vadd.f32 0.0, %v2731
    %v2733 = vpop.f32.mrb[0].mxu0
    %v2734 = vadd.f32 0.0, %v2733
    %2735 = vdwg.mxu0
    %v2744 = vrot.slane %v2587, 7
    %v2745 = vsel %vm351, %v2744, %v2586
    %v2746 = vrot.slane %v2588, 6
    %v2747 = vsel %vm354, %v2746, %v2745
    %v2748 = vrot.slane %v2589, 5
    %v2749 = vsel %vm357, %v2748, %v2747
    %v2750 = vrot.slane %v2590, 4
    %v2751 = vsel %vm360, %v2750, %v2749
    %v2752 = vrot.slane %v2591, 3
    %v2753 = vsel %vm363, %v2752, %v2751
    %v2754 = vrot.slane %v2592, 2
    %v2755 = vsel %vm366, %v2754, %v2753
    %v2756 = vrot.slane %v2593, 1
    %v2757 = vsel %vm369, %v2756, %v2755
    %2759 = vmatprep.subr.mxu0 %v73
    %2760 = vmatpush1.msra.mxu0 %v72
    %2761 = vmatprep.subr.mxu0 %v77
    %2762 = vmatpush1.msra.mxu0 %v76
    %2763 = vmatprep.subr.mxu0 %v81
    %2764 = vmatpush1.msra.mxu0 %v80
    %2765 = vmatprep.subr.mxu0 %v85
    %2766 = vmatpush1.msra.mxu0 %v84
    %2767 = vmatprep.subr.mxu0 %v89
    %2768 = vmatpush1.msra.mxu0 %v88
    %2769 = vmatprep.subr.mxu0 %v93
    %2770 = vmatpush1.msra.mxu0 %v92
    %2771 = vmatprep.subr.mxu0 %v97
    %2772 = vmatpush1.msra.mxu0 %v96
    %2773 = vmatprep.subr.mxu0 %v101
    %2774 = vmatpush1.msra.mxu0 %v100
    %2775 = vmatprep.subr.mxu0 %v105
    %2776 = vmatpush1.msra.mxu0 %v104
    %2777 = vmatprep.subr.mxu0 %v109
    %2778 = vmatpush1.msra.mxu0 %v108
    %2779 = vmatprep.subr.mxu0 %v113
    %2780 = vmatpush1.msra.mxu0 %v112
    %2781 = vmatprep.subr.mxu0 %v117
    %2782 = vmatpush1.msra.mxu0 %v116
    %2783 = vmatprep.subr.mxu0 %v121
    %2784 = vmatpush1.msra.mxu0 %v120
    %2785 = vmatprep.subr.mxu0 %v125
    %2786 = vmatpush1.msra.mxu0 %v124
    %2787 = vmatprep.subr.mxu0 %v129
    %2788 = vmatpush1.msra.mxu0 %v128
    %2789 = vmatprep.subr.mxu0 %v133
    %2790 = vmatpush1.msra.mxu0 %v132
    %2791 = vmatprep.subr.mxu0 0.0
    %2792 = vmatpush1.msra.mxu0 0.0
    %2793 = vmatprep.subr.mxu0 0.0
    %2794 = vmatpush1.msra.mxu0 0.0
    %2795 = vmatprep.subr.mxu0 0.0
    %2796 = vmatpush1.msra.mxu0 0.0
    %2797 = vmatprep.subr.mxu0 0.0
    %2798 = vmatpush1.msra.mxu0 0.0
    %2799 = vmatprep.subr.mxu0 0.0
    %2800 = vmatpush1.msra.mxu0 0.0
    %2801 = vmatprep.subr.mxu0 0.0
    %2802 = vmatpush1.msra.mxu0 0.0
    %2803 = vmatprep.subr.mxu0 0.0
    %2804 = vmatpush1.msra.mxu0 0.0
    %2805 = vmatprep.subr.mxu0 0.0
    %2806 = vmatpush1.msra.mxu0 0.0
    %2807 = vmatprep.subr.mxu0 0.0
    %2808 = vmatpush1.msra.mxu0 0.0
    %2809 = vmatprep.subr.mxu0 0.0
    %2810 = vmatpush1.msra.mxu0 0.0
    %2811 = vmatprep.subr.mxu0 0.0
    %2812 = vmatpush1.msra.mxu0 0.0
    %2813 = vmatprep.subr.mxu0 0.0
    %2814 = vmatpush1.msra.mxu0 0.0
    %2815 = vmatprep.subr.mxu0 0.0
    %2816 = vmatpush1.msra.mxu0 0.0
    %2817 = vmatprep.subr.mxu0 0.0
    %2818 = vmatpush1.msra.mxu0 0.0
    %2819 = vmatprep.subr.mxu0 0.0
    %2820 = vmatpush1.msra.mxu0 0.0
    %2821 = vmatprep.subr.mxu0 0.0
    %2822 = vmatpush1.msra.mxu0 0.0
    %2823 = vmatprep.mubr.f32.mxu0 0.0
    %2824 = vmatmul.mubr.f32.gmra.mrb[0].mxu0 %v2757
    %v2825 = vpop.f32.mrb[0].mxu0
    %v2826 = vadd.f32 %v2661, %v2825
    %v2827 = vpop.f32.mrb[0].mxu0
    %v2828 = vadd.f32 %v2663, %v2827
    %2829 = vdwg.mxu0
    %2830 = vmatprep.subr.mxu0 %v75
    %2831 = vmatpush1.msra.mxu0 %v74
    %2832 = vmatprep.subr.mxu0 %v79
    %2833 = vmatpush1.msra.mxu0 %v78
    %2834 = vmatprep.subr.mxu0 %v83
    %2835 = vmatpush1.msra.mxu0 %v82
    %2836 = vmatprep.subr.mxu0 %v87
    %2837 = vmatpush1.msra.mxu0 %v86
    %2838 = vmatprep.subr.mxu0 %v91
    %2839 = vmatpush1.msra.mxu0 %v90
    %2840 = vmatprep.subr.mxu0 %v95
    %2841 = vmatpush1.msra.mxu0 %v94
    %2842 = vmatprep.subr.mxu0 %v99
    %2843 = vmatpush1.msra.mxu0 %v98
    %2844 = vmatprep.subr.mxu0 %v103
    %2845 = vmatpush1.msra.mxu0 %v102
    %2846 = vmatprep.subr.mxu0 %v107
    %2847 = vmatpush1.msra.mxu0 %v106
    %2848 = vmatprep.subr.mxu0 %v111
    %2849 = vmatpush1.msra.mxu0 %v110
    %2850 = vmatprep.subr.mxu0 %v115
    %2851 = vmatpush1.msra.mxu0 %v114
    %2852 = vmatprep.subr.mxu0 %v119
    %2853 = vmatpush1.msra.mxu0 %v118
    %2854 = vmatprep.subr.mxu0 %v123
    %2855 = vmatpush1.msra.mxu0 %v122
    %2856 = vmatprep.subr.mxu0 %v127
    %2857 = vmatpush1.msra.mxu0 %v126
    %2858 = vmatprep.subr.mxu0 %v131
    %2859 = vmatpush1.msra.mxu0 %v130
    %2860 = vmatprep.subr.mxu0 %v135
    %2861 = vmatpush1.msra.mxu0 %v134
    %2862 = vmatprep.subr.mxu0 0.0
    %2863 = vmatpush1.msra.mxu0 0.0
    %2864 = vmatprep.subr.mxu0 0.0
    %2865 = vmatpush1.msra.mxu0 0.0
    %2866 = vmatprep.subr.mxu0 0.0
    %2867 = vmatpush1.msra.mxu0 0.0
    %2868 = vmatprep.subr.mxu0 0.0
    %2869 = vmatpush1.msra.mxu0 0.0
    %2870 = vmatprep.subr.mxu0 0.0
    %2871 = vmatpush1.msra.mxu0 0.0
    %2872 = vmatprep.subr.mxu0 0.0
    %2873 = vmatpush1.msra.mxu0 0.0
    %2874 = vmatprep.subr.mxu0 0.0
    %2875 = vmatpush1.msra.mxu0 0.0
    %2876 = vmatprep.subr.mxu0 0.0
    %2877 = vmatpush1.msra.mxu0 0.0
    %2878 = vmatprep.subr.mxu0 0.0
    %2879 = vmatpush1.msra.mxu0 0.0
    %2880 = vmatprep.subr.mxu0 0.0
    %2881 = vmatpush1.msra.mxu0 0.0
    %2882 = vmatprep.subr.mxu0 0.0
    %2883 = vmatpush1.msra.mxu0 0.0
    %2884 = vmatprep.subr.mxu0 0.0
    %2885 = vmatpush1.msra.mxu0 0.0
    %2886 = vmatprep.subr.mxu0 0.0
    %2887 = vmatpush1.msra.mxu0 0.0
    %2888 = vmatprep.subr.mxu0 0.0
    %2889 = vmatpush1.msra.mxu0 0.0
    %2890 = vmatprep.subr.mxu0 0.0
    %2891 = vmatpush1.msra.mxu0 0.0
    %2892 = vmatprep.subr.mxu0 0.0
    %2893 = vmatpush1.msra.mxu0 0.0
    %2894 = vmatprep.mubr.f32.mxu0 0.0
    %2895 = vmatmul.mubr.f32.gmra.mrb[0].mxu0 %v2757
    %v2896 = vpop.f32.mrb[0].mxu0
    %v2897 = vadd.f32 %v2732, %v2896
    %v2898 = vpop.f32.mrb[0].mxu0
    %v2899 = vadd.f32 %v2734, %v2898
    %2900 = vdwg.mxu0
    %v2901 = vadd.f32 %v2826, %v518
    %v2902 = vadd.f32 %v2828, %v522
    %v2903 = vadd.f32 %v2897, %v526
    %v2904 = vadd.f32 %v2899, %v530
    %v2905 = vxor.u32 %v2901, 2147483648
    %v2906 = vmul.f32 %v2905, 1.442695
    %v2907 = vpow.pop %v2906
    %v2908 = vadd.f32 %v2907, 1.0
    %v2909 = vrcp.pop %v2908
    %v2910 = vmul.f32 1.0, %v2909
    %v2911 = vxor.u32 %v2902, 2147483648
    %v2912 = vmul.f32 %v2911, 1.442695
    %v2913 = vpow.pop %v2912
    %v2914 = vadd.f32 %v2913, 1.0
    %v2915 = vrcp.pop %v2914
    %v2916 = vmul.f32 1.0, %v2915
    %v2917 = vmul.f32 %v2910, %v2904
    %v2918 = vadd.f32 %v2903, %v2917
    %v2919 = vtanh.pop %v2918
    %v2920 = vsub.f32 1.0, %v2916
    %v2921 = vmul.f32 %v2920, %v2919
    %v2922 = vmul.f32 %v2916, %v2585
    %v2923 = vadd.f32 %v2921, %v2922
    %v2924 = vld [vmem:[%s1 + $0x8] sm:$0x1]
    %v2925 = vld [vmem:[%s1 + $0x18] sm:$0x1]
    %v2926 = vld [vmem:[%s1 + $0x28] sm:$0x1]
    %v2927 = vld [vmem:[%s1 + $0x38] sm:$0x1]
    %v2928 = vld [vmem:[%s1 + $0x48] sm:$0x1]
    %v2929 = vld [vmem:[%s1 + $0x58] sm:$0x1]
    %v2930 = vld [vmem:[%s1 + $0x68] sm:$0x1]
    %v2931 = vld [vmem:[%s1 + $0x78] sm:$0x1]
    %2932 = vmatprep.subr.mxu0 %v137
    %2933 = vmatpush1.msra.mxu0 %v136
    %2934 = vmatprep.subr.mxu0 %v141
    %2935 = vmatpush1.msra.mxu0 %v140
    %2936 = vmatprep.subr.mxu0 %v145
    %2937 = vmatpush1.msra.mxu0 %v144
    %2938 = vmatprep.subr.mxu0 %v149
    %2939 = vmatpush1.msra.mxu0 %v148
    %2940 = vmatprep.subr.mxu0 %v153
    %2941 = vmatpush1.msra.mxu0 %v152
    %2942 = vmatprep.subr.mxu0 %v157
    %2943 = vmatpush1.msra.mxu0 %v156
    %2944 = vmatprep.subr.mxu0 %v161
    %2945 = vmatpush1.msra.mxu0 %v160
    %2946 = vmatprep.subr.mxu0 %v165
    %2947 = vmatpush1.msra.mxu0 %v164
    %2948 = vmatprep.subr.mxu0 %v169
    %2949 = vmatpush1.msra.mxu0 %v168
    %2950 = vmatprep.subr.mxu0 %v173
    %2951 = vmatpush1.msra.mxu0 %v172
    %2952 = vmatprep.subr.mxu0 %v177
    %2953 = vmatpush1.msra.mxu0 %v176
    %2954 = vmatprep.subr.mxu0 %v181
    %2955 = vmatpush1.msra.mxu0 %v180
    %2956 = vmatprep.subr.mxu0 %v185
    %2957 = vmatpush1.msra.mxu0 %v184
    %2958 = vmatprep.subr.mxu0 %v189
    %2959 = vmatpush1.msra.mxu0 %v188
    %2960 = vmatprep.subr.mxu0 %v193
    %2961 = vmatpush1.msra.mxu0 %v192
    %2962 = vmatprep.subr.mxu0 %v197
    %2963 = vmatpush1.msra.mxu0 %v196
    %2964 = vmatprep.subr.mxu0 0.0
    %2965 = vmatpush1.msra.mxu0 0.0
    %2966 = vmatprep.subr.mxu0 0.0
    %2967 = vmatpush1.msra.mxu0 0.0
    %2968 = vmatprep.subr.mxu0 0.0
    %2969 = vmatpush1.msra.mxu0 0.0
    %2970 = vmatprep.subr.mxu0 0.0
    %2971 = vmatpush1.msra.mxu0 0.0
    %2972 = vmatprep.subr.mxu0 0.0
    %2973 = vmatpush1.msra.mxu0 0.0
    %2974 = vmatprep.subr.mxu0 0.0
    %2975 = vmatpush1.msra.mxu0 0.0
    %2976 = vmatprep.subr.mxu0 0.0
    %2977 = vmatpush1.msra.mxu0 0.0
    %2978 = vmatprep.subr.mxu0 0.0
    %2979 = vmatpush1.msra.mxu0 0.0
    %2980 = vmatprep.subr.mxu0 0.0
    %2981 = vmatpush1.msra.mxu0 0.0
    %2982 = vmatprep.subr.mxu0 0.0
    %2983 = vmatpush1.msra.mxu0 0.0
    %2984 = vmatprep.subr.mxu0 0.0
    %2985 = vmatpush1.msra.mxu0 0.0
    %2986 = vmatprep.subr.mxu0 0.0
    %2987 = vmatpush1.msra.mxu0 0.0
    %2988 = vmatprep.subr.mxu0 0.0
    %2989 = vmatpush1.msra.mxu0 0.0
    %2990 = vmatprep.subr.mxu0 0.0
    %2991 = vmatpush1.msra.mxu0 0.0
    %2992 = vmatprep.subr.mxu0 0.0
    %2993 = vmatpush1.msra.mxu0 0.0
    %2994 = vmatprep.subr.mxu0 0.0
    %2995 = vmatpush1.msra.mxu0 0.0
    %2996 = vmatprep.mubr.f32.mxu0 0.0
    %2997 = vmatmul.mubr.f32.gmra.mrb[0].mxu0 %v2923
    %v2998 = vpop.f32.mrb[0].mxu0
    %v2999 = vadd.f32 0.0, %v2998
    %v3000 = vpop.f32.mrb[0].mxu0
    %v3001 = vadd.f32 0.0, %v3000
    %3002 = vdwg.mxu0
    %3003 = vmatprep.subr.mxu0 %v139
    %3004 = vmatpush1.msra.mxu0 %v138
    %3005 = vmatprep.subr.mxu0 %v143
    %3006 = vmatpush1.msra.mxu0 %v142
    %3007 = vmatprep.subr.mxu0 %v147
    %3008 = vmatpush1.msra.mxu0 %v146
    %3009 = vmatprep.subr.mxu0 %v151
    %3010 = vmatpush1.msra.mxu0 %v150
    %3011 = vmatprep.subr.mxu0 %v155
    %3012 = vmatpush1.msra.mxu0 %v154
    %3013 = vmatprep.subr.mxu0 %v159
    %3014 = vmatpush1.msra.mxu0 %v158
    %3015 = vmatprep.subr.mxu0 %v163
    %3016 = vmatpush1.msra.mxu0 %v162
    %3017 = vmatprep.subr.mxu0 %v167
    %3018 = vmatpush1.msra.mxu0 %v166
    %3019 = vmatprep.subr.mxu0 %v171
    %3020 = vmatpush1.msra.mxu0 %v170
    %3021 = vmatprep.subr.mxu0 %v175
    %3022 = vmatpush1.msra.mxu0 %v174
    %3023 = vmatprep.subr.mxu0 %v179
    %3024 = vmatpush1.msra.mxu0 %v178
    %3025 = vmatprep.subr.mxu0 %v183
    %3026 = vmatpush1.msra.mxu0 %v182
    %3027 = vmatprep.subr.mxu0 %v187
    %3028 = vmatpush1.msra.mxu0 %v186
    %3029 = vmatprep.subr.mxu0 %v191
    %3030 = vmatpush1.msra.mxu0 %v190
    %3031 = vmatprep.subr.mxu0 %v195
    %3032 = vmatpush1.msra.mxu0 %v194
    %3033 = vmatprep.subr.mxu0 %v199
    %3034 = vmatpush1.msra.mxu0 %v198
    %3035 = vmatprep.subr.mxu0 0.0
    %3036 = vmatpush1.msra.mxu0 0.0
    %3037 = vmatprep.subr.mxu0 0.0
    %3038 = vmatpush1.msra.mxu0 0.0
    %3039 = vmatprep.subr.mxu0 0.0
    %3040 = vmatpush1.msra.mxu0 0.0
    %3041 = vmatprep.subr.mxu0 0.0
    %3042 = vmatpush1.msra.mxu0 0.0
    %3043 = vmatprep.subr.mxu0 0.0
    %3044 = vmatpush1.msra.mxu0 0.0
    %3045 = vmatprep.subr.mxu0 0.0
    %3046 = vmatpush1.msra.mxu0 0.0
    %3047 = vmatprep.subr.mxu0 0.0
    %3048 = vmatpush1.msra.mxu0 0.0
    %3049 = vmatprep.subr.mxu0 0.0
    %3050 = vmatpush1.msra.mxu0 0.0
    %3051 = vmatprep.subr.mxu0 0.0
    %3052 = vmatpush1.msra.mxu0 0.0
    %3053 = vmatprep.subr.mxu0 0.0
    %3054 = vmatpush1.msra.mxu0 0.0
    %3055 = vmatprep.subr.mxu0 0.0
    %3056 = vmatpush1.msra.mxu0 0.0
    %3057 = vmatprep.subr.mxu0 0.0
    %3058 = vmatpush1.msra.mxu0 0.0
    %3059 = vmatprep.subr.mxu0 0.0
    %3060 = vmatpush1.msra.mxu0 0.0
    %3061 = vmatprep.subr.mxu0 0.0
    %3062 = vmatpush1.msra.mxu0 0.0
    %3063 = vmatprep.subr.mxu0 0.0
    %3064 = vmatpush1.msra.mxu0 0.0
    %3065 = vmatprep.subr.mxu0 0.0
    %3066 = vmatpush1.msra.mxu0 0.0
    %3067 = vmatprep.mubr.f32.mxu0 0.0
    %3068 = vmatmul.mubr.f32.gmra.mrb[0].mxu0 %v2923
    %v3069 = vpop.f32.mrb[0].mxu0
    %v3070 = vadd.f32 0.0, %v3069
    %v3071 = vpop.f32.mrb[0].mxu0
    %v3072 = vadd.f32 0.0, %v3071
    %3073 = vdwg.mxu0
    %v3082 = vrot.slane %v2925, 7
    %v3083 = vsel %vm351, %v3082, %v2924
    %v3084 = vrot.slane %v2926, 6
    %v3085 = vsel %vm354, %v3084, %v3083
    %v3086 = vrot.slane %v2927, 5
    %v3087 = vsel %vm357, %v3086, %v3085
    %v3088 = vrot.slane %v2928, 4
    %v3089 = vsel %vm360, %v3088, %v3087
    %v3090 = vrot.slane %v2929, 3
    %v3091 = vsel %vm363, %v3090, %v3089
    %v3092 = vrot.slane %v2930, 2
    %v3093 = vsel %vm366, %v3092, %v3091
    %v3094 = vrot.slane %v2931, 1
    %v3095 = vsel %vm369, %v3094, %v3093
    %3097 = vmatprep.subr.mxu0 %v73
    %3098 = vmatpush1.msra.mxu0 %v72
    %3099 = vmatprep.subr.mxu0 %v77
    %3100 = vmatpush1.msra.mxu0 %v76
    %3101 = vmatprep.subr.mxu0 %v81
    %3102 = vmatpush1.msra.mxu0 %v80
    %3103 = vmatprep.subr.mxu0 %v85
    %3104 = vmatpush1.msra.mxu0 %v84
    %3105 = vmatprep.subr.mxu0 %v89
    %3106 = vmatpush1.msra.mxu0 %v88
    %3107 = vmatprep.subr.mxu0 %v93
    %3108 = vmatpush1.msra.mxu0 %v92
    %3109 = vmatprep.subr.mxu0 %v97
    %3110 = vmatpush1.msra.mxu0 %v96
    %3111 = vmatprep.subr.mxu0 %v101
    %3112 = vmatpush1.msra.mxu0 %v100
    %3113 = vmatprep.subr.mxu0 %v105
    %3114 = vmatpush1.msra.mxu0 %v104
    %3115 = vmatprep.subr.mxu0 %v109
    %3116 = vmatpush1.msra.mxu0 %v108
    %3117 = vmatprep.subr.mxu0 %v113
    %3118 = vmatpush1.msra.mxu0 %v112
    %3119 = vmatprep.subr.mxu0 %v117
    %3120 = vmatpush1.msra.mxu0 %v116
    %3121 = vmatprep.subr.mxu0 %v121
    %3122 = vmatpush1.msra.mxu0 %v120
    %3123 = vmatprep.subr.mxu0 %v125
    %3124 = vmatpush1.msra.mxu0 %v124
    %3125 = vmatprep.subr.mxu0 %v129
    %3126 = vmatpush1.msra.mxu0 %v128
    %3127 = vmatprep.subr.mxu0 %v133
    %3128 = vmatpush1.msra.mxu0 %v132
    %3129 = vmatprep.subr.mxu0 0.0
    %3130 = vmatpush1.msra.mxu0 0.0
    %3131 = vmatprep.subr.mxu0 0.0
    %3132 = vmatpush1.msra.mxu0 0.0
    %3133 = vmatprep.subr.mxu0 0.0
    %3134 = vmatpush1.msra.mxu0 0.0
    %3135 = vmatprep.subr.mxu0 0.0
    %3136 = vmatpush1.msra.mxu0 0.0
    %3137 = vmatprep.subr.mxu0 0.0
    %3138 = vmatpush1.msra.mxu0 0.0
    %3139 = vmatprep.subr.mxu0 0.0
    %3140 = vmatpush1.msra.mxu0 0.0
    %3141 = vmatprep.subr.mxu0 0.0
    %3142 = vmatpush1.msra.mxu0 0.0
    %3143 = vmatprep.subr.mxu0 0.0
    %3144 = vmatpush1.msra.mxu0 0.0
    %3145 = vmatprep.subr.mxu0 0.0
    %3146 = vmatpush1.msra.mxu0 0.0
    %3147 = vmatprep.subr.mxu0 0.0
    %3148 = vmatpush1.msra.mxu0 0.0
    %3149 = vmatprep.subr.mxu0 0.0
    %3150 = vmatpush1.msra.mxu0 0.0
    %3151 = vmatprep.subr.mxu0 0.0
    %3152 = vmatpush1.msra.mxu0 0.0
    %3153 = vmatprep.subr.mxu0 0.0
    %3154 = vmatpush1.msra.mxu0 0.0
    %3155 = vmatprep.subr.mxu0 0.0
    %3156 = vmatpush1.msra.mxu0 0.0
    %3157 = vmatprep.subr.mxu0 0.0
    %3158 = vmatpush1.msra.mxu0 0.0
    %3159 = vmatprep.subr.mxu0 0.0
    %3160 = vmatpush1.msra.mxu0 0.0
    %3161 = vmatprep.mubr.f32.mxu0 0.0
    %3162 = vmatmul.mubr.f32.gmra.mrb[0].mxu0 %v3095
    %v3163 = vpop.f32.mrb[0].mxu0
    %v3164 = vadd.f32 %v2999, %v3163
    %v3165 = vpop.f32.mrb[0].mxu0
    %v3166 = vadd.f32 %v3001, %v3165
    %3167 = vdwg.mxu0
    %3168 = vmatprep.subr.mxu0 %v75
    %3169 = vmatpush1.msra.mxu0 %v74
    %3170 = vmatprep.subr.mxu0 %v79
    %3171 = vmatpush1.msra.mxu0 %v78
    %3172 = vmatprep.subr.mxu0 %v83
    %3173 = vmatpush1.msra.mxu0 %v82
    %3174 = vmatprep.subr.mxu0 %v87
    %3175 = vmatpush1.msra.mxu0 %v86
    %3176 = vmatprep.subr.mxu0 %v91
    %3177 = vmatpush1.msra.mxu0 %v90
    %3178 = vmatprep.subr.mxu0 %v95
    %3179 = vmatpush1.msra.mxu0 %v94
    %3180 = vmatprep.subr.mxu0 %v99
    %3181 = vmatpush1.msra.mxu0 %v98
    %3182 = vmatprep.subr.mxu0 %v103
    %3183 = vmatpush1.msra.mxu0 %v102
    %3184 = vmatprep.subr.mxu0 %v107
    %3185 = vmatpush1.msra.mxu0 %v106
    %3186 = vmatprep.subr.mxu0 %v111
    %3187 = vmatpush1.msra.mxu0 %v110
    %3188 = vmatprep.subr.mxu0 %v115
    %3189 = vmatpush1.msra.mxu0 %v114
    %3190 = vmatprep.subr.mxu0 %v119
    %3191 = vmatpush1.msra.mxu0 %v118
    %3192 = vmatprep.subr.mxu0 %v123
    %3193 = vmatpush1.msra.mxu0 %v122
    %3194 = vmatprep.subr.mxu0 %v127
    %3195 = vmatpush1.msra.mxu0 %v126
    %3196 = vmatprep.subr.mxu0 %v131
    %3197 = vmatpush1.msra.mxu0 %v130
    %3198 = vmatprep.subr.mxu0 %v135
    %3199 = vmatpush1.msra.mxu0 %v134
    %3200 = vmatprep.subr.mxu0 0.0
    %3201 = vmatpush1.msra.mxu0 0.0
    %3202 = vmatprep.subr.mxu0 0.0
    %3203 = vmatpush1.msra.mxu0 0.0
    %3204 = vmatprep.subr.mxu0 0.0
    %3205 = vmatpush1.msra.mxu0 0.0
    %3206 = vmatprep.subr.mxu0 0.0
    %3207 = vmatpush1.msra.mxu0 0.0
    %3208 = vmatprep.subr.mxu0 0.0
    %3209 = vmatpush1.msra.mxu0 0.0
    %3210 = vmatprep.subr.mxu0 0.0
    %3211 = vmatpush1.msra.mxu0 0.0
    %3212 = vmatprep.subr.mxu0 0.0
    %3213 = vmatpush1.msra.mxu0 0.0
    %3214 = vmatprep.subr.mxu0 0.0
    %3215 = vmatpush1.msra.mxu0 0.0
    %3216 = vmatprep.subr.mxu0 0.0
    %3217 = vmatpush1.msra.mxu0 0.0
    %3218 = vmatprep.subr.mxu0 0.0
    %3219 = vmatpush1.msra.mxu0 0.0
    %3220 = vmatprep.subr.mxu0 0.0
    %3221 = vmatpush1.msra.mxu0 0.0
    %3222 = vmatprep.subr.mxu0 0.0
    %3223 = vmatpush1.msra.mxu0 0.0
    %3224 = vmatprep.subr.mxu0 0.0
    %3225 = vmatpush1.msra.mxu0 0.0
    %3226 = vmatprep.subr.mxu0 0.0
    %3227 = vmatpush1.msra.mxu0 0.0
    %3228 = vmatprep.subr.mxu0 0.0
    %3229 = vmatpush1.msra.mxu0 0.0
    %3230 = vmatprep.subr.mxu0 0.0
    %3231 = vmatpush1.msra.mxu0 0.0
    %3232 = vmatprep.mubr.f32.mxu0 0.0
    %3233 = vmatmul.mubr.f32.gmra.mrb[0].mxu0 %v3095
    %v3234 = vpop.f32.mrb[0].mxu0
    %v3235 = vadd.f32 %v3070, %v3234
    %v3236 = vpop.f32.mrb[0].mxu0
    %v3237 = vadd.f32 %v3072, %v3236
    %3238 = vdwg.mxu0
    %v3239 = vadd.f32 %v3164, %v518
    %v3240 = vadd.f32 %v3166, %v522
    %v3241 = vadd.f32 %v3235, %v526
    %v3242 = vadd.f32 %v3237, %v530
    %v3243 = vxor.u32 %v3239, 2147483648
    %v3244 = vmul.f32 %v3243, 1.442695
    %v3245 = vpow.pop %v3244
    %v3246 = vadd.f32 %v3245, 1.0
    %v3247 = vrcp.pop %v3246
    %v3248 = vmul.f32 1.0, %v3247
    %v3249 = vxor.u32 %v3240, 2147483648
    %v3250 = vmul.f32 %v3249, 1.442695
    %v3251 = vpow.pop %v3250
    %v3252 = vadd.f32 %v3251, 1.0
    %v3253 = vrcp.pop %v3252
    %v3254 = vmul.f32 1.0, %v3253
    %v3255 = vmul.f32 %v3248, %v3242
    %v3256 = vadd.f32 %v3241, %v3255
    %v3257 = vtanh.pop %v3256
    %v3258 = vsub.f32 1.0, %v3254
    %v3259 = vmul.f32 %v3258, %v3257
    %v3260 = vmul.f32 %v3254, %v2923
    %v3261 = vadd.f32 %v3259, %v3260
    %v3262 = vld [vmem:[%s1 + $0x9] sm:$0x1]
    %v3263 = vld [vmem:[%s1 + $0x19] sm:$0x1]
    %v3264 = vld [vmem:[%s1 + $0x29] sm:$0x1]
    %v3265 = vld [vmem:[%s1 + $0x39] sm:$0x1]
    %v3266 = vld [vmem:[%s1 + $0x49] sm:$0x1]
    %v3267 = vld [vmem:[%s1 + $0x59] sm:$0x1]
    %v3268 = vld [vmem:[%s1 + $0x69] sm:$0x1]
    %v3269 = vld [vmem:[%s1 + $0x79] sm:$0x1]
    %3270 = vmatprep.subr.mxu0 %v137
    %3271 = vmatpush1.msra.mxu0 %v136
    %3272 = vmatprep.subr.mxu0 %v141
    %3273 = vmatpush1.msra.mxu0 %v140
    %3274 = vmatprep.subr.mxu0 %v145
    %3275 = vmatpush1.msra.mxu0 %v144
    %3276 = vmatprep.subr.mxu0 %v149
    %3277 = vmatpush1.msra.mxu0 %v148
    %3278 = vmatprep.subr.mxu0 %v153
    %3279 = vmatpush1.msra.mxu0 %v152
    %3280 = vmatprep.subr.mxu0 %v157
    %3281 = vmatpush1.msra.mxu0 %v156
    %3282 = vmatprep.subr.mxu0 %v161
    %3283 = vmatpush1.msra.mxu0 %v160
    %3284 = vmatprep.subr.mxu0 %v165
    %3285 = vmatpush1.msra.mxu0 %v164
    %3286 = vmatprep.subr.mxu0 %v169
    %3287 = vmatpush1.msra.mxu0 %v168
    %3288 = vmatprep.subr.mxu0 %v173
    %3289 = vmatpush1.msra.mxu0 %v172
    %3290 = vmatprep.subr.mxu0 %v177
    %3291 = vmatpush1.msra.mxu0 %v176
    %3292 = vmatprep.subr.mxu0 %v181
    %3293 = vmatpush1.msra.mxu0 %v180
    %3294 = vmatprep.subr.mxu0 %v185
    %3295 = vmatpush1.msra.mxu0 %v184
    %3296 = vmatprep.subr.mxu0 %v189
    %3297 = vmatpush1.msra.mxu0 %v188
    %3298 = vmatprep.subr.mxu0 %v193
    %3299 = vmatpush1.msra.mxu0 %v192
    %3300 = vmatprep.subr.mxu0 %v197
    %3301 = vmatpush1.msra.mxu0 %v196
    %3302 = vmatprep.subr.mxu0 0.0
    %3303 = vmatpush1.msra.mxu0 0.0
    %3304 = vmatprep.subr.mxu0 0.0
    %3305 = vmatpush1.msra.mxu0 0.0
    %3306 = vmatprep.subr.mxu0 0.0
    %3307 = vmatpush1.msra.mxu0 0.0
    %3308 = vmatprep.subr.mxu0 0.0
    %3309 = vmatpush1.msra.mxu0 0.0
    %3310 = vmatprep.subr.mxu0 0.0
    %3311 = vmatpush1.msra.mxu0 0.0
    %3312 = vmatprep.subr.mxu0 0.0
    %3313 = vmatpush1.msra.mxu0 0.0
    %3314 = vmatprep.subr.mxu0 0.0
    %3315 = vmatpush1.msra.mxu0 0.0
    %3316 = vmatprep.subr.mxu0 0.0
    %3317 = vmatpush1.msra.mxu0 0.0
    %3318 = vmatprep.subr.mxu0 0.0
    %3319 = vmatpush1.msra.mxu0 0.0
    %3320 = vmatprep.subr.mxu0 0.0
    %3321 = vmatpush1.msra.mxu0 0.0
    %3322 = vmatprep.subr.mxu0 0.0
    %3323 = vmatpush1.msra.mxu0 0.0
    %3324 = vmatprep.subr.mxu0 0.0
    %3325 = vmatpush1.msra.mxu0 0.0
    %3326 = vmatprep.subr.mxu0 0.0
    %3327 = vmatpush1.msra.mxu0 0.0
    %3328 = vmatprep.subr.mxu0 0.0
    %3329 = vmatpush1.msra.mxu0 0.0
    %3330 = vmatprep.subr.mxu0 0.0
    %3331 = vmatpush1.msra.mxu0 0.0
    %3332 = vmatprep.subr.mxu0 0.0
    %3333 = vmatpush1.msra.mxu0 0.0
    %3334 = vmatprep.mubr.f32.mxu0 0.0
    %3335 = vmatmul.mubr.f32.gmra.mrb[0].mxu0 %v3261
    %v3336 = vpop.f32.mrb[0].mxu0
    %v3337 = vadd.f32 0.0, %v3336
    %v3338 = vpop.f32.mrb[0].mxu0
    %v3339 = vadd.f32 0.0, %v3338
    %3340 = vdwg.mxu0
    %3341 = vmatprep.subr.mxu0 %v139
    %3342 = vmatpush1.msra.mxu0 %v138
    %3343 = vmatprep.subr.mxu0 %v143
    %3344 = vmatpush1.msra.mxu0 %v142
    %3345 = vmatprep.subr.mxu0 %v147
    %3346 = vmatpush1.msra.mxu0 %v146
    %3347 = vmatprep.subr.mxu0 %v151
    %3348 = vmatpush1.msra.mxu0 %v150
    %3349 = vmatprep.subr.mxu0 %v155
    %3350 = vmatpush1.msra.mxu0 %v154
    %3351 = vmatprep.subr.mxu0 %v159
    %3352 = vmatpush1.msra.mxu0 %v158
    %3353 = vmatprep.subr.mxu0 %v163
    %3354 = vmatpush1.msra.mxu0 %v162
    %3355 = vmatprep.subr.mxu0 %v167
    %3356 = vmatpush1.msra.mxu0 %v166
    %3357 = vmatprep.subr.mxu0 %v171
    %3358 = vmatpush1.msra.mxu0 %v170
    %3359 = vmatprep.subr.mxu0 %v175
    %3360 = vmatpush1.msra.mxu0 %v174
    %3361 = vmatprep.subr.mxu0 %v179
    %3362 = vmatpush1.msra.mxu0 %v178
    %3363 = vmatprep.subr.mxu0 %v183
    %3364 = vmatpush1.msra.mxu0 %v182
    %3365 = vmatprep.subr.mxu0 %v187
    %3366 = vmatpush1.msra.mxu0 %v186
    %3367 = vmatprep.subr.mxu0 %v191
    %3368 = vmatpush1.msra.mxu0 %v190
    %3369 = vmatprep.subr.mxu0 %v195
    %3370 = vmatpush1.msra.mxu0 %v194
    %3371 = vmatprep.subr.mxu0 %v199
    %3372 = vmatpush1.msra.mxu0 %v198
    %3373 = vmatprep.subr.mxu0 0.0
    %3374 = vmatpush1.msra.mxu0 0.0
    %3375 = vmatprep.subr.mxu0 0.0
    %3376 = vmatpush1.msra.mxu0 0.0
    %3377 = vmatprep.subr.mxu0 0.0
    %3378 = vmatpush1.msra.mxu0 0.0
    %3379 = vmatprep.subr.mxu0 0.0
    %3380 = vmatpush1.msra.mxu0 0.0
    %3381 = vmatprep.subr.mxu0 0.0
    %3382 = vmatpush1.msra.mxu0 0.0
    %3383 = vmatprep.subr.mxu0 0.0
    %3384 = vmatpush1.msra.mxu0 0.0
    %3385 = vmatprep.subr.mxu0 0.0
    %3386 = vmatpush1.msra.mxu0 0.0
    %3387 = vmatprep.subr.mxu0 0.0
    %3388 = vmatpush1.msra.mxu0 0.0
    %3389 = vmatprep.subr.mxu0 0.0
    %3390 = vmatpush1.msra.mxu0 0.0
    %3391 = vmatprep.subr.mxu0 0.0
    %3392 = vmatpush1.msra.mxu0 0.0
    %3393 = vmatprep.subr.mxu0 0.0
    %3394 = vmatpush1.msra.mxu0 0.0
    %3395 = vmatprep.subr.mxu0 0.0
    %3396 = vmatpush1.msra.mxu0 0.0
    %3397 = vmatprep.subr.mxu0 0.0
    %3398 = vmatpush1.msra.mxu0 0.0
    %3399 = vmatprep.subr.mxu0 0.0
    %3400 = vmatpush1.msra.mxu0 0.0
    %3401 = vmatprep.subr.mxu0 0.0
    %3402 = vmatpush1.msra.mxu0 0.0
    %3403 = vmatprep.subr.mxu0 0.0
    %3404 = vmatpush1.msra.mxu0 0.0
    %3405 = vmatprep.mubr.f32.mxu0 0.0
    %3406 = vmatmul.mubr.f32.gmra.mrb[0].mxu0 %v3261
    %v3407 = vpop.f32.mrb[0].mxu0
    %v3408 = vadd.f32 0.0, %v3407
    %v3409 = vpop.f32.mrb[0].mxu0
    %v3410 = vadd.f32 0.0, %v3409
    %3411 = vdwg.mxu0
    %v3420 = vrot.slane %v3263, 7
    %v3421 = vsel %vm351, %v3420, %v3262
    %v3422 = vrot.slane %v3264, 6
    %v3423 = vsel %vm354, %v3422, %v3421
    %v3424 = vrot.slane %v3265, 5
    %v3425 = vsel %vm357, %v3424, %v3423
    %v3426 = vrot.slane %v3266, 4
    %v3427 = vsel %vm360, %v3426, %v3425
    %v3428 = vrot.slane %v3267, 3
    %v3429 = vsel %vm363, %v3428, %v3427
    %v3430 = vrot.slane %v3268, 2
    %v3431 = vsel %vm366, %v3430, %v3429
    %v3432 = vrot.slane %v3269, 1
    %v3433 = vsel %vm369, %v3432, %v3431
    %3435 = vmatprep.subr.mxu0 %v73
    %3436 = vmatpush1.msra.mxu0 %v72
    %3437 = vmatprep.subr.mxu0 %v77
    %3438 = vmatpush1.msra.mxu0 %v76
    %3439 = vmatprep.subr.mxu0 %v81
    %3440 = vmatpush1.msra.mxu0 %v80
    %3441 = vmatprep.subr.mxu0 %v85
    %3442 = vmatpush1.msra.mxu0 %v84
    %3443 = vmatprep.subr.mxu0 %v89
    %3444 = vmatpush1.msra.mxu0 %v88
    %3445 = vmatprep.subr.mxu0 %v93
    %3446 = vmatpush1.msra.mxu0 %v92
    %3447 = vmatprep.subr.mxu0 %v97
    %3448 = vmatpush1.msra.mxu0 %v96
    %3449 = vmatprep.subr.mxu0 %v101
    %3450 = vmatpush1.msra.mxu0 %v100
    %3451 = vmatprep.subr.mxu0 %v105
    %3452 = vmatpush1.msra.mxu0 %v104
    %3453 = vmatprep.subr.mxu0 %v109
    %3454 = vmatpush1.msra.mxu0 %v108
    %3455 = vmatprep.subr.mxu0 %v113
    %3456 = vmatpush1.msra.mxu0 %v112
    %3457 = vmatprep.subr.mxu0 %v117
    %3458 = vmatpush1.msra.mxu0 %v116
    %3459 = vmatprep.subr.mxu0 %v121
    %3460 = vmatpush1.msra.mxu0 %v120
    %3461 = vmatprep.subr.mxu0 %v125
    %3462 = vmatpush1.msra.mxu0 %v124
    %3463 = vmatprep.subr.mxu0 %v129
    %3464 = vmatpush1.msra.mxu0 %v128
    %3465 = vmatprep.subr.mxu0 %v133
    %3466 = vmatpush1.msra.mxu0 %v132
    %3467 = vmatprep.subr.mxu0 0.0
    %3468 = vmatpush1.msra.mxu0 0.0
    %3469 = vmatprep.subr.mxu0 0.0
    %3470 = vmatpush1.msra.mxu0 0.0
    %3471 = vmatprep.subr.mxu0 0.0
    %3472 = vmatpush1.msra.mxu0 0.0
    %3473 = vmatprep.subr.mxu0 0.0
    %3474 = vmatpush1.msra.mxu0 0.0
    %3475 = vmatprep.subr.mxu0 0.0
    %3476 = vmatpush1.msra.mxu0 0.0
    %3477 = vmatprep.subr.mxu0 0.0
    %3478 = vmatpush1.msra.mxu0 0.0
    %3479 = vmatprep.subr.mxu0 0.0
    %3480 = vmatpush1.msra.mxu0 0.0
    %3481 = vmatprep.subr.mxu0 0.0
    %3482 = vmatpush1.msra.mxu0 0.0
    %3483 = vmatprep.subr.mxu0 0.0
    %3484 = vmatpush1.msra.mxu0 0.0
    %3485 = vmatprep.subr.mxu0 0.0
    %3486 = vmatpush1.msra.mxu0 0.0
    %3487 = vmatprep.subr.mxu0 0.0
    %3488 = vmatpush1.msra.mxu0 0.0
    %3489 = vmatprep.subr.mxu0 0.0
    %3490 = vmatpush1.msra.mxu0 0.0
    %3491 = vmatprep.subr.mxu0 0.0
    %3492 = vmatpush1.msra.mxu0 0.0
    %3493 = vmatprep.subr.mxu0 0.0
    %3494 = vmatpush1.msra.mxu0 0.0
    %3495 = vmatprep.subr.mxu0 0.0
    %3496 = vmatpush1.msra.mxu0 0.0
    %3497 = vmatprep.subr.mxu0 0.0
    %3498 = vmatpush1.msra.mxu0 0.0
    %3499 = vmatprep.mubr.f32.mxu0 0.0
    %3500 = vmatmul.mubr.f32.gmra.mrb[0].mxu0 %v3433
    %v3501 = vpop.f32.mrb[0].mxu0
    %v3502 = vadd.f32 %v3337, %v3501
    %v3503 = vpop.f32.mrb[0].mxu0
    %v3504 = vadd.f32 %v3339, %v3503
    %3505 = vdwg.mxu0
    %3506 = vmatprep.subr.mxu0 %v75
    %3507 = vmatpush1.msra.mxu0 %v74
    %3508 = vmatprep.subr.mxu0 %v79
    %3509 = vmatpush1.msra.mxu0 %v78
    %3510 = vmatprep.subr.mxu0 %v83
    %3511 = vmatpush1.msra.mxu0 %v82
    %3512 = vmatprep.subr.mxu0 %v87
    %3513 = vmatpush1.msra.mxu0 %v86
    %3514 = vmatprep.subr.mxu0 %v91
    %3515 = vmatpush1.msra.mxu0 %v90
    %3516 = vmatprep.subr.mxu0 %v95
    %3517 = vmatpush1.msra.mxu0 %v94
    %3518 = vmatprep.subr.mxu0 %v99
    %3519 = vmatpush1.msra.mxu0 %v98
    %3520 = vmatprep.subr.mxu0 %v103
    %3521 = vmatpush1.msra.mxu0 %v102
    %3522 = vmatprep.subr.mxu0 %v107
    %3523 = vmatpush1.msra.mxu0 %v106
    %3524 = vmatprep.subr.mxu0 %v111
    %3525 = vmatpush1.msra.mxu0 %v110
    %3526 = vmatprep.subr.mxu0 %v115
    %3527 = vmatpush1.msra.mxu0 %v114
    %3528 = vmatprep.subr.mxu0 %v119
    %3529 = vmatpush1.msra.mxu0 %v118
    %3530 = vmatprep.subr.mxu0 %v123
    %3531 = vmatpush1.msra.mxu0 %v122
    %3532 = vmatprep.subr.mxu0 %v127
    %3533 = vmatpush1.msra.mxu0 %v126
    %3534 = vmatprep.subr.mxu0 %v131
    %3535 = vmatpush1.msra.mxu0 %v130
    %3536 = vmatprep.subr.mxu0 %v135
    %3537 = vmatpush1.msra.mxu0 %v134
    %3538 = vmatprep.subr.mxu0 0.0
    %3539 = vmatpush1.msra.mxu0 0.0
    %3540 = vmatprep.subr.mxu0 0.0
    %3541 = vmatpush1.msra.mxu0 0.0
    %3542 = vmatprep.subr.mxu0 0.0
    %3543 = vmatpush1.msra.mxu0 0.0
    %3544 = vmatprep.subr.mxu0 0.0
    %3545 = vmatpush1.msra.mxu0 0.0
    %3546 = vmatprep.subr.mxu0 0.0
    %3547 = vmatpush1.msra.mxu0 0.0
    %3548 = vmatprep.subr.mxu0 0.0
    %3549 = vmatpush1.msra.mxu0 0.0
    %3550 = vmatprep.subr.mxu0 0.0
    %3551 = vmatpush1.msra.mxu0 0.0
    %3552 = vmatprep.subr.mxu0 0.0
    %3553 = vmatpush1.msra.mxu0 0.0
    %3554 = vmatprep.subr.mxu0 0.0
    %3555 = vmatpush1.msra.mxu0 0.0
    %3556 = vmatprep.subr.mxu0 0.0
    %3557 = vmatpush1.msra.mxu0 0.0
    %3558 = vmatprep.subr.mxu0 0.0
    %3559 = vmatpush1.msra.mxu0 0.0
    %3560 = vmatprep.subr.mxu0 0.0
    %3561 = vmatpush1.msra.mxu0 0.0
    %3562 = vmatprep.subr.mxu0 0.0
    %3563 = vmatpush1.msra.mxu0 0.0
    %3564 = vmatprep.subr.mxu0 0.0
    %3565 = vmatpush1.msra.mxu0 0.0
    %3566 = vmatprep.subr.mxu0 0.0
    %3567 = vmatpush1.msra.mxu0 0.0
    %3568 = vmatprep.subr.mxu0 0.0
    %3569 = vmatpush1.msra.mxu0 0.0
    %3570 = vmatprep.mubr.f32.mxu0 0.0
    %3571 = vmatmul.mubr.f32.gmra.mrb[0].mxu0 %v3433
    %v3572 = vpop.f32.mrb[0].mxu0
    %v3573 = vadd.f32 %v3408, %v3572
    %v3574 = vpop.f32.mrb[0].mxu0
    %v3575 = vadd.f32 %v3410, %v3574
    %3576 = vdwg.mxu0
    %v3577 = vadd.f32 %v3502, %v518
    %v3578 = vadd.f32 %v3504, %v522
    %v3579 = vadd.f32 %v3573, %v526
    %v3580 = vadd.f32 %v3575, %v530
    %v3581 = vxor.u32 %v3577, 2147483648
    %v3582 = vmul.f32 %v3581, 1.442695
    %v3583 = vpow.pop %v3582
    %v3584 = vadd.f32 %v3583, 1.0
    %v3585 = vrcp.pop %v3584
    %v3586 = vmul.f32 1.0, %v3585
    %v3587 = vxor.u32 %v3578, 2147483648
    %v3588 = vmul.f32 %v3587, 1.442695
    %v3589 = vpow.pop %v3588
    %v3590 = vadd.f32 %v3589, 1.0
    %v3591 = vrcp.pop %v3590
    %v3592 = vmul.f32 1.0, %v3591
    %v3593 = vmul.f32 %v3586, %v3580
    %v3594 = vadd.f32 %v3579, %v3593
    %v3595 = vtanh.pop %v3594
    %v3596 = vsub.f32 1.0, %v3592
    %v3597 = vmul.f32 %v3596, %v3595
    %v3598 = vmul.f32 %v3592, %v3261
    %v3599 = vadd.f32 %v3597, %v3598
    %3600 = vst [vmem:[%s12] sm:$0x1] 0.0
    %3601 = vst [vmem:[%s12 + $0x8] sm:$0x1] 0.0
    %3602 = vst [vmem:[%s12 + $0x10] sm:$0x1] 0.0
    %3603 = vst [vmem:[%s12 + $0x18] sm:$0x1] 0.0
    %3604 = vst [vmem:[%s12 + $0x20] sm:$0x1] 0.0
    %3605 = vst [vmem:[%s12 + $0x28] sm:$0x1] 0.0
    %3606 = vst [vmem:[%s12 + $0x30] sm:$0x1] 0.0
    %3607 = vst [vmem:[%s12 + $0x38] sm:$0x1] 0.0
    %3608 = vst [vmem:[#allocation2] sm:$0xff] 0.0
    %v3609 = vld [vmem:[%s2] sm:$0x1]
    %v3610 = vld [vmem:[%s2 + $0x8] sm:$0x1]
    %v3611 = vld [vmem:[%s2 + $0x10] sm:$0x1]
    %v3612 = vld [vmem:[%s2 + $0x18] sm:$0x1]
    %v3613 = vld [vmem:[%s2 + $0x20] sm:$0x1]
    %v3614 = vld [vmem:[%s2 + $0x28] sm:$0x1]
    %v3615 = vld [vmem:[%s2 + $0x30] sm:$0x1]
    %v3616 = vld [vmem:[%s2 + $0x38] sm:$0x1]
    %v3617 = vld [vmem:[%s6] sm:$0xff]
    %v3618 = vld [vmem:[%s6 + $0x8] sm:$0xff]
    %v3619 = vld [vmem:[%s6 + $0x10] sm:$0xff]
    %v3620 = vld [vmem:[%s6 + $0x18] sm:$0xff]
    %v3621 = vld [vmem:[%s6 + $0x20] sm:$0xff]
    %v3622 = vld [vmem:[%s6 + $0x28] sm:$0xff]
    %v3623 = vld [vmem:[%s6 + $0x30] sm:$0xff]
    %v3624 = vld [vmem:[%s6 + $0x38] sm:$0xff]
    %v3625 = vld [vmem:[%s6 + $0x40] sm:$0xff]
    %v3626 = vld [vmem:[%s6 + $0x48] sm:$0xff]
    %v3627 = vld [vmem:[%s6 + $0x50] sm:$0xff]
    %v3628 = vld [vmem:[%s6 + $0x58] sm:$0xff]
    %v3629 = vld [vmem:[%s6 + $0x60] sm:$0xff]
    %v3630 = vld [vmem:[%s6 + $0x68] sm:$0xff]
    %v3631 = vld [vmem:[%s6 + $0x70] sm:$0xff]
    %v3632 = vld [vmem:[%s6 + $0x78] sm:$0xff]
    %v3633 = vld [vmem:[%s6 + $0x80] sm:$0xff]
    %v3634 = vld [vmem:[%s6 + $0x88] sm:$0xff]
    %v3635 = vld [vmem:[%s6 + $0x90] sm:$0xff]
    %v3636 = vld [vmem:[%s6 + $0x98] sm:$0xff]
    %v3637 = vld [vmem:[%s6 + $0xa0] sm:$0xff]
    %v3638 = vld [vmem:[%s6 + $0xa8] sm:$0xff]
    %v3639 = vld [vmem:[%s6 + $0xb0] sm:$0xff]
    %v3640 = vld [vmem:[%s6 + $0xb8] sm:$0xff]
    %v3641 = vld [vmem:[%s6 + $0xc0] sm:$0xff]
    %v3642 = vld [vmem:[%s6 + $0xc8] sm:$0xff]
    %v3643 = vld [vmem:[%s6 + $0xd0] sm:$0xff]
    %v3644 = vld [vmem:[%s6 + $0xd8] sm:$0xff]
    %v3645 = vld [vmem:[%s6 + $0xe0] sm:$0xff]
    %v3646 = vld [vmem:[%s6 + $0xe8] sm:$0xff]
    %v3647 = vld [vmem:[%s6 + $0xf0] sm:$0xff]
    %v3648 = vld [vmem:[%s6 + $0xf8] sm:$0xff]
    %v3649 = vld [vmem:[%s6 + $0x100] sm:$0xff]
    %v3650 = vld [vmem:[%s6 + $0x108] sm:$0xff]
    %v3651 = vld [vmem:[%s6 + $0x110] sm:$0xff]
    %v3652 = vld [vmem:[%s6 + $0x118] sm:$0xff]
    %v3653 = vld [vmem:[%s6 + $0x120] sm:$0xff]
    %v3654 = vld [vmem:[%s6 + $0x128] sm:$0xff]
    %v3655 = vld [vmem:[%s6 + $0x130] sm:$0xff]
    %v3656 = vld [vmem:[%s6 + $0x138] sm:$0xff]
    %v3657 = vld [vmem:[%s6 + $0x140] sm:$0xff]
    %v3658 = vld [vmem:[%s6 + $0x148] sm:$0xff]
    %v3659 = vld [vmem:[%s6 + $0x150] sm:$0xff]
    %v3660 = vld [vmem:[%s6 + $0x158] sm:$0xff]
    %v3661 = vld [vmem:[%s6 + $0x160] sm:$0xff]
    %v3662 = vld [vmem:[%s6 + $0x168] sm:$0xff]
    %v3663 = vld [vmem:[%s6 + $0x170] sm:$0xff]
    %v3664 = vld [vmem:[%s6 + $0x178] sm:$0xff]
    %v3665 = vld [vmem:[%s6 + $0x180] sm:$0xff]
    %v3666 = vld [vmem:[%s6 + $0x188] sm:$0xff]
    %v3667 = vld [vmem:[%s6 + $0x190] sm:$0xff]
    %v3668 = vld [vmem:[%s6 + $0x198] sm:$0xff]
    %v3669 = vld [vmem:[%s6 + $0x1a0] sm:$0xff]
    %v3670 = vld [vmem:[%s6 + $0x1a8] sm:$0xff]
    %v3671 = vld [vmem:[%s6 + $0x1b0] sm:$0xff]
    %v3672 = vld [vmem:[%s6 + $0x1b8] sm:$0xff]
    %v3673 = vld [vmem:[%s6 + $0x1c0] sm:$0xff]
    %v3674 = vld [vmem:[%s6 + $0x1c8] sm:$0xff]
    %v3675 = vld [vmem:[%s6 + $0x1d0] sm:$0xff]
    %v3676 = vld [vmem:[%s6 + $0x1d8] sm:$0xff]
    %v3677 = vld [vmem:[%s6 + $0x1e0] sm:$0xff]
    %v3678 = vld [vmem:[%s6 + $0x1e8] sm:$0xff]
    %v3679 = vld [vmem:[%s6 + $0x1f0] sm:$0xff]
    %v3680 = vld [vmem:[%s6 + $0x1f8] sm:$0xff]
    %v3681 = vld [vmem:[#allocation5] sm:$0xff]
    %v3682 = vld [vmem:[#allocation5 + $0x8] sm:$0xff]
    %v3683 = vld [vmem:[#allocation5 + $0x10] sm:$0xff]
    %v3684 = vld [vmem:[#allocation5 + $0x18] sm:$0xff]
    %v3685 = vld [vmem:[#allocation5 + $0x20] sm:$0xff]
    %v3686 = vld [vmem:[#allocation5 + $0x28] sm:$0xff]
    %v3687 = vld [vmem:[#allocation5 + $0x30] sm:$0xff]
    %v3688 = vld [vmem:[#allocation5 + $0x38] sm:$0xff]
    %v3689 = vld [vmem:[#allocation5 + $0x40] sm:$0xff]
    %v3690 = vld [vmem:[#allocation5 + $0x48] sm:$0xff]
    %v3691 = vld [vmem:[#allocation5 + $0x50] sm:$0xff]
    %v3692 = vld [vmem:[#allocation5 + $0x58] sm:$0xff]
    %v3693 = vld [vmem:[#allocation5 + $0x60] sm:$0xff]
    %v3694 = vld [vmem:[#allocation5 + $0x68] sm:$0xff]
    %v3695 = vld [vmem:[#allocation5 + $0x70] sm:$0xff]
    %v3696 = vld [vmem:[#allocation5 + $0x78] sm:$0xff]
    %v3697 = vld [vmem:[#allocation5 + $0x80] sm:$0xff]
    %v3698 = vld [vmem:[#allocation5 + $0x88] sm:$0xff]
    %v3699 = vld [vmem:[#allocation5 + $0x90] sm:$0xff]
    %v3700 = vld [vmem:[#allocation5 + $0x98] sm:$0xff]
    %v3701 = vld [vmem:[#allocation5 + $0xa0] sm:$0xff]
    %v3702 = vld [vmem:[#allocation5 + $0xa8] sm:$0xff]
    %v3703 = vld [vmem:[#allocation5 + $0xb0] sm:$0xff]
    %v3704 = vld [vmem:[#allocation5 + $0xb8] sm:$0xff]
    %v3705 = vld [vmem:[#allocation5 + $0xc0] sm:$0xff]
    %v3706 = vld [vmem:[#allocation5 + $0xc8] sm:$0xff]
    %v3707 = vld [vmem:[#allocation5 + $0xd0] sm:$0xff]
    %v3708 = vld [vmem:[#allocation5 + $0xd8] sm:$0xff]
    %v3709 = vld [vmem:[#allocation5 + $0xe0] sm:$0xff]
    %v3710 = vld [vmem:[#allocation5 + $0xe8] sm:$0xff]
    %v3711 = vld [vmem:[#allocation5 + $0xf0] sm:$0xff]
    %v3712 = vld [vmem:[#allocation5 + $0xf8] sm:$0xff]
    %v3713 = vld [vmem:[#allocation5 + $0x100] sm:$0xff]
    %v3714 = vld [vmem:[#allocation5 + $0x108] sm:$0xff]
    %v3715 = vld [vmem:[#allocation5 + $0x110] sm:$0xff]
    %v3716 = vld [vmem:[#allocation5 + $0x118] sm:$0xff]
    %v3717 = vld [vmem:[#allocation5 + $0x120] sm:$0xff]
    %v3718 = vld [vmem:[#allocation5 + $0x128] sm:$0xff]
    %v3719 = vld [vmem:[#allocation5 + $0x130] sm:$0xff]
    %v3720 = vld [vmem:[#allocation5 + $0x138] sm:$0xff]
    %v3721 = vld [vmem:[#allocation5 + $0x140] sm:$0xff]
    %v3722 = vld [vmem:[#allocation5 + $0x148] sm:$0xff]
    %v3723 = vld [vmem:[#allocation5 + $0x150] sm:$0xff]
    %v3724 = vld [vmem:[#allocation5 + $0x158] sm:$0xff]
    %v3725 = vld [vmem:[#allocation5 + $0x160] sm:$0xff]
    %v3726 = vld [vmem:[#allocation5 + $0x168] sm:$0xff]
    %v3727 = vld [vmem:[#allocation5 + $0x170] sm:$0xff]
    %v3728 = vld [vmem:[#allocation5 + $0x178] sm:$0xff]
    %v3729 = vld [vmem:[#allocation5 + $0x180] sm:$0xff]
    %v3730 = vld [vmem:[#allocation5 + $0x188] sm:$0xff]
    %v3731 = vld [vmem:[#allocation5 + $0x190] sm:$0xff]
    %v3732 = vld [vmem:[#allocation5 + $0x198] sm:$0xff]
    %v3733 = vld [vmem:[#allocation5 + $0x1a0] sm:$0xff]
    %v3734 = vld [vmem:[#allocation5 + $0x1a8] sm:$0xff]
    %v3735 = vld [vmem:[#allocation5 + $0x1b0] sm:$0xff]
    %v3736 = vld [vmem:[#allocation5 + $0x1b8] sm:$0xff]
    %v3737 = vld [vmem:[#allocation5 + $0x1c0] sm:$0xff]
    %v3738 = vld [vmem:[#allocation5 + $0x1c8] sm:$0xff]
    %v3739 = vld [vmem:[#allocation5 + $0x1d0] sm:$0xff]
    %v3740 = vld [vmem:[#allocation5 + $0x1d8] sm:$0xff]
    %v3741 = vld [vmem:[#allocation5 + $0x1e0] sm:$0xff]
    %v3742 = vld [vmem:[#allocation5 + $0x1e8] sm:$0xff]
    %v3743 = vld [vmem:[#allocation5 + $0x1f0] sm:$0xff]
    %v3744 = vld [vmem:[#allocation5 + $0x1f8] sm:$0xff]
    %3745 = vmatprep.subr.mxu0 %v3682
    %3746 = vmatpush1.msra.mxu0 %v3681
    %3747 = vmatprep.subr.mxu0 %v3686
    %3748 = vmatpush1.msra.mxu0 %v3685
    %3749 = vmatprep.subr.mxu0 %v3690
    %3750 = vmatpush1.msra.mxu0 %v3689
    %3751 = vmatprep.subr.mxu0 %v3694
    %3752 = vmatpush1.msra.mxu0 %v3693
    %3753 = vmatprep.subr.mxu0 %v3698
    %3754 = vmatpush1.msra.mxu0 %v3697
    %3755 = vmatprep.subr.mxu0 %v3702
    %3756 = vmatpush1.msra.mxu0 %v3701
    %3757 = vmatprep.subr.mxu0 %v3706
    %3758 = vmatpush1.msra.mxu0 %v3705
    %3759 = vmatprep.subr.mxu0 %v3710
    %3760 = vmatpush1.msra.mxu0 %v3709
    %3761 = vmatprep.subr.mxu0 %v3714
    %3762 = vmatpush1.msra.mxu0 %v3713
    %3763 = vmatprep.subr.mxu0 %v3718
    %3764 = vmatpush1.msra.mxu0 %v3717
    %3765 = vmatprep.subr.mxu0 %v3722
    %3766 = vmatpush1.msra.mxu0 %v3721
    %3767 = vmatprep.subr.mxu0 %v3726
    %3768 = vmatpush1.msra.mxu0 %v3725
    %3769 = vmatprep.subr.mxu0 %v3730
    %3770 = vmatpush1.msra.mxu0 %v3729
    %3771 = vmatprep.subr.mxu0 %v3734
    %3772 = vmatpush1.msra.mxu0 %v3733
    %3773 = vmatprep.subr.mxu0 %v3738
    %3774 = vmatpush1.msra.mxu0 %v3737
    %3775 = vmatprep.subr.mxu0 %v3742
    %3776 = vmatpush1.msra.mxu0 %v3741
    %3777 = vmatprep.subr.mxu0 0.0
    %3778 = vmatpush1.msra.mxu0 0.0
    %3779 = vmatprep.subr.mxu0 0.0
    %3780 = vmatpush1.msra.mxu0 0.0
    %3781 = vmatprep.subr.mxu0 0.0
    %3782 = vmatpush1.msra.mxu0 0.0
    %3783 = vmatprep.subr.mxu0 0.0
    %3784 = vmatpush1.msra.mxu0 0.0
    %3785 = vmatprep.subr.mxu0 0.0
    %3786 = vmatpush1.msra.mxu0 0.0
    %3787 = vmatprep.subr.mxu0 0.0
    %3788 = vmatpush1.msra.mxu0 0.0
    %3789 = vmatprep.subr.mxu0 0.0
    %3790 = vmatpush1.msra.mxu0 0.0
    %3791 = vmatprep.subr.mxu0 0.0
    %3792 = vmatpush1.msra.mxu0 0.0
    %3793 = vmatprep.subr.mxu0 0.0
    %3794 = vmatpush1.msra.mxu0 0.0
    %3795 = vmatprep.subr.mxu0 0.0
    %3796 = vmatpush1.msra.mxu0 0.0
    %3797 = vmatprep.subr.mxu0 0.0
    %3798 = vmatpush1.msra.mxu0 0.0
    %3799 = vmatprep.subr.mxu0 0.0
    %3800 = vmatpush1.msra.mxu0 0.0
    %3801 = vmatprep.subr.mxu0 0.0
    %3802 = vmatpush1.msra.mxu0 0.0
    %3803 = vmatprep.subr.mxu0 0.0
    %3804 = vmatpush1.msra.mxu0 0.0
    %3805 = vmatprep.subr.mxu0 0.0
    %3806 = vmatpush1.msra.mxu0 0.0
    %3807 = vmatprep.subr.mxu0 0.0
    %3808 = vmatpush1.msra.mxu0 0.0
    %3809 = vmatprep.mubr.f32.mxu0 0.0
    %3810 = vmatmul.mubr.f32.gmra.mrb[0].mxu0 %v3599
    %v3811 = vpop.f32.mrb[0].mxu0
    %v3812 = vadd.f32 0.0, %v3811
    %v3813 = vpop.f32.mrb[0].mxu0
    %v3814 = vadd.f32 0.0, %v3813
    %3815 = vdwg.mxu0
    %3816 = vmatprep.subr.mxu0 %v3684
    %3817 = vmatpush1.msra.mxu0 %v3683
    %3818 = vmatprep.subr.mxu0 %v3688
    %3819 = vmatpush1.msra.mxu0 %v3687
    %3820 = vmatprep.subr.mxu0 %v3692
    %3821 = vmatpush1.msra.mxu0 %v3691
    %3822 = vmatprep.subr.mxu0 %v3696
    %3823 = vmatpush1.msra.mxu0 %v3695
    %3824 = vmatprep.subr.mxu0 %v3700
    %3825 = vmatpush1.msra.mxu0 %v3699
    %3826 = vmatprep.subr.mxu0 %v3704
    %3827 = vmatpush1.msra.mxu0 %v3703
    %3828 = vmatprep.subr.mxu0 %v3708
    %3829 = vmatpush1.msra.mxu0 %v3707
    %3830 = vmatprep.subr.mxu0 %v3712
    %3831 = vmatpush1.msra.mxu0 %v3711
    %3832 = vmatprep.subr.mxu0 %v3716
    %3833 = vmatpush1.msra.mxu0 %v3715
    %3834 = vmatprep.subr.mxu0 %v3720
    %3835 = vmatpush1.msra.mxu0 %v3719
    %3836 = vmatprep.subr.mxu0 %v3724
    %3837 = vmatpush1.msra.mxu0 %v3723
    %3838 = vmatprep.subr.mxu0 %v3728
    %3839 = vmatpush1.msra.mxu0 %v3727
    %3840 = vmatprep.subr.mxu0 %v3732
    %3841 = vmatpush1.msra.mxu0 %v3731
    %3842 = vmatprep.subr.mxu0 %v3736
    %3843 = vmatpush1.msra.mxu0 %v3735
    %3844 = vmatprep.subr.mxu0 %v3740
    %3845 = vmatpush1.msra.mxu0 %v3739
    %3846 = vmatprep.subr.mxu0 %v3744
    %3847 = vmatpush1.msra.mxu0 %v3743
    %3848 = vmatprep.subr.mxu0 0.0
    %3849 = vmatpush1.msra.mxu0 0.0
    %3850 = vmatprep.subr.mxu0 0.0
    %3851 = vmatpush1.msra.mxu0 0.0
    %3852 = vmatprep.subr.mxu0 0.0
    %3853 = vmatpush1.msra.mxu0 0.0
    %3854 = vmatprep.subr.mxu0 0.0
    %3855 = vmatpush1.msra.mxu0 0.0
    %3856 = vmatprep.subr.mxu0 0.0
    %3857 = vmatpush1.msra.mxu0 0.0
    %3858 = vmatprep.subr.mxu0 0.0
    %3859 = vmatpush1.msra.mxu0 0.0
    %3860 = vmatprep.subr.mxu0 0.0
    %3861 = vmatpush1.msra.mxu0 0.0
    %3862 = vmatprep.subr.mxu0 0.0
    %3863 = vmatpush1.msra.mxu0 0.0
    %3864 = vmatprep.subr.mxu0 0.0
    %3865 = vmatpush1.msra.mxu0 0.0
    %3866 = vmatprep.subr.mxu0 0.0
    %3867 = vmatpush1.msra.mxu0 0.0
    %3868 = vmatprep.subr.mxu0 0.0
    %3869 = vmatpush1.msra.mxu0 0.0
    %3870 = vmatprep.subr.mxu0 0.0
    %3871 = vmatpush1.msra.mxu0 0.0
    %3872 = vmatprep.subr.mxu0 0.0
    %3873 = vmatpush1.msra.mxu0 0.0
    %3874 = vmatprep.subr.mxu0 0.0
    %3875 = vmatpush1.msra.mxu0 0.0
    %3876 = vmatprep.subr.mxu0 0.0
    %3877 = vmatpush1.msra.mxu0 0.0
    %3878 = vmatprep.subr.mxu0 0.0
    %3879 = vmatpush1.msra.mxu0 0.0
    %3880 = vmatprep.mubr.f32.mxu0 0.0
    %3881 = vmatmul.mubr.f32.gmra.mrb[0].mxu0 %v3599
    %v3882 = vpop.f32.mrb[0].mxu0
    %v3883 = vadd.f32 0.0, %v3882
    %v3884 = vpop.f32.mrb[0].mxu0
    %v3885 = vadd.f32 0.0, %v3884
    %3886 = vdwg.mxu0
    %v3895 = vrot.slane %v3610, 7
    %v3896 = vsel %vm351, %v3895, %v3609
    %v3897 = vrot.slane %v3611, 6
    %v3898 = vsel %vm354, %v3897, %v3896
    %v3899 = vrot.slane %v3612, 5
    %v3900 = vsel %vm357, %v3899, %v3898
    %v3901 = vrot.slane %v3613, 4
    %v3902 = vsel %vm360, %v3901, %v3900
    %v3903 = vrot.slane %v3614, 3
    %v3904 = vsel %vm363, %v3903, %v3902
    %v3905 = vrot.slane %v3615, 2
    %v3906 = vsel %vm366, %v3905, %v3904
    %v3907 = vrot.slane %v3616, 1
    %v3908 = vsel %vm369, %v3907, %v3906
    %3910 = vmatprep.subr.mxu0 %v3618
    %3911 = vmatpush1.msra.mxu0 %v3617
    %3912 = vmatprep.subr.mxu0 %v3622
    %3913 = vmatpush1.msra.mxu0 %v3621
    %3914 = vmatprep.subr.mxu0 %v3626
    %3915 = vmatpush1.msra.mxu0 %v3625
    %3916 = vmatprep.subr.mxu0 %v3630
    %3917 = vmatpush1.msra.mxu0 %v3629
    %3918 = vmatprep.subr.mxu0 %v3634
    %3919 = vmatpush1.msra.mxu0 %v3633
    %3920 = vmatprep.subr.mxu0 %v3638
    %3921 = vmatpush1.msra.mxu0 %v3637
    %3922 = vmatprep.subr.mxu0 %v3642
    %3923 = vmatpush1.msra.mxu0 %v3641
    %3924 = vmatprep.subr.mxu0 %v3646
    %3925 = vmatpush1.msra.mxu0 %v3645
    %3926 = vmatprep.subr.mxu0 %v3650
    %3927 = vmatpush1.msra.mxu0 %v3649
    %3928 = vmatprep.subr.mxu0 %v3654
    %3929 = vmatpush1.msra.mxu0 %v3653
    %3930 = vmatprep.subr.mxu0 %v3658
    %3931 = vmatpush1.msra.mxu0 %v3657
    %3932 = vmatprep.subr.mxu0 %v3662
    %3933 = vmatpush1.msra.mxu0 %v3661
    %3934 = vmatprep.subr.mxu0 %v3666
    %3935 = vmatpush1.msra.mxu0 %v3665
    %3936 = vmatprep.subr.mxu0 %v3670
    %3937 = vmatpush1.msra.mxu0 %v3669
    %3938 = vmatprep.subr.mxu0 %v3674
    %3939 = vmatpush1.msra.mxu0 %v3673
    %3940 = vmatprep.subr.mxu0 %v3678
    %3941 = vmatpush1.msra.mxu0 %v3677
    %3942 = vmatprep.subr.mxu0 0.0
    %3943 = vmatpush1.msra.mxu0 0.0
    %3944 = vmatprep.subr.mxu0 0.0
    %3945 = vmatpush1.msra.mxu0 0.0
    %3946 = vmatprep.subr.mxu0 0.0
    %3947 = vmatpush1.msra.mxu0 0.0
    %3948 = vmatprep.subr.mxu0 0.0
    %3949 = vmatpush1.msra.mxu0 0.0
    %3950 = vmatprep.subr.mxu0 0.0
    %3951 = vmatpush1.msra.mxu0 0.0
    %3952 = vmatprep.subr.mxu0 0.0
    %3953 = vmatpush1.msra.mxu0 0.0
    %3954 = vmatprep.subr.mxu0 0.0
    %3955 = vmatpush1.msra.mxu0 0.0
    %3956 = vmatprep.subr.mxu0 0.0
    %3957 = vmatpush1.msra.mxu0 0.0
    %3958 = vmatprep.subr.mxu0 0.0
    %3959 = vmatpush1.msra.mxu0 0.0
    %3960 = vmatprep.subr.mxu0 0.0
    %3961 = vmatpush1.msra.mxu0 0.0
    %3962 = vmatprep.subr.mxu0 0.0
    %3963 = vmatpush1.msra.mxu0 0.0
    %3964 = vmatprep.subr.mxu0 0.0
    %3965 = vmatpush1.msra.mxu0 0.0
    %3966 = vmatprep.subr.mxu0 0.0
    %3967 = vmatpush1.msra.mxu0 0.0
    %3968 = vmatprep.subr.mxu0 0.0
    %3969 = vmatpush1.msra.mxu0 0.0
    %3970 = vmatprep.subr.mxu0 0.0
    %3971 = vmatpush1.msra.mxu0 0.0
    %3972 = vmatprep.subr.mxu0 0.0
    %3973 = vmatpush1.msra.mxu0 0.0
    %3974 = vmatprep.mubr.f32.mxu0 0.0
    %3975 = vmatmul.mubr.f32.gmra.mrb[0].mxu0 %v3908
    %v3976 = vpop.f32.mrb[0].mxu0
    %v3977 = vadd.f32 %v3812, %v3976
    %v3978 = vpop.f32.mrb[0].mxu0
    %v3979 = vadd.f32 %v3814, %v3978
    %3980 = vdwg.mxu0
    %3981 = vmatprep.subr.mxu0 %v3620
    %3982 = vmatpush1.msra.mxu0 %v3619
    %3983 = vmatprep.subr.mxu0 %v3624
    %3984 = vmatpush1.msra.mxu0 %v3623
    %3985 = vmatprep.subr.mxu0 %v3628
    %3986 = vmatpush1.msra.mxu0 %v3627
    %3987 = vmatprep.subr.mxu0 %v3632
    %3988 = vmatpush1.msra.mxu0 %v3631
    %3989 = vmatprep.subr.mxu0 %v3636
    %3990 = vmatpush1.msra.mxu0 %v3635
    %3991 = vmatprep.subr.mxu0 %v3640
    %3992 = vmatpush1.msra.mxu0 %v3639
    %3993 = vmatprep.subr.mxu0 %v3644
    %3994 = vmatpush1.msra.mxu0 %v3643
    %3995 = vmatprep.subr.mxu0 %v3648
    %3996 = vmatpush1.msra.mxu0 %v3647
    %3997 = vmatprep.subr.mxu0 %v3652
    %3998 = vmatpush1.msra.mxu0 %v3651
    %3999 = vmatprep.subr.mxu0 %v3656
    %4000 = vmatpush1.msra.mxu0 %v3655
    %4001 = vmatprep.subr.mxu0 %v3660
    %4002 = vmatpush1.msra.mxu0 %v3659
    %4003 = vmatprep.subr.mxu0 %v3664
    %4004 = vmatpush1.msra.mxu0 %v3663
    %4005 = vmatprep.subr.mxu0 %v3668
    %4006 = vmatpush1.msra.mxu0 %v3667
    %4007 = vmatprep.subr.mxu0 %v3672
    %4008 = vmatpush1.msra.mxu0 %v3671
    %4009 = vmatprep.subr.mxu0 %v3676
    %4010 = vmatpush1.msra.mxu0 %v3675
    %4011 = vmatprep.subr.mxu0 %v3680
    %4012 = vmatpush1.msra.mxu0 %v3679
    %4013 = vmatprep.subr.mxu0 0.0
    %4014 = vmatpush1.msra.mxu0 0.0
    %4015 = vmatprep.subr.mxu0 0.0
    %4016 = vmatpush1.msra.mxu0 0.0
    %4017 = vmatprep.subr.mxu0 0.0
    %4018 = vmatpush1.msra.mxu0 0.0
    %4019 = vmatprep.subr.mxu0 0.0
    %4020 = vmatpush1.msra.mxu0 0.0
    %4021 = vmatprep.subr.mxu0 0.0
    %4022 = vmatpush1.msra.mxu0 0.0
    %4023 = vmatprep.subr.mxu0 0.0
    %4024 = vmatpush1.msra.mxu0 0.0
    %4025 = vmatprep.subr.mxu0 0.0
    %4026 = vmatpush1.msra.mxu0 0.0
    %4027 = vmatprep.subr.mxu0 0.0
    %4028 = vmatpush1.msra.mxu0 0.0
    %4029 = vmatprep.subr.mxu0 0.0
    %4030 = vmatpush1.msra.mxu0 0.0
    %4031 = vmatprep.subr.mxu0 0.0
    %4032 = vmatpush1.msra.mxu0 0.0
    %4033 = vmatprep.subr.mxu0 0.0
    %4034 = vmatpush1.msra.mxu0 0.0
    %4035 = vmatprep.subr.mxu0 0.0
    %4036 = vmatpush1.msra.mxu0 0.0
    %4037 = vmatprep.subr.mxu0 0.0
    %4038 = vmatpush1.msra.mxu0 0.0
    %4039 = vmatprep.subr.mxu0 0.0
    %4040 = vmatpush1.msra.mxu0 0.0
    %4041 = vmatprep.subr.mxu0 0.0
    %4042 = vmatpush1.msra.mxu0 0.0
    %4043 = vmatprep.subr.mxu0 0.0
    %4044 = vmatpush1.msra.mxu0 0.0
    %4045 = vmatprep.mubr.f32.mxu0 0.0
    %4046 = vmatmul.mubr.f32.gmra.mrb[0].mxu0 %v3908
    %v4047 = vpop.f32.mrb[0].mxu0
    %v4048 = vadd.f32 %v3883, %v4047
    %v4049 = vpop.f32.mrb[0].mxu0
    %v4050 = vadd.f32 %v3885, %v4049
    %4051 = vdwg.mxu0
    %v4053 = vlaneseq
    %v4054 = vshrl.u32 %v4053, 7
    %v4055 = vsub.s32 0, %v4054
    %v4056 = vrot.slane %v60, %v4055
    %v4057 = vlaneseq
    %v4058 = vshrl.u32 %v4057, 7
    %v4059 = vsub.s32 1, %v4058
    %v4060 = vrot.slane %v60, %v4059
    %v4061 = vlaneseq
    %v4062 = vshrl.u32 %v4061, 7
    %v4063 = vsub.s32 2, %v4062
    %v4064 = vrot.slane %v60, %v4063
    %v4065 = vlaneseq
    %v4066 = vshrl.u32 %v4065, 7
    %v4067 = vsub.s32 3, %v4066
    %v4068 = vrot.slane %v60, %v4067
    %v4073 = vadd.f32 %v3977, %v4056
    %v4074 = vadd.f32 %v3979, %v4060
    %v4075 = vadd.f32 %v4048, %v4064
    %v4076 = vadd.f32 %v4050, %v4068
    %v4077 = vxor.u32 %v4073, 2147483648
    %v4078 = vmul.f32 %v4077, 1.442695
    %v4079 = vpow.pop %v4078
    %v4080 = vadd.f32 %v4079, 1.0
    %v4081 = vrcp.pop %v4080
    %v4082 = vmul.f32 1.0, %v4081
    %v4083 = vxor.u32 %v4074, 2147483648
    %v4084 = vmul.f32 %v4083, 1.442695
    %v4085 = vpow.pop %v4084
    %v4086 = vadd.f32 %v4085, 1.0
    %v4087 = vrcp.pop %v4086
    %v4088 = vmul.f32 1.0, %v4087
    %v4089 = vmul.f32 %v4082, %v4076
    %v4090 = vadd.f32 %v4075, %v4089
    %v4091 = vtanh.pop %v4090
    %v4092 = vsub.f32 1.0, %v4088
    %v4093 = vmul.f32 %v4092, %v4091
    %v4094 = vmul.f32 %v4088, %v3599
    %v4095 = vadd.f32 %v4093, %v4094
    %v4096 = vld [vmem:[%s9] sm:$0xff]
    %v4097 = vld [vmem:[%s9 + $0x8] sm:$0xff]
    %v4098 = vld [vmem:[%s9 + $0x10] sm:$0xff]
    %v4099 = vld [vmem:[%s9 + $0x18] sm:$0xff]
    %v4100 = vld [vmem:[%s9 + $0x20] sm:$0xff]
    %v4101 = vld [vmem:[%s9 + $0x28] sm:$0xff]
    %v4102 = vld [vmem:[%s9 + $0x30] sm:$0xff]
    %v4103 = vld [vmem:[%s9 + $0x38] sm:$0xff]
    %v4104 = vld [vmem:[%s9 + $0x40] sm:$0xff]
    %v4105 = vld [vmem:[%s9 + $0x48] sm:$0xff]
    %v4106 = vld [vmem:[%s9 + $0x50] sm:$0xff]
    %v4107 = vld [vmem:[%s9 + $0x58] sm:$0xff]
    %v4108 = vld [vmem:[%s9 + $0x60] sm:$0xff]
    %v4109 = vld [vmem:[%s9 + $0x68] sm:$0xff]
    %v4110 = vld [vmem:[%s9 + $0x70] sm:$0xff]
    %v4111 = vld [vmem:[%s9 + $0x78] sm:$0xff]
    %v4113 = vlaneseq
    %v4114 = vshrl.u32 %v4113, 7
    %v4115 = vsub.s32 0, %v4114
    %v4116 = vrot.slane %v61, %v4115
    %4118 = vmatprep.subr.mxu0 0.0
    %4119 = vmatpush1.msra.mxu0 %v4096
    %4120 = vmatprep.subr.mxu0 0.0
    %4121 = vmatpush1.msra.mxu0 %v4097
    %4122 = vmatprep.subr.mxu0 0.0
    %4123 = vmatpush1.msra.mxu0 %v4098
    %4124 = vmatprep.subr.mxu0 0.0
    %4125 = vmatpush1.msra.mxu0 %v4099
    %4126 = vmatprep.subr.mxu0 0.0
    %4127 = vmatpush1.msra.mxu0 %v4100
    %4128 = vmatprep.subr.mxu0 0.0
    %4129 = vmatpush1.msra.mxu0 %v4101
    %4130 = vmatprep.subr.mxu0 0.0
    %4131 = vmatpush1.msra.mxu0 %v4102
    %4132 = vmatprep.subr.mxu0 0.0
    %4133 = vmatpush1.msra.mxu0 %v4103
    %4134 = vmatprep.subr.mxu0 0.0
    %4135 = vmatpush1.msra.mxu0 %v4104
    %4136 = vmatprep.subr.mxu0 0.0
    %4137 = vmatpush1.msra.mxu0 %v4105
    %4138 = vmatprep.subr.mxu0 0.0
    %4139 = vmatpush1.msra.mxu0 %v4106
    %4140 = vmatprep.subr.mxu0 0.0
    %4141 = vmatpush1.msra.mxu0 %v4107
    %4142 = vmatprep.subr.mxu0 0.0
    %4143 = vmatpush1.msra.mxu0 %v4108
    %4144 = vmatprep.subr.mxu0 0.0
    %4145 = vmatpush1.msra.mxu0 %v4109
    %4146 = vmatprep.subr.mxu0 0.0
    %4147 = vmatpush1.msra.mxu0 %v4110
    %4148 = vmatprep.subr.mxu0 0.0
    %4149 = vmatpush1.msra.mxu0 %v4111
    %4150 = vmatprep.subr.mxu0 0.0
    %4151 = vmatpush1.msra.mxu0 0.0
    %4152 = vmatprep.subr.mxu0 0.0
    %4153 = vmatpush1.msra.mxu0 0.0
    %4154 = vmatprep.subr.mxu0 0.0
    %4155 = vmatpush1.msra.mxu0 0.0
    %4156 = vmatprep.subr.mxu0 0.0
    %4157 = vmatpush1.msra.mxu0 0.0
    %4158 = vmatprep.subr.mxu0 0.0
    %4159 = vmatpush1.msra.mxu0 0.0
    %4160 = vmatprep.subr.mxu0 0.0
    %4161 = vmatpush1.msra.mxu0 0.0
    %4162 = vmatprep.subr.mxu0 0.0
    %4163 = vmatpush1.msra.mxu0 0.0
    %4164 = vmatprep.subr.mxu0 0.0
    %4165 = vmatpush1.msra.mxu0 0.0
    %4166 = vmatprep.subr.mxu0 0.0
    %4167 = vmatpush1.msra.mxu0 0.0
    %4168 = vmatprep.subr.mxu0 0.0
    %4169 = vmatpush1.msra.mxu0 0.0
    %4170 = vmatprep.subr.mxu0 0.0
    %4171 = vmatpush1.msra.mxu0 0.0
    %4172 = vmatprep.subr.mxu0 0.0
    %4173 = vmatpush1.msra.mxu0 0.0
    %4174 = vmatprep.subr.mxu0 0.0
    %4175 = vmatpush1.msra.mxu0 0.0
    %4176 = vmatprep.subr.mxu0 0.0
    %4177 = vmatpush1.msra.mxu0 0.0
    %4178 = vmatprep.subr.mxu0 0.0
    %4179 = vmatpush1.msra.mxu0 0.0
    %4180 = vmatprep.subr.mxu0 0.0
    %4181 = vmatpush1.msra.mxu0 0.0
    %4182 = vmatprep.mubr.f32.mxu0 0.0
    %4183 = vmatmul.mubr.f32.gmra.mrb[0].mxu0 %v4095
    %v4184 = vpop.f32.mrb[0].mxu0
    %v4185 = vadd.f32 %v4116, %v4184
    %v4186 = vpop.f32.mrb[0].mxu0
    %4187 = vdwg.mxu0
    %v4189 = vcombine.high %v4185, %v4185
    %v4191 = vunpack.c.l.s4 1966171168
    %v4192 = vunpack.c.0.s8 %v4191
    %v4193 = vlaneseq
    %v4194 = vshrl.u32 %v4193, 7
    %v4195 = vsub.s32 %v4192, %v4194
    %v4196 = vrot.slane %v4185, %v4195
    %v4198 = vunpack.c.l.s4 1966171168
    %v4199 = vunpack.c.0.s8 %v4198
    %v4200 = vlaneseq
    %v4201 = vshrl.u32 %v4200, 7
    %v4202 = vsub.s32 %v4199, %v4201
    %v4203 = vrot.slane %v4189, %v4202
    %v4204 = vcombine.high %v4196, %v4196
    %v4205 = vcombine.high %v4203, %v4203
    %v4207 = vunpack.c.l.s4 1966171168
    %v4208 = vunpack.c.0.s8 %v4207
    %v4209 = vlaneseq
    %v4210 = vshrl.u32 %v4209, 7
    %v4211 = vsub.s32 %v4208, %v4210
    %v4212 = vrot.slane %v4196, %v4211
    %v4214 = vunpack.c.l.s4 1966171168
    %v4215 = vunpack.c.0.s8 %v4214
    %v4216 = vlaneseq
    %v4217 = vshrl.u32 %v4216, 7
    %v4218 = vsub.s32 %v4215, %v4217
    %v4219 = vrot.slane %v4203, %v4218
    %v4221 = vunpack.c.l.s4 1966171168
    %v4222 = vunpack.c.0.s8 %v4221
    %v4223 = vlaneseq
    %v4224 = vshrl.u32 %v4223, 7
    %v4225 = vsub.s32 %v4222, %v4224
    %v4226 = vrot.slane %v4204, %v4225
    %v4228 = vunpack.c.l.s4 1966171168
    %v4229 = vunpack.c.0.s8 %v4228
    %v4230 = vlaneseq
    %v4231 = vshrl.u32 %v4230, 7
    %v4232 = vsub.s32 %v4229, %v4231
    %v4233 = vrot.slane %v4205, %v4232
    %v4234 = vcombine.high %v4212, %v4212
    %v4235 = vcombine.high %v4219, %v4219
    %v4236 = vcombine.high %v4226, %v4226
    %v4237 = vcombine.high %v4233, %v4233
    %4246 = vst [vmem:[%s12 + $0x1] sm:$0x1] %v4212
    %4247 = vst [vmem:[%s12 + $0x9] sm:$0x1] %v4226
    %4248 = vst [vmem:[%s12 + $0x11] sm:$0x1] %v4234
    %4249 = vst [vmem:[%s12 + $0x19] sm:$0x1] %v4236
    %4250 = vst [vmem:[%s12 + $0x21] sm:$0x1] %v4219
    %4251 = vst [vmem:[%s12 + $0x29] sm:$0x1] %v4233
    %4252 = vst [vmem:[%s12 + $0x31] sm:$0x1] %v4235
    %4253 = vst [vmem:[%s12 + $0x39] sm:$0x1] %v4237
    %s4254 = sld [smem:[#allocation4]]
    %p4255 = scmp.eq.s32.totalorder %s4254, 0
    // Predicated region
    $region50: #{seq2seq_forward.1} parent=1 // pred_check
      %p4256 = pneg %p4255
    $region51: #{seq2seq_forward.1} parent=1 // pred_check_branch
      %4258 = sbr.rel (%p4256) target = $region53
    $region52: #{seq2seq_forward.1} parent=1 // pred_region
      %4259 = vmax.xlane.f32.xlu0 %v4185
      %v4260 = vpop.xlane.xlu0 %4259
      %vm4261 = vcmp.eq.f32.partialorder %v4185, %v4260
      %v4262 = vsel %vm4261, %v63, 128
      %v4263 = vand.u32 %v4262, 65535
      %v4264 = vshra.s32 %v4262, 16
      %v4265 = vcvt.s32.f32 %v4263
      %v4266 = vcvt.s32.f32 %v4264
      %4267 = vmin.xlane.f32.xlu0 %v4266
      %v4268 = vpop.xlane.xlu0 %4267
      %vm4269 = vcmp.eq.f32.partialorder %v4266, %v4268
      %v4270 = vsel %vm4269, %v4265, inf
      %4271 = vmin.xlane.f32.xlu0 %v4270
      %v4272 = vpop.xlane.xlu0 %4271
      %v4273 = vcvt.f32.s32 %v4272
      %v4274 = vcvt.f32.s32 %v4268
      %v4275 = vshll.u32 %v4274, 16
      %v4276 = vadd.s32 %v4275, %v4273
      %vm4277 = vcmp.eq.s32.totalorder %v63, %v4276
      %v4278 = vsel %vm4277, 1, 0
      %v4279 = vcvt.s32.f32 %v4278
      %v4280 = vld [vmem:[%s11] sm:$0xff]
      %v4281 = vld [vmem:[%s11 + $0x8] sm:$0xff]
      %v4282 = vld [vmem:[%s11 + $0x10] sm:$0xff]
      %v4283 = vld [vmem:[%s11 + $0x18] sm:$0xff]
      %v4284 = vld [vmem:[%s11 + $0x20] sm:$0xff]
      %v4285 = vld [vmem:[%s11 + $0x28] sm:$0xff]
      %v4286 = vld [vmem:[%s11 + $0x30] sm:$0xff]
      %v4287 = vld [vmem:[%s11 + $0x38] sm:$0xff]
      %v4288 = vld [vmem:[%s11 + $0x40] sm:$0xff]
      %v4289 = vld [vmem:[%s11 + $0x48] sm:$0xff]
      %v4290 = vld [vmem:[%s11 + $0x50] sm:$0xff]
      %v4291 = vld [vmem:[%s11 + $0x58] sm:$0xff]
      %v4292 = vld [vmem:[%s11 + $0x60] sm:$0xff]
      %v4293 = vld [vmem:[%s11 + $0x68] sm:$0xff]
      %v4294 = vld [vmem:[%s11 + $0x70] sm:$0xff]
      %v4295 = vld [vmem:[%s11 + $0x78] sm:$0xff]
      %4296 = vmatprep.subr.mxu0 0.0
      %4297 = vmatpush1.msra.mxu0 %v4280
      %4298 = vmatprep.subr.mxu0 0.0
      %4299 = vmatpush1.msra.mxu0 %v4281
      %4300 = vmatprep.subr.mxu0 0.0
      %4301 = vmatpush1.msra.mxu0 %v4282
      %4302 = vmatprep.subr.mxu0 0.0
      %4303 = vmatpush1.msra.mxu0 %v4283
      %4304 = vmatprep.subr.mxu0 0.0
      %4305 = vmatpush1.msra.mxu0 %v4284
      %4306 = vmatprep.subr.mxu0 0.0
      %4307 = vmatpush1.msra.mxu0 %v4285
      %4308 = vmatprep.subr.mxu0 0.0
      %4309 = vmatpush1.msra.mxu0 %v4286
      %4310 = vmatprep.subr.mxu0 0.0
      %4311 = vmatpush1.msra.mxu0 %v4287
      %4312 = vmatprep.subr.mxu0 0.0
      %4313 = vmatpush1.msra.mxu0 %v4288
      %4314 = vmatprep.subr.mxu0 0.0
      %4315 = vmatpush1.msra.mxu0 %v4289
      %4316 = vmatprep.subr.mxu0 0.0
      %4317 = vmatpush1.msra.mxu0 %v4290
      %4318 = vmatprep.subr.mxu0 0.0
      %4319 = vmatpush1.msra.mxu0 %v4291
      %4320 = vmatprep.subr.mxu0 0.0
      %4321 = vmatpush1.msra.mxu0 %v4292
      %4322 = vmatprep.subr.mxu0 0.0
      %4323 = vmatpush1.msra.mxu0 %v4293
      %4324 = vmatprep.subr.mxu0 0.0
      %4325 = vmatpush1.msra.mxu0 %v4294
      %4326 = vmatprep.subr.mxu0 0.0
      %4327 = vmatpush1.msra.mxu0 %v4295
      %4328 = vmatprep.subr.mxu0 0.0
      %4329 = vmatpush1.msra.mxu0 0.0
      %4330 = vmatprep.subr.mxu0 0.0
      %4331 = vmatpush1.msra.mxu0 0.0
      %4332 = vmatprep.subr.mxu0 0.0
      %4333 = vmatpush1.msra.mxu0 0.0
      %4334 = vmatprep.subr.mxu0 0.0
      %4335 = vmatpush1.msra.mxu0 0.0
      %4336 = vmatprep.subr.mxu0 0.0
      %4337 = vmatpush1.msra.mxu0 0.0
      %4338 = vmatprep.subr.mxu0 0.0
      %4339 = vmatpush1.msra.mxu0 0.0
      %4340 = vmatprep.subr.mxu0 0.0
      %4341 = vmatpush1.msra.mxu0 0.0
      %4342 = vmatprep.subr.mxu0 0.0
      %4343 = vmatpush1.msra.mxu0 0.0
      %4344 = vmatprep.subr.mxu0 0.0
      %4345 = vmatpush1.msra.mxu0 0.0
      %4346 = vmatprep.subr.mxu0 0.0
      %4347 = vmatpush1.msra.mxu0 0.0
      %4348 = vmatprep.subr.mxu0 0.0
      %4349 = vmatpush1.msra.mxu0 0.0
      %4350 = vmatprep.subr.mxu0 0.0
      %4351 = vmatpush1.msra.mxu0 0.0
      %4352 = vmatprep.subr.mxu0 0.0
      %4353 = vmatpush1.msra.mxu0 0.0
      %4354 = vmatprep.subr.mxu0 0.0
      %4355 = vmatpush1.msra.mxu0 0.0
      %4356 = vmatprep.subr.mxu0 0.0
      %4357 = vmatpush1.msra.mxu0 0.0
      %4358 = vmatprep.subr.mxu0 0.0
      %4359 = vmatpush1.msra.mxu0 0.0
      %4360 = vmatprep.mubr.f32.mxu0 0.0
      %4361 = vmatmul.mubr.f32.gmra.mrb[0].mxu0 %v4279
      %v4362 = vpop.f32.mrb[0].mxu0
      %v4363 = vadd.f32 0.0, %v4362
      %v4364 = vpop.f32.mrb[0].mxu0
      %4365 = vdwg.mxu0
      %4366 = vst [vmem:[#allocation2] sm:$0xff] %v4363
    $region53: #{seq2seq_forward.1} parent=1 // pred_fallthru
      _
    %s4367 = sld [smem:[#allocation4]]
    %p4368 = scmp.ne.s32.totalorder %s4367, 0
    %v4369 = vld [vmem:[%s2 + $0x1] sm:$0x1]
    %v4370 = vld [vmem:[%s2 + $0x9] sm:$0x1]
    %v4371 = vld [vmem:[%s2 + $0x11] sm:$0x1]
    %v4372 = vld [vmem:[%s2 + $0x19] sm:$0x1]
    %v4373 = vld [vmem:[%s2 + $0x21] sm:$0x1]
    %v4374 = vld [vmem:[%s2 + $0x29] sm:$0x1]
    %v4375 = vld [vmem:[%s2 + $0x31] sm:$0x1]
    %v4376 = vld [vmem:[%s2 + $0x39] sm:$0x1]
    %v4377 = vld [vmem:[#allocation2] sm:$0xff]
    %s4378 = scalar_select %p4368, 1, 0
    %v4379 = vstv %s4378
    %vm4380 = vcmp.eq.s32.totalorder %v4379, 1
    %v4382 = vrot.slane %v4377, 1
    %v4383 = vrot.slane %v4377, 2
    %v4384 = vrot.slane %v4377, 3
    %v4385 = vrot.slane %v4377, 4
    %v4386 = vrot.slane %v4377, 5
    %v4387 = vrot.slane %v4377, 6
    %v4388 = vrot.slane %v4377, 7
    %v4397 = vsel %vm4380, %v4369, %v4377
    %v4398 = vsel %vm4380, %v4370, %v4382
    %v4399 = vsel %vm4380, %v4371, %v4383
    %v4400 = vsel %vm4380, %v4372, %v4384
    %v4401 = vsel %vm4380, %v4373, %v4385
    %v4402 = vsel %vm4380, %v4374, %v4386
    %v4403 = vsel %vm4380, %v4375, %v4387
    %v4404 = vsel %vm4380, %v4376, %v4388
    %v4405 = vld [vmem:[%s6] sm:$0xff]
    %v4406 = vld [vmem:[%s6 + $0x8] sm:$0xff]
    %v4407 = vld [vmem:[%s6 + $0x10] sm:$0xff]
    %v4408 = vld [vmem:[%s6 + $0x18] sm:$0xff]
    %v4409 = vld [vmem:[%s6 + $0x20] sm:$0xff]
    %v4410 = vld [vmem:[%s6 + $0x28] sm:$0xff]
    %v4411 = vld [vmem:[%s6 + $0x30] sm:$0xff]
    %v4412 = vld [vmem:[%s6 + $0x38] sm:$0xff]
    %v4413 = vld [vmem:[%s6 + $0x40] sm:$0xff]
    %v4414 = vld [vmem:[%s6 + $0x48] sm:$0xff]
    %v4415 = vld [vmem:[%s6 + $0x50] sm:$0xff]
    %v4416 = vld [vmem:[%s6 + $0x58] sm:$0xff]
    %v4417 = vld [vmem:[%s6 + $0x60] sm:$0xff]
    %v4418 = vld [vmem:[%s6 + $0x68] sm:$0xff]
    %v4419 = vld [vmem:[%s6 + $0x70] sm:$0xff]
    %v4420 = vld [vmem:[%s6 + $0x78] sm:$0xff]
    %v4421 = vld [vmem:[%s6 + $0x80] sm:$0xff]
    %v4422 = vld [vmem:[%s6 + $0x88] sm:$0xff]
    %v4423 = vld [vmem:[%s6 + $0x90] sm:$0xff]
    %v4424 = vld [vmem:[%s6 + $0x98] sm:$0xff]
    %v4425 = vld [vmem:[%s6 + $0xa0] sm:$0xff]
    %v4426 = vld [vmem:[%s6 + $0xa8] sm:$0xff]
    %v4427 = vld [vmem:[%s6 + $0xb0] sm:$0xff]
    %v4428 = vld [vmem:[%s6 + $0xb8] sm:$0xff]
    %v4429 = vld [vmem:[%s6 + $0xc0] sm:$0xff]
    %v4430 = vld [vmem:[%s6 + $0xc8] sm:$0xff]
    %v4431 = vld [vmem:[%s6 + $0xd0] sm:$0xff]
    %v4432 = vld [vmem:[%s6 + $0xd8] sm:$0xff]
    %v4433 = vld [vmem:[%s6 + $0xe0] sm:$0xff]
    %v4434 = vld [vmem:[%s6 + $0xe8] sm:$0xff]
    %v4435 = vld [vmem:[%s6 + $0xf0] sm:$0xff]
    %v4436 = vld [vmem:[%s6 + $0xf8] sm:$0xff]
    %v4437 = vld [vmem:[%s6 + $0x100] sm:$0xff]
    %v4438 = vld [vmem:[%s6 + $0x108] sm:$0xff]
    %v4439 = vld [vmem:[%s6 + $0x110] sm:$0xff]
    %v4440 = vld [vmem:[%s6 + $0x118] sm:$0xff]
    %v4441 = vld [vmem:[%s6 + $0x120] sm:$0xff]
    %v4442 = vld [vmem:[%s6 + $0x128] sm:$0xff]
    %v4443 = vld [vmem:[%s6 + $0x130] sm:$0xff]
    %v4444 = vld [vmem:[%s6 + $0x138] sm:$0xff]
    %v4445 = vld [vmem:[%s6 + $0x140] sm:$0xff]
    %v4446 = vld [vmem:[%s6 + $0x148] sm:$0xff]
    %v4447 = vld [vmem:[%s6 + $0x150] sm:$0xff]
    %v4448 = vld [vmem:[%s6 + $0x158] sm:$0xff]
    %v4449 = vld [vmem:[%s6 + $0x160] sm:$0xff]
    %v4450 = vld [vmem:[%s6 + $0x168] sm:$0xff]
    %v4451 = vld [vmem:[%s6 + $0x170] sm:$0xff]
    %v4452 = vld [vmem:[%s6 + $0x178] sm:$0xff]
    %v4453 = vld [vmem:[%s6 + $0x180] sm:$0xff]
    %v4454 = vld [vmem:[%s6 + $0x188] sm:$0xff]
    %v4455 = vld [vmem:[%s6 + $0x190] sm:$0xff]
    %v4456 = vld [vmem:[%s6 + $0x198] sm:$0xff]
    %v4457 = vld [vmem:[%s6 + $0x1a0] sm:$0xff]
    %v4458 = vld [vmem:[%s6 + $0x1a8] sm:$0xff]
    %v4459 = vld [vmem:[%s6 + $0x1b0] sm:$0xff]
    %v4460 = vld [vmem:[%s6 + $0x1b8] sm:$0xff]
    %v4461 = vld [vmem:[%s6 + $0x1c0] sm:$0xff]
    %v4462 = vld [vmem:[%s6 + $0x1c8] sm:$0xff]
    %v4463 = vld [vmem:[%s6 + $0x1d0] sm:$0xff]
    %v4464 = vld [vmem:[%s6 + $0x1d8] sm:$0xff]
    %v4465 = vld [vmem:[%s6 + $0x1e0] sm:$0xff]
    %v4466 = vld [vmem:[%s6 + $0x1e8] sm:$0xff]
    %v4467 = vld [vmem:[%s6 + $0x1f0] sm:$0xff]
    %v4468 = vld [vmem:[%s6 + $0x1f8] sm:$0xff]
    %v4469 = vld [vmem:[#allocation5] sm:$0xff]
    %v4470 = vld [vmem:[#allocation5 + $0x8] sm:$0xff]
    %v4471 = vld [vmem:[#allocation5 + $0x10] sm:$0xff]
    %v4472 = vld [vmem:[#allocation5 + $0x18] sm:$0xff]
    %v4473 = vld [vmem:[#allocation5 + $0x20] sm:$0xff]
    %v4474 = vld [vmem:[#allocation5 + $0x28] sm:$0xff]
    %v4475 = vld [vmem:[#allocation5 + $0x30] sm:$0xff]
    %v4476 = vld [vmem:[#allocation5 + $0x38] sm:$0xff]
    %v4477 = vld [vmem:[#allocation5 + $0x40] sm:$0xff]
    %v4478 = vld [vmem:[#allocation5 + $0x48] sm:$0xff]
    %v4479 = vld [vmem:[#allocation5 + $0x50] sm:$0xff]
    %v4480 = vld [vmem:[#allocation5 + $0x58] sm:$0xff]
    %v4481 = vld [vmem:[#allocation5 + $0x60] sm:$0xff]
    %v4482 = vld [vmem:[#allocation5 + $0x68] sm:$0xff]
    %v4483 = vld [vmem:[#allocation5 + $0x70] sm:$0xff]
    %v4484 = vld [vmem:[#allocation5 + $0x78] sm:$0xff]
    %v4485 = vld [vmem:[#allocation5 + $0x80] sm:$0xff]
    %v4486 = vld [vmem:[#allocation5 + $0x88] sm:$0xff]
    %v4487 = vld [vmem:[#allocation5 + $0x90] sm:$0xff]
    %v4488 = vld [vmem:[#allocation5 + $0x98] sm:$0xff]
    %v4489 = vld [vmem:[#allocation5 + $0xa0] sm:$0xff]
    %v4490 = vld [vmem:[#allocation5 + $0xa8] sm:$0xff]
    %v4491 = vld [vmem:[#allocation5 + $0xb0] sm:$0xff]
    %v4492 = vld [vmem:[#allocation5 + $0xb8] sm:$0xff]
    %v4493 = vld [vmem:[#allocation5 + $0xc0] sm:$0xff]
    %v4494 = vld [vmem:[#allocation5 + $0xc8] sm:$0xff]
    %v4495 = vld [vmem:[#allocation5 + $0xd0] sm:$0xff]
    %v4496 = vld [vmem:[#allocation5 + $0xd8] sm:$0xff]
    %v4497 = vld [vmem:[#allocation5 + $0xe0] sm:$0xff]
    %v4498 = vld [vmem:[#allocation5 + $0xe8] sm:$0xff]
    %v4499 = vld [vmem:[#allocation5 + $0xf0] sm:$0xff]
    %v4500 = vld [vmem:[#allocation5 + $0xf8] sm:$0xff]
    %v4501 = vld [vmem:[#allocation5 + $0x100] sm:$0xff]
    %v4502 = vld [vmem:[#allocation5 + $0x108] sm:$0xff]
    %v4503 = vld [vmem:[#allocation5 + $0x110] sm:$0xff]
    %v4504 = vld [vmem:[#allocation5 + $0x118] sm:$0xff]
    %v4505 = vld [vmem:[#allocation5 + $0x120] sm:$0xff]
    %v4506 = vld [vmem:[#allocation5 + $0x128] sm:$0xff]
    %v4507 = vld [vmem:[#allocation5 + $0x130] sm:$0xff]
    %v4508 = vld [vmem:[#allocation5 + $0x138] sm:$0xff]
    %v4509 = vld [vmem:[#allocation5 + $0x140] sm:$0xff]
    %v4510 = vld [vmem:[#allocation5 + $0x148] sm:$0xff]
    %v4511 = vld [vmem:[#allocation5 + $0x150] sm:$0xff]
    %v4512 = vld [vmem:[#allocation5 + $0x158] sm:$0xff]
    %v4513 = vld [vmem:[#allocation5 + $0x160] sm:$0xff]
    %v4514 = vld [vmem:[#allocation5 + $0x168] sm:$0xff]
    %v4515 = vld [vmem:[#allocation5 + $0x170] sm:$0xff]
    %v4516 = vld [vmem:[#allocation5 + $0x178] sm:$0xff]
    %v4517 = vld [vmem:[#allocation5 + $0x180] sm:$0xff]
    %v4518 = vld [vmem:[#allocation5 + $0x188] sm:$0xff]
    %v4519 = vld [vmem:[#allocation5 + $0x190] sm:$0xff]
    %v4520 = vld [vmem:[#allocation5 + $0x198] sm:$0xff]
    %v4521 = vld [vmem:[#allocation5 + $0x1a0] sm:$0xff]
    %v4522 = vld [vmem:[#allocation5 + $0x1a8] sm:$0xff]
    %v4523 = vld [vmem:[#allocation5 + $0x1b0] sm:$0xff]
    %v4524 = vld [vmem:[#allocation5 + $0x1b8] sm:$0xff]
    %v4525 = vld [vmem:[#allocation5 + $0x1c0] sm:$0xff]
    %v4526 = vld [vmem:[#allocation5 + $0x1c8] sm:$0xff]
    %v4527 = vld [vmem:[#allocation5 + $0x1d0] sm:$0xff]
    %v4528 = vld [vmem:[#allocation5 + $0x1d8] sm:$0xff]
    %v4529 = vld [vmem:[#allocation5 + $0x1e0] sm:$0xff]
    %v4530 = vld [vmem:[#allocation5 + $0x1e8] sm:$0xff]
    %v4531 = vld [vmem:[#allocation5 + $0x1f0] sm:$0xff]
    %v4532 = vld [vmem:[#allocation5 + $0x1f8] sm:$0xff]
    %4533 = vmatprep.subr.mxu0 %v4470
    %4534 = vmatpush1.msra.mxu0 %v4469
    %4535 = vmatprep.subr.mxu0 %v4474
    %4536 = vmatpush1.msra.mxu0 %v4473
    %4537 = vmatprep.subr.mxu0 %v4478
    %4538 = vmatpush1.msra.mxu0 %v4477
    %4539 = vmatprep.subr.mxu0 %v4482
    %4540 = vmatpush1.msra.mxu0 %v4481
    %4541 = vmatprep.subr.mxu0 %v4486
    %4542 = vmatpush1.msra.mxu0 %v4485
    %4543 = vmatprep.subr.mxu0 %v4490
    %4544 = vmatpush1.msra.mxu0 %v4489
    %4545 = vmatprep.subr.mxu0 %v4494
    %4546 = vmatpush1.msra.mxu0 %v4493
    %4547 = vmatprep.subr.mxu0 %v4498
    %4548 = vmatpush1.msra.mxu0 %v4497
    %4549 = vmatprep.subr.mxu0 %v4502
    %4550 = vmatpush1.msra.mxu0 %v4501
    %4551 = vmatprep.subr.mxu0 %v4506
    %4552 = vmatpush1.msra.mxu0 %v4505
    %4553 = vmatprep.subr.mxu0 %v4510
    %4554 = vmatpush1.msra.mxu0 %v4509
    %4555 = vmatprep.subr.mxu0 %v4514
    %4556 = vmatpush1.msra.mxu0 %v4513
    %4557 = vmatprep.subr.mxu0 %v4518
    %4558 = vmatpush1.msra.mxu0 %v4517
    %4559 = vmatprep.subr.mxu0 %v4522
    %4560 = vmatpush1.msra.mxu0 %v4521
    %4561 = vmatprep.subr.mxu0 %v4526
    %4562 = vmatpush1.msra.mxu0 %v4525
    %4563 = vmatprep.subr.mxu0 %v4530
    %4564 = vmatpush1.msra.mxu0 %v4529
    %4565 = vmatprep.subr.mxu0 0.0
    %4566 = vmatpush1.msra.mxu0 0.0
    %4567 = vmatprep.subr.mxu0 0.0
    %4568 = vmatpush1.msra.mxu0 0.0
    %4569 = vmatprep.subr.mxu0 0.0
    %4570 = vmatpush1.msra.mxu0 0.0
    %4571 = vmatprep.subr.mxu0 0.0
    %4572 = vmatpush1.msra.mxu0 0.0
    %4573 = vmatprep.subr.mxu0 0.0
    %4574 = vmatpush1.msra.mxu0 0.0
    %4575 = vmatprep.subr.mxu0 0.0
    %4576 = vmatpush1.msra.mxu0 0.0
    %4577 = vmatprep.subr.mxu0 0.0
    %4578 = vmatpush1.msra.mxu0 0.0
    %4579 = vmatprep.subr.mxu0 0.0
    %4580 = vmatpush1.msra.mxu0 0.0
    %4581 = vmatprep.subr.mxu0 0.0
    %4582 = vmatpush1.msra.mxu0 0.0
    %4583 = vmatprep.subr.mxu0 0.0
    %4584 = vmatpush1.msra.mxu0 0.0
    %4585 = vmatprep.subr.mxu0 0.0
    %4586 = vmatpush1.msra.mxu0 0.0
    %4587 = vmatprep.subr.mxu0 0.0
    %4588 = vmatpush1.msra.mxu0 0.0
    %4589 = vmatprep.subr.mxu0 0.0
    %4590 = vmatpush1.msra.mxu0 0.0
    %4591 = vmatprep.subr.mxu0 0.0
    %4592 = vmatpush1.msra.mxu0 0.0
    %4593 = vmatprep.subr.mxu0 0.0
    %4594 = vmatpush1.msra.mxu0 0.0
    %4595 = vmatprep.subr.mxu0 0.0
    %4596 = vmatpush1.msra.mxu0 0.0
    %4597 = vmatprep.mubr.f32.mxu0 0.0
    %4598 = vmatmul.mubr.f32.gmra.mrb[0].mxu0 %v4095
    %v4599 = vpop.f32.mrb[0].mxu0
    %v4600 = vadd.f32 0.0, %v4599
    %v4601 = vpop.f32.mrb[0].mxu0
    %v4602 = vadd.f32 0.0, %v4601
    %4603 = vdwg.mxu0
    %4604 = vmatprep.subr.mxu0 %v4472
    %4605 = vmatpush1.msra.mxu0 %v4471
    %4606 = vmatprep.subr.mxu0 %v4476
    %4607 = vmatpush1.msra.mxu0 %v4475
    %4608 = vmatprep.subr.mxu0 %v4480
    %4609 = vmatpush1.msra.mxu0 %v4479
    %4610 = vmatprep.subr.mxu0 %v4484
    %4611 = vmatpush1.msra.mxu0 %v4483
    %4612 = vmatprep.subr.mxu0 %v4488
    %4613 = vmatpush1.msra.mxu0 %v4487
    %4614 = vmatprep.subr.mxu0 %v4492
    %4615 = vmatpush1.msra.mxu0 %v4491
    %4616 = vmatprep.subr.mxu0 %v4496
    %4617 = vmatpush1.msra.mxu0 %v4495
    %4618 = vmatprep.subr.mxu0 %v4500
    %4619 = vmatpush1.msra.mxu0 %v4499
    %4620 = vmatprep.subr.mxu0 %v4504
    %4621 = vmatpush1.msra.mxu0 %v4503
    %4622 = vmatprep.subr.mxu0 %v4508
    %4623 = vmatpush1.msra.mxu0 %v4507
    %4624 = vmatprep.subr.mxu0 %v4512
    %4625 = vmatpush1.msra.mxu0 %v4511
    %4626 = vmatprep.subr.mxu0 %v4516
    %4627 = vmatpush1.msra.mxu0 %v4515
    %4628 = vmatprep.subr.mxu0 %v4520
    %4629 = vmatpush1.msra.mxu0 %v4519
    %4630 = vmatprep.subr.mxu0 %v4524
    %4631 = vmatpush1.msra.mxu0 %v4523
    %4632 = vmatprep.subr.mxu0 %v4528
    %4633 = vmatpush1.msra.mxu0 %v4527
    %4634 = vmatprep.subr.mxu0 %v4532
    %4635 = vmatpush1.msra.mxu0 %v4531
    %4636 = vmatprep.subr.mxu0 0.0
    %4637 = vmatpush1.msra.mxu0 0.0
    %4638 = vmatprep.subr.mxu0 0.0
    %4639 = vmatpush1.msra.mxu0 0.0
    %4640 = vmatprep.subr.mxu0 0.0
    %4641 = vmatpush1.msra.mxu0 0.0
    %4642 = vmatprep.subr.mxu0 0.0
    %4643 = vmatpush1.msra.mxu0 0.0
    %4644 = vmatprep.subr.mxu0 0.0
    %4645 = vmatpush1.msra.mxu0 0.0
    %4646 = vmatprep.subr.mxu0 0.0
    %4647 = vmatpush1.msra.mxu0 0.0
    %4648 = vmatprep.subr.mxu0 0.0
    %4649 = vmatpush1.msra.mxu0 0.0
    %4650 = vmatprep.subr.mxu0 0.0
    %4651 = vmatpush1.msra.mxu0 0.0
    %4652 = vmatprep.subr.mxu0 0.0
    %4653 = vmatpush1.msra.mxu0 0.0
    %4654 = vmatprep.subr.mxu0 0.0
    %4655 = vmatpush1.msra.mxu0 0.0
    %4656 = vmatprep.subr.mxu0 0.0
    %4657 = vmatpush1.msra.mxu0 0.0
    %4658 = vmatprep.subr.mxu0 0.0
    %4659 = vmatpush1.msra.mxu0 0.0
    %4660 = vmatprep.subr.mxu0 0.0
    %4661 = vmatpush1.msra.mxu0 0.0
    %4662 = vmatprep.subr.mxu0 0.0
    %4663 = vmatpush1.msra.mxu0 0.0
    %4664 = vmatprep.subr.mxu0 0.0
    %4665 = vmatpush1.msra.mxu0 0.0
    %4666 = vmatprep.subr.mxu0 0.0
    %4667 = vmatpush1.msra.mxu0 0.0
    %4668 = vmatprep.mubr.f32.mxu0 0.0
    %4669 = vmatmul.mubr.f32.gmra.mrb[0].mxu0 %v4095
    %v4670 = vpop.f32.mrb[0].mxu0
    %v4671 = vadd.f32 0.0, %v4670
    %v4672 = vpop.f32.mrb[0].mxu0
    %v4673 = vadd.f32 0.0, %v4672
    %4674 = vdwg.mxu0
    %v4683 = vrot.slane %v4398, 7
    %v4684 = vsel %vm351, %v4683, %v4397
    %v4685 = vrot.slane %v4399, 6
    %v4686 = vsel %vm354, %v4685, %v4684
    %v4687 = vrot.slane %v4400, 5
    %v4688 = vsel %vm357, %v4687, %v4686
    %v4689 = vrot.slane %v4401, 4
    %v4690 = vsel %vm360, %v4689, %v4688
    %v4691 = vrot.slane %v4402, 3
    %v4692 = vsel %vm363, %v4691, %v4690
    %v4693 = vrot.slane %v4403, 2
    %v4694 = vsel %vm366, %v4693, %v4692
    %v4695 = vrot.slane %v4404, 1
    %v4696 = vsel %vm369, %v4695, %v4694
    %4698 = vmatprep.subr.mxu0 %v4406
    %4699 = vmatpush1.msra.mxu0 %v4405
    %4700 = vmatprep.subr.mxu0 %v4410
    %4701 = vmatpush1.msra.mxu0 %v4409
    %4702 = vmatprep.subr.mxu0 %v4414
    %4703 = vmatpush1.msra.mxu0 %v4413
    %4704 = vmatprep.subr.mxu0 %v4418
    %4705 = vmatpush1.msra.mxu0 %v4417
    %4706 = vmatprep.subr.mxu0 %v4422
    %4707 = vmatpush1.msra.mxu0 %v4421
    %4708 = vmatprep.subr.mxu0 %v4426
    %4709 = vmatpush1.msra.mxu0 %v4425
    %4710 = vmatprep.subr.mxu0 %v4430
    %4711 = vmatpush1.msra.mxu0 %v4429
    %4712 = vmatprep.subr.mxu0 %v4434
    %4713 = vmatpush1.msra.mxu0 %v4433
    %4714 = vmatprep.subr.mxu0 %v4438
    %4715 = vmatpush1.msra.mxu0 %v4437
    %4716 = vmatprep.subr.mxu0 %v4442
    %4717 = vmatpush1.msra.mxu0 %v4441
    %4718 = vmatprep.subr.mxu0 %v4446
    %4719 = vmatpush1.msra.mxu0 %v4445
    %4720 = vmatprep.subr.mxu0 %v4450
    %4721 = vmatpush1.msra.mxu0 %v4449
    %4722 = vmatprep.subr.mxu0 %v4454
    %4723 = vmatpush1.msra.mxu0 %v4453
    %4724 = vmatprep.subr.mxu0 %v4458
    %4725 = vmatpush1.msra.mxu0 %v4457
    %4726 = vmatprep.subr.mxu0 %v4462
    %4727 = vmatpush1.msra.mxu0 %v4461
    %4728 = vmatprep.subr.mxu0 %v4466
    %4729 = vmatpush1.msra.mxu0 %v4465
    %4730 = vmatprep.subr.mxu0 0.0
    %4731 = vmatpush1.msra.mxu0 0.0
    %4732 = vmatprep.subr.mxu0 0.0
    %4733 = vmatpush1.msra.mxu0 0.0
    %4734 = vmatprep.subr.mxu0 0.0
    %4735 = vmatpush1.msra.mxu0 0.0
    %4736 = vmatprep.subr.mxu0 0.0
    %4737 = vmatpush1.msra.mxu0 0.0
    %4738 = vmatprep.subr.mxu0 0.0
    %4739 = vmatpush1.msra.mxu0 0.0
    %4740 = vmatprep.subr.mxu0 0.0
    %4741 = vmatpush1.msra.mxu0 0.0
    %4742 = vmatprep.subr.mxu0 0.0
    %4743 = vmatpush1.msra.mxu0 0.0
    %4744 = vmatprep.subr.mxu0 0.0
    %4745 = vmatpush1.msra.mxu0 0.0
    %4746 = vmatprep.subr.mxu0 0.0
    %4747 = vmatpush1.msra.mxu0 0.0
    %4748 = vmatprep.subr.mxu0 0.0
    %4749 = vmatpush1.msra.mxu0 0.0
    %4750 = vmatprep.subr.mxu0 0.0
    %4751 = vmatpush1.msra.mxu0 0.0
    %4752 = vmatprep.subr.mxu0 0.0
    %4753 = vmatpush1.msra.mxu0 0.0
    %4754 = vmatprep.subr.mxu0 0.0
    %4755 = vmatpush1.msra.mxu0 0.0
    %4756 = vmatprep.subr.mxu0 0.0
    %4757 = vmatpush1.msra.mxu0 0.0
    %4758 = vmatprep.subr.mxu0 0.0
    %4759 = vmatpush1.msra.mxu0 0.0
    %4760 = vmatprep.subr.mxu0 0.0
    %4761 = vmatpush1.msra.mxu0 0.0
    %4762 = vmatprep.mubr.f32.mxu0 0.0
    %4763 = vmatmul.mubr.f32.gmra.mrb[0].mxu0 %v4696
    %v4764 = vpop.f32.mrb[0].mxu0
    %v4765 = vadd.f32 %v4600, %v4764
    %v4766 = vpop.f32.mrb[0].mxu0
    %v4767 = vadd.f32 %v4602, %v4766
    %4768 = vdwg.mxu0
    %4769 = vmatprep.subr.mxu0 %v4408
    %4770 = vmatpush1.msra.mxu0 %v4407
    %4771 = vmatprep.subr.mxu0 %v4412
    %4772 = vmatpush1.msra.mxu0 %v4411
    %4773 = vmatprep.subr.mxu0 %v4416
    %4774 = vmatpush1.msra.mxu0 %v4415
    %4775 = vmatprep.subr.mxu0 %v4420
    %4776 = vmatpush1.msra.mxu0 %v4419
    %4777 = vmatprep.subr.mxu0 %v4424
    %4778 = vmatpush1.msra.mxu0 %v4423
    %4779 = vmatprep.subr.mxu0 %v4428
    %4780 = vmatpush1.msra.mxu0 %v4427
    %4781 = vmatprep.subr.mxu0 %v4432
    %4782 = vmatpush1.msra.mxu0 %v4431
    %4783 = vmatprep.subr.mxu0 %v4436
    %4784 = vmatpush1.msra.mxu0 %v4435
    %4785 = vmatprep.subr.mxu0 %v4440
    %4786 = vmatpush1.msra.mxu0 %v4439
    %4787 = vmatprep.subr.mxu0 %v4444
    %4788 = vmatpush1.msra.mxu0 %v4443
    %4789 = vmatprep.subr.mxu0 %v4448
    %4790 = vmatpush1.msra.mxu0 %v4447
    %4791 = vmatprep.subr.mxu0 %v4452
    %4792 = vmatpush1.msra.mxu0 %v4451
    %4793 = vmatprep.subr.mxu0 %v4456
    %4794 = vmatpush1.msra.mxu0 %v4455
    %4795 = vmatprep.subr.mxu0 %v4460
    %4796 = vmatpush1.msra.mxu0 %v4459
    %4797 = vmatprep.subr.mxu0 %v4464
    %4798 = vmatpush1.msra.mxu0 %v4463
    %4799 = vmatprep.subr.mxu0 %v4468
    %4800 = vmatpush1.msra.mxu0 %v4467
    %4801 = vmatprep.subr.mxu0 0.0
    %4802 = vmatpush1.msra.mxu0 0.0
    %4803 = vmatprep.subr.mxu0 0.0
    %4804 = vmatpush1.msra.mxu0 0.0
    %4805 = vmatprep.subr.mxu0 0.0
    %4806 = vmatpush1.msra.mxu0 0.0
    %4807 = vmatprep.subr.mxu0 0.0
    %4808 = vmatpush1.msra.mxu0 0.0
    %4809 = vmatprep.subr.mxu0 0.0
    %4810 = vmatpush1.msra.mxu0 0.0
    %4811 = vmatprep.subr.mxu0 0.0
    %4812 = vmatpush1.msra.mxu0 0.0
    %4813 = vmatprep.subr.mxu0 0.0
    %4814 = vmatpush1.msra.mxu0 0.0
    %4815 = vmatprep.subr.mxu0 0.0
    %4816 = vmatpush1.msra.mxu0 0.0
    %4817 = vmatprep.subr.mxu0 0.0
    %4818 = vmatpush1.msra.mxu0 0.0
    %4819 = vmatprep.subr.mxu0 0.0
    %4820 = vmatpush1.msra.mxu0 0.0
    %4821 = vmatprep.subr.mxu0 0.0
    %4822 = vmatpush1.msra.mxu0 0.0
    %4823 = vmatprep.subr.mxu0 0.0
    %4824 = vmatpush1.msra.mxu0 0.0
    %4825 = vmatprep.subr.mxu0 0.0
    %4826 = vmatpush1.msra.mxu0 0.0
    %4827 = vmatprep.subr.mxu0 0.0
    %4828 = vmatpush1.msra.mxu0 0.0
    %4829 = vmatprep.subr.mxu0 0.0
    %4830 = vmatpush1.msra.mxu0 0.0
    %4831 = vmatprep.subr.mxu0 0.0
    %4832 = vmatpush1.msra.mxu0 0.0
    %4833 = vmatprep.mubr.f32.mxu0 0.0
    %4834 = vmatmul.mubr.f32.gmra.mrb[0].mxu0 %v4696
    %v4835 = vpop.f32.mrb[0].mxu0
    %v4836 = vadd.f32 %v4671, %v4835
    %v4837 = vpop.f32.mrb[0].mxu0
    %v4838 = vadd.f32 %v4673, %v4837
    %4839 = vdwg.mxu0
    %v4840 = vadd.f32 %v4765, %v4056
    %v4841 = vadd.f32 %v4767, %v4060
    %v4842 = vadd.f32 %v4836, %v4064
    %v4843 = vadd.f32 %v4838, %v4068
    %v4844 = vxor.u32 %v4840, 2147483648
    %v4845 = vmul.f32 %v4844, 1.442695
    %v4846 = vpow.pop %v4845
    %v4847 = vadd.f32 %v4846, 1.0
    %v4848 = vrcp.pop %v4847
    %v4849 = vmul.f32 1.0, %v4848
    %v4850 = vxor.u32 %v4841, 2147483648
    %v4851 = vmul.f32 %v4850, 1.442695
    %v4852 = vpow.pop %v4851
    %v4853 = vadd.f32 %v4852, 1.0
    %v4854 = vrcp.pop %v4853
    %v4855 = vmul.f32 1.0, %v4854
    %v4856 = vmul.f32 %v4849, %v4843
    %v4857 = vadd.f32 %v4842, %v4856
    %v4858 = vtanh.pop %v4857
    %v4859 = vsub.f32 1.0, %v4855
    %v4860 = vmul.f32 %v4859, %v4858
    %v4861 = vmul.f32 %v4855, %v4095
    %v4862 = vadd.f32 %v4860, %v4861
    %v4863 = vld [vmem:[%s9] sm:$0xff]
    %v4864 = vld [vmem:[%s9 + $0x8] sm:$0xff]
    %v4865 = vld [vmem:[%s9 + $0x10] sm:$0xff]
    %v4866 = vld [vmem:[%s9 + $0x18] sm:$0xff]
    %v4867 = vld [vmem:[%s9 + $0x20] sm:$0xff]
    %v4868 = vld [vmem:[%s9 + $0x28] sm:$0xff]
    %v4869 = vld [vmem:[%s9 + $0x30] sm:$0xff]
    %v4870 = vld [vmem:[%s9 + $0x38] sm:$0xff]
    %v4871 = vld [vmem:[%s9 + $0x40] sm:$0xff]
    %v4872 = vld [vmem:[%s9 + $0x48] sm:$0xff]
    %v4873 = vld [vmem:[%s9 + $0x50] sm:$0xff]
    %v4874 = vld [vmem:[%s9 + $0x58] sm:$0xff]
    %v4875 = vld [vmem:[%s9 + $0x60] sm:$0xff]
    %v4876 = vld [vmem:[%s9 + $0x68] sm:$0xff]
    %v4877 = vld [vmem:[%s9 + $0x70] sm:$0xff]
    %v4878 = vld [vmem:[%s9 + $0x78] sm:$0xff]
    %4879 = vmatprep.subr.mxu0 0.0
    %4880 = vmatpush1.msra.mxu0 %v4863
    %4881 = vmatprep.subr.mxu0 0.0
    %4882 = vmatpush1.msra.mxu0 %v4864
    %4883 = vmatprep.subr.mxu0 0.0
    %4884 = vmatpush1.msra.mxu0 %v4865
    %4885 = vmatprep.subr.mxu0 0.0
    %4886 = vmatpush1.msra.mxu0 %v4866
    %4887 = vmatprep.subr.mxu0 0.0
    %4888 = vmatpush1.msra.mxu0 %v4867
    %4889 = vmatprep.subr.mxu0 0.0
    %4890 = vmatpush1.msra.mxu0 %v4868
    %4891 = vmatprep.subr.mxu0 0.0
    %4892 = vmatpush1.msra.mxu0 %v4869
    %4893 = vmatprep.subr.mxu0 0.0
    %4894 = vmatpush1.msra.mxu0 %v4870
    %4895 = vmatprep.subr.mxu0 0.0
    %4896 = vmatpush1.msra.mxu0 %v4871
    %4897 = vmatprep.subr.mxu0 0.0
    %4898 = vmatpush1.msra.mxu0 %v4872
    %4899 = vmatprep.subr.mxu0 0.0
    %4900 = vmatpush1.msra.mxu0 %v4873
    %4901 = vmatprep.subr.mxu0 0.0
    %4902 = vmatpush1.msra.mxu0 %v4874
    %4903 = vmatprep.subr.mxu0 0.0
    %4904 = vmatpush1.msra.mxu0 %v4875
    %4905 = vmatprep.subr.mxu0 0.0
    %4906 = vmatpush1.msra.mxu0 %v4876
    %4907 = vmatprep.subr.mxu0 0.0
    %4908 = vmatpush1.msra.mxu0 %v4877
    %4909 = vmatprep.subr.mxu0 0.0
    %4910 = vmatpush1.msra.mxu0 %v4878
    %4911 = vmatprep.subr.mxu0 0.0
    %4912 = vmatpush1.msra.mxu0 0.0
    %4913 = vmatprep.subr.mxu0 0.0
    %4914 = vmatpush1.msra.mxu0 0.0
    %4915 = vmatprep.subr.mxu0 0.0
    %4916 = vmatpush1.msra.mxu0 0.0
    %4917 = vmatprep.subr.mxu0 0.0
    %4918 = vmatpush1.msra.mxu0 0.0
    %4919 = vmatprep.subr.mxu0 0.0
    %4920 = vmatpush1.msra.mxu0 0.0
    %4921 = vmatprep.subr.mxu0 0.0
    %4922 = vmatpush1.msra.mxu0 0.0
    %4923 = vmatprep.subr.mxu0 0.0
    %4924 = vmatpush1.msra.mxu0 0.0
    %4925 = vmatprep.subr.mxu0 0.0
    %4926 = vmatpush1.msra.mxu0 0.0
    %4927 = vmatprep.subr.mxu0 0.0
    %4928 = vmatpush1.msra.mxu0 0.0
    %4929 = vmatprep.subr.mxu0 0.0
    %4930 = vmatpush1.msra.mxu0 0.0
    %4931 = vmatprep.subr.mxu0 0.0
    %4932 = vmatpush1.msra.mxu0 0.0
    %4933 = vmatprep.subr.mxu0 0.0
    %4934 = vmatpush1.msra.mxu0 0.0
    %4935 = vmatprep.subr.mxu0 0.0
    %4936 = vmatpush1.msra.mxu0 0.0
    %4937 = vmatprep.subr.mxu0 0.0
    %4938 = vmatpush1.msra.mxu0 0.0
    %4939 = vmatprep.subr.mxu0 0.0
    %4940 = vmatpush1.msra.mxu0 0.0
    %4941 = vmatprep.subr.mxu0 0.0
    %4942 = vmatpush1.msra.mxu0 0.0
    %4943 = vmatprep.mubr.f32.mxu0 0.0
    %4944 = vmatmul.mubr.f32.gmra.mrb[0].mxu0 %v4862
    %v4945 = vpop.f32.mrb[0].mxu0
    %v4946 = vadd.f32 %v4116, %v4945
    %v4947 = vpop.f32.mrb[0].mxu0
    %4948 = vdwg.mxu0
    %v4950 = vcombine.high %v4946, %v4946
    %v4952 = vunpack.c.l.s4 1966171168
    %v4953 = vunpack.c.0.s8 %v4952
    %v4954 = vlaneseq
    %v4955 = vshrl.u32 %v4954, 7
    %v4956 = vsub.s32 %v4953, %v4955
    %v4957 = vrot.slane %v4946, %v4956
    %v4959 = vunpack.c.l.s4 1966171168
    %v4960 = vunpack.c.0.s8 %v4959
    %v4961 = vlaneseq
    %v4962 = vshrl.u32 %v4961, 7
    %v4963 = vsub.s32 %v4960, %v4962
    %v4964 = vrot.slane %v4950, %v4963
    %v4965 = vcombine.high %v4957, %v4957
    %v4966 = vcombine.high %v4964, %v4964
    %v4968 = vunpack.c.l.s4 1966171168
    %v4969 = vunpack.c.0.s8 %v4968
    %v4970 = vlaneseq
    %v4971 = vshrl.u32 %v4970, 7
    %v4972 = vsub.s32 %v4969, %v4971
    %v4973 = vrot.slane %v4957, %v4972
    %v4975 = vunpack.c.l.s4 1966171168
    %v4976 = vunpack.c.0.s8 %v4975
    %v4977 = vlaneseq
    %v4978 = vshrl.u32 %v4977, 7
    %v4979 = vsub.s32 %v4976, %v4978
    %v4980 = vrot.slane %v4964, %v4979
    %v4982 = vunpack.c.l.s4 1966171168
    %v4983 = vunpack.c.0.s8 %v4982
    %v4984 = vlaneseq
    %v4985 = vshrl.u32 %v4984, 7
    %v4986 = vsub.s32 %v4983, %v4985
    %v4987 = vrot.slane %v4965, %v4986
    %v4989 = vunpack.c.l.s4 1966171168
    %v4990 = vunpack.c.0.s8 %v4989
    %v4991 = vlaneseq
    %v4992 = vshrl.u32 %v4991, 7
    %v4993 = vsub.s32 %v4990, %v4992
    %v4994 = vrot.slane %v4966, %v4993
    %v4995 = vcombine.high %v4973, %v4973
    %v4996 = vcombine.high %v4980, %v4980
    %v4997 = vcombine.high %v4987, %v4987
    %v4998 = vcombine.high %v4994, %v4994
    %5007 = vst [vmem:[%s12 + $0x2] sm:$0x1] %v4973
    %5008 = vst [vmem:[%s12 + $0xa] sm:$0x1] %v4987
    %5009 = vst [vmem:[%s12 + $0x12] sm:$0x1] %v4995
    %5010 = vst [vmem:[%s12 + $0x1a] sm:$0x1] %v4997
    %5011 = vst [vmem:[%s12 + $0x22] sm:$0x1] %v4980
    %5012 = vst [vmem:[%s12 + $0x2a] sm:$0x1] %v4994
    %5013 = vst [vmem:[%s12 + $0x32] sm:$0x1] %v4996
    %5014 = vst [vmem:[%s12 + $0x3a] sm:$0x1] %v4998
    %s5015 = sld [smem:[#allocation4 + $0x1]]
    %p5016 = scmp.eq.s32.totalorder %s5015, 0
    // Predicated region
    $region54: #{seq2seq_forward.1} parent=1 // pred_check
      %p5017 = pneg %p5016
    $region55: #{seq2seq_forward.1} parent=1 // pred_check_branch
      %5019 = sbr.rel (%p5017) target = $region57
    $region56: #{seq2seq_forward.1} parent=1 // pred_region
      %5020 = vmax.xlane.f32.xlu0 %v4946
      %v5021 = vpop.xlane.xlu0 %5020
      %vm5022 = vcmp.eq.f32.partialorder %v4946, %v5021
      %v5023 = vsel %vm5022, %v63, 128
      %v5024 = vand.u32 %v5023, 65535
      %v5025 = vshra.s32 %v5023, 16
      %v5026 = vcvt.s32.f32 %v5024
      %v5027 = vcvt.s32.f32 %v5025
      %5028 = vmin.xlane.f32.xlu0 %v5027
      %v5029 = vpop.xlane.xlu0 %5028
      %vm5030 = vcmp.eq.f32.partialorder %v5027, %v5029
      %v5031 = vsel %vm5030, %v5026, inf
      %5032 = vmin.xlane.f32.xlu0 %v5031
      %v5033 = vpop.xlane.xlu0 %5032
      %v5034 = vcvt.f32.s32 %v5033
      %v5035 = vcvt.f32.s32 %v5029
      %v5036 = vshll.u32 %v5035, 16
      %v5037 = vadd.s32 %v5036, %v5034
      %vm5038 = vcmp.eq.s32.totalorder %v63, %v5037
      %v5039 = vsel %vm5038, 1, 0
      %v5040 = vcvt.s32.f32 %v5039
      %v5041 = vld [vmem:[%s11] sm:$0xff]
      %v5042 = vld [vmem:[%s11 + $0x8] sm:$0xff]
      %v5043 = vld [vmem:[%s11 + $0x10] sm:$0xff]
      %v5044 = vld [vmem:[%s11 + $0x18] sm:$0xff]
      %v5045 = vld [vmem:[%s11 + $0x20] sm:$0xff]
      %v5046 = vld [vmem:[%s11 + $0x28] sm:$0xff]
      %v5047 = vld [vmem:[%s11 + $0x30] sm:$0xff]
      %v5048 = vld [vmem:[%s11 + $0x38] sm:$0xff]
      %v5049 = vld [vmem:[%s11 + $0x40] sm:$0xff]
      %v5050 = vld [vmem:[%s11 + $0x48] sm:$0xff]
      %v5051 = vld [vmem:[%s11 + $0x50] sm:$0xff]
      %v5052 = vld [vmem:[%s11 + $0x58] sm:$0xff]
      %v5053 = vld [vmem:[%s11 + $0x60] sm:$0xff]
      %v5054 = vld [vmem:[%s11 + $0x68] sm:$0xff]
      %v5055 = vld [vmem:[%s11 + $0x70] sm:$0xff]
      %v5056 = vld [vmem:[%s11 + $0x78] sm:$0xff]
      %5057 = vmatprep.subr.mxu0 0.0
      %5058 = vmatpush1.msra.mxu0 %v5041
      %5059 = vmatprep.subr.mxu0 0.0
      %5060 = vmatpush1.msra.mxu0 %v5042
      %5061 = vmatprep.subr.mxu0 0.0
      %5062 = vmatpush1.msra.mxu0 %v5043
      %5063 = vmatprep.subr.mxu0 0.0
      %5064 = vmatpush1.msra.mxu0 %v5044
      %5065 = vmatprep.subr.mxu0 0.0
      %5066 = vmatpush1.msra.mxu0 %v5045
      %5067 = vmatprep.subr.mxu0 0.0
      %5068 = vmatpush1.msra.mxu0 %v5046
      %5069 = vmatprep.subr.mxu0 0.0
      %5070 = vmatpush1.msra.mxu0 %v5047
      %5071 = vmatprep.subr.mxu0 0.0
      %5072 = vmatpush1.msra.mxu0 %v5048
      %5073 = vmatprep.subr.mxu0 0.0
      %5074 = vmatpush1.msra.mxu0 %v5049
      %5075 = vmatprep.subr.mxu0 0.0
      %5076 = vmatpush1.msra.mxu0 %v5050
      %5077 = vmatprep.subr.mxu0 0.0
      %5078 = vmatpush1.msra.mxu0 %v5051
      %5079 = vmatprep.subr.mxu0 0.0
      %5080 = vmatpush1.msra.mxu0 %v5052
      %5081 = vmatprep.subr.mxu0 0.0
      %5082 = vmatpush1.msra.mxu0 %v5053
      %5083 = vmatprep.subr.mxu0 0.0
      %5084 = vmatpush1.msra.mxu0 %v5054
      %5085 = vmatprep.subr.mxu0 0.0
      %5086 = vmatpush1.msra.mxu0 %v5055
      %5087 = vmatprep.subr.mxu0 0.0
      %5088 = vmatpush1.msra.mxu0 %v5056
      %5089 = vmatprep.subr.mxu0 0.0
      %5090 = vmatpush1.msra.mxu0 0.0
      %5091 = vmatprep.subr.mxu0 0.0
      %5092 = vmatpush1.msra.mxu0 0.0
      %5093 = vmatprep.subr.mxu0 0.0
      %5094 = vmatpush1.msra.mxu0 0.0
      %5095 = vmatprep.subr.mxu0 0.0
      %5096 = vmatpush1.msra.mxu0 0.0
      %5097 = vmatprep.subr.mxu0 0.0
      %5098 = vmatpush1.msra.mxu0 0.0
      %5099 = vmatprep.subr.mxu0 0.0
      %5100 = vmatpush1.msra.mxu0 0.0
      %5101 = vmatprep.subr.mxu0 0.0
      %5102 = vmatpush1.msra.mxu0 0.0
      %5103 = vmatprep.subr.mxu0 0.0
      %5104 = vmatpush1.msra.mxu0 0.0
      %5105 = vmatprep.subr.mxu0 0.0
      %5106 = vmatpush1.msra.mxu0 0.0
      %5107 = vmatprep.subr.mxu0 0.0
      %5108 = vmatpush1.msra.mxu0 0.0
      %5109 = vmatprep.subr.mxu0 0.0
      %5110 = vmatpush1.msra.mxu0 0.0
      %5111 = vmatprep.subr.mxu0 0.0
      %5112 = vmatpush1.msra.mxu0 0.0
      %5113 = vmatprep.subr.mxu0 0.0
      %5114 = vmatpush1.msra.mxu0 0.0
      %5115 = vmatprep.subr.mxu0 0.0
      %5116 = vmatpush1.msra.mxu0 0.0
      %5117 = vmatprep.subr.mxu0 0.0
      %5118 = vmatpush1.msra.mxu0 0.0
      %5119 = vmatprep.subr.mxu0 0.0
      %5120 = vmatpush1.msra.mxu0 0.0
      %5121 = vmatprep.mubr.f32.mxu0 0.0
      %5122 = vmatmul.mubr.f32.gmra.mrb[0].mxu0 %v5040
      %v5123 = vpop.f32.mrb[0].mxu0
      %v5124 = vadd.f32 0.0, %v5123
      %v5125 = vpop.f32.mrb[0].mxu0
      %5126 = vdwg.mxu0
      %5127 = vst [vmem:[#allocation2] sm:$0xff] %v5124
    $region57: #{seq2seq_forward.1} parent=1 // pred_fallthru
      _
    %s5128 = sld [smem:[#allocation4 + $0x1]]
    %p5129 = scmp.ne.s32.totalorder %s5128, 0
    %v5130 = vld [vmem:[%s2 + $0x2] sm:$0x1]
    %v5131 = vld [vmem:[%s2 + $0xa] sm:$0x1]
    %v5132 = vld [vmem:[%s2 + $0x12] sm:$0x1]
    %v5133 = vld [vmem:[%s2 + $0x1a] sm:$0x1]
    %v5134 = vld [vmem:[%s2 + $0x22] sm:$0x1]
    %v5135 = vld [vmem:[%s2 + $0x2a] sm:$0x1]
    %v5136 = vld [vmem:[%s2 + $0x32] sm:$0x1]
    %v5137 = vld [vmem:[%s2 + $0x3a] sm:$0x1]
    %v5138 = vld [vmem:[#allocation2] sm:$0xff]
    %s5139 = scalar_select %p5129, 1, 0
    %v5140 = vstv %s5139
    %vm5141 = vcmp.eq.s32.totalorder %v5140, 1
    %v5143 = vrot.slane %v5138, 1
    %v5144 = vrot.slane %v5138, 2
    %v5145 = vrot.slane %v5138, 3
    %v5146 = vrot.slane %v5138, 4
    %v5147 = vrot.slane %v5138, 5
    %v5148 = vrot.slane %v5138, 6
    %v5149 = vrot.slane %v5138, 7
    %v5158 = vsel %vm5141, %v5130, %v5138
    %v5159 = vsel %vm5141, %v5131, %v5143
    %v5160 = vsel %vm5141, %v5132, %v5144
    %v5161 = vsel %vm5141, %v5133, %v5145
    %v5162 = vsel %vm5141, %v5134, %v5146
    %v5163 = vsel %vm5141, %v5135, %v5147
    %v5164 = vsel %vm5141, %v5136, %v5148
    %v5165 = vsel %vm5141, %v5137, %v5149
    %v5166 = vld [vmem:[%s6] sm:$0xff]
    %v5167 = vld [vmem:[%s6 + $0x8] sm:$0xff]
    %v5168 = vld [vmem:[%s6 + $0x10] sm:$0xff]
    %v5169 = vld [vmem:[%s6 + $0x18] sm:$0xff]
    %v5170 = vld [vmem:[%s6 + $0x20] sm:$0xff]
    %v5171 = vld [vmem:[%s6 + $0x28] sm:$0xff]
    %v5172 = vld [vmem:[%s6 + $0x30] sm:$0xff]
    %v5173 = vld [vmem:[%s6 + $0x38] sm:$0xff]
    %v5174 = vld [vmem:[%s6 + $0x40] sm:$0xff]
    %v5175 = vld [vmem:[%s6 + $0x48] sm:$0xff]
    %v5176 = vld [vmem:[%s6 + $0x50] sm:$0xff]
    %v5177 = vld [vmem:[%s6 + $0x58] sm:$0xff]
    %v5178 = vld [vmem:[%s6 + $0x60] sm:$0xff]
    %v5179 = vld [vmem:[%s6 + $0x68] sm:$0xff]
    %v5180 = vld [vmem:[%s6 + $0x70] sm:$0xff]
    %v5181 = vld [vmem:[%s6 + $0x78] sm:$0xff]
    %v5182 = vld [vmem:[%s6 + $0x80] sm:$0xff]
    %v5183 = vld [vmem:[%s6 + $0x88] sm:$0xff]
    %v5184 = vld [vmem:[%s6 + $0x90] sm:$0xff]
    %v5185 = vld [vmem:[%s6 + $0x98] sm:$0xff]
    %v5186 = vld [vmem:[%s6 + $0xa0] sm:$0xff]
    %v5187 = vld [vmem:[%s6 + $0xa8] sm:$0xff]
    %v5188 = vld [vmem:[%s6 + $0xb0] sm:$0xff]
    %v5189 = vld [vmem:[%s6 + $0xb8] sm:$0xff]
    %v5190 = vld [vmem:[%s6 + $0xc0] sm:$0xff]
    %v5191 = vld [vmem:[%s6 + $0xc8] sm:$0xff]
    %v5192 = vld [vmem:[%s6 + $0xd0] sm:$0xff]
    %v5193 = vld [vmem:[%s6 + $0xd8] sm:$0xff]
    %v5194 = vld [vmem:[%s6 + $0xe0] sm:$0xff]
    %v5195 = vld [vmem:[%s6 + $0xe8] sm:$0xff]
    %v5196 = vld [vmem:[%s6 + $0xf0] sm:$0xff]
    %v5197 = vld [vmem:[%s6 + $0xf8] sm:$0xff]
    %v5198 = vld [vmem:[%s6 + $0x100] sm:$0xff]
    %v5199 = vld [vmem:[%s6 + $0x108] sm:$0xff]
    %v5200 = vld [vmem:[%s6 + $0x110] sm:$0xff]
    %v5201 = vld [vmem:[%s6 + $0x118] sm:$0xff]
    %v5202 = vld [vmem:[%s6 + $0x120] sm:$0xff]
    %v5203 = vld [vmem:[%s6 + $0x128] sm:$0xff]
    %v5204 = vld [vmem:[%s6 + $0x130] sm:$0xff]
    %v5205 = vld [vmem:[%s6 + $0x138] sm:$0xff]
    %v5206 = vld [vmem:[%s6 + $0x140] sm:$0xff]
    %v5207 = vld [vmem:[%s6 + $0x148] sm:$0xff]
    %v5208 = vld [vmem:[%s6 + $0x150] sm:$0xff]
    %v5209 = vld [vmem:[%s6 + $0x158] sm:$0xff]
    %v5210 = vld [vmem:[%s6 + $0x160] sm:$0xff]
    %v5211 = vld [vmem:[%s6 + $0x168] sm:$0xff]
    %v5212 = vld [vmem:[%s6 + $0x170] sm:$0xff]
    %v5213 = vld [vmem:[%s6 + $0x178] sm:$0xff]
    %v5214 = vld [vmem:[%s6 + $0x180] sm:$0xff]
    %v5215 = vld [vmem:[%s6 + $0x188] sm:$0xff]
    %v5216 = vld [vmem:[%s6 + $0x190] sm:$0xff]
    %v5217 = vld [vmem:[%s6 + $0x198] sm:$0xff]
    %v5218 = vld [vmem:[%s6 + $0x1a0] sm:$0xff]
    %v5219 = vld [vmem:[%s6 + $0x1a8] sm:$0xff]
    %v5220 = vld [vmem:[%s6 + $0x1b0] sm:$0xff]
    %v5221 = vld [vmem:[%s6 + $0x1b8] sm:$0xff]
    %v5222 = vld [vmem:[%s6 + $0x1c0] sm:$0xff]
    %v5223 = vld [vmem:[%s6 + $0x1c8] sm:$0xff]
    %v5224 = vld [vmem:[%s6 + $0x1d0] sm:$0xff]
    %v5225 = vld [vmem:[%s6 + $0x1d8] sm:$0xff]
    %v5226 = vld [vmem:[%s6 + $0x1e0] sm:$0xff]
    %v5227 = vld [vmem:[%s6 + $0x1e8] sm:$0xff]
    %v5228 = vld [vmem:[%s6 + $0x1f0] sm:$0xff]
    %v5229 = vld [vmem:[%s6 + $0x1f8] sm:$0xff]
    %v5230 = vld [vmem:[#allocation5] sm:$0xff]
    %v5231 = vld [vmem:[#allocation5 + $0x8] sm:$0xff]
    %v5232 = vld [vmem:[#allocation5 + $0x10] sm:$0xff]
    %v5233 = vld [vmem:[#allocation5 + $0x18] sm:$0xff]
    %v5234 = vld [vmem:[#allocation5 + $0x20] sm:$0xff]
    %v5235 = vld [vmem:[#allocation5 + $0x28] sm:$0xff]
    %v5236 = vld [vmem:[#allocation5 + $0x30] sm:$0xff]
    %v5237 = vld [vmem:[#allocation5 + $0x38] sm:$0xff]
    %v5238 = vld [vmem:[#allocation5 + $0x40] sm:$0xff]
    %v5239 = vld [vmem:[#allocation5 + $0x48] sm:$0xff]
    %v5240 = vld [vmem:[#allocation5 + $0x50] sm:$0xff]
    %v5241 = vld [vmem:[#allocation5 + $0x58] sm:$0xff]
    %v5242 = vld [vmem:[#allocation5 + $0x60] sm:$0xff]
    %v5243 = vld [vmem:[#allocation5 + $0x68] sm:$0xff]
    %v5244 = vld [vmem:[#allocation5 + $0x70] sm:$0xff]
    %v5245 = vld [vmem:[#allocation5 + $0x78] sm:$0xff]
    %v5246 = vld [vmem:[#allocation5 + $0x80] sm:$0xff]
    %v5247 = vld [vmem:[#allocation5 + $0x88] sm:$0xff]
    %v5248 = vld [vmem:[#allocation5 + $0x90] sm:$0xff]
    %v5249 = vld [vmem:[#allocation5 + $0x98] sm:$0xff]
    %v5250 = vld [vmem:[#allocation5 + $0xa0] sm:$0xff]
    %v5251 = vld [vmem:[#allocation5 + $0xa8] sm:$0xff]
    %v5252 = vld [vmem:[#allocation5 + $0xb0] sm:$0xff]
    %v5253 = vld [vmem:[#allocation5 + $0xb8] sm:$0xff]
    %v5254 = vld [vmem:[#allocation5 + $0xc0] sm:$0xff]
    %v5255 = vld [vmem:[#allocation5 + $0xc8] sm:$0xff]
    %v5256 = vld [vmem:[#allocation5 + $0xd0] sm:$0xff]
    %v5257 = vld [vmem:[#allocation5 + $0xd8] sm:$0xff]
    %v5258 = vld [vmem:[#allocation5 + $0xe0] sm:$0xff]
    %v5259 = vld [vmem:[#allocation5 + $0xe8] sm:$0xff]
    %v5260 = vld [vmem:[#allocation5 + $0xf0] sm:$0xff]
    %v5261 = vld [vmem:[#allocation5 + $0xf8] sm:$0xff]
    %v5262 = vld [vmem:[#allocation5 + $0x100] sm:$0xff]
    %v5263 = vld [vmem:[#allocation5 + $0x108] sm:$0xff]
    %v5264 = vld [vmem:[#allocation5 + $0x110] sm:$0xff]
    %v5265 = vld [vmem:[#allocation5 + $0x118] sm:$0xff]
    %v5266 = vld [vmem:[#allocation5 + $0x120] sm:$0xff]
    %v5267 = vld [vmem:[#allocation5 + $0x128] sm:$0xff]
    %v5268 = vld [vmem:[#allocation5 + $0x130] sm:$0xff]
    %v5269 = vld [vmem:[#allocation5 + $0x138] sm:$0xff]
    %v5270 = vld [vmem:[#allocation5 + $0x140] sm:$0xff]
    %v5271 = vld [vmem:[#allocation5 + $0x148] sm:$0xff]
    %v5272 = vld [vmem:[#allocation5 + $0x150] sm:$0xff]
    %v5273 = vld [vmem:[#allocation5 + $0x158] sm:$0xff]
    %v5274 = vld [vmem:[#allocation5 + $0x160] sm:$0xff]
    %v5275 = vld [vmem:[#allocation5 + $0x168] sm:$0xff]
    %v5276 = vld [vmem:[#allocation5 + $0x170] sm:$0xff]
    %v5277 = vld [vmem:[#allocation5 + $0x178] sm:$0xff]
    %v5278 = vld [vmem:[#allocation5 + $0x180] sm:$0xff]
    %v5279 = vld [vmem:[#allocation5 + $0x188] sm:$0xff]
    %v5280 = vld [vmem:[#allocation5 + $0x190] sm:$0xff]
    %v5281 = vld [vmem:[#allocation5 + $0x198] sm:$0xff]
    %v5282 = vld [vmem:[#allocation5 + $0x1a0] sm:$0xff]
    %v5283 = vld [vmem:[#allocation5 + $0x1a8] sm:$0xff]
    %v5284 = vld [vmem:[#allocation5 + $0x1b0] sm:$0xff]
    %v5285 = vld [vmem:[#allocation5 + $0x1b8] sm:$0xff]
    %v5286 = vld [vmem:[#allocation5 + $0x1c0] sm:$0xff]
    %v5287 = vld [vmem:[#allocation5 + $0x1c8] sm:$0xff]
    %v5288 = vld [vmem:[#allocation5 + $0x1d0] sm:$0xff]
    %v5289 = vld [vmem:[#allocation5 + $0x1d8] sm:$0xff]
    %v5290 = vld [vmem:[#allocation5 + $0x1e0] sm:$0xff]
    %v5291 = vld [vmem:[#allocation5 + $0x1e8] sm:$0xff]
    %v5292 = vld [vmem:[#allocation5 + $0x1f0] sm:$0xff]
    %v5293 = vld [vmem:[#allocation5 + $0x1f8] sm:$0xff]
    %5294 = vmatprep.subr.mxu0 %v5231
    %5295 = vmatpush1.msra.mxu0 %v5230
    %5296 = vmatprep.subr.mxu0 %v5235
    %5297 = vmatpush1.msra.mxu0 %v5234
    %5298 = vmatprep.subr.mxu0 %v5239
    %5299 = vmatpush1.msra.mxu0 %v5238
    %5300 = vmatprep.subr.mxu0 %v5243
    %5301 = vmatpush1.msra.mxu0 %v5242
    %5302 = vmatprep.subr.mxu0 %v5247
    %5303 = vmatpush1.msra.mxu0 %v5246
    %5304 = vmatprep.subr.mxu0 %v5251
    %5305 = vmatpush1.msra.mxu0 %v5250
    %5306 = vmatprep.subr.mxu0 %v5255
    %5307 = vmatpush1.msra.mxu0 %v5254
    %5308 = vmatprep.subr.mxu0 %v5259
    %5309 = vmatpush1.msra.mxu0 %v5258
    %5310 = vmatprep.subr.mxu0 %v5263
    %5311 = vmatpush1.msra.mxu0 %v5262
    %5312 = vmatprep.subr.mxu0 %v5267
    %5313 = vmatpush1.msra.mxu0 %v5266
    %5314 = vmatprep.subr.mxu0 %v5271
    %5315 = vmatpush1.msra.mxu0 %v5270
    %5316 = vmatprep.subr.mxu0 %v5275
    %5317 = vmatpush1.msra.mxu0 %v5274
    %5318 = vmatprep.subr.mxu0 %v5279
    %5319 = vmatpush1.msra.mxu0 %v5278
    %5320 = vmatprep.subr.mxu0 %v5283
    %5321 = vmatpush1.msra.mxu0 %v5282
    %5322 = vmatprep.subr.mxu0 %v5287
    %5323 = vmatpush1.msra.mxu0 %v5286
    %5324 = vmatprep.subr.mxu0 %v5291
    %5325 = vmatpush1.msra.mxu0 %v5290
    %5326 = vmatprep.subr.mxu0 0.0
    %5327 = vmatpush1.msra.mxu0 0.0
    %5328 = vmatprep.subr.mxu0 0.0
    %5329 = vmatpush1.msra.mxu0 0.0
    %5330 = vmatprep.subr.mxu0 0.0
    %5331 = vmatpush1.msra.mxu0 0.0
    %5332 = vmatprep.subr.mxu0 0.0
    %5333 = vmatpush1.msra.mxu0 0.0
    %5334 = vmatprep.subr.mxu0 0.0
    %5335 = vmatpush1.msra.mxu0 0.0
    %5336 = vmatprep.subr.mxu0 0.0
    %5337 = vmatpush1.msra.mxu0 0.0
    %5338 = vmatprep.subr.mxu0 0.0
    %5339 = vmatpush1.msra.mxu0 0.0
    %5340 = vmatprep.subr.mxu0 0.0
    %5341 = vmatpush1.msra.mxu0 0.0
    %5342 = vmatprep.subr.mxu0 0.0
    %5343 = vmatpush1.msra.mxu0 0.0
    %5344 = vmatprep.subr.mxu0 0.0
    %5345 = vmatpush1.msra.mxu0 0.0
    %5346 = vmatprep.subr.mxu0 0.0
    %5347 = vmatpush1.msra.mxu0 0.0
    %5348 = vmatprep.subr.mxu0 0.0
    %5349 = vmatpush1.msra.mxu0 0.0
    %5350 = vmatprep.subr.mxu0 0.0
    %5351 = vmatpush1.msra.mxu0 0.0
    %5352 = vmatprep.subr.mxu0 0.0
    %5353 = vmatpush1.msra.mxu0 0.0
    %5354 = vmatprep.subr.mxu0 0.0
    %5355 = vmatpush1.msra.mxu0 0.0
    %5356 = vmatprep.subr.mxu0 0.0
    %5357 = vmatpush1.msra.mxu0 0.0
    %5358 = vmatprep.mubr.f32.mxu0 0.0
    %5359 = vmatmul.mubr.f32.gmra.mrb[0].mxu0 %v4862
    %v5360 = vpop.f32.mrb[0].mxu0
    %v5361 = vadd.f32 0.0, %v5360
    %v5362 = vpop.f32.mrb[0].mxu0
    %v5363 = vadd.f32 0.0, %v5362
    %5364 = vdwg.mxu0
    %5365 = vmatprep.subr.mxu0 %v5233
    %5366 = vmatpush1.msra.mxu0 %v5232
    %5367 = vmatprep.subr.mxu0 %v5237
    %5368 = vmatpush1.msra.mxu0 %v5236
    %5369 = vmatprep.subr.mxu0 %v5241
    %5370 = vmatpush1.msra.mxu0 %v5240
    %5371 = vmatprep.subr.mxu0 %v5245
    %5372 = vmatpush1.msra.mxu0 %v5244
    %5373 = vmatprep.subr.mxu0 %v5249
    %5374 = vmatpush1.msra.mxu0 %v5248
    %5375 = vmatprep.subr.mxu0 %v5253
    %5376 = vmatpush1.msra.mxu0 %v5252
    %5377 = vmatprep.subr.mxu0 %v5257
    %5378 = vmatpush1.msra.mxu0 %v5256
    %5379 = vmatprep.subr.mxu0 %v5261
    %5380 = vmatpush1.msra.mxu0 %v5260
    %5381 = vmatprep.subr.mxu0 %v5265
    %5382 = vmatpush1.msra.mxu0 %v5264
    %5383 = vmatprep.subr.mxu0 %v5269
    %5384 = vmatpush1.msra.mxu0 %v5268
    %5385 = vmatprep.subr.mxu0 %v5273
    %5386 = vmatpush1.msra.mxu0 %v5272
    %5387 = vmatprep.subr.mxu0 %v5277
    %5388 = vmatpush1.msra.mxu0 %v5276
    %5389 = vmatprep.subr.mxu0 %v5281
    %5390 = vmatpush1.msra.mxu0 %v5280
    %5391 = vmatprep.subr.mxu0 %v5285
    %5392 = vmatpush1.msra.mxu0 %v5284
    %5393 = vmatprep.subr.mxu0 %v5289
    %5394 = vmatpush1.msra.mxu0 %v5288
    %5395 = vmatprep.subr.mxu0 %v5293
    %5396 = vmatpush1.msra.mxu0 %v5292
    %5397 = vmatprep.subr.mxu0 0.0
    %5398 = vmatpush1.msra.mxu0 0.0
    %5399 = vmatprep.subr.mxu0 0.0
    %5400 = vmatpush1.msra.mxu0 0.0
    %5401 = vmatprep.subr.mxu0 0.0
    %5402 = vmatpush1.msra.mxu0 0.0
    %5403 = vmatprep.subr.mxu0 0.0
    %5404 = vmatpush1.msra.mxu0 0.0
    %5405 = vmatprep.subr.mxu0 0.0
    %5406 = vmatpush1.msra.mxu0 0.0
    %5407 = vmatprep.subr.mxu0 0.0
    %5408 = vmatpush1.msra.mxu0 0.0
    %5409 = vmatprep.subr.mxu0 0.0
    %5410 = vmatpush1.msra.mxu0 0.0
    %5411 = vmatprep.subr.mxu0 0.0
    %5412 = vmatpush1.msra.mxu0 0.0
    %5413 = vmatprep.subr.mxu0 0.0
    %5414 = vmatpush1.msra.mxu0 0.0
    %5415 = vmatprep.subr.mxu0 0.0
    %5416 = vmatpush1.msra.mxu0 0.0
    %5417 = vmatprep.subr.mxu0 0.0
    %5418 = vmatpush1.msra.mxu0 0.0
    %5419 = vmatprep.subr.mxu0 0.0
    %5420 = vmatpush1.msra.mxu0 0.0
    %5421 = vmatprep.subr.mxu0 0.0
    %5422 = vmatpush1.msra.mxu0 0.0
    %5423 = vmatprep.subr.mxu0 0.0
    %5424 = vmatpush1.msra.mxu0 0.0
    %5425 = vmatprep.subr.mxu0 0.0
    %5426 = vmatpush1.msra.mxu0 0.0
    %5427 = vmatprep.subr.mxu0 0.0
    %5428 = vmatpush1.msra.mxu0 0.0
    %5429 = vmatprep.mubr.f32.mxu0 0.0
    %5430 = vmatmul.mubr.f32.gmra.mrb[0].mxu0 %v4862
    %v5431 = vpop.f32.mrb[0].mxu0
    %v5432 = vadd.f32 0.0, %v5431
    %v5433 = vpop.f32.mrb[0].mxu0
    %v5434 = vadd.f32 0.0, %v5433
    %5435 = vdwg.mxu0
    %v5444 = vrot.slane %v5159, 7
    %v5445 = vsel %vm351, %v5444, %v5158
    %v5446 = vrot.slane %v5160, 6
    %v5447 = vsel %vm354, %v5446, %v5445
    %v5448 = vrot.slane %v5161, 5
    %v5449 = vsel %vm357, %v5448, %v5447
    %v5450 = vrot.slane %v5162, 4
    %v5451 = vsel %vm360, %v5450, %v5449
    %v5452 = vrot.slane %v5163, 3
    %v5453 = vsel %vm363, %v5452, %v5451
    %v5454 = vrot.slane %v5164, 2
    %v5455 = vsel %vm366, %v5454, %v5453
    %v5456 = vrot.slane %v5165, 1
    %v5457 = vsel %vm369, %v5456, %v5455
    %5459 = vmatprep.subr.mxu0 %v5167
    %5460 = vmatpush1.msra.mxu0 %v5166
    %5461 = vmatprep.subr.mxu0 %v5171
    %5462 = vmatpush1.msra.mxu0 %v5170
    %5463 = vmatprep.subr.mxu0 %v5175
    %5464 = vmatpush1.msra.mxu0 %v5174
    %5465 = vmatprep.subr.mxu0 %v5179
    %5466 = vmatpush1.msra.mxu0 %v5178
    %5467 = vmatprep.subr.mxu0 %v5183
    %5468 = vmatpush1.msra.mxu0 %v5182
    %5469 = vmatprep.subr.mxu0 %v5187
    %5470 = vmatpush1.msra.mxu0 %v5186
    %5471 = vmatprep.subr.mxu0 %v5191
    %5472 = vmatpush1.msra.mxu0 %v5190
    %5473 = vmatprep.subr.mxu0 %v5195
    %5474 = vmatpush1.msra.mxu0 %v5194
    %5475 = vmatprep.subr.mxu0 %v5199
    %5476 = vmatpush1.msra.mxu0 %v5198
    %5477 = vmatprep.subr.mxu0 %v5203
    %5478 = vmatpush1.msra.mxu0 %v5202
    %5479 = vmatprep.subr.mxu0 %v5207
    %5480 = vmatpush1.msra.mxu0 %v5206
    %5481 = vmatprep.subr.mxu0 %v5211
    %5482 = vmatpush1.msra.mxu0 %v5210
    %5483 = vmatprep.subr.mxu0 %v5215
    %5484 = vmatpush1.msra.mxu0 %v5214
    %5485 = vmatprep.subr.mxu0 %v5219
    %5486 = vmatpush1.msra.mxu0 %v5218
    %5487 = vmatprep.subr.mxu0 %v5223
    %5488 = vmatpush1.msra.mxu0 %v5222
    %5489 = vmatprep.subr.mxu0 %v5227
    %5490 = vmatpush1.msra.mxu0 %v5226
    %5491 = vmatprep.subr.mxu0 0.0
    %5492 = vmatpush1.msra.mxu0 0.0
    %5493 = vmatprep.subr.mxu0 0.0
    %5494 = vmatpush1.msra.mxu0 0.0
    %5495 = vmatprep.subr.mxu0 0.0
    %5496 = vmatpush1.msra.mxu0 0.0
    %5497 = vmatprep.subr.mxu0 0.0
    %5498 = vmatpush1.msra.mxu0 0.0
    %5499 = vmatprep.subr.mxu0 0.0
    %5500 = vmatpush1.msra.mxu0 0.0
    %5501 = vmatprep.subr.mxu0 0.0
    %5502 = vmatpush1.msra.mxu0 0.0
    %5503 = vmatprep.subr.mxu0 0.0
    %5504 = vmatpush1.msra.mxu0 0.0
    %5505 = vmatprep.subr.mxu0 0.0
    %5506 = vmatpush1.msra.mxu0 0.0
    %5507 = vmatprep.subr.mxu0 0.0
    %5508 = vmatpush1.msra.mxu0 0.0
    %5509 = vmatprep.subr.mxu0 0.0
    %5510 = vmatpush1.msra.mxu0 0.0
    %5511 = vmatprep.subr.mxu0 0.0
    %5512 = vmatpush1.msra.mxu0 0.0
    %5513 = vmatprep.subr.mxu0 0.0
    %5514 = vmatpush1.msra.mxu0 0.0
    %5515 = vmatprep.subr.mxu0 0.0
    %5516 = vmatpush1.msra.mxu0 0.0
    %5517 = vmatprep.subr.mxu0 0.0
    %5518 = vmatpush1.msra.mxu0 0.0
    %5519 = vmatprep.subr.mxu0 0.0
    %5520 = vmatpush1.msra.mxu0 0.0
    %5521 = vmatprep.subr.mxu0 0.0
    %5522 = vmatpush1.msra.mxu0 0.0
    %5523 = vmatprep.mubr.f32.mxu0 0.0
    %5524 = vmatmul.mubr.f32.gmra.mrb[0].mxu0 %v5457
    %v5525 = vpop.f32.mrb[0].mxu0
    %v5526 = vadd.f32 %v5361, %v5525
    %v5527 = vpop.f32.mrb[0].mxu0
    %v5528 = vadd.f32 %v5363, %v5527
    %5529 = vdwg.mxu0
    %5530 = vmatprep.subr.mxu0 %v5169
    %5531 = vmatpush1.msra.mxu0 %v5168
    %5532 = vmatprep.subr.mxu0 %v5173
    %5533 = vmatpush1.msra.mxu0 %v5172
    %5534 = vmatprep.subr.mxu0 %v5177
    %5535 = vmatpush1.msra.mxu0 %v5176
    %5536 = vmatprep.subr.mxu0 %v5181
    %5537 = vmatpush1.msra.mxu0 %v5180
    %5538 = vmatprep.subr.mxu0 %v5185
    %5539 = vmatpush1.msra.mxu0 %v5184
    %5540 = vmatprep.subr.mxu0 %v5189
    %5541 = vmatpush1.msra.mxu0 %v5188
    %5542 = vmatprep.subr.mxu0 %v5193
    %5543 = vmatpush1.msra.mxu0 %v5192
    %5544 = vmatprep.subr.mxu0 %v5197
    %5545 = vmatpush1.msra.mxu0 %v5196
    %5546 = vmatprep.subr.mxu0 %v5201
    %5547 = vmatpush1.msra.mxu0 %v5200
    %5548 = vmatprep.subr.mxu0 %v5205
    %5549 = vmatpush1.msra.mxu0 %v5204
    %5550 = vmatprep.subr.mxu0 %v5209
    %5551 = vmatpush1.msra.mxu0 %v5208
    %5552 = vmatprep.subr.mxu0 %v5213
    %5553 = vmatpush1.msra.mxu0 %v5212
    %5554 = vmatprep.subr.mxu0 %v5217
    %5555 = vmatpush1.msra.mxu0 %v5216
    %5556 = vmatprep.subr.mxu0 %v5221
    %5557 = vmatpush1.msra.mxu0 %v5220
    %5558 = vmatprep.subr.mxu0 %v5225
    %5559 = vmatpush1.msra.mxu0 %v5224
    %5560 = vmatprep.subr.mxu0 %v5229
    %5561 = vmatpush1.msra.mxu0 %v5228
    %5562 = vmatprep.subr.mxu0 0.0
    %5563 = vmatpush1.msra.mxu0 0.0
    %5564 = vmatprep.subr.mxu0 0.0
    %5565 = vmatpush1.msra.mxu0 0.0
    %5566 = vmatprep.subr.mxu0 0.0
    %5567 = vmatpush1.msra.mxu0 0.0
    %5568 = vmatprep.subr.mxu0 0.0
    %5569 = vmatpush1.msra.mxu0 0.0
    %5570 = vmatprep.subr.mxu0 0.0
    %5571 = vmatpush1.msra.mxu0 0.0
    %5572 = vmatprep.subr.mxu0 0.0
    %5573 = vmatpush1.msra.mxu0 0.0
    %5574 = vmatprep.subr.mxu0 0.0
    %5575 = vmatpush1.msra.mxu0 0.0
    %5576 = vmatprep.subr.mxu0 0.0
    %5577 = vmatpush1.msra.mxu0 0.0
    %5578 = vmatprep.subr.mxu0 0.0
    %5579 = vmatpush1.msra.mxu0 0.0
    %5580 = vmatprep.subr.mxu0 0.0
    %5581 = vmatpush1.msra.mxu0 0.0
    %5582 = vmatprep.subr.mxu0 0.0
    %5583 = vmatpush1.msra.mxu0 0.0
    %5584 = vmatprep.subr.mxu0 0.0
    %5585 = vmatpush1.msra.mxu0 0.0
    %5586 = vmatprep.subr.mxu0 0.0
    %5587 = vmatpush1.msra.mxu0 0.0
    %5588 = vmatprep.subr.mxu0 0.0
    %5589 = vmatpush1.msra.mxu0 0.0
    %5590 = vmatprep.subr.mxu0 0.0
    %5591 = vmatpush1.msra.mxu0 0.0
    %5592 = vmatprep.subr.mxu0 0.0
    %5593 = vmatpush1.msra.mxu0 0.0
    %5594 = vmatprep.mubr.f32.mxu0 0.0
    %5595 = vmatmul.mubr.f32.gmra.mrb[0].mxu0 %v5457
    %v5596 = vpop.f32.mrb[0].mxu0
    %v5597 = vadd.f32 %v5432, %v5596
    %v5598 = vpop.f32.mrb[0].mxu0
    %v5599 = vadd.f32 %v5434, %v5598
    %5600 = vdwg.mxu0
    %v5601 = vadd.f32 %v5526, %v4056
    %v5602 = vadd.f32 %v5528, %v4060
    %v5603 = vadd.f32 %v5597, %v4064
    %v5604 = vadd.f32 %v5599, %v4068
    %v5605 = vxor.u32 %v5601, 2147483648
    %v5606 = vmul.f32 %v5605, 1.442695
    %v5607 = vpow.pop %v5606
    %v5608 = vadd.f32 %v5607, 1.0
    %v5609 = vrcp.pop %v5608
    %v5610 = vmul.f32 1.0, %v5609
    %v5611 = vxor.u32 %v5602, 2147483648
    %v5612 = vmul.f32 %v5611, 1.442695
    %v5613 = vpow.pop %v5612
    %v5614 = vadd.f32 %v5613, 1.0
    %v5615 = vrcp.pop %v5614
    %v5616 = vmul.f32 1.0, %v5615
    %v5617 = vmul.f32 %v5610, %v5604
    %v5618 = vadd.f32 %v5603, %v5617
    %v5619 = vtanh.pop %v5618
    %v5620 = vsub.f32 1.0, %v5616
    %v5621 = vmul.f32 %v5620, %v5619
    %v5622 = vmul.f32 %v5616, %v4862
    %v5623 = vadd.f32 %v5621, %v5622
    %v5624 = vld [vmem:[%s9] sm:$0xff]
    %v5625 = vld [vmem:[%s9 + $0x8] sm:$0xff]
    %v5626 = vld [vmem:[%s9 + $0x10] sm:$0xff]
    %v5627 = vld [vmem:[%s9 + $0x18] sm:$0xff]
    %v5628 = vld [vmem:[%s9 + $0x20] sm:$0xff]
    %v5629 = vld [vmem:[%s9 + $0x28] sm:$0xff]
    %v5630 = vld [vmem:[%s9 + $0x30] sm:$0xff]
    %v5631 = vld [vmem:[%s9 + $0x38] sm:$0xff]
    %v5632 = vld [vmem:[%s9 + $0x40] sm:$0xff]
    %v5633 = vld [vmem:[%s9 + $0x48] sm:$0xff]
    %v5634 = vld [vmem:[%s9 + $0x50] sm:$0xff]
    %v5635 = vld [vmem:[%s9 + $0x58] sm:$0xff]
    %v5636 = vld [vmem:[%s9 + $0x60] sm:$0xff]
    %v5637 = vld [vmem:[%s9 + $0x68] sm:$0xff]
    %v5638 = vld [vmem:[%s9 + $0x70] sm:$0xff]
    %v5639 = vld [vmem:[%s9 + $0x78] sm:$0xff]
    %5640 = vmatprep.subr.mxu0 0.0
    %5641 = vmatpush1.msra.mxu0 %v5624
    %5642 = vmatprep.subr.mxu0 0.0
    %5643 = vmatpush1.msra.mxu0 %v5625
    %5644 = vmatprep.subr.mxu0 0.0
    %5645 = vmatpush1.msra.mxu0 %v5626
    %5646 = vmatprep.subr.mxu0 0.0
    %5647 = vmatpush1.msra.mxu0 %v5627
    %5648 = vmatprep.subr.mxu0 0.0
    %5649 = vmatpush1.msra.mxu0 %v5628
    %5650 = vmatprep.subr.mxu0 0.0
    %5651 = vmatpush1.msra.mxu0 %v5629
    %5652 = vmatprep.subr.mxu0 0.0
    %5653 = vmatpush1.msra.mxu0 %v5630
    %5654 = vmatprep.subr.mxu0 0.0
    %5655 = vmatpush1.msra.mxu0 %v5631
    %5656 = vmatprep.subr.mxu0 0.0
    %5657 = vmatpush1.msra.mxu0 %v5632
    %5658 = vmatprep.subr.mxu0 0.0
    %5659 = vmatpush1.msra.mxu0 %v5633
    %5660 = vmatprep.subr.mxu0 0.0
    %5661 = vmatpush1.msra.mxu0 %v5634
    %5662 = vmatprep.subr.mxu0 0.0
    %5663 = vmatpush1.msra.mxu0 %v5635
    %5664 = vmatprep.subr.mxu0 0.0
    %5665 = vmatpush1.msra.mxu0 %v5636
    %5666 = vmatprep.subr.mxu0 0.0
    %5667 = vmatpush1.msra.mxu0 %v5637
    %5668 = vmatprep.subr.mxu0 0.0
    %5669 = vmatpush1.msra.mxu0 %v5638
    %5670 = vmatprep.subr.mxu0 0.0
    %5671 = vmatpush1.msra.mxu0 %v5639
    %5672 = vmatprep.subr.mxu0 0.0
    %5673 = vmatpush1.msra.mxu0 0.0
    %5674 = vmatprep.subr.mxu0 0.0
    %5675 = vmatpush1.msra.mxu0 0.0
    %5676 = vmatprep.subr.mxu0 0.0
    %5677 = vmatpush1.msra.mxu0 0.0
    %5678 = vmatprep.subr.mxu0 0.0
    %5679 = vmatpush1.msra.mxu0 0.0
    %5680 = vmatprep.subr.mxu0 0.0
    %5681 = vmatpush1.msra.mxu0 0.0
    %5682 = vmatprep.subr.mxu0 0.0
    %5683 = vmatpush1.msra.mxu0 0.0
    %5684 = vmatprep.subr.mxu0 0.0
    %5685 = vmatpush1.msra.mxu0 0.0
    %5686 = vmatprep.subr.mxu0 0.0
    %5687 = vmatpush1.msra.mxu0 0.0
    %5688 = vmatprep.subr.mxu0 0.0
    %5689 = vmatpush1.msra.mxu0 0.0
    %5690 = vmatprep.subr.mxu0 0.0
    %5691 = vmatpush1.msra.mxu0 0.0
    %5692 = vmatprep.subr.mxu0 0.0
    %5693 = vmatpush1.msra.mxu0 0.0
    %5694 = vmatprep.subr.mxu0 0.0
    %5695 = vmatpush1.msra.mxu0 0.0
    %5696 = vmatprep.subr.mxu0 0.0
    %5697 = vmatpush1.msra.mxu0 0.0
    %5698 = vmatprep.subr.mxu0 0.0
    %5699 = vmatpush1.msra.mxu0 0.0
    %5700 = vmatprep.subr.mxu0 0.0
    %5701 = vmatpush1.msra.mxu0 0.0
    %5702 = vmatprep.subr.mxu0 0.0
    %5703 = vmatpush1.msra.mxu0 0.0
    %5704 = vmatprep.mubr.f32.mxu0 0.0
    %5705 = vmatmul.mubr.f32.gmra.mrb[0].mxu0 %v5623
    %v5706 = vpop.f32.mrb[0].mxu0
    %v5707 = vadd.f32 %v4116, %v5706
    %v5708 = vpop.f32.mrb[0].mxu0
    %5709 = vdwg.mxu0
    %v5711 = vcombine.high %v5707, %v5707
    %v5713 = vunpack.c.l.s4 1966171168
    %v5714 = vunpack.c.0.s8 %v5713
    %v5715 = vlaneseq
    %v5716 = vshrl.u32 %v5715, 7
    %v5717 = vsub.s32 %v5714, %v5716
    %v5718 = vrot.slane %v5707, %v5717
    %v5720 = vunpack.c.l.s4 1966171168
    %v5721 = vunpack.c.0.s8 %v5720
    %v5722 = vlaneseq
    %v5723 = vshrl.u32 %v5722, 7
    %v5724 = vsub.s32 %v5721, %v5723
    %v5725 = vrot.slane %v5711, %v5724
    %v5726 = vcombine.high %v5718, %v5718
    %v5727 = vcombine.high %v5725, %v5725
    %v5729 = vunpack.c.l.s4 1966171168
    %v5730 = vunpack.c.0.s8 %v5729
    %v5731 = vlaneseq
    %v5732 = vshrl.u32 %v5731, 7
    %v5733 = vsub.s32 %v5730, %v5732
    %v5734 = vrot.slane %v5718, %v5733
    %v5736 = vunpack.c.l.s4 1966171168
    %v5737 = vunpack.c.0.s8 %v5736
    %v5738 = vlaneseq
    %v5739 = vshrl.u32 %v5738, 7
    %v5740 = vsub.s32 %v5737, %v5739
    %v5741 = vrot.slane %v5725, %v5740
    %v5743 = vunpack.c.l.s4 1966171168
    %v5744 = vunpack.c.0.s8 %v5743
    %v5745 = vlaneseq
    %v5746 = vshrl.u32 %v5745, 7
    %v5747 = vsub.s32 %v5744, %v5746
    %v5748 = vrot.slane %v5726, %v5747
    %v5750 = vunpack.c.l.s4 1966171168
    %v5751 = vunpack.c.0.s8 %v5750
    %v5752 = vlaneseq
    %v5753 = vshrl.u32 %v5752, 7
    %v5754 = vsub.s32 %v5751, %v5753
    %v5755 = vrot.slane %v5727, %v5754
    %v5756 = vcombine.high %v5734, %v5734
    %v5757 = vcombine.high %v5741, %v5741
    %v5758 = vcombine.high %v5748, %v5748
    %v5759 = vcombine.high %v5755, %v5755
    %5768 = vst [vmem:[%s12 + $0x3] sm:$0x1] %v5734
    %5769 = vst [vmem:[%s12 + $0xb] sm:$0x1] %v5748
    %5770 = vst [vmem:[%s12 + $0x13] sm:$0x1] %v5756
    %5771 = vst [vmem:[%s12 + $0x1b] sm:$0x1] %v5758
    %5772 = vst [vmem:[%s12 + $0x23] sm:$0x1] %v5741
    %5773 = vst [vmem:[%s12 + $0x2b] sm:$0x1] %v5755
    %5774 = vst [vmem:[%s12 + $0x33] sm:$0x1] %v5757
    %5775 = vst [vmem:[%s12 + $0x3b] sm:$0x1] %v5759
    %s5776 = sld [smem:[#allocation4 + $0x2]]
    %p5777 = scmp.eq.s32.totalorder %s5776, 0
    // Predicated region
    $region58: #{seq2seq_forward.1} parent=1 // pred_check
      %p5778 = pneg %p5777
    $region59: #{seq2seq_forward.1} parent=1 // pred_check_branch
      %5780 = sbr.rel (%p5778) target = $region61
    $region60: #{seq2seq_forward.1} parent=1 // pred_region
      %5781 = vmax.xlane.f32.xlu0 %v5707
      %v5782 = vpop.xlane.xlu0 %5781
      %vm5783 = vcmp.eq.f32.partialorder %v5707, %v5782
      %v5784 = vsel %vm5783, %v63, 128
      %v5785 = vand.u32 %v5784, 65535
      %v5786 = vshra.s32 %v5784, 16
      %v5787 = vcvt.s32.f32 %v5785
      %v5788 = vcvt.s32.f32 %v5786
      %5789 = vmin.xlane.f32.xlu0 %v5788
      %v5790 = vpop.xlane.xlu0 %5789
      %vm5791 = vcmp.eq.f32.partialorder %v5788, %v5790
      %v5792 = vsel %vm5791, %v5787, inf
      %5793 = vmin.xlane.f32.xlu0 %v5792
      %v5794 = vpop.xlane.xlu0 %5793
      %v5795 = vcvt.f32.s32 %v5794
      %v5796 = vcvt.f32.s32 %v5790
      %v5797 = vshll.u32 %v5796, 16
      %v5798 = vadd.s32 %v5797, %v5795
      %vm5799 = vcmp.eq.s32.totalorder %v63, %v5798
      %v5800 = vsel %vm5799, 1, 0
      %v5801 = vcvt.s32.f32 %v5800
      %v5802 = vld [vmem:[%s11] sm:$0xff]
      %v5803 = vld [vmem:[%s11 + $0x8] sm:$0xff]
      %v5804 = vld [vmem:[%s11 + $0x10] sm:$0xff]
      %v5805 = vld [vmem:[%s11 + $0x18] sm:$0xff]
      %v5806 = vld [vmem:[%s11 + $0x20] sm:$0xff]
      %v5807 = vld [vmem:[%s11 + $0x28] sm:$0xff]
      %v5808 = vld [vmem:[%s11 + $0x30] sm:$0xff]
      %v5809 = vld [vmem:[%s11 + $0x38] sm:$0xff]
      %v5810 = vld [vmem:[%s11 + $0x40] sm:$0xff]
      %v5811 = vld [vmem:[%s11 + $0x48] sm:$0xff]
      %v5812 = vld [vmem:[%s11 + $0x50] sm:$0xff]
      %v5813 = vld [vmem:[%s11 + $0x58] sm:$0xff]
      %v5814 = vld [vmem:[%s11 + $0x60] sm:$0xff]
      %v5815 = vld [vmem:[%s11 + $0x68] sm:$0xff]
      %v5816 = vld [vmem:[%s11 + $0x70] sm:$0xff]
      %v5817 = vld [vmem:[%s11 + $0x78] sm:$0xff]
      %5818 = vmatprep.subr.mxu0 0.0
      %5819 = vmatpush1.msra.mxu0 %v5802
      %5820 = vmatprep.subr.mxu0 0.0
      %5821 = vmatpush1.msra.mxu0 %v5803
      %5822 = vmatprep.subr.mxu0 0.0
      %5823 = vmatpush1.msra.mxu0 %v5804
      %5824 = vmatprep.subr.mxu0 0.0
      %5825 = vmatpush1.msra.mxu0 %v5805
      %5826 = vmatprep.subr.mxu0 0.0
      %5827 = vmatpush1.msra.mxu0 %v5806
      %5828 = vmatprep.subr.mxu0 0.0
      %5829 = vmatpush1.msra.mxu0 %v5807
      %5830 = vmatprep.subr.mxu0 0.0
      %5831 = vmatpush1.msra.mxu0 %v5808
      %5832 = vmatprep.subr.mxu0 0.0
      %5833 = vmatpush1.msra.mxu0 %v5809
      %5834 = vmatprep.subr.mxu0 0.0
      %5835 = vmatpush1.msra.mxu0 %v5810
      %5836 = vmatprep.subr.mxu0 0.0
      %5837 = vmatpush1.msra.mxu0 %v5811
      %5838 = vmatprep.subr.mxu0 0.0
      %5839 = vmatpush1.msra.mxu0 %v5812
      %5840 = vmatprep.subr.mxu0 0.0
      %5841 = vmatpush1.msra.mxu0 %v5813
      %5842 = vmatprep.subr.mxu0 0.0
      %5843 = vmatpush1.msra.mxu0 %v5814
      %5844 = vmatprep.subr.mxu0 0.0
      %5845 = vmatpush1.msra.mxu0 %v5815
      %5846 = vmatprep.subr.mxu0 0.0
      %5847 = vmatpush1.msra.mxu0 %v5816
      %5848 = vmatprep.subr.mxu0 0.0
      %5849 = vmatpush1.msra.mxu0 %v5817
      %5850 = vmatprep.subr.mxu0 0.0
      %5851 = vmatpush1.msra.mxu0 0.0
      %5852 = vmatprep.subr.mxu0 0.0
      %5853 = vmatpush1.msra.mxu0 0.0
      %5854 = vmatprep.subr.mxu0 0.0
      %5855 = vmatpush1.msra.mxu0 0.0
      %5856 = vmatprep.subr.mxu0 0.0
      %5857 = vmatpush1.msra.mxu0 0.0
      %5858 = vmatprep.subr.mxu0 0.0
      %5859 = vmatpush1.msra.mxu0 0.0
      %5860 = vmatprep.subr.mxu0 0.0
      %5861 = vmatpush1.msra.mxu0 0.0
      %5862 = vmatprep.subr.mxu0 0.0
      %5863 = vmatpush1.msra.mxu0 0.0
      %5864 = vmatprep.subr.mxu0 0.0
      %5865 = vmatpush1.msra.mxu0 0.0
      %5866 = vmatprep.subr.mxu0 0.0
      %5867 = vmatpush1.msra.mxu0 0.0
      %5868 = vmatprep.subr.mxu0 0.0
      %5869 = vmatpush1.msra.mxu0 0.0
      %5870 = vmatprep.subr.mxu0 0.0
      %5871 = vmatpush1.msra.mxu0 0.0
      %5872 = vmatprep.subr.mxu0 0.0
      %5873 = vmatpush1.msra.mxu0 0.0
      %5874 = vmatprep.subr.mxu0 0.0
      %5875 = vmatpush1.msra.mxu0 0.0
      %5876 = vmatprep.subr.mxu0 0.0
      %5877 = vmatpush1.msra.mxu0 0.0
      %5878 = vmatprep.subr.mxu0 0.0
      %5879 = vmatpush1.msra.mxu0 0.0
      %5880 = vmatprep.subr.mxu0 0.0
      %5881 = vmatpush1.msra.mxu0 0.0
      %5882 = vmatprep.mubr.f32.mxu0 0.0
      %5883 = vmatmul.mubr.f32.gmra.mrb[0].mxu0 %v5801
      %v5884 = vpop.f32.mrb[0].mxu0
      %v5885 = vadd.f32 0.0, %v5884
      %v5886 = vpop.f32.mrb[0].mxu0
      %5887 = vdwg.mxu0
      %5888 = vst [vmem:[#allocation2] sm:$0xff] %v5885
    $region61: #{seq2seq_forward.1} parent=1 // pred_fallthru
      _
    %s5889 = sld [smem:[#allocation4 + $0x2]]
    %p5890 = scmp.ne.s32.totalorder %s5889, 0
    %v5891 = vld [vmem:[%s2 + $0x3] sm:$0x1]
    %v5892 = vld [vmem:[%s2 + $0xb] sm:$0x1]
    %v5893 = vld [vmem:[%s2 + $0x13] sm:$0x1]
    %v5894 = vld [vmem:[%s2 + $0x1b] sm:$0x1]
    %v5895 = vld [vmem:[%s2 + $0x23] sm:$0x1]
    %v5896 = vld [vmem:[%s2 + $0x2b] sm:$0x1]
    %v5897 = vld [vmem:[%s2 + $0x33] sm:$0x1]
    %v5898 = vld [vmem:[%s2 + $0x3b] sm:$0x1]
    %v5899 = vld [vmem:[#allocation2] sm:$0xff]
    %s5900 = scalar_select %p5890, 1, 0
    %v5901 = vstv %s5900
    %vm5902 = vcmp.eq.s32.totalorder %v5901, 1
    %v5904 = vrot.slane %v5899, 1
    %v5905 = vrot.slane %v5899, 2
    %v5906 = vrot.slane %v5899, 3
    %v5907 = vrot.slane %v5899, 4
    %v5908 = vrot.slane %v5899, 5
    %v5909 = vrot.slane %v5899, 6
    %v5910 = vrot.slane %v5899, 7
    %v5919 = vsel %vm5902, %v5891, %v5899
    %v5920 = vsel %vm5902, %v5892, %v5904
    %v5921 = vsel %vm5902, %v5893, %v5905
    %v5922 = vsel %vm5902, %v5894, %v5906
    %v5923 = vsel %vm5902, %v5895, %v5907
    %v5924 = vsel %vm5902, %v5896, %v5908
    %v5925 = vsel %vm5902, %v5897, %v5909
    %v5926 = vsel %vm5902, %v5898, %v5910
    %v5927 = vld [vmem:[%s6] sm:$0xff]
    %v5928 = vld [vmem:[%s6 + $0x8] sm:$0xff]
    %v5929 = vld [vmem:[%s6 + $0x10] sm:$0xff]
    %v5930 = vld [vmem:[%s6 + $0x18] sm:$0xff]
    %v5931 = vld [vmem:[%s6 + $0x20] sm:$0xff]
    %v5932 = vld [vmem:[%s6 + $0x28] sm:$0xff]
    %v5933 = vld [vmem:[%s6 + $0x30] sm:$0xff]
    %v5934 = vld [vmem:[%s6 + $0x38] sm:$0xff]
    %v5935 = vld [vmem:[%s6 + $0x40] sm:$0xff]
    %v5936 = vld [vmem:[%s6 + $0x48] sm:$0xff]
    %v5937 = vld [vmem:[%s6 + $0x50] sm:$0xff]
    %v5938 = vld [vmem:[%s6 + $0x58] sm:$0xff]
    %v5939 = vld [vmem:[%s6 + $0x60] sm:$0xff]
    %v5940 = vld [vmem:[%s6 + $0x68] sm:$0xff]
    %v5941 = vld [vmem:[%s6 + $0x70] sm:$0xff]
    %v5942 = vld [vmem:[%s6 + $0x78] sm:$0xff]
    %v5943 = vld [vmem:[%s6 + $0x80] sm:$0xff]
    %v5944 = vld [vmem:[%s6 + $0x88] sm:$0xff]
    %v5945 = vld [vmem:[%s6 + $0x90] sm:$0xff]
    %v5946 = vld [vmem:[%s6 + $0x98] sm:$0xff]
    %v5947 = vld [vmem:[%s6 + $0xa0] sm:$0xff]
    %v5948 = vld [vmem:[%s6 + $0xa8] sm:$0xff]
    %v5949 = vld [vmem:[%s6 + $0xb0] sm:$0xff]
    %v5950 = vld [vmem:[%s6 + $0xb8] sm:$0xff]
    %v5951 = vld [vmem:[%s6 + $0xc0] sm:$0xff]
    %v5952 = vld [vmem:[%s6 + $0xc8] sm:$0xff]
    %v5953 = vld [vmem:[%s6 + $0xd0] sm:$0xff]
    %v5954 = vld [vmem:[%s6 + $0xd8] sm:$0xff]
    %v5955 = vld [vmem:[%s6 + $0xe0] sm:$0xff]
    %v5956 = vld [vmem:[%s6 + $0xe8] sm:$0xff]
    %v5957 = vld [vmem:[%s6 + $0xf0] sm:$0xff]
    %v5958 = vld [vmem:[%s6 + $0xf8] sm:$0xff]
    %v5959 = vld [vmem:[%s6 + $0x100] sm:$0xff]
    %v5960 = vld [vmem:[%s6 + $0x108] sm:$0xff]
    %v5961 = vld [vmem:[%s6 + $0x110] sm:$0xff]
    %v5962 = vld [vmem:[%s6 + $0x118] sm:$0xff]
    %v5963 = vld [vmem:[%s6 + $0x120] sm:$0xff]
    %v5964 = vld [vmem:[%s6 + $0x128] sm:$0xff]
    %v5965 = vld [vmem:[%s6 + $0x130] sm:$0xff]
    %v5966 = vld [vmem:[%s6 + $0x138] sm:$0xff]
    %v5967 = vld [vmem:[%s6 + $0x140] sm:$0xff]
    %v5968 = vld [vmem:[%s6 + $0x148] sm:$0xff]
    %v5969 = vld [vmem:[%s6 + $0x150] sm:$0xff]
    %v5970 = vld [vmem:[%s6 + $0x158] sm:$0xff]
    %v5971 = vld [vmem:[%s6 + $0x160] sm:$0xff]
    %v5972 = vld [vmem:[%s6 + $0x168] sm:$0xff]
    %v5973 = vld [vmem:[%s6 + $0x170] sm:$0xff]
    %v5974 = vld [vmem:[%s6 + $0x178] sm:$0xff]
    %v5975 = vld [vmem:[%s6 + $0x180] sm:$0xff]
    %v5976 = vld [vmem:[%s6 + $0x188] sm:$0xff]
    %v5977 = vld [vmem:[%s6 + $0x190] sm:$0xff]
    %v5978 = vld [vmem:[%s6 + $0x198] sm:$0xff]
    %v5979 = vld [vmem:[%s6 + $0x1a0] sm:$0xff]
    %v5980 = vld [vmem:[%s6 + $0x1a8] sm:$0xff]
    %v5981 = vld [vmem:[%s6 + $0x1b0] sm:$0xff]
    %v5982 = vld [vmem:[%s6 + $0x1b8] sm:$0xff]
    %v5983 = vld [vmem:[%s6 + $0x1c0] sm:$0xff]
    %v5984 = vld [vmem:[%s6 + $0x1c8] sm:$0xff]
    %v5985 = vld [vmem:[%s6 + $0x1d0] sm:$0xff]
    %v5986 = vld [vmem:[%s6 + $0x1d8] sm:$0xff]
    %v5987 = vld [vmem:[%s6 + $0x1e0] sm:$0xff]
    %v5988 = vld [vmem:[%s6 + $0x1e8] sm:$0xff]
    %v5989 = vld [vmem:[%s6 + $0x1f0] sm:$0xff]
    %v5990 = vld [vmem:[%s6 + $0x1f8] sm:$0xff]
    %v5991 = vld [vmem:[#allocation5] sm:$0xff]
    %v5992 = vld [vmem:[#allocation5 + $0x8] sm:$0xff]
    %v5993 = vld [vmem:[#allocation5 + $0x10] sm:$0xff]
    %v5994 = vld [vmem:[#allocation5 + $0x18] sm:$0xff]
    %v5995 = vld [vmem:[#allocation5 + $0x20] sm:$0xff]
    %v5996 = vld [vmem:[#allocation5 + $0x28] sm:$0xff]
    %v5997 = vld [vmem:[#allocation5 + $0x30] sm:$0xff]
    %v5998 = vld [vmem:[#allocation5 + $0x38] sm:$0xff]
    %v5999 = vld [vmem:[#allocation5 + $0x40] sm:$0xff]
    %v6000 = vld [vmem:[#allocation5 + $0x48] sm:$0xff]
    %v6001 = vld [vmem:[#allocation5 + $0x50] sm:$0xff]
    %v6002 = vld [vmem:[#allocation5 + $0x58] sm:$0xff]
    %v6003 = vld [vmem:[#allocation5 + $0x60] sm:$0xff]
    %v6004 = vld [vmem:[#allocation5 + $0x68] sm:$0xff]
    %v6005 = vld [vmem:[#allocation5 + $0x70] sm:$0xff]
    %v6006 = vld [vmem:[#allocation5 + $0x78] sm:$0xff]
    %v6007 = vld [vmem:[#allocation5 + $0x80] sm:$0xff]
    %v6008 = vld [vmem:[#allocation5 + $0x88] sm:$0xff]
    %v6009 = vld [vmem:[#allocation5 + $0x90] sm:$0xff]
    %v6010 = vld [vmem:[#allocation5 + $0x98] sm:$0xff]
    %v6011 = vld [vmem:[#allocation5 + $0xa0] sm:$0xff]
    %v6012 = vld [vmem:[#allocation5 + $0xa8] sm:$0xff]
    %v6013 = vld [vmem:[#allocation5 + $0xb0] sm:$0xff]
    %v6014 = vld [vmem:[#allocation5 + $0xb8] sm:$0xff]
    %v6015 = vld [vmem:[#allocation5 + $0xc0] sm:$0xff]
    %v6016 = vld [vmem:[#allocation5 + $0xc8] sm:$0xff]
    %v6017 = vld [vmem:[#allocation5 + $0xd0] sm:$0xff]
    %v6018 = vld [vmem:[#allocation5 + $0xd8] sm:$0xff]
    %v6019 = vld [vmem:[#allocation5 + $0xe0] sm:$0xff]
    %v6020 = vld [vmem:[#allocation5 + $0xe8] sm:$0xff]
    %v6021 = vld [vmem:[#allocation5 + $0xf0] sm:$0xff]
    %v6022 = vld [vmem:[#allocation5 + $0xf8] sm:$0xff]
    %v6023 = vld [vmem:[#allocation5 + $0x100] sm:$0xff]
    %v6024 = vld [vmem:[#allocation5 + $0x108] sm:$0xff]
    %v6025 = vld [vmem:[#allocation5 + $0x110] sm:$0xff]
    %v6026 = vld [vmem:[#allocation5 + $0x118] sm:$0xff]
    %v6027 = vld [vmem:[#allocation5 + $0x120] sm:$0xff]
    %v6028 = vld [vmem:[#allocation5 + $0x128] sm:$0xff]
    %v6029 = vld [vmem:[#allocation5 + $0x130] sm:$0xff]
    %v6030 = vld [vmem:[#allocation5 + $0x138] sm:$0xff]
    %v6031 = vld [vmem:[#allocation5 + $0x140] sm:$0xff]
    %v6032 = vld [vmem:[#allocation5 + $0x148] sm:$0xff]
    %v6033 = vld [vmem:[#allocation5 + $0x150] sm:$0xff]
    %v6034 = vld [vmem:[#allocation5 + $0x158] sm:$0xff]
    %v6035 = vld [vmem:[#allocation5 + $0x160] sm:$0xff]
    %v6036 = vld [vmem:[#allocation5 + $0x168] sm:$0xff]
    %v6037 = vld [vmem:[#allocation5 + $0x170] sm:$0xff]
    %v6038 = vld [vmem:[#allocation5 + $0x178] sm:$0xff]
    %v6039 = vld [vmem:[#allocation5 + $0x180] sm:$0xff]
    %v6040 = vld [vmem:[#allocation5 + $0x188] sm:$0xff]
    %v6041 = vld [vmem:[#allocation5 + $0x190] sm:$0xff]
    %v6042 = vld [vmem:[#allocation5 + $0x198] sm:$0xff]
    %v6043 = vld [vmem:[#allocation5 + $0x1a0] sm:$0xff]
    %v6044 = vld [vmem:[#allocation5 + $0x1a8] sm:$0xff]
    %v6045 = vld [vmem:[#allocation5 + $0x1b0] sm:$0xff]
    %v6046 = vld [vmem:[#allocation5 + $0x1b8] sm:$0xff]
    %v6047 = vld [vmem:[#allocation5 + $0x1c0] sm:$0xff]
    %v6048 = vld [vmem:[#allocation5 + $0x1c8] sm:$0xff]
    %v6049 = vld [vmem:[#allocation5 + $0x1d0] sm:$0xff]
    %v6050 = vld [vmem:[#allocation5 + $0x1d8] sm:$0xff]
    %v6051 = vld [vmem:[#allocation5 + $0x1e0] sm:$0xff]
    %v6052 = vld [vmem:[#allocation5 + $0x1e8] sm:$0xff]
    %v6053 = vld [vmem:[#allocation5 + $0x1f0] sm:$0xff]
    %v6054 = vld [vmem:[#allocation5 + $0x1f8] sm:$0xff]
    %6055 = vmatprep.subr.mxu0 %v5992
    %6056 = vmatpush1.msra.mxu0 %v5991
    %6057 = vmatprep.subr.mxu0 %v5996
    %6058 = vmatpush1.msra.mxu0 %v5995
    %6059 = vmatprep.subr.mxu0 %v6000
    %6060 = vmatpush1.msra.mxu0 %v5999
    %6061 = vmatprep.subr.mxu0 %v6004
    %6062 = vmatpush1.msra.mxu0 %v6003
    %6063 = vmatprep.subr.mxu0 %v6008
    %6064 = vmatpush1.msra.mxu0 %v6007
    %6065 = vmatprep.subr.mxu0 %v6012
    %6066 = vmatpush1.msra.mxu0 %v6011
    %6067 = vmatprep.subr.mxu0 %v6016
    %6068 = vmatpush1.msra.mxu0 %v6015
    %6069 = vmatprep.subr.mxu0 %v6020
    %6070 = vmatpush1.msra.mxu0 %v6019
    %6071 = vmatprep.subr.mxu0 %v6024
    %6072 = vmatpush1.msra.mxu0 %v6023
    %6073 = vmatprep.subr.mxu0 %v6028
    %6074 = vmatpush1.msra.mxu0 %v6027
    %6075 = vmatprep.subr.mxu0 %v6032
    %6076 = vmatpush1.msra.mxu0 %v6031
    %6077 = vmatprep.subr.mxu0 %v6036
    %6078 = vmatpush1.msra.mxu0 %v6035
    %6079 = vmatprep.subr.mxu0 %v6040
    %6080 = vmatpush1.msra.mxu0 %v6039
    %6081 = vmatprep.subr.mxu0 %v6044
    %6082 = vmatpush1.msra.mxu0 %v6043
    %6083 = vmatprep.subr.mxu0 %v6048
    %6084 = vmatpush1.msra.mxu0 %v6047
    %6085 = vmatprep.subr.mxu0 %v6052
    %6086 = vmatpush1.msra.mxu0 %v6051
    %6087 = vmatprep.subr.mxu0 0.0
    %6088 = vmatpush1.msra.mxu0 0.0
    %6089 = vmatprep.subr.mxu0 0.0
    %6090 = vmatpush1.msra.mxu0 0.0
    %6091 = vmatprep.subr.mxu0 0.0
    %6092 = vmatpush1.msra.mxu0 0.0
    %6093 = vmatprep.subr.mxu0 0.0
    %6094 = vmatpush1.msra.mxu0 0.0
    %6095 = vmatprep.subr.mxu0 0.0
    %6096 = vmatpush1.msra.mxu0 0.0
    %6097 = vmatprep.subr.mxu0 0.0
    %6098 = vmatpush1.msra.mxu0 0.0
    %6099 = vmatprep.subr.mxu0 0.0
    %6100 = vmatpush1.msra.mxu0 0.0
    %6101 = vmatprep.subr.mxu0 0.0
    %6102 = vmatpush1.msra.mxu0 0.0
    %6103 = vmatprep.subr.mxu0 0.0
    %6104 = vmatpush1.msra.mxu0 0.0
    %6105 = vmatprep.subr.mxu0 0.0
    %6106 = vmatpush1.msra.mxu0 0.0
    %6107 = vmatprep.subr.mxu0 0.0
    %6108 = vmatpush1.msra.mxu0 0.0
    %6109 = vmatprep.subr.mxu0 0.0
    %6110 = vmatpush1.msra.mxu0 0.0
    %6111 = vmatprep.subr.mxu0 0.0
    %6112 = vmatpush1.msra.mxu0 0.0
    %6113 = vmatprep.subr.mxu0 0.0
    %6114 = vmatpush1.msra.mxu0 0.0
    %6115 = vmatprep.subr.mxu0 0.0
    %6116 = vmatpush1.msra.mxu0 0.0
    %6117 = vmatprep.subr.mxu0 0.0
    %6118 = vmatpush1.msra.mxu0 0.0
    %6119 = vmatprep.mubr.f32.mxu0 0.0
    %6120 = vmatmul.mubr.f32.gmra.mrb[0].mxu0 %v5623
    %v6121 = vpop.f32.mrb[0].mxu0
    %v6122 = vadd.f32 0.0, %v6121
    %v6123 = vpop.f32.mrb[0].mxu0
    %v6124 = vadd.f32 0.0, %v6123
    %6125 = vdwg.mxu0
    %6126 = vmatprep.subr.mxu0 %v5994
    %6127 = vmatpush1.msra.mxu0 %v5993
    %6128 = vmatprep.subr.mxu0 %v5998
    %6129 = vmatpush1.msra.mxu0 %v5997
    %6130 = vmatprep.subr.mxu0 %v6002
    %6131 = vmatpush1.msra.mxu0 %v6001
    %6132 = vmatprep.subr.mxu0 %v6006
    %6133 = vmatpush1.msra.mxu0 %v6005
    %6134 = vmatprep.subr.mxu0 %v6010
    %6135 = vmatpush1.msra.mxu0 %v6009
    %6136 = vmatprep.subr.mxu0 %v6014
    %6137 = vmatpush1.msra.mxu0 %v6013
    %6138 = vmatprep.subr.mxu0 %v6018
    %6139 = vmatpush1.msra.mxu0 %v6017
    %6140 = vmatprep.subr.mxu0 %v6022
    %6141 = vmatpush1.msra.mxu0 %v6021
    %6142 = vmatprep.subr.mxu0 %v6026
    %6143 = vmatpush1.msra.mxu0 %v6025
    %6144 = vmatprep.subr.mxu0 %v6030
    %6145 = vmatpush1.msra.mxu0 %v6029
    %6146 = vmatprep.subr.mxu0 %v6034
    %6147 = vmatpush1.msra.mxu0 %v6033
    %6148 = vmatprep.subr.mxu0 %v6038
    %6149 = vmatpush1.msra.mxu0 %v6037
    %6150 = vmatprep.subr.mxu0 %v6042
    %6151 = vmatpush1.msra.mxu0 %v6041
    %6152 = vmatprep.subr.mxu0 %v6046
    %6153 = vmatpush1.msra.mxu0 %v6045
    %6154 = vmatprep.subr.mxu0 %v6050
    %6155 = vmatpush1.msra.mxu0 %v6049
    %6156 = vmatprep.subr.mxu0 %v6054
    %6157 = vmatpush1.msra.mxu0 %v6053
    %6158 = vmatprep.subr.mxu0 0.0
    %6159 = vmatpush1.msra.mxu0 0.0
    %6160 = vmatprep.subr.mxu0 0.0
    %6161 = vmatpush1.msra.mxu0 0.0
    %6162 = vmatprep.subr.mxu0 0.0
    %6163 = vmatpush1.msra.mxu0 0.0
    %6164 = vmatprep.subr.mxu0 0.0
    %6165 = vmatpush1.msra.mxu0 0.0
    %6166 = vmatprep.subr.mxu0 0.0
    %6167 = vmatpush1.msra.mxu0 0.0
    %6168 = vmatprep.subr.mxu0 0.0
    %6169 = vmatpush1.msra.mxu0 0.0
    %6170 = vmatprep.subr.mxu0 0.0
    %6171 = vmatpush1.msra.mxu0 0.0
    %6172 = vmatprep.subr.mxu0 0.0
    %6173 = vmatpush1.msra.mxu0 0.0
    %6174 = vmatprep.subr.mxu0 0.0
    %6175 = vmatpush1.msra.mxu0 0.0
    %6176 = vmatprep.subr.mxu0 0.0
    %6177 = vmatpush1.msra.mxu0 0.0
    %6178 = vmatprep.subr.mxu0 0.0
    %6179 = vmatpush1.msra.mxu0 0.0
    %6180 = vmatprep.subr.mxu0 0.0
    %6181 = vmatpush1.msra.mxu0 0.0
    %6182 = vmatprep.subr.mxu0 0.0
    %6183 = vmatpush1.msra.mxu0 0.0
    %6184 = vmatprep.subr.mxu0 0.0
    %6185 = vmatpush1.msra.mxu0 0.0
    %6186 = vmatprep.subr.mxu0 0.0
    %6187 = vmatpush1.msra.mxu0 0.0
    %6188 = vmatprep.subr.mxu0 0.0
    %6189 = vmatpush1.msra.mxu0 0.0
    %6190 = vmatprep.mubr.f32.mxu0 0.0
    %6191 = vmatmul.mubr.f32.gmra.mrb[0].mxu0 %v5623
    %v6192 = vpop.f32.mrb[0].mxu0
    %v6193 = vadd.f32 0.0, %v6192
    %v6194 = vpop.f32.mrb[0].mxu0
    %v6195 = vadd.f32 0.0, %v6194
    %6196 = vdwg.mxu0
    %v6205 = vrot.slane %v5920, 7
    %v6206 = vsel %vm351, %v6205, %v5919
    %v6207 = vrot.slane %v5921, 6
    %v6208 = vsel %vm354, %v6207, %v6206
    %v6209 = vrot.slane %v5922, 5
    %v6210 = vsel %vm357, %v6209, %v6208
    %v6211 = vrot.slane %v5923, 4
    %v6212 = vsel %vm360, %v6211, %v6210
    %v6213 = vrot.slane %v5924, 3
    %v6214 = vsel %vm363, %v6213, %v6212
    %v6215 = vrot.slane %v5925, 2
    %v6216 = vsel %vm366, %v6215, %v6214
    %v6217 = vrot.slane %v5926, 1
    %v6218 = vsel %vm369, %v6217, %v6216
    %6220 = vmatprep.subr.mxu0 %v5928
    %6221 = vmatpush1.msra.mxu0 %v5927
    %6222 = vmatprep.subr.mxu0 %v5932
    %6223 = vmatpush1.msra.mxu0 %v5931
    %6224 = vmatprep.subr.mxu0 %v5936
    %6225 = vmatpush1.msra.mxu0 %v5935
    %6226 = vmatprep.subr.mxu0 %v5940
    %6227 = vmatpush1.msra.mxu0 %v5939
    %6228 = vmatprep.subr.mxu0 %v5944
    %6229 = vmatpush1.msra.mxu0 %v5943
    %6230 = vmatprep.subr.mxu0 %v5948
    %6231 = vmatpush1.msra.mxu0 %v5947
    %6232 = vmatprep.subr.mxu0 %v5952
    %6233 = vmatpush1.msra.mxu0 %v5951
    %6234 = vmatprep.subr.mxu0 %v5956
    %6235 = vmatpush1.msra.mxu0 %v5955
    %6236 = vmatprep.subr.mxu0 %v5960
    %6237 = vmatpush1.msra.mxu0 %v5959
    %6238 = vmatprep.subr.mxu0 %v5964
    %6239 = vmatpush1.msra.mxu0 %v5963
    %6240 = vmatprep.subr.mxu0 %v5968
    %6241 = vmatpush1.msra.mxu0 %v5967
    %6242 = vmatprep.subr.mxu0 %v5972
    %6243 = vmatpush1.msra.mxu0 %v5971
    %6244 = vmatprep.subr.mxu0 %v5976
    %6245 = vmatpush1.msra.mxu0 %v5975
    %6246 = vmatprep.subr.mxu0 %v5980
    %6247 = vmatpush1.msra.mxu0 %v5979
    %6248 = vmatprep.subr.mxu0 %v5984
    %6249 = vmatpush1.msra.mxu0 %v5983
    %6250 = vmatprep.subr.mxu0 %v5988
    %6251 = vmatpush1.msra.mxu0 %v5987
    %6252 = vmatprep.subr.mxu0 0.0
    %6253 = vmatpush1.msra.mxu0 0.0
    %6254 = vmatprep.subr.mxu0 0.0
    %6255 = vmatpush1.msra.mxu0 0.0
    %6256 = vmatprep.subr.mxu0 0.0
    %6257 = vmatpush1.msra.mxu0 0.0
    %6258 = vmatprep.subr.mxu0 0.0
    %6259 = vmatpush1.msra.mxu0 0.0
    %6260 = vmatprep.subr.mxu0 0.0
    %6261 = vmatpush1.msra.mxu0 0.0
    %6262 = vmatprep.subr.mxu0 0.0
    %6263 = vmatpush1.msra.mxu0 0.0
    %6264 = vmatprep.subr.mxu0 0.0
    %6265 = vmatpush1.msra.mxu0 0.0
    %6266 = vmatprep.subr.mxu0 0.0
    %6267 = vmatpush1.msra.mxu0 0.0
    %6268 = vmatprep.subr.mxu0 0.0
    %6269 = vmatpush1.msra.mxu0 0.0
    %6270 = vmatprep.subr.mxu0 0.0
    %6271 = vmatpush1.msra.mxu0 0.0
    %6272 = vmatprep.subr.mxu0 0.0
    %6273 = vmatpush1.msra.mxu0 0.0
    %6274 = vmatprep.subr.mxu0 0.0
    %6275 = vmatpush1.msra.mxu0 0.0
    %6276 = vmatprep.subr.mxu0 0.0
    %6277 = vmatpush1.msra.mxu0 0.0
    %6278 = vmatprep.subr.mxu0 0.0
    %6279 = vmatpush1.msra.mxu0 0.0
    %6280 = vmatprep.subr.mxu0 0.0
    %6281 = vmatpush1.msra.mxu0 0.0
    %6282 = vmatprep.subr.mxu0 0.0
    %6283 = vmatpush1.msra.mxu0 0.0
    %6284 = vmatprep.mubr.f32.mxu0 0.0
    %6285 = vmatmul.mubr.f32.gmra.mrb[0].mxu0 %v6218
    %v6286 = vpop.f32.mrb[0].mxu0
    %v6287 = vadd.f32 %v6122, %v6286
    %v6288 = vpop.f32.mrb[0].mxu0
    %v6289 = vadd.f32 %v6124, %v6288
    %6290 = vdwg.mxu0
    %6291 = vmatprep.subr.mxu0 %v5930
    %6292 = vmatpush1.msra.mxu0 %v5929
    %6293 = vmatprep.subr.mxu0 %v5934
    %6294 = vmatpush1.msra.mxu0 %v5933
    %6295 = vmatprep.subr.mxu0 %v5938
    %6296 = vmatpush1.msra.mxu0 %v5937
    %6297 = vmatprep.subr.mxu0 %v5942
    %6298 = vmatpush1.msra.mxu0 %v5941
    %6299 = vmatprep.subr.mxu0 %v5946
    %6300 = vmatpush1.msra.mxu0 %v5945
    %6301 = vmatprep.subr.mxu0 %v5950
    %6302 = vmatpush1.msra.mxu0 %v5949
    %6303 = vmatprep.subr.mxu0 %v5954
    %6304 = vmatpush1.msra.mxu0 %v5953
    %6305 = vmatprep.subr.mxu0 %v5958
    %6306 = vmatpush1.msra.mxu0 %v5957
    %6307 = vmatprep.subr.mxu0 %v5962
    %6308 = vmatpush1.msra.mxu0 %v5961
    %6309 = vmatprep.subr.mxu0 %v5966
    %6310 = vmatpush1.msra.mxu0 %v5965
    %6311 = vmatprep.subr.mxu0 %v5970
    %6312 = vmatpush1.msra.mxu0 %v5969
    %6313 = vmatprep.subr.mxu0 %v5974
    %6314 = vmatpush1.msra.mxu0 %v5973
    %6315 = vmatprep.subr.mxu0 %v5978
    %6316 = vmatpush1.msra.mxu0 %v5977
    %6317 = vmatprep.subr.mxu0 %v5982
    %6318 = vmatpush1.msra.mxu0 %v5981
    %6319 = vmatprep.subr.mxu0 %v5986
    %6320 = vmatpush1.msra.mxu0 %v5985
    %6321 = vmatprep.subr.mxu0 %v5990
    %6322 = vmatpush1.msra.mxu0 %v5989
    %6323 = vmatprep.subr.mxu0 0.0
    %6324 = vmatpush1.msra.mxu0 0.0
    %6325 = vmatprep.subr.mxu0 0.0
    %6326 = vmatpush1.msra.mxu0 0.0
    %6327 = vmatprep.subr.mxu0 0.0
    %6328 = vmatpush1.msra.mxu0 0.0
    %6329 = vmatprep.subr.mxu0 0.0
    %6330 = vmatpush1.msra.mxu0 0.0
    %6331 = vmatprep.subr.mxu0 0.0
    %6332 = vmatpush1.msra.mxu0 0.0
    %6333 = vmatprep.subr.mxu0 0.0
    %6334 = vmatpush1.msra.mxu0 0.0
    %6335 = vmatprep.subr.mxu0 0.0
    %6336 = vmatpush1.msra.mxu0 0.0
    %6337 = vmatprep.subr.mxu0 0.0
    %6338 = vmatpush1.msra.mxu0 0.0
    %6339 = vmatprep.subr.mxu0 0.0
    %6340 = vmatpush1.msra.mxu0 0.0
    %6341 = vmatprep.subr.mxu0 0.0
    %6342 = vmatpush1.msra.mxu0 0.0
    %6343 = vmatprep.subr.mxu0 0.0
    %6344 = vmatpush1.msra.mxu0 0.0
    %6345 = vmatprep.subr.mxu0 0.0
    %6346 = vmatpush1.msra.mxu0 0.0
    %6347 = vmatprep.subr.mxu0 0.0
    %6348 = vmatpush1.msra.mxu0 0.0
    %6349 = vmatprep.subr.mxu0 0.0
    %6350 = vmatpush1.msra.mxu0 0.0
    %6351 = vmatprep.subr.mxu0 0.0
    %6352 = vmatpush1.msra.mxu0 0.0
    %6353 = vmatprep.subr.mxu0 0.0
    %6354 = vmatpush1.msra.mxu0 0.0
    %6355 = vmatprep.mubr.f32.mxu0 0.0
    %6356 = vmatmul.mubr.f32.gmra.mrb[0].mxu0 %v6218
    %v6357 = vpop.f32.mrb[0].mxu0
    %v6358 = vadd.f32 %v6193, %v6357
    %v6359 = vpop.f32.mrb[0].mxu0
    %v6360 = vadd.f32 %v6195, %v6359
    %6361 = vdwg.mxu0
    %v6362 = vadd.f32 %v6287, %v4056
    %v6363 = vadd.f32 %v6289, %v4060
    %v6364 = vadd.f32 %v6358, %v4064
    %v6365 = vadd.f32 %v6360, %v4068
    %v6366 = vxor.u32 %v6362, 2147483648
    %v6367 = vmul.f32 %v6366, 1.442695
    %v6368 = vpow.pop %v6367
    %v6369 = vadd.f32 %v6368, 1.0
    %v6370 = vrcp.pop %v6369
    %v6371 = vmul.f32 1.0, %v6370
    %v6372 = vxor.u32 %v6363, 2147483648
    %v6373 = vmul.f32 %v6372, 1.442695
    %v6374 = vpow.pop %v6373
    %v6375 = vadd.f32 %v6374, 1.0
    %v6376 = vrcp.pop %v6375
    %v6377 = vmul.f32 1.0, %v6376
    %v6378 = vmul.f32 %v6371, %v6365
    %v6379 = vadd.f32 %v6364, %v6378
    %v6380 = vtanh.pop %v6379
    %v6381 = vsub.f32 1.0, %v6377
    %v6382 = vmul.f32 %v6381, %v6380
    %v6383 = vmul.f32 %v6377, %v5623
    %v6384 = vadd.f32 %v6382, %v6383
    %v6385 = vld [vmem:[%s9] sm:$0xff]
    %v6386 = vld [vmem:[%s9 + $0x8] sm:$0xff]
    %v6387 = vld [vmem:[%s9 + $0x10] sm:$0xff]
    %v6388 = vld [vmem:[%s9 + $0x18] sm:$0xff]
    %v6389 = vld [vmem:[%s9 + $0x20] sm:$0xff]
    %v6390 = vld [vmem:[%s9 + $0x28] sm:$0xff]
    %v6391 = vld [vmem:[%s9 + $0x30] sm:$0xff]
    %v6392 = vld [vmem:[%s9 + $0x38] sm:$0xff]
    %v6393 = vld [vmem:[%s9 + $0x40] sm:$0xff]
    %v6394 = vld [vmem:[%s9 + $0x48] sm:$0xff]
    %v6395 = vld [vmem:[%s9 + $0x50] sm:$0xff]
    %v6396 = vld [vmem:[%s9 + $0x58] sm:$0xff]
    %v6397 = vld [vmem:[%s9 + $0x60] sm:$0xff]
    %v6398 = vld [vmem:[%s9 + $0x68] sm:$0xff]
    %v6399 = vld [vmem:[%s9 + $0x70] sm:$0xff]
    %v6400 = vld [vmem:[%s9 + $0x78] sm:$0xff]
    %6401 = vmatprep.subr.mxu0 0.0
    %6402 = vmatpush1.msra.mxu0 %v6385
    %6403 = vmatprep.subr.mxu0 0.0
    %6404 = vmatpush1.msra.mxu0 %v6386
    %6405 = vmatprep.subr.mxu0 0.0
    %6406 = vmatpush1.msra.mxu0 %v6387
    %6407 = vmatprep.subr.mxu0 0.0
    %6408 = vmatpush1.msra.mxu0 %v6388
    %6409 = vmatprep.subr.mxu0 0.0
    %6410 = vmatpush1.msra.mxu0 %v6389
    %6411 = vmatprep.subr.mxu0 0.0
    %6412 = vmatpush1.msra.mxu0 %v6390
    %6413 = vmatprep.subr.mxu0 0.0
    %6414 = vmatpush1.msra.mxu0 %v6391
    %6415 = vmatprep.subr.mxu0 0.0
    %6416 = vmatpush1.msra.mxu0 %v6392
    %6417 = vmatprep.subr.mxu0 0.0
    %6418 = vmatpush1.msra.mxu0 %v6393
    %6419 = vmatprep.subr.mxu0 0.0
    %6420 = vmatpush1.msra.mxu0 %v6394
    %6421 = vmatprep.subr.mxu0 0.0
    %6422 = vmatpush1.msra.mxu0 %v6395
    %6423 = vmatprep.subr.mxu0 0.0
    %6424 = vmatpush1.msra.mxu0 %v6396
    %6425 = vmatprep.subr.mxu0 0.0
    %6426 = vmatpush1.msra.mxu0 %v6397
    %6427 = vmatprep.subr.mxu0 0.0
    %6428 = vmatpush1.msra.mxu0 %v6398
    %6429 = vmatprep.subr.mxu0 0.0
    %6430 = vmatpush1.msra.mxu0 %v6399
    %6431 = vmatprep.subr.mxu0 0.0
    %6432 = vmatpush1.msra.mxu0 %v6400
    %6433 = vmatprep.subr.mxu0 0.0
    %6434 = vmatpush1.msra.mxu0 0.0
    %6435 = vmatprep.subr.mxu0 0.0
    %6436 = vmatpush1.msra.mxu0 0.0
    %6437 = vmatprep.subr.mxu0 0.0
    %6438 = vmatpush1.msra.mxu0 0.0
    %6439 = vmatprep.subr.mxu0 0.0
    %6440 = vmatpush1.msra.mxu0 0.0
    %6441 = vmatprep.subr.mxu0 0.0
    %6442 = vmatpush1.msra.mxu0 0.0
    %6443 = vmatprep.subr.mxu0 0.0
    %6444 = vmatpush1.msra.mxu0 0.0
    %6445 = vmatprep.subr.mxu0 0.0
    %6446 = vmatpush1.msra.mxu0 0.0
    %6447 = vmatprep.subr.mxu0 0.0
    %6448 = vmatpush1.msra.mxu0 0.0
    %6449 = vmatprep.subr.mxu0 0.0
    %6450 = vmatpush1.msra.mxu0 0.0
    %6451 = vmatprep.subr.mxu0 0.0
    %6452 = vmatpush1.msra.mxu0 0.0
    %6453 = vmatprep.subr.mxu0 0.0
    %6454 = vmatpush1.msra.mxu0 0.0
    %6455 = vmatprep.subr.mxu0 0.0
    %6456 = vmatpush1.msra.mxu0 0.0
    %6457 = vmatprep.subr.mxu0 0.0
    %6458 = vmatpush1.msra.mxu0 0.0
    %6459 = vmatprep.subr.mxu0 0.0
    %6460 = vmatpush1.msra.mxu0 0.0
    %6461 = vmatprep.subr.mxu0 0.0
    %6462 = vmatpush1.msra.mxu0 0.0
    %6463 = vmatprep.subr.mxu0 0.0
    %6464 = vmatpush1.msra.mxu0 0.0
    %6465 = vmatprep.mubr.f32.mxu0 0.0
    %6466 = vmatmul.mubr.f32.gmra.mrb[0].mxu0 %v6384
    %v6467 = vpop.f32.mrb[0].mxu0
    %v6468 = vadd.f32 %v4116, %v6467
    %v6469 = vpop.f32.mrb[0].mxu0
    %6470 = vdwg.mxu0
    %v6472 = vcombine.high %v6468, %v6468
    %v6474 = vunpack.c.l.s4 1966171168
    %v6475 = vunpack.c.0.s8 %v6474
    %v6476 = vlaneseq
    %v6477 = vshrl.u32 %v6476, 7
    %v6478 = vsub.s32 %v6475, %v6477
    %v6479 = vrot.slane %v6468, %v6478
    %v6481 = vunpack.c.l.s4 1966171168
    %v6482 = vunpack.c.0.s8 %v6481
    %v6483 = vlaneseq
    %v6484 = vshrl.u32 %v6483, 7
    %v6485 = vsub.s32 %v6482, %v6484
    %v6486 = vrot.slane %v6472, %v6485
    %v6487 = vcombine.high %v6479, %v6479
    %v6488 = vcombine.high %v6486, %v6486
    %v6490 = vunpack.c.l.s4 1966171168
    %v6491 = vunpack.c.0.s8 %v6490
    %v6492 = vlaneseq
    %v6493 = vshrl.u32 %v6492, 7
    %v6494 = vsub.s32 %v6491, %v6493
    %v6495 = vrot.slane %v6479, %v6494
    %v6497 = vunpack.c.l.s4 1966171168
    %v6498 = vunpack.c.0.s8 %v6497
    %v6499 = vlaneseq
    %v6500 = vshrl.u32 %v6499, 7
    %v6501 = vsub.s32 %v6498, %v6500
    %v6502 = vrot.slane %v6486, %v6501
    %v6504 = vunpack.c.l.s4 1966171168
    %v6505 = vunpack.c.0.s8 %v6504
    %v6506 = vlaneseq
    %v6507 = vshrl.u32 %v6506, 7
    %v6508 = vsub.s32 %v6505, %v6507
    %v6509 = vrot.slane %v6487, %v6508
    %v6511 = vunpack.c.l.s4 1966171168
    %v6512 = vunpack.c.0.s8 %v6511
    %v6513 = vlaneseq
    %v6514 = vshrl.u32 %v6513, 7
    %v6515 = vsub.s32 %v6512, %v6514
    %v6516 = vrot.slane %v6488, %v6515
    %v6517 = vcombine.high %v6495, %v6495
    %v6518 = vcombine.high %v6502, %v6502
    %v6519 = vcombine.high %v6509, %v6509
    %v6520 = vcombine.high %v6516, %v6516
    %6529 = vst [vmem:[%s12 + $0x4] sm:$0x1] %v6495
    %6530 = vst [vmem:[%s12 + $0xc] sm:$0x1] %v6509
    %6531 = vst [vmem:[%s12 + $0x14] sm:$0x1] %v6517
    %6532 = vst [vmem:[%s12 + $0x1c] sm:$0x1] %v6519
    %6533 = vst [vmem:[%s12 + $0x24] sm:$0x1] %v6502
    %6534 = vst [vmem:[%s12 + $0x2c] sm:$0x1] %v6516
    %6535 = vst [vmem:[%s12 + $0x34] sm:$0x1] %v6518
    %6536 = vst [vmem:[%s12 + $0x3c] sm:$0x1] %v6520
    %s6537 = sld [smem:[#allocation4 + $0x3]]
    %p6538 = scmp.eq.s32.totalorder %s6537, 0
    // Predicated region
    $region62: #{seq2seq_forward.1} parent=1 // pred_check
      %p6539 = pneg %p6538
    $region63: #{seq2seq_forward.1} parent=1 // pred_check_branch
      %6541 = sbr.rel (%p6539) target = $region65
    $region64: #{seq2seq_forward.1} parent=1 // pred_region
      %6542 = vmax.xlane.f32.xlu0 %v6468
      %v6543 = vpop.xlane.xlu0 %6542
      %vm6544 = vcmp.eq.f32.partialorder %v6468, %v6543
      %v6545 = vsel %vm6544, %v63, 128
      %v6546 = vand.u32 %v6545, 65535
      %v6547 = vshra.s32 %v6545, 16
      %v6548 = vcvt.s32.f32 %v6546
      %v6549 = vcvt.s32.f32 %v6547
      %6550 = vmin.xlane.f32.xlu0 %v6549
      %v6551 = vpop.xlane.xlu0 %6550
      %vm6552 = vcmp.eq.f32.partialorder %v6549, %v6551
      %v6553 = vsel %vm6552, %v6548, inf
      %6554 = vmin.xlane.f32.xlu0 %v6553
      %v6555 = vpop.xlane.xlu0 %6554
      %v6556 = vcvt.f32.s32 %v6555
      %v6557 = vcvt.f32.s32 %v6551
      %v6558 = vshll.u32 %v6557, 16
      %v6559 = vadd.s32 %v6558, %v6556
      %vm6560 = vcmp.eq.s32.totalorder %v63, %v6559
      %v6561 = vsel %vm6560, 1, 0
      %v6562 = vcvt.s32.f32 %v6561
      %v6563 = vld [vmem:[%s11] sm:$0xff]
      %v6564 = vld [vmem:[%s11 + $0x8] sm:$0xff]
      %v6565 = vld [vmem:[%s11 + $0x10] sm:$0xff]
      %v6566 = vld [vmem:[%s11 + $0x18] sm:$0xff]
      %v6567 = vld [vmem:[%s11 + $0x20] sm:$0xff]
      %v6568 = vld [vmem:[%s11 + $0x28] sm:$0xff]
      %v6569 = vld [vmem:[%s11 + $0x30] sm:$0xff]
      %v6570 = vld [vmem:[%s11 + $0x38] sm:$0xff]
      %v6571 = vld [vmem:[%s11 + $0x40] sm:$0xff]
      %v6572 = vld [vmem:[%s11 + $0x48] sm:$0xff]
      %v6573 = vld [vmem:[%s11 + $0x50] sm:$0xff]
      %v6574 = vld [vmem:[%s11 + $0x58] sm:$0xff]
      %v6575 = vld [vmem:[%s11 + $0x60] sm:$0xff]
      %v6576 = vld [vmem:[%s11 + $0x68] sm:$0xff]
      %v6577 = vld [vmem:[%s11 + $0x70] sm:$0xff]
      %v6578 = vld [vmem:[%s11 + $0x78] sm:$0xff]
      %6579 = vmatprep.subr.mxu0 0.0
      %6580 = vmatpush1.msra.mxu0 %v6563
      %6581 = vmatprep.subr.mxu0 0.0
      %6582 = vmatpush1.msra.mxu0 %v6564
      %6583 = vmatprep.subr.mxu0 0.0
      %6584 = vmatpush1.msra.mxu0 %v6565
      %6585 = vmatprep.subr.mxu0 0.0
      %6586 = vmatpush1.msra.mxu0 %v6566
      %6587 = vmatprep.subr.mxu0 0.0
      %6588 = vmatpush1.msra.mxu0 %v6567
      %6589 = vmatprep.subr.mxu0 0.0
      %6590 = vmatpush1.msra.mxu0 %v6568
      %6591 = vmatprep.subr.mxu0 0.0
      %6592 = vmatpush1.msra.mxu0 %v6569
      %6593 = vmatprep.subr.mxu0 0.0
      %6594 = vmatpush1.msra.mxu0 %v6570
      %6595 = vmatprep.subr.mxu0 0.0
      %6596 = vmatpush1.msra.mxu0 %v6571
      %6597 = vmatprep.subr.mxu0 0.0
      %6598 = vmatpush1.msra.mxu0 %v6572
      %6599 = vmatprep.subr.mxu0 0.0
      %6600 = vmatpush1.msra.mxu0 %v6573
      %6601 = vmatprep.subr.mxu0 0.0
      %6602 = vmatpush1.msra.mxu0 %v6574
      %6603 = vmatprep.subr.mxu0 0.0
      %6604 = vmatpush1.msra.mxu0 %v6575
      %6605 = vmatprep.subr.mxu0 0.0
      %6606 = vmatpush1.msra.mxu0 %v6576
      %6607 = vmatprep.subr.mxu0 0.0
      %6608 = vmatpush1.msra.mxu0 %v6577
      %6609 = vmatprep.subr.mxu0 0.0
      %6610 = vmatpush1.msra.mxu0 %v6578
      %6611 = vmatprep.subr.mxu0 0.0
      %6612 = vmatpush1.msra.mxu0 0.0
      %6613 = vmatprep.subr.mxu0 0.0
      %6614 = vmatpush1.msra.mxu0 0.0
      %6615 = vmatprep.subr.mxu0 0.0
      %6616 = vmatpush1.msra.mxu0 0.0
      %6617 = vmatprep.subr.mxu0 0.0
      %6618 = vmatpush1.msra.mxu0 0.0
      %6619 = vmatprep.subr.mxu0 0.0
      %6620 = vmatpush1.msra.mxu0 0.0
      %6621 = vmatprep.subr.mxu0 0.0
      %6622 = vmatpush1.msra.mxu0 0.0
      %6623 = vmatprep.subr.mxu0 0.0
      %6624 = vmatpush1.msra.mxu0 0.0
      %6625 = vmatprep.subr.mxu0 0.0
      %6626 = vmatpush1.msra.mxu0 0.0
      %6627 = vmatprep.subr.mxu0 0.0
      %6628 = vmatpush1.msra.mxu0 0.0
      %6629 = vmatprep.subr.mxu0 0.0
      %6630 = vmatpush1.msra.mxu0 0.0
      %6631 = vmatprep.subr.mxu0 0.0
      %6632 = vmatpush1.msra.mxu0 0.0
      %6633 = vmatprep.subr.mxu0 0.0
      %6634 = vmatpush1.msra.mxu0 0.0
      %6635 = vmatprep.subr.mxu0 0.0
      %6636 = vmatpush1.msra.mxu0 0.0
      %6637 = vmatprep.subr.mxu0 0.0
      %6638 = vmatpush1.msra.mxu0 0.0
      %6639 = vmatprep.subr.mxu0 0.0
      %6640 = vmatpush1.msra.mxu0 0.0
      %6641 = vmatprep.subr.mxu0 0.0
      %6642 = vmatpush1.msra.mxu0 0.0
      %6643 = vmatprep.mubr.f32.mxu0 0.0
      %6644 = vmatmul.mubr.f32.gmra.mrb[0].mxu0 %v6562
      %v6645 = vpop.f32.mrb[0].mxu0
      %v6646 = vadd.f32 0.0, %v6645
      %v6647 = vpop.f32.mrb[0].mxu0
      %6648 = vdwg.mxu0
      %6649 = vst [vmem:[#allocation2] sm:$0xff] %v6646
    $region65: #{seq2seq_forward.1} parent=1 // pred_fallthru
      _
    %s6650 = sld [smem:[#allocation4 + $0x3]]
    %p6651 = scmp.ne.s32.totalorder %s6650, 0
    %v6652 = vld [vmem:[%s2 + $0x4] sm:$0x1]
    %v6653 = vld [vmem:[%s2 + $0xc] sm:$0x1]
    %v6654 = vld [vmem:[%s2 + $0x14] sm:$0x1]
    %v6655 = vld [vmem:[%s2 + $0x1c] sm:$0x1]
    %v6656 = vld [vmem:[%s2 + $0x24] sm:$0x1]
    %v6657 = vld [vmem:[%s2 + $0x2c] sm:$0x1]
    %v6658 = vld [vmem:[%s2 + $0x34] sm:$0x1]
    %v6659 = vld [vmem:[%s2 + $0x3c] sm:$0x1]
    %v6660 = vld [vmem:[#allocation2] sm:$0xff]
    %s6661 = scalar_select %p6651, 1, 0
    %v6662 = vstv %s6661
    %vm6663 = vcmp.eq.s32.totalorder %v6662, 1
    %v6665 = vrot.slane %v6660, 1
    %v6666 = vrot.slane %v6660, 2
    %v6667 = vrot.slane %v6660, 3
    %v6668 = vrot.slane %v6660, 4
    %v6669 = vrot.slane %v6660, 5
    %v6670 = vrot.slane %v6660, 6
    %v6671 = vrot.slane %v6660, 7
    %v6680 = vsel %vm6663, %v6652, %v6660
    %v6681 = vsel %vm6663, %v6653, %v6665
    %v6682 = vsel %vm6663, %v6654, %v6666
    %v6683 = vsel %vm6663, %v6655, %v6667
    %v6684 = vsel %vm6663, %v6656, %v6668
    %v6685 = vsel %vm6663, %v6657, %v6669
    %v6686 = vsel %vm6663, %v6658, %v6670
    %v6687 = vsel %vm6663, %v6659, %v6671
    %v6688 = vld [vmem:[%s6] sm:$0xff]
    %v6689 = vld [vmem:[%s6 + $0x8] sm:$0xff]
    %v6690 = vld [vmem:[%s6 + $0x10] sm:$0xff]
    %v6691 = vld [vmem:[%s6 + $0x18] sm:$0xff]
    %v6692 = vld [vmem:[%s6 + $0x20] sm:$0xff]
    %v6693 = vld [vmem:[%s6 + $0x28] sm:$0xff]
    %v6694 = vld [vmem:[%s6 + $0x30] sm:$0xff]
    %v6695 = vld [vmem:[%s6 + $0x38] sm:$0xff]
    %v6696 = vld [vmem:[%s6 + $0x40] sm:$0xff]
    %v6697 = vld [vmem:[%s6 + $0x48] sm:$0xff]
    %v6698 = vld [vmem:[%s6 + $0x50] sm:$0xff]
    %v6699 = vld [vmem:[%s6 + $0x58] sm:$0xff]
    %v6700 = vld [vmem:[%s6 + $0x60] sm:$0xff]
    %v6701 = vld [vmem:[%s6 + $0x68] sm:$0xff]
    %v6702 = vld [vmem:[%s6 + $0x70] sm:$0xff]
    %v6703 = vld [vmem:[%s6 + $0x78] sm:$0xff]
    %v6704 = vld [vmem:[%s6 + $0x80] sm:$0xff]
    %v6705 = vld [vmem:[%s6 + $0x88] sm:$0xff]
    %v6706 = vld [vmem:[%s6 + $0x90] sm:$0xff]
    %v6707 = vld [vmem:[%s6 + $0x98] sm:$0xff]
    %v6708 = vld [vmem:[%s6 + $0xa0] sm:$0xff]
    %v6709 = vld [vmem:[%s6 + $0xa8] sm:$0xff]
    %v6710 = vld [vmem:[%s6 + $0xb0] sm:$0xff]
    %v6711 = vld [vmem:[%s6 + $0xb8] sm:$0xff]
    %v6712 = vld [vmem:[%s6 + $0xc0] sm:$0xff]
    %v6713 = vld [vmem:[%s6 + $0xc8] sm:$0xff]
    %v6714 = vld [vmem:[%s6 + $0xd0] sm:$0xff]
    %v6715 = vld [vmem:[%s6 + $0xd8] sm:$0xff]
    %v6716 = vld [vmem:[%s6 + $0xe0] sm:$0xff]
    %v6717 = vld [vmem:[%s6 + $0xe8] sm:$0xff]
    %v6718 = vld [vmem:[%s6 + $0xf0] sm:$0xff]
    %v6719 = vld [vmem:[%s6 + $0xf8] sm:$0xff]
    %v6720 = vld [vmem:[%s6 + $0x100] sm:$0xff]
    %v6721 = vld [vmem:[%s6 + $0x108] sm:$0xff]
    %v6722 = vld [vmem:[%s6 + $0x110] sm:$0xff]
    %v6723 = vld [vmem:[%s6 + $0x118] sm:$0xff]
    %v6724 = vld [vmem:[%s6 + $0x120] sm:$0xff]
    %v6725 = vld [vmem:[%s6 + $0x128] sm:$0xff]
    %v6726 = vld [vmem:[%s6 + $0x130] sm:$0xff]
    %v6727 = vld [vmem:[%s6 + $0x138] sm:$0xff]
    %v6728 = vld [vmem:[%s6 + $0x140] sm:$0xff]
    %v6729 = vld [vmem:[%s6 + $0x148] sm:$0xff]
    %v6730 = vld [vmem:[%s6 + $0x150] sm:$0xff]
    %v6731 = vld [vmem:[%s6 + $0x158] sm:$0xff]
    %v6732 = vld [vmem:[%s6 + $0x160] sm:$0xff]
    %v6733 = vld [vmem:[%s6 + $0x168] sm:$0xff]
    %v6734 = vld [vmem:[%s6 + $0x170] sm:$0xff]
    %v6735 = vld [vmem:[%s6 + $0x178] sm:$0xff]
    %v6736 = vld [vmem:[%s6 + $0x180] sm:$0xff]
    %v6737 = vld [vmem:[%s6 + $0x188] sm:$0xff]
    %v6738 = vld [vmem:[%s6 + $0x190] sm:$0xff]
    %v6739 = vld [vmem:[%s6 + $0x198] sm:$0xff]
    %v6740 = vld [vmem:[%s6 + $0x1a0] sm:$0xff]
    %v6741 = vld [vmem:[%s6 + $0x1a8] sm:$0xff]
    %v6742 = vld [vmem:[%s6 + $0x1b0] sm:$0xff]
    %v6743 = vld [vmem:[%s6 + $0x1b8] sm:$0xff]
    %v6744 = vld [vmem:[%s6 + $0x1c0] sm:$0xff]
    %v6745 = vld [vmem:[%s6 + $0x1c8] sm:$0xff]
    %v6746 = vld [vmem:[%s6 + $0x1d0] sm:$0xff]
    %v6747 = vld [vmem:[%s6 + $0x1d8] sm:$0xff]
    %v6748 = vld [vmem:[%s6 + $0x1e0] sm:$0xff]
    %v6749 = vld [vmem:[%s6 + $0x1e8] sm:$0xff]
    %v6750 = vld [vmem:[%s6 + $0x1f0] sm:$0xff]
    %v6751 = vld [vmem:[%s6 + $0x1f8] sm:$0xff]
    %v6752 = vld [vmem:[#allocation5] sm:$0xff]
    %v6753 = vld [vmem:[#allocation5 + $0x8] sm:$0xff]
    %v6754 = vld [vmem:[#allocation5 + $0x10] sm:$0xff]
    %v6755 = vld [vmem:[#allocation5 + $0x18] sm:$0xff]
    %v6756 = vld [vmem:[#allocation5 + $0x20] sm:$0xff]
    %v6757 = vld [vmem:[#allocation5 + $0x28] sm:$0xff]
    %v6758 = vld [vmem:[#allocation5 + $0x30] sm:$0xff]
    %v6759 = vld [vmem:[#allocation5 + $0x38] sm:$0xff]
    %v6760 = vld [vmem:[#allocation5 + $0x40] sm:$0xff]
    %v6761 = vld [vmem:[#allocation5 + $0x48] sm:$0xff]
    %v6762 = vld [vmem:[#allocation5 + $0x50] sm:$0xff]
    %v6763 = vld [vmem:[#allocation5 + $0x58] sm:$0xff]
    %v6764 = vld [vmem:[#allocation5 + $0x60] sm:$0xff]
    %v6765 = vld [vmem:[#allocation5 + $0x68] sm:$0xff]
    %v6766 = vld [vmem:[#allocation5 + $0x70] sm:$0xff]
    %v6767 = vld [vmem:[#allocation5 + $0x78] sm:$0xff]
    %v6768 = vld [vmem:[#allocation5 + $0x80] sm:$0xff]
    %v6769 = vld [vmem:[#allocation5 + $0x88] sm:$0xff]
    %v6770 = vld [vmem:[#allocation5 + $0x90] sm:$0xff]
    %v6771 = vld [vmem:[#allocation5 + $0x98] sm:$0xff]
    %v6772 = vld [vmem:[#allocation5 + $0xa0] sm:$0xff]
    %v6773 = vld [vmem:[#allocation5 + $0xa8] sm:$0xff]
    %v6774 = vld [vmem:[#allocation5 + $0xb0] sm:$0xff]
    %v6775 = vld [vmem:[#allocation5 + $0xb8] sm:$0xff]
    %v6776 = vld [vmem:[#allocation5 + $0xc0] sm:$0xff]
    %v6777 = vld [vmem:[#allocation5 + $0xc8] sm:$0xff]
    %v6778 = vld [vmem:[#allocation5 + $0xd0] sm:$0xff]
    %v6779 = vld [vmem:[#allocation5 + $0xd8] sm:$0xff]
    %v6780 = vld [vmem:[#allocation5 + $0xe0] sm:$0xff]
    %v6781 = vld [vmem:[#allocation5 + $0xe8] sm:$0xff]
    %v6782 = vld [vmem:[#allocation5 + $0xf0] sm:$0xff]
    %v6783 = vld [vmem:[#allocation5 + $0xf8] sm:$0xff]
    %v6784 = vld [vmem:[#allocation5 + $0x100] sm:$0xff]
    %v6785 = vld [vmem:[#allocation5 + $0x108] sm:$0xff]
    %v6786 = vld [vmem:[#allocation5 + $0x110] sm:$0xff]
    %v6787 = vld [vmem:[#allocation5 + $0x118] sm:$0xff]
    %v6788 = vld [vmem:[#allocation5 + $0x120] sm:$0xff]
    %v6789 = vld [vmem:[#allocation5 + $0x128] sm:$0xff]
    %v6790 = vld [vmem:[#allocation5 + $0x130] sm:$0xff]
    %v6791 = vld [vmem:[#allocation5 + $0x138] sm:$0xff]
    %v6792 = vld [vmem:[#allocation5 + $0x140] sm:$0xff]
    %v6793 = vld [vmem:[#allocation5 + $0x148] sm:$0xff]
    %v6794 = vld [vmem:[#allocation5 + $0x150] sm:$0xff]
    %v6795 = vld [vmem:[#allocation5 + $0x158] sm:$0xff]
    %v6796 = vld [vmem:[#allocation5 + $0x160] sm:$0xff]
    %v6797 = vld [vmem:[#allocation5 + $0x168] sm:$0xff]
    %v6798 = vld [vmem:[#allocation5 + $0x170] sm:$0xff]
    %v6799 = vld [vmem:[#allocation5 + $0x178] sm:$0xff]
    %v6800 = vld [vmem:[#allocation5 + $0x180] sm:$0xff]
    %v6801 = vld [vmem:[#allocation5 + $0x188] sm:$0xff]
    %v6802 = vld [vmem:[#allocation5 + $0x190] sm:$0xff]
    %v6803 = vld [vmem:[#allocation5 + $0x198] sm:$0xff]
    %v6804 = vld [vmem:[#allocation5 + $0x1a0] sm:$0xff]
    %v6805 = vld [vmem:[#allocation5 + $0x1a8] sm:$0xff]
    %v6806 = vld [vmem:[#allocation5 + $0x1b0] sm:$0xff]
    %v6807 = vld [vmem:[#allocation5 + $0x1b8] sm:$0xff]
    %v6808 = vld [vmem:[#allocation5 + $0x1c0] sm:$0xff]
    %v6809 = vld [vmem:[#allocation5 + $0x1c8] sm:$0xff]
    %v6810 = vld [vmem:[#allocation5 + $0x1d0] sm:$0xff]
    %v6811 = vld [vmem:[#allocation5 + $0x1d8] sm:$0xff]
    %v6812 = vld [vmem:[#allocation5 + $0x1e0] sm:$0xff]
    %v6813 = vld [vmem:[#allocation5 + $0x1e8] sm:$0xff]
    %v6814 = vld [vmem:[#allocation5 + $0x1f0] sm:$0xff]
    %v6815 = vld [vmem:[#allocation5 + $0x1f8] sm:$0xff]
    %6816 = vmatprep.subr.mxu0 %v6753
    %6817 = vmatpush1.msra.mxu0 %v6752
    %6818 = vmatprep.subr.mxu0 %v6757
    %6819 = vmatpush1.msra.mxu0 %v6756
    %6820 = vmatprep.subr.mxu0 %v6761
    %6821 = vmatpush1.msra.mxu0 %v6760
    %6822 = vmatprep.subr.mxu0 %v6765
    %6823 = vmatpush1.msra.mxu0 %v6764
    %6824 = vmatprep.subr.mxu0 %v6769
    %6825 = vmatpush1.msra.mxu0 %v6768
    %6826 = vmatprep.subr.mxu0 %v6773
    %6827 = vmatpush1.msra.mxu0 %v6772
    %6828 = vmatprep.subr.mxu0 %v6777
    %6829 = vmatpush1.msra.mxu0 %v6776
    %6830 = vmatprep.subr.mxu0 %v6781
    %6831 = vmatpush1.msra.mxu0 %v6780
    %6832 = vmatprep.subr.mxu0 %v6785
    %6833 = vmatpush1.msra.mxu0 %v6784
    %6834 = vmatprep.subr.mxu0 %v6789
    %6835 = vmatpush1.msra.mxu0 %v6788
    %6836 = vmatprep.subr.mxu0 %v6793
    %6837 = vmatpush1.msra.mxu0 %v6792
    %6838 = vmatprep.subr.mxu0 %v6797
    %6839 = vmatpush1.msra.mxu0 %v6796
    %6840 = vmatprep.subr.mxu0 %v6801
    %6841 = vmatpush1.msra.mxu0 %v6800
    %6842 = vmatprep.subr.mxu0 %v6805
    %6843 = vmatpush1.msra.mxu0 %v6804
    %6844 = vmatprep.subr.mxu0 %v6809
    %6845 = vmatpush1.msra.mxu0 %v6808
    %6846 = vmatprep.subr.mxu0 %v6813
    %6847 = vmatpush1.msra.mxu0 %v6812
    %6848 = vmatprep.subr.mxu0 0.0
    %6849 = vmatpush1.msra.mxu0 0.0
    %6850 = vmatprep.subr.mxu0 0.0
    %6851 = vmatpush1.msra.mxu0 0.0
    %6852 = vmatprep.subr.mxu0 0.0
    %6853 = vmatpush1.msra.mxu0 0.0
    %6854 = vmatprep.subr.mxu0 0.0
    %6855 = vmatpush1.msra.mxu0 0.0
    %6856 = vmatprep.subr.mxu0 0.0
    %6857 = vmatpush1.msra.mxu0 0.0
    %6858 = vmatprep.subr.mxu0 0.0
    %6859 = vmatpush1.msra.mxu0 0.0
    %6860 = vmatprep.subr.mxu0 0.0
    %6861 = vmatpush1.msra.mxu0 0.0
    %6862 = vmatprep.subr.mxu0 0.0
    %6863 = vmatpush1.msra.mxu0 0.0
    %6864 = vmatprep.subr.mxu0 0.0
    %6865 = vmatpush1.msra.mxu0 0.0
    %6866 = vmatprep.subr.mxu0 0.0
    %6867 = vmatpush1.msra.mxu0 0.0
    %6868 = vmatprep.subr.mxu0 0.0
    %6869 = vmatpush1.msra.mxu0 0.0
    %6870 = vmatprep.subr.mxu0 0.0
    %6871 = vmatpush1.msra.mxu0 0.0
    %6872 = vmatprep.subr.mxu0 0.0
    %6873 = vmatpush1.msra.mxu0 0.0
    %6874 = vmatprep.subr.mxu0 0.0
    %6875 = vmatpush1.msra.mxu0 0.0
    %6876 = vmatprep.subr.mxu0 0.0
    %6877 = vmatpush1.msra.mxu0 0.0
    %6878 = vmatprep.subr.mxu0 0.0
    %6879 = vmatpush1.msra.mxu0 0.0
    %6880 = vmatprep.mubr.f32.mxu0 0.0
    %6881 = vmatmul.mubr.f32.gmra.mrb[0].mxu0 %v6384
    %v6882 = vpop.f32.mrb[0].mxu0
    %v6883 = vadd.f32 0.0, %v6882
    %v6884 = vpop.f32.mrb[0].mxu0
    %v6885 = vadd.f32 0.0, %v6884
    %6886 = vdwg.mxu0
    %6887 = vmatprep.subr.mxu0 %v6755
    %6888 = vmatpush1.msra.mxu0 %v6754
    %6889 = vmatprep.subr.mxu0 %v6759
    %6890 = vmatpush1.msra.mxu0 %v6758
    %6891 = vmatprep.subr.mxu0 %v6763
    %6892 = vmatpush1.msra.mxu0 %v6762
    %6893 = vmatprep.subr.mxu0 %v6767
    %6894 = vmatpush1.msra.mxu0 %v6766
    %6895 = vmatprep.subr.mxu0 %v6771
    %6896 = vmatpush1.msra.mxu0 %v6770
    %6897 = vmatprep.subr.mxu0 %v6775
    %6898 = vmatpush1.msra.mxu0 %v6774
    %6899 = vmatprep.subr.mxu0 %v6779
    %6900 = vmatpush1.msra.mxu0 %v6778
    %6901 = vmatprep.subr.mxu0 %v6783
    %6902 = vmatpush1.msra.mxu0 %v6782
    %6903 = vmatprep.subr.mxu0 %v6787
    %6904 = vmatpush1.msra.mxu0 %v6786
    %6905 = vmatprep.subr.mxu0 %v6791
    %6906 = vmatpush1.msra.mxu0 %v6790
    %6907 = vmatprep.subr.mxu0 %v6795
    %6908 = vmatpush1.msra.mxu0 %v6794
    %6909 = vmatprep.subr.mxu0 %v6799
    %6910 = vmatpush1.msra.mxu0 %v6798
    %6911 = vmatprep.subr.mxu0 %v6803
    %6912 = vmatpush1.msra.mxu0 %v6802
    %6913 = vmatprep.subr.mxu0 %v6807
    %6914 = vmatpush1.msra.mxu0 %v6806
    %6915 = vmatprep.subr.mxu0 %v6811
    %6916 = vmatpush1.msra.mxu0 %v6810
    %6917 = vmatprep.subr.mxu0 %v6815
    %6918 = vmatpush1.msra.mxu0 %v6814
    %6919 = vmatprep.subr.mxu0 0.0
    %6920 = vmatpush1.msra.mxu0 0.0
    %6921 = vmatprep.subr.mxu0 0.0
    %6922 = vmatpush1.msra.mxu0 0.0
    %6923 = vmatprep.subr.mxu0 0.0
    %6924 = vmatpush1.msra.mxu0 0.0
    %6925 = vmatprep.subr.mxu0 0.0
    %6926 = vmatpush1.msra.mxu0 0.0
    %6927 = vmatprep.subr.mxu0 0.0
    %6928 = vmatpush1.msra.mxu0 0.0
    %6929 = vmatprep.subr.mxu0 0.0
    %6930 = vmatpush1.msra.mxu0 0.0
    %6931 = vmatprep.subr.mxu0 0.0
    %6932 = vmatpush1.msra.mxu0 0.0
    %6933 = vmatprep.subr.mxu0 0.0
    %6934 = vmatpush1.msra.mxu0 0.0
    %6935 = vmatprep.subr.mxu0 0.0
    %6936 = vmatpush1.msra.mxu0 0.0
    %6937 = vmatprep.subr.mxu0 0.0
    %6938 = vmatpush1.msra.mxu0 0.0
    %6939 = vmatprep.subr.mxu0 0.0
    %6940 = vmatpush1.msra.mxu0 0.0
    %6941 = vmatprep.subr.mxu0 0.0
    %6942 = vmatpush1.msra.mxu0 0.0
    %6943 = vmatprep.subr.mxu0 0.0
    %6944 = vmatpush1.msra.mxu0 0.0
    %6945 = vmatprep.subr.mxu0 0.0
    %6946 = vmatpush1.msra.mxu0 0.0
    %6947 = vmatprep.subr.mxu0 0.0
    %6948 = vmatpush1.msra.mxu0 0.0
    %6949 = vmatprep.subr.mxu0 0.0
    %6950 = vmatpush1.msra.mxu0 0.0
    %6951 = vmatprep.mubr.f32.mxu0 0.0
    %6952 = vmatmul.mubr.f32.gmra.mrb[0].mxu0 %v6384
    %v6953 = vpop.f32.mrb[0].mxu0
    %v6954 = vadd.f32 0.0, %v6953
    %v6955 = vpop.f32.mrb[0].mxu0
    %v6956 = vadd.f32 0.0, %v6955
    %6957 = vdwg.mxu0
    %v6966 = vrot.slane %v6681, 7
    %v6967 = vsel %vm351, %v6966, %v6680
    %v6968 = vrot.slane %v6682, 6
    %v6969 = vsel %vm354, %v6968, %v6967
    %v6970 = vrot.slane %v6683, 5
    %v6971 = vsel %vm357, %v6970, %v6969
    %v6972 = vrot.slane %v6684, 4
    %v6973 = vsel %vm360, %v6972, %v6971
    %v6974 = vrot.slane %v6685, 3
    %v6975 = vsel %vm363, %v6974, %v6973
    %v6976 = vrot.slane %v6686, 2
    %v6977 = vsel %vm366, %v6976, %v6975
    %v6978 = vrot.slane %v6687, 1
    %v6979 = vsel %vm369, %v6978, %v6977
    %6981 = vmatprep.subr.mxu0 %v6689
    %6982 = vmatpush1.msra.mxu0 %v6688
    %6983 = vmatprep.subr.mxu0 %v6693
    %6984 = vmatpush1.msra.mxu0 %v6692
    %6985 = vmatprep.subr.mxu0 %v6697
    %6986 = vmatpush1.msra.mxu0 %v6696
    %6987 = vmatprep.subr.mxu0 %v6701
    %6988 = vmatpush1.msra.mxu0 %v6700
    %6989 = vmatprep.subr.mxu0 %v6705
    %6990 = vmatpush1.msra.mxu0 %v6704
    %6991 = vmatprep.subr.mxu0 %v6709
    %6992 = vmatpush1.msra.mxu0 %v6708
    %6993 = vmatprep.subr.mxu0 %v6713
    %6994 = vmatpush1.msra.mxu0 %v6712
    %6995 = vmatprep.subr.mxu0 %v6717
    %6996 = vmatpush1.msra.mxu0 %v6716
    %6997 = vmatprep.subr.mxu0 %v6721
    %6998 = vmatpush1.msra.mxu0 %v6720
    %6999 = vmatprep.subr.mxu0 %v6725
    %7000 = vmatpush1.msra.mxu0 %v6724
    %7001 = vmatprep.subr.mxu0 %v6729
    %7002 = vmatpush1.msra.mxu0 %v6728
    %7003 = vmatprep.subr.mxu0 %v6733
    %7004 = vmatpush1.msra.mxu0 %v6732
    %7005 = vmatprep.subr.mxu0 %v6737
    %7006 = vmatpush1.msra.mxu0 %v6736
    %7007 = vmatprep.subr.mxu0 %v6741
    %7008 = vmatpush1.msra.mxu0 %v6740
    %7009 = vmatprep.subr.mxu0 %v6745
    %7010 = vmatpush1.msra.mxu0 %v6744
    %7011 = vmatprep.subr.mxu0 %v6749
    %7012 = vmatpush1.msra.mxu0 %v6748
    %7013 = vmatprep.subr.mxu0 0.0
    %7014 = vmatpush1.msra.mxu0 0.0
    %7015 = vmatprep.subr.mxu0 0.0
    %7016 = vmatpush1.msra.mxu0 0.0
    %7017 = vmatprep.subr.mxu0 0.0
    %7018 = vmatpush1.msra.mxu0 0.0
    %7019 = vmatprep.subr.mxu0 0.0
    %7020 = vmatpush1.msra.mxu0 0.0
    %7021 = vmatprep.subr.mxu0 0.0
    %7022 = vmatpush1.msra.mxu0 0.0
    %7023 = vmatprep.subr.mxu0 0.0
    %7024 = vmatpush1.msra.mxu0 0.0
    %7025 = vmatprep.subr.mxu0 0.0
    %7026 = vmatpush1.msra.mxu0 0.0
    %7027 = vmatprep.subr.mxu0 0.0
    %7028 = vmatpush1.msra.mxu0 0.0
    %7029 = vmatprep.subr.mxu0 0.0
    %7030 = vmatpush1.msra.mxu0 0.0
    %7031 = vmatprep.subr.mxu0 0.0
    %7032 = vmatpush1.msra.mxu0 0.0
    %7033 = vmatprep.subr.mxu0 0.0
    %7034 = vmatpush1.msra.mxu0 0.0
    %7035 = vmatprep.subr.mxu0 0.0
    %7036 = vmatpush1.msra.mxu0 0.0
    %7037 = vmatprep.subr.mxu0 0.0
    %7038 = vmatpush1.msra.mxu0 0.0
    %7039 = vmatprep.subr.mxu0 0.0
    %7040 = vmatpush1.msra.mxu0 0.0
    %7041 = vmatprep.subr.mxu0 0.0
    %7042 = vmatpush1.msra.mxu0 0.0
    %7043 = vmatprep.subr.mxu0 0.0
    %7044 = vmatpush1.msra.mxu0 0.0
    %7045 = vmatprep.mubr.f32.mxu0 0.0
    %7046 = vmatmul.mubr.f32.gmra.mrb[0].mxu0 %v6979
    %v7047 = vpop.f32.mrb[0].mxu0
    %v7048 = vadd.f32 %v6883, %v7047
    %v7049 = vpop.f32.mrb[0].mxu0
    %v7050 = vadd.f32 %v6885, %v7049
    %7051 = vdwg.mxu0
    %7052 = vmatprep.subr.mxu0 %v6691
    %7053 = vmatpush1.msra.mxu0 %v6690
    %7054 = vmatprep.subr.mxu0 %v6695
    %7055 = vmatpush1.msra.mxu0 %v6694
    %7056 = vmatprep.subr.mxu0 %v6699
    %7057 = vmatpush1.msra.mxu0 %v6698
    %7058 = vmatprep.subr.mxu0 %v6703
    %7059 = vmatpush1.msra.mxu0 %v6702
    %7060 = vmatprep.subr.mxu0 %v6707
    %7061 = vmatpush1.msra.mxu0 %v6706
    %7062 = vmatprep.subr.mxu0 %v6711
    %7063 = vmatpush1.msra.mxu0 %v6710
    %7064 = vmatprep.subr.mxu0 %v6715
    %7065 = vmatpush1.msra.mxu0 %v6714
    %7066 = vmatprep.subr.mxu0 %v6719
    %7067 = vmatpush1.msra.mxu0 %v6718
    %7068 = vmatprep.subr.mxu0 %v6723
    %7069 = vmatpush1.msra.mxu0 %v6722
    %7070 = vmatprep.subr.mxu0 %v6727
    %7071 = vmatpush1.msra.mxu0 %v6726
    %7072 = vmatprep.subr.mxu0 %v6731
    %7073 = vmatpush1.msra.mxu0 %v6730
    %7074 = vmatprep.subr.mxu0 %v6735
    %7075 = vmatpush1.msra.mxu0 %v6734
    %7076 = vmatprep.subr.mxu0 %v6739
    %7077 = vmatpush1.msra.mxu0 %v6738
    %7078 = vmatprep.subr.mxu0 %v6743
    %7079 = vmatpush1.msra.mxu0 %v6742
    %7080 = vmatprep.subr.mxu0 %v6747
    %7081 = vmatpush1.msra.mxu0 %v6746
    %7082 = vmatprep.subr.mxu0 %v6751
    %7083 = vmatpush1.msra.mxu0 %v6750
    %7084 = vmatprep.subr.mxu0 0.0
    %7085 = vmatpush1.msra.mxu0 0.0
    %7086 = vmatprep.subr.mxu0 0.0
    %7087 = vmatpush1.msra.mxu0 0.0
    %7088 = vmatprep.subr.mxu0 0.0
    %7089 = vmatpush1.msra.mxu0 0.0
    %7090 = vmatprep.subr.mxu0 0.0
    %7091 = vmatpush1.msra.mxu0 0.0
    %7092 = vmatprep.subr.mxu0 0.0
    %7093 = vmatpush1.msra.mxu0 0.0
    %7094 = vmatprep.subr.mxu0 0.0
    %7095 = vmatpush1.msra.mxu0 0.0
    %7096 = vmatprep.subr.mxu0 0.0
    %7097 = vmatpush1.msra.mxu0 0.0
    %7098 = vmatprep.subr.mxu0 0.0
    %7099 = vmatpush1.msra.mxu0 0.0
    %7100 = vmatprep.subr.mxu0 0.0
    %7101 = vmatpush1.msra.mxu0 0.0
    %7102 = vmatprep.subr.mxu0 0.0
    %7103 = vmatpush1.msra.mxu0 0.0
    %7104 = vmatprep.subr.mxu0 0.0
    %7105 = vmatpush1.msra.mxu0 0.0
    %7106 = vmatprep.subr.mxu0 0.0
    %7107 = vmatpush1.msra.mxu0 0.0
    %7108 = vmatprep.subr.mxu0 0.0
    %7109 = vmatpush1.msra.mxu0 0.0
    %7110 = vmatprep.subr.mxu0 0.0
    %7111 = vmatpush1.msra.mxu0 0.0
    %7112 = vmatprep.subr.mxu0 0.0
    %7113 = vmatpush1.msra.mxu0 0.0
    %7114 = vmatprep.subr.mxu0 0.0
    %7115 = vmatpush1.msra.mxu0 0.0
    %7116 = vmatprep.mubr.f32.mxu0 0.0
    %7117 = vmatmul.mubr.f32.gmra.mrb[0].mxu0 %v6979
    %v7118 = vpop.f32.mrb[0].mxu0
    %v7119 = vadd.f32 %v6954, %v7118
    %v7120 = vpop.f32.mrb[0].mxu0
    %v7121 = vadd.f32 %v6956, %v7120
    %7122 = vdwg.mxu0
    %v7123 = vadd.f32 %v7048, %v4056
    %v7124 = vadd.f32 %v7050, %v4060
    %v7125 = vadd.f32 %v7119, %v4064
    %v7126 = vadd.f32 %v7121, %v4068
    %v7127 = vxor.u32 %v7123, 2147483648
    %v7128 = vmul.f32 %v7127, 1.442695
    %v7129 = vpow.pop %v7128
    %v7130 = vadd.f32 %v7129, 1.0
    %v7131 = vrcp.pop %v7130
    %v7132 = vmul.f32 1.0, %v7131
    %v7133 = vxor.u32 %v7124, 2147483648
    %v7134 = vmul.f32 %v7133, 1.442695
    %v7135 = vpow.pop %v7134
    %v7136 = vadd.f32 %v7135, 1.0
    %v7137 = vrcp.pop %v7136
    %v7138 = vmul.f32 1.0, %v7137
    %v7139 = vmul.f32 %v7132, %v7126
    %v7140 = vadd.f32 %v7125, %v7139
    %v7141 = vtanh.pop %v7140
    %v7142 = vsub.f32 1.0, %v7138
    %v7143 = vmul.f32 %v7142, %v7141
    %v7144 = vmul.f32 %v7138, %v6384
    %v7145 = vadd.f32 %v7143, %v7144
    %v7146 = vld [vmem:[%s9] sm:$0xff]
    %v7147 = vld [vmem:[%s9 + $0x8] sm:$0xff]
    %v7148 = vld [vmem:[%s9 + $0x10] sm:$0xff]
    %v7149 = vld [vmem:[%s9 + $0x18] sm:$0xff]
    %v7150 = vld [vmem:[%s9 + $0x20] sm:$0xff]
    %v7151 = vld [vmem:[%s9 + $0x28] sm:$0xff]
    %v7152 = vld [vmem:[%s9 + $0x30] sm:$0xff]
    %v7153 = vld [vmem:[%s9 + $0x38] sm:$0xff]
    %v7154 = vld [vmem:[%s9 + $0x40] sm:$0xff]
    %v7155 = vld [vmem:[%s9 + $0x48] sm:$0xff]
    %v7156 = vld [vmem:[%s9 + $0x50] sm:$0xff]
    %v7157 = vld [vmem:[%s9 + $0x58] sm:$0xff]
    %v7158 = vld [vmem:[%s9 + $0x60] sm:$0xff]
    %v7159 = vld [vmem:[%s9 + $0x68] sm:$0xff]
    %v7160 = vld [vmem:[%s9 + $0x70] sm:$0xff]
    %v7161 = vld [vmem:[%s9 + $0x78] sm:$0xff]
    %7162 = vmatprep.subr.mxu0 0.0
    %7163 = vmatpush1.msra.mxu0 %v7146
    %7164 = vmatprep.subr.mxu0 0.0
    %7165 = vmatpush1.msra.mxu0 %v7147
    %7166 = vmatprep.subr.mxu0 0.0
    %7167 = vmatpush1.msra.mxu0 %v7148
    %7168 = vmatprep.subr.mxu0 0.0
    %7169 = vmatpush1.msra.mxu0 %v7149
    %7170 = vmatprep.subr.mxu0 0.0
    %7171 = vmatpush1.msra.mxu0 %v7150
    %7172 = vmatprep.subr.mxu0 0.0
    %7173 = vmatpush1.msra.mxu0 %v7151
    %7174 = vmatprep.subr.mxu0 0.0
    %7175 = vmatpush1.msra.mxu0 %v7152
    %7176 = vmatprep.subr.mxu0 0.0
    %7177 = vmatpush1.msra.mxu0 %v7153
    %7178 = vmatprep.subr.mxu0 0.0
    %7179 = vmatpush1.msra.mxu0 %v7154
    %7180 = vmatprep.subr.mxu0 0.0
    %7181 = vmatpush1.msra.mxu0 %v7155
    %7182 = vmatprep.subr.mxu0 0.0
    %7183 = vmatpush1.msra.mxu0 %v7156
    %7184 = vmatprep.subr.mxu0 0.0
    %7185 = vmatpush1.msra.mxu0 %v7157
    %7186 = vmatprep.subr.mxu0 0.0
    %7187 = vmatpush1.msra.mxu0 %v7158
    %7188 = vmatprep.subr.mxu0 0.0
    %7189 = vmatpush1.msra.mxu0 %v7159
    %7190 = vmatprep.subr.mxu0 0.0
    %7191 = vmatpush1.msra.mxu0 %v7160
    %7192 = vmatprep.subr.mxu0 0.0
    %7193 = vmatpush1.msra.mxu0 %v7161
    %7194 = vmatprep.subr.mxu0 0.0
    %7195 = vmatpush1.msra.mxu0 0.0
    %7196 = vmatprep.subr.mxu0 0.0
    %7197 = vmatpush1.msra.mxu0 0.0
    %7198 = vmatprep.subr.mxu0 0.0
    %7199 = vmatpush1.msra.mxu0 0.0
    %7200 = vmatprep.subr.mxu0 0.0
    %7201 = vmatpush1.msra.mxu0 0.0
    %7202 = vmatprep.subr.mxu0 0.0
    %7203 = vmatpush1.msra.mxu0 0.0
    %7204 = vmatprep.subr.mxu0 0.0
    %7205 = vmatpush1.msra.mxu0 0.0
    %7206 = vmatprep.subr.mxu0 0.0
    %7207 = vmatpush1.msra.mxu0 0.0
    %7208 = vmatprep.subr.mxu0 0.0
    %7209 = vmatpush1.msra.mxu0 0.0
    %7210 = vmatprep.subr.mxu0 0.0
    %7211 = vmatpush1.msra.mxu0 0.0
    %7212 = vmatprep.subr.mxu0 0.0
    %7213 = vmatpush1.msra.mxu0 0.0
    %7214 = vmatprep.subr.mxu0 0.0
    %7215 = vmatpush1.msra.mxu0 0.0
    %7216 = vmatprep.subr.mxu0 0.0
    %7217 = vmatpush1.msra.mxu0 0.0
    %7218 = vmatprep.subr.mxu0 0.0
    %7219 = vmatpush1.msra.mxu0 0.0
    %7220 = vmatprep.subr.mxu0 0.0
    %7221 = vmatpush1.msra.mxu0 0.0
    %7222 = vmatprep.subr.mxu0 0.0
    %7223 = vmatpush1.msra.mxu0 0.0
    %7224 = vmatprep.subr.mxu0 0.0
    %7225 = vmatpush1.msra.mxu0 0.0
    %7226 = vmatprep.mubr.f32.mxu0 0.0
    %7227 = vmatmul.mubr.f32.gmra.mrb[0].mxu0 %v7145
    %v7228 = vpop.f32.mrb[0].mxu0
    %v7229 = vadd.f32 %v4116, %v7228
    %v7230 = vpop.f32.mrb[0].mxu0
    %7231 = vdwg.mxu0
    %v7233 = vcombine.high %v7229, %v7229
    %v7235 = vunpack.c.l.s4 1966171168
    %v7236 = vunpack.c.0.s8 %v7235
    %v7237 = vlaneseq
    %v7238 = vshrl.u32 %v7237, 7
    %v7239 = vsub.s32 %v7236, %v7238
    %v7240 = vrot.slane %v7229, %v7239
    %v7242 = vunpack.c.l.s4 1966171168
    %v7243 = vunpack.c.0.s8 %v7242
    %v7244 = vlaneseq
    %v7245 = vshrl.u32 %v7244, 7
    %v7246 = vsub.s32 %v7243, %v7245
    %v7247 = vrot.slane %v7233, %v7246
    %v7248 = vcombine.high %v7240, %v7240
    %v7249 = vcombine.high %v7247, %v7247
    %v7251 = vunpack.c.l.s4 1966171168
    %v7252 = vunpack.c.0.s8 %v7251
    %v7253 = vlaneseq
    %v7254 = vshrl.u32 %v7253, 7
    %v7255 = vsub.s32 %v7252, %v7254
    %v7256 = vrot.slane %v7240, %v7255
    %v7258 = vunpack.c.l.s4 1966171168
    %v7259 = vunpack.c.0.s8 %v7258
    %v7260 = vlaneseq
    %v7261 = vshrl.u32 %v7260, 7
    %v7262 = vsub.s32 %v7259, %v7261
    %v7263 = vrot.slane %v7247, %v7262
    %v7265 = vunpack.c.l.s4 1966171168
    %v7266 = vunpack.c.0.s8 %v7265
    %v7267 = vlaneseq
    %v7268 = vshrl.u32 %v7267, 7
    %v7269 = vsub.s32 %v7266, %v7268
    %v7270 = vrot.slane %v7248, %v7269
    %v7272 = vunpack.c.l.s4 1966171168
    %v7273 = vunpack.c.0.s8 %v7272
    %v7274 = vlaneseq
    %v7275 = vshrl.u32 %v7274, 7
    %v7276 = vsub.s32 %v7273, %v7275
    %v7277 = vrot.slane %v7249, %v7276
    %v7278 = vcombine.high %v7256, %v7256
    %v7279 = vcombine.high %v7263, %v7263
    %v7280 = vcombine.high %v7270, %v7270
    %v7281 = vcombine.high %v7277, %v7277
    %7290 = vst [vmem:[%s12 + $0x5] sm:$0x1] %v7256
    %7291 = vst [vmem:[%s12 + $0xd] sm:$0x1] %v7270
    %7292 = vst [vmem:[%s12 + $0x15] sm:$0x1] %v7278
    %7293 = vst [vmem:[%s12 + $0x1d] sm:$0x1] %v7280
    %7294 = vst [vmem:[%s12 + $0x25] sm:$0x1] %v7263
    %7295 = vst [vmem:[%s12 + $0x2d] sm:$0x1] %v7277
    %7296 = vst [vmem:[%s12 + $0x35] sm:$0x1] %v7279
    %7297 = vst [vmem:[%s12 + $0x3d] sm:$0x1] %v7281
    // Predicated region
    $region66: #{seq2seq_forward.1} parent=1 // pred_check
      _
    $region67: #{seq2seq_forward.1} parent=1 // pred_check_branch
      %7299 = sbr.rel (0) target = $region69
    $region68: #{seq2seq_forward.1} parent=1 // pred_region
      _
    $region69: #{seq2seq_forward.1} parent=1 // pred_fallthru
      _
    // Predicated region
    $region70: #{seq2seq_forward.1} parent=1 // pred_check
      _
    $region71: #{seq2seq_forward.1} parent=1 // pred_check_branch
      %7301 = sbr.rel (0) target = $region73
    $region72: #{seq2seq_forward.1} parent=1 // pred_region
      _
    $region73: #{seq2seq_forward.1} parent=1 // pred_fallthru
      _
    %7302 = vsyncpa [#allocation6], 1

</llo_original>
